<compile_context>
chip_gen: v6e
topology: v6e:2x2x1
jax: 0.10.0
libtpu: 0.0.40
codegen_flags: <defaults>
</compile_context>

<pallas_src>
import math

import jax
import jax.numpy as jnp
from jax.experimental import pallas as pl
from jax.experimental.pallas import tpu as pltpu

EPS = 1e-5
SSN_BANDS = 5
TAB_W = 40          # lane width of the packed parameter tables (>= max C = 35)


# ----------------------------------------------------------------------------
# Deterministic synthetic parameters (inference-mode BN/SSN running stats).
# ----------------------------------------------------------------------------
def _uniform(key, shape, fan_in):
    bound = 1.0 / math.sqrt(fan_in)
    return jax.random.uniform(key, shape, jnp.float32, -bound, bound)


def _bn_init(key, c):
    k = jax.random.split(key, 4)
    return {
        "gamma": 1.0 + 0.1 * jax.random.normal(k[0], (c,), jnp.float32),
        "beta": 0.1 * jax.random.normal(k[1], (c,), jnp.float32),
        "mean": 0.1 * jax.random.normal(k[2], (c,), jnp.float32),
        "var": 1.0 + 0.1 * jnp.abs(jax.random.normal(k[3], (c,), jnp.float32)),
    }


def init_transition(key, cin, cout):
    ks = jax.random.split(key, 11)
    return {
        "c1_w": _uniform(ks[0], (cin, cout), cin),
        "c1_b": _uniform(ks[1], (cout,), cin),
        "bn1": _bn_init(ks[2], cout),
        "dw_w": _uniform(ks[3], (3, cout), 3),
        "dw_b": _uniform(ks[4], (cout,), 3),
        "ssn": _bn_init(ks[5], cout * SSN_BANDS),
        "t_w": _uniform(ks[6], (3, cout), 3),
        "t_b": _uniform(ks[7], (cout,), 3),
        "bn2": _bn_init(ks[8], cout),
        "c2_w": _uniform(ks[9], (cout, cout), cout),
        "c2_b": _uniform(ks[10], (cout,), cout),
    }


def init_normal(key, c):
    ks = jax.random.split(key, 8)
    return {
        "dw_w": _uniform(ks[0], (3, c), 3),
        "dw_b": _uniform(ks[1], (c,), 3),
        "ssn": _bn_init(ks[2], c * SSN_BANDS),
        "t_w": _uniform(ks[3], (3, c), 3),
        "t_b": _uniform(ks[4], (c,), 3),
        "bn2": _bn_init(ks[5], c),
        "c2_w": _uniform(ks[6], (c, c), c),
        "c2_b": _uniform(ks[7], (c,), c),
    }


def init_model(key, n_class=35, scale=1):
    # TODO(synk): final depthwise 5x5 uses groups == channels (exact for scale=1,
    # the PyTorch module hard-codes groups=20).
    ks = jax.random.split(key, 20)
    c16, c8, c12, c20, c32 = 16 * scale, 8 * scale, 12 * scale, 20 * scale, 32 * scale
    return {
        "in_w": _uniform(ks[0], (25, c16), 25),
        "in_b": _uniform(ks[1], (c16,), 25),
        "t1": init_transition(ks[2], c16, c8),
        "n11": init_normal(ks[3], c8),
        "t2": init_transition(ks[4], c8, c12),
        "n21": init_normal(ks[5], c12),
        "t3": init_transition(ks[6], c12, c16),
        "n31": init_normal(ks[7], c16),
        "n32": init_normal(ks[8], c16),
        "n33": init_normal(ks[9], c16),
        "t4": init_transition(ks[10], c16, c20),
        "n41": init_normal(ks[11], c20),
        "n42": init_normal(ks[12], c20),
        "n43": init_normal(ks[13], c20),
        "dw_w": _uniform(ks[14], (25, c20), 25),
        "dw_b": _uniform(ks[15], (c20,), 25),
        "ox_w": _uniform(ks[16], (c20, c32), c20),
        "ox_b": _uniform(ks[17], (c32,), c20),
        "hd_w": _uniform(ks[18], (c32, n_class), c32),
        "hd_b": _uniform(ks[19], (n_class,), c32),
    }


# ----------------------------------------------------------------------------
# Parameter packing: fold all norms, fold conv biases preceding a norm, and
# pack every parameter into two f32 tables (vector-like rows / matmul weights).
# Offsets are Python ints baked into the kernel as constants.
# ----------------------------------------------------------------------------
class _Table:
    def __init__(self, width):
        self.width = width
        self._chunks = []
        self._rows = 0

    def add(self, arr):
        arr = jnp.asarray(arr, jnp.float32)
        if arr.ndim == 1:
            arr = arr[None, :]
        r, c = arr.shape
        assert c <= self.width, (c, self.width)
        rp = ((r + 7) // 8) * 8                       # sublane-align every entry
        buf = jnp.zeros((rp, self.width), jnp.float32).at[:r, :c].set(arr)
        off = self._rows
        self._chunks.append(buf)
        self._rows += rp
        return off

    def build(self):
        return jnp.concatenate(self._chunks, axis=0)


def prepare_model(raw, n_freq_in, n_time):
    T = n_time
    fA = (n_freq_in - 1) // 2 + 1      # after input conv (k=5, pad=2, stride=2)
    fB = (fA - 1) // 2 + 1             # after t2's strided (3,1) conv
    fC = (fB - 1) // 2 + 1             # after t3's strided (3,1) conv
    for f in (fA, fB, fC):
        assert f % SSN_BANDS == 0, "SubSpectralNorm needs freq divisible by 5"
    assert fC == 5, "final depthwise 5x5 needs exactly 5 freq bins (use n_freq_in=40)"
    assert T >= 5 and T % 8 == 0, "time dim must be >=5 and a multiple of 8"

    vec, mat = _Table(TAB_W), _Table(TAB_W)

    def fold_bn(bn, prev_bias=None):
        s = bn["gamma"] / jnp.sqrt(bn["var"] + EPS)
        b = bn["beta"] - bn["mean"] * s
        if prev_bias is not None:
            b = b + prev_bias * s
        return s, b

    def fold_ssn(ssn, prev_bias, f):
        c = ssn["gamma"].shape[0] // SSN_BANDS
        s = ssn["gamma"] / jnp.sqrt(ssn["var"] + EPS)
        b = ssn["beta"] - ssn["mean"] * s
        rep = f // SSN_BANDS
        s_fc = jnp.repeat(s.reshape(c, SSN_BANDS), rep, axis=1).T      # (f, c)
        b_fc = jnp.repeat(b.reshape(c, SSN_BANDS), rep, axis=1).T
        if prev_bias is not None:
            b_fc = b_fc + prev_bias[None, :] * s_fc
        # replicate over time so the affine applies directly in (f*T, c) space
        return jnp.repeat(s_fc, T, axis=0), jnp.repeat(b_fc, T, axis=0)

    def prep_transition(p, cin, cout, f_in, f_out, stride, dil):
        a1_s, a1_b = fold_bn(p["bn1"], p["c1_b"])
        ssn_s, ssn_b = fold_ssn(p["ssn"], p["dw_b"], f_out)
        a2_s, a2_b = fold_bn(p["bn2"], p["t_b"])
        return dict(kind="t", cin=cin, cout=cout, f_in=f_in, f_out=f_out,
                    stride=stride, dil=dil,
                    c1_w=mat.add(p["c1_w"]),
                    a1_s=vec.add(a1_s), a1_b=vec.add(a1_b),
                    dw=vec.add(p["dw_w"]),
                    ssn_s=vec.add(ssn_s), ssn_b=vec.add(ssn_b),
                    tw=vec.add(p["t_w"]),
                    a2_s=vec.add(a2_s), a2_b=vec.add(a2_b),
                    c2_w=mat.add(p["c2_w"]), c2_b=vec.add(p["c2_b"]))

    def prep_normal(p, c, f, dil):
        ssn_s, ssn_b = fold_ssn(p["ssn"], p["dw_b"], f)
        a2_s, a2_b = fold_bn(p["bn2"], p["t_b"])
        return dict(kind="n", c=c, f=f, dil=dil,
                    dw=vec.add(p["dw_w"]),
                    ssn_s=vec.add(ssn_s), ssn_b=vec.add(ssn_b),
                    tw=vec.add(p["t_w"]),
                    a2_s=vec.add(a2_s), a2_b=vec.add(a2_b),
                    c2_w=mat.add(p["c2_w"]), c2_b=vec.add(p["c2_b"]))

    c0 = raw["in_w"].shape[1]
    c_t1 = raw["t1"]["c1_w"].shape[1]
    c_t2 = raw["t2"]["c1_w"].shape[1]
    c_t3 = raw["t3"]["c1_w"].shape[1]
    c_t4 = raw["t4"]["c1_w"].shape[1]

    blocks = [
        prep_transition(raw["t1"], c0, c_t1, fA, fA, 1, 1),
        prep_normal(raw["n11"], c_t1, fA, 1),
        prep_transition(raw["t2"], c_t1, c_t2, fA, fB, 2, 2),
        prep_normal(raw["n21"], c_t2, fB, 2),
        prep_transition(raw["t3"], c_t2, c_t3, fB, fC, 2, 4),
        prep_normal(raw["n31"], c_t3, fC, 4),
        prep_normal(raw["n32"], c_t3, fC, 4),
        prep_normal(raw["n33"], c_t3, fC, 4),
        prep_transition(raw["t4"], c_t3, c_t4, fC, fC, 1, 8),
        prep_normal(raw["n41"], c_t4, fC, 8),
        prep_normal(raw["n42"], c_t4, fC, 8),
        prep_normal(raw["n43"], c_t4, fC, 8),
    ]

    layout = dict(
        T=T, fA=fA, f_final=fC, n_class=raw["hd_w"].shape[1], c0=c0,
        in_w=mat.add(raw["in_w"]), in_b=vec.add(raw["in_b"]),
        blocks=blocks,
        dw5_w=vec.add(raw["dw_w"]), dw5_b=vec.add(raw["dw_b"]),
        c_dw5=raw["dw_w"].shape[1],
        ox_w=mat.add(raw["ox_w"]), ox_b=vec.add(raw["ox_b"]),
        c_ox=raw["ox_w"].shape[1],
        hd_w=mat.add(raw["hd_w"]), hd_b=vec.add(raw["hd_b"]),
    )
    return vec.build(), mat.build(), layout


# ----------------------------------------------------------------------------
# The fused Pallas kernel (whole forward for one batch element per grid step).
# ----------------------------------------------------------------------------
def _build_kernel(layout):
    T = layout["T"]

    def kernel(p_ref, vec_ref, mat_ref, o_ref):
        f32 = jnp.float32

        def vrow(off, c):                              # (1, C)
            return vec_ref[off:off + 1, 0:c]

        def vblk(off, r, c):                           # (r, C)
            return vec_ref[off:off + r, 0:c]

        def mm(x2, w_off, ci, co, b_off=None):         # MXU 1x1 conv / matmul
            y = jnp.dot(x2, mat_ref[w_off:w_off + ci, 0:co],
                        preferred_element_type=f32)
            if b_off is not None:
                y = y + vrow(b_off, co)
            return y

        def silu(x):
            return x * pl.reciprocal(1.0 + jnp.exp(-x), approx=True)

        def dw_freq3(x3, w_off, c, stride):
            # depthwise (3,1) conv over freq, zero pad 1; stride folded into taps.
            f = x3.shape[0]
            z = jnp.zeros((1, T, c), f32)
            xp = jnp.concatenate([z, x3, z], axis=0)            # (f+2, T, c)
            w0, w1, w2 = vrow(w_off, c), vrow(w_off + 1, c), vrow(w_off + 2, c)
            if stride == 1:
                top, mid, bot = xp[0:f], xp[1:f + 1], xp[2:f + 2]
            else:                                               # stride 2, f even
                fo = f // 2
                a = xp[0:f].reshape(fo, 2, T, c)                # a[i,0]=xp[2i]
                b = xp[2:f + 2].reshape(fo, 2, T, c)            # b[i,0]=xp[2i+2]
                top, mid, bot = a[:, 0], a[:, 1], b[:, 0]
            return top * w0 + mid * w1 + bot * w2

        def dw_time3(z2, w_off, c, d):
            # depthwise (1,3) dilated conv over time, 'same' zero padding.
            t = z2.shape[0]
            zz = jnp.zeros((d, c), f32)
            zp = jnp.concatenate([zz, z2, zz], axis=0)          # (t+2d, c)
            return (zp[0:t] * vrow(w_off, c)
                    + zp[d:d + t] * vrow(w_off + 1, c)
                    + zp[2 * d:2 * d + t] * vrow(w_off + 2, c))

        def transition(h2, L):
            f, cin, cout = L["f_in"], L["cin"], L["cout"]
            # f2: 1x1 (MXU) -> BN+ReLU -> depthwise (3,1) (maybe strided) -> SSN
            y = mm(h2, L["c1_w"], cin, cout)                    # bias folded in a1
            y = jnp.maximum(y * vrow(L["a1_s"], cout) + vrow(L["a1_b"], cout), 0.0)
            y3 = dw_freq3(y.reshape(f, T, cout), L["dw"], cout, L["stride"])
            fo = L["f_out"]
            y2 = y3.reshape(fo * T, cout)
            y2 = y2 * vblk(L["ssn_s"], fo * T, cout) + vblk(L["ssn_b"], fo * T, cout)
            # f1 on freq mean: dw (1,3) dilated -> BN+SiLU -> 1x1 (Dropout = id)
            z = jnp.mean(y2.reshape(fo, T, cout), axis=0)       # (T, cout)
            z = dw_time3(z, L["tw"], cout, L["dil"])
            z = silu(z * vrow(L["a2_s"], cout) + vrow(L["a2_b"], cout))
            z = mm(z, L["c2_w"], cout, cout, L["c2_b"])
            out3 = jnp.maximum(y2.reshape(fo, T, cout) + z, 0.0)
            return out3.reshape(fo * T, cout)

        def normal(h2, L):
            f, c = L["f"], L["c"]
            h3 = h2.reshape(f, T, c)
            x1 = dw_freq3(h3, L["dw"], c, 1)
            x1 = x1.reshape(f * T, c)
            x1 = x1 * vblk(L["ssn_s"], f * T, c) + vblk(L["ssn_b"], f * T, c)
            x1_3 = x1.reshape(f, T, c)
            z = jnp.mean(x1_3, axis=0)                          # (T, c)
            z = dw_time3(z, L["tw"], c, L["dil"])
            z = silu(z * vrow(L["a2_s"], c) + vrow(L["a2_b"], c))
            z = mm(z, L["c2_w"], c, c, L["c2_b"])
            out3 = jnp.maximum(h3 + x1_3 + z, 0.0)
            return out3.reshape(f * T, c)

        # ---- input 5x5 conv: im2col patches (built in wrapper) @ W (MXU) -----
        c0 = layout["c0"]
        patches = p_ref[0]                                      # (fA*T, 25)
        h = mm(patches, layout["in_w"], 25, c0, layout["in_b"])

        # ---- transition / normal blocks --------------------------------------
        for L in layout["blocks"]:
            h = transition(h, L) if L["kind"] == "t" else normal(h, L)

        # ---- final depthwise 5x5 valid conv: freq 5 -> 1, time T -> T-4 ------
        c5 = layout["c_dw5"]
        fF = layout["f_final"]                                  # == 5
        to = T - 4
        y3 = h.reshape(fF, T, c5)
        acc = None
        for kh in range(5):
            row = y3[kh]                                        # (T, c5)
            for kw in range(5):
                term = row[kw:kw + to] * vrow(layout["dw5_w"] + kh * 5 + kw, c5)
                acc = term if acc is None else acc + term
        acc = acc + vrow(layout["dw5_b"], c5)                   # (to, c5)

        # ---- 1x1 conv -> 32c, mean over time, head 1x1, log-softmax ----------
        cox = layout["c_ox"]
        y = mm(acc, layout["ox_w"], c5, cox, layout["ox_b"])    # (to, cox)
        y = jnp.mean(y, axis=0, keepdims=True)                  # (1, cox)
        n_class = layout["n_class"]
        logits = mm(y, layout["hd_w"], cox, n_class, layout["hd_b"])   # (1, n_class)
        mx = jnp.max(logits, axis=-1, keepdims=True)
        sh = logits - mx
        lse = jnp.log(jnp.sum(jnp.exp(sh), axis=-1, keepdims=True))
        o_ref[0] = sh - lse

    return kernel


# ----------------------------------------------------------------------------
# Wrapper: input im2col (one tiny fused XLA op) + a single pallas_call over batch.
# ----------------------------------------------------------------------------
def _im2col_input(x, f_out):
    # x: (N, F, T); 5x5 conv, stride (2,1), padding 2 -> (N, f_out*T, 25)
    n, f, t = x.shape
    xp = jnp.pad(x, ((0, 0), (2, 2), (2, 2)))
    cols = []
    for kh in range(5):
        for kw in range(5):
            cols.append(xp[:, kh:kh + 2 * f_out:2, kw:kw + t])  # (N, f_out, T)
    p = jnp.stack(cols, axis=-1)                                # (N, f_out, T, 25)
    return p.reshape(n, f_out * t, 25)


def build_forward(layout):
    kernel = _build_kernel(layout)
    T, fA, n_class = layout["T"], layout["fA"], layout["n_class"]

    def forward(vec_tab, mat_tab, x_nchw):
        x = x_nchw[:, 0].astype(jnp.float32)                    # (N, F, T)
        n = x.shape[0]
        patches = _im2col_input(x, fA)                          # (N, fA*T, 25)
        out = pl.pallas_call(
            kernel,
            out_shape=jax.ShapeDtypeStruct((n, 1, n_class), jnp.float32),
            grid=(n,),
            in_specs=[
                pl.BlockSpec((1, fA * T, 25), lambda i: (i, 0, 0)),
                pl.BlockSpec(vec_tab.shape, lambda i: (0, 0)),
                pl.BlockSpec(mat_tab.shape, lambda i: (0, 0)),
            ],
            out_specs=pl.BlockSpec((1, 1, n_class), lambda i: (i, 0, 0)),
            compiler_params=pltpu.CompilerParams(
                dimension_semantics=("parallel",),
                vmem_limit_bytes=32 * 1024 * 1024,
            ),
        )(patches, vec_tab, mat_tab)
        return out.reshape(n, n_class)

    return jax.jit(forward)


if __name__ == "__main__":
    key = jax.random.PRNGKey(0)
    kp, kx = jax.random.split(key)

    # PyTorch-style NCHW input (N=2, C=1, F=40, T=8): F=40 keeps every
    # SubSpectralNorm frequency count divisible by 5 and the final 5x5
    # depthwise conv valid (freq reaches 5, T=8 >= 5).
    N, F, T = 2, 40, 8
    raw = init_model(kp, n_class=35, scale=1)
    vec_tab, mat_tab, layout = prepare_model(raw, n_freq_in=F, n_time=T)

    x_nchw = jax.random.normal(kx, (N, 1, F, T), jnp.float32)

    fwd = build_forward(layout)
    out = fwd(vec_tab, mat_tab, x_nchw)
    jax.block_until_ready(out)
    assert out.shape == (N, 35), out.shape
    assert bool(jnp.all(jnp.isfinite(out))), "non-finite output"
    print("KERNEL_OK")
</pallas_src>

<mosaic_0001>
module attributes {stable_mosaic.version = 11 : i64} {
  func.func @kernel(%arg0: i32, %arg1: memref<1x160x25xf32, #tpu.memory_space<vmem>>, %arg2: memref<2208x40xf32, #tpu.memory_space<vmem>>, %arg3: memref<352x40xf32, #tpu.memory_space<vmem>>, %arg4: memref<1x1x35xf32, #tpu.memory_space<vmem>>) attributes {dimension_semantics = [#tpu.dimension_semantics<parallel>], iteration_bounds = array<i64: 2>, scalar_prefetch = 0 : i64, scratch_operands = 0 : i64, tpu.core_type = #tpu.core_type<tc>, window_params = [{transform_indices = @transform_0, window_bounds = array<i64: 1, 160, 25>}, {pipeline_mode = #tpu.pipeline_mode<synchronous>, transform_indices = @transform_1, window_bounds = array<i64: 2208, 40>}, {pipeline_mode = #tpu.pipeline_mode<synchronous>, transform_indices = @transform_2, window_bounds = array<i64: 352, 40>}, {transform_indices = @transform_3, window_bounds = array<i64: 1, 1, 35>}]} {
    %c0 = arith.constant 0 : index
    %c0_0 = arith.constant 0 : index
    %c0_1 = arith.constant 0 : index
    %0 = vector.load %arg1[%c0, %c0_0, %c0_1] : memref<1x160x25xf32, #tpu.memory_space<vmem>>, vector<1x160x25xf32>
    %1 = vector.shape_cast %0 : vector<1x160x25xf32> to vector<160x25xf32>
    %c264 = arith.constant 264 : index
    %c0_2 = arith.constant 0 : index
    %2 = vector.load %arg3[%c264, %c0_2] : memref<352x40xf32, #tpu.memory_space<vmem>>, vector<25x16xf32>
    %cst = arith.constant dense<0.000000e+00> : vector<160x16xf32>
    %3 = tpu.matmul %1, %2, %cst {dimension_numbers = #tpu.dot_dimension_numbers<[1], [0], [0], [1], [0, 0, 1, 1], [], []>} : vector<160x25xf32>, vector<25x16xf32>, vector<160x16xf32> -> vector<160x16xf32>
    %c2144 = arith.constant 2144 : index
    %c0_3 = arith.constant 0 : index
    %4 = vector.load %arg2[%c2144, %c0_3] : memref<2208x40xf32, #tpu.memory_space<vmem>>, vector<1x16xf32>
    %5 = vector.broadcast %4 : vector<1x16xf32> to vector<160x16xf32>
    %6 = arith.addf %3, %5 : vector<160x16xf32>
    %c0_4 = arith.constant 0 : index
    %c0_5 = arith.constant 0 : index
    %7 = vector.load %arg3[%c0_4, %c0_5] : memref<352x40xf32, #tpu.memory_space<vmem>>, vector<16x8xf32>
    %cst_6 = arith.constant dense<0.000000e+00> : vector<160x8xf32>
    %8 = tpu.matmul %6, %7, %cst_6 {dimension_numbers = #tpu.dot_dimension_numbers<[1], [0], [0], [1], [0, 0, 1, 1], [], []>} : vector<160x16xf32>, vector<16x8xf32>, vector<160x8xf32> -> vector<160x8xf32>
    %c0_7 = arith.constant 0 : index
    %c0_8 = arith.constant 0 : index
    %9 = vector.load %arg2[%c0_7, %c0_8] : memref<2208x40xf32, #tpu.memory_space<vmem>>, vector<1x8xf32>
    %10 = vector.broadcast %9 : vector<1x8xf32> to vector<160x8xf32>
    %11 = arith.mulf %8, %10 : vector<160x8xf32>
    %c8 = arith.constant 8 : index
    %c0_9 = arith.constant 0 : index
    %12 = vector.load %arg2[%c8, %c0_9] : memref<2208x40xf32, #tpu.memory_space<vmem>>, vector<1x8xf32>
    %13 = vector.broadcast %12 : vector<1x8xf32> to vector<160x8xf32>
    %14 = arith.addf %11, %13 : vector<160x8xf32>
    %cst_10 = arith.constant 0.000000e+00 : f32
    %15 = vector.broadcast %cst_10 : f32 to vector<160x8xf32>
    %16 = arith.maximumf %14, %15 : vector<160x8xf32>
    %17 = vector.shape_cast %16 : vector<160x8xf32> to vector<20x8x8xf32>
    %cst_11 = arith.constant 0.000000e+00 : f32
    %18 = vector.broadcast %cst_11 : f32 to vector<1x8x8xf32>
    %19 = tpu.concatenate %18, %17, %18 in 0 : vector<1x8x8xf32>, vector<20x8x8xf32>, vector<1x8x8xf32> -> vector<22x8x8xf32>
    %c16 = arith.constant 16 : index
    %c0_12 = arith.constant 0 : index
    %20 = vector.load %arg2[%c16, %c0_12] : memref<2208x40xf32, #tpu.memory_space<vmem>>, vector<1x8xf32>
    %c17 = arith.constant 17 : index
    %c0_13 = arith.constant 0 : index
    %21 = vector.load %arg2[%c17, %c0_13] : memref<2208x40xf32, #tpu.memory_space<vmem>>, vector<1x8xf32>
    %c18 = arith.constant 18 : index
    %c0_14 = arith.constant 0 : index
    %22 = vector.load %arg2[%c18, %c0_14] : memref<2208x40xf32, #tpu.memory_space<vmem>>, vector<1x8xf32>
    %23 = vector.extract_strided_slice %19 {offsets = [0, 0, 0], sizes = [20, 8, 8], strides = [1, 1, 1]} : vector<22x8x8xf32> to vector<20x8x8xf32>
    %24 = vector.extract_strided_slice %19 {offsets = [1, 0, 0], sizes = [20, 8, 8], strides = [1, 1, 1]} : vector<22x8x8xf32> to vector<20x8x8xf32>
    %25 = vector.extract_strided_slice %19 {offsets = [2, 0, 0], sizes = [20, 8, 8], strides = [1, 1, 1]} : vector<22x8x8xf32> to vector<20x8x8xf32>
    %26 = vector.shape_cast %20 : vector<1x8xf32> to vector<1x1x8xf32>
    %27 = vector.broadcast %26 : vector<1x1x8xf32> to vector<20x8x8xf32>
    %28 = arith.mulf %23, %27 : vector<20x8x8xf32>
    %29 = vector.shape_cast %21 : vector<1x8xf32> to vector<1x1x8xf32>
    %30 = vector.broadcast %29 : vector<1x1x8xf32> to vector<20x8x8xf32>
    %31 = arith.mulf %24, %30 : vector<20x8x8xf32>
    %32 = arith.addf %28, %31 : vector<20x8x8xf32>
    %33 = vector.shape_cast %22 : vector<1x8xf32> to vector<1x1x8xf32>
    %34 = vector.broadcast %33 : vector<1x1x8xf32> to vector<20x8x8xf32>
    %35 = arith.mulf %25, %34 : vector<20x8x8xf32>
    %36 = arith.addf %32, %35 : vector<20x8x8xf32>
    %37 = vector.shape_cast %36 : vector<20x8x8xf32> to vector<160x8xf32>
    %c24 = arith.constant 24 : index
    %c0_15 = arith.constant 0 : index
    %38 = vector.load %arg2[%c24, %c0_15] : memref<2208x40xf32, #tpu.memory_space<vmem>>, vector<160x8xf32>
    %39 = arith.mulf %37, %38 : vector<160x8xf32>
    %c184 = arith.constant 184 : index
    %c0_16 = arith.constant 0 : index
    %40 = vector.load %arg2[%c184, %c0_16] : memref<2208x40xf32, #tpu.memory_space<vmem>>, vector<160x8xf32>
    %41 = arith.addf %39, %40 : vector<160x8xf32>
    %42 = vector.shape_cast %41 : vector<160x8xf32> to vector<20x8x8xf32>
    %cst_17 = arith.constant dense<0.000000e+00> : vector<8x8xf32>
    %43 = vector.multi_reduction <add>, %42, %cst_17 [0] : vector<20x8x8xf32> to vector<8x8xf32>
    %cst_18 = arith.constant 2.000000e+01 : f32
    %44 = vector.broadcast %cst_18 : f32 to vector<8x8xf32>
    %45 = arith.divf %43, %44 : vector<8x8xf32>
    %cst_19 = arith.constant 0.000000e+00 : f32
    %46 = vector.broadcast %cst_19 : f32 to vector<1x8xf32>
    %47 = tpu.concatenate %46, %45, %46 in 0 : vector<1x8xf32>, vector<8x8xf32>, vector<1x8xf32> -> vector<10x8xf32>
    %48 = vector.extract_strided_slice %47 {offsets = [0, 0], sizes = [8, 8], strides = [1, 1]} : vector<10x8xf32> to vector<8x8xf32>
    %c344 = arith.constant 344 : index
    %c0_20 = arith.constant 0 : index
    %49 = vector.load %arg2[%c344, %c0_20] : memref<2208x40xf32, #tpu.memory_space<vmem>>, vector<1x8xf32>
    %50 = vector.broadcast %49 : vector<1x8xf32> to vector<8x8xf32>
    %51 = arith.mulf %48, %50 : vector<8x8xf32>
    %52 = vector.extract_strided_slice %47 {offsets = [1, 0], sizes = [8, 8], strides = [1, 1]} : vector<10x8xf32> to vector<8x8xf32>
    %c345 = arith.constant 345 : index
    %c0_21 = arith.constant 0 : index
    %53 = vector.load %arg2[%c345, %c0_21] : memref<2208x40xf32, #tpu.memory_space<vmem>>, vector<1x8xf32>
    %54 = vector.broadcast %53 : vector<1x8xf32> to vector<8x8xf32>
    %55 = arith.mulf %52, %54 : vector<8x8xf32>
    %56 = arith.addf %51, %55 : vector<8x8xf32>
    %57 = vector.extract_strided_slice %47 {offsets = [2, 0], sizes = [8, 8], strides = [1, 1]} : vector<10x8xf32> to vector<8x8xf32>
    %c346 = arith.constant 346 : index
    %c0_22 = arith.constant 0 : index
    %58 = vector.load %arg2[%c346, %c0_22] : memref<2208x40xf32, #tpu.memory_space<vmem>>, vector<1x8xf32>
    %59 = vector.broadcast %58 : vector<1x8xf32> to vector<8x8xf32>
    %60 = arith.mulf %57, %59 : vector<8x8xf32>
    %61 = arith.addf %56, %60 : vector<8x8xf32>
    %c352 = arith.constant 352 : index
    %c0_23 = arith.constant 0 : index
    %62 = vector.load %arg2[%c352, %c0_23] : memref<2208x40xf32, #tpu.memory_space<vmem>>, vector<1x8xf32>
    %63 = vector.broadcast %62 : vector<1x8xf32> to vector<8x8xf32>
    %64 = arith.mulf %61, %63 : vector<8x8xf32>
    %c360 = arith.constant 360 : index
    %c0_24 = arith.constant 0 : index
    %65 = vector.load %arg2[%c360, %c0_24] : memref<2208x40xf32, #tpu.memory_space<vmem>>, vector<1x8xf32>
    %66 = vector.broadcast %65 : vector<1x8xf32> to vector<8x8xf32>
    %67 = arith.addf %64, %66 : vector<8x8xf32>
    %cst_25 = arith.constant 0.000000e+00 : f32
    %68 = vector.broadcast %cst_25 : f32 to vector<8x8xf32>
    %69 = arith.subf %68, %67 : vector<8x8xf32>
    %70 = math.exp %69 : vector<8x8xf32>
    %cst_26 = arith.constant 1.000000e+00 : f32
    %71 = vector.broadcast %cst_26 : f32 to vector<8x8xf32>
    %72 = arith.addf %71, %70 : vector<8x8xf32>
    %73 = tpu.reciprocal %72 {approx = true} : vector<8x8xf32> -> vector<8x8xf32>
    %74 = arith.mulf %67, %73 : vector<8x8xf32>
    %c16_27 = arith.constant 16 : index
    %c0_28 = arith.constant 0 : index
    %75 = vector.load %arg3[%c16_27, %c0_28] : memref<352x40xf32, #tpu.memory_space<vmem>>, vector<8x8xf32>
    %cst_29 = arith.constant dense<0.000000e+00> : vector<8x8xf32>
    %76 = tpu.matmul %74, %75, %cst_29 {dimension_numbers = #tpu.dot_dimension_numbers<[1], [0], [0], [1], [0, 0, 1, 1], [], []>} : vector<8x8xf32>, vector<8x8xf32>, vector<8x8xf32> -> vector<8x8xf32>
    %c368 = arith.constant 368 : index
    %c0_30 = arith.constant 0 : index
    %77 = vector.load %arg2[%c368, %c0_30] : memref<2208x40xf32, #tpu.memory_space<vmem>>, vector<1x8xf32>
    %78 = vector.broadcast %77 : vector<1x8xf32> to vector<8x8xf32>
    %79 = arith.addf %76, %78 : vector<8x8xf32>
    %80 = vector.shape_cast %41 : vector<160x8xf32> to vector<20x8x8xf32>
    %81 = vector.shape_cast %79 : vector<8x8xf32> to vector<1x8x8xf32>
    %82 = vector.broadcast %81 : vector<1x8x8xf32> to vector<20x8x8xf32>
    %83 = arith.addf %80, %82 : vector<20x8x8xf32>
    %cst_31 = arith.constant 0.000000e+00 : f32
    %84 = vector.broadcast %cst_31 : f32 to vector<20x8x8xf32>
    %85 = arith.maximumf %83, %84 : vector<20x8x8xf32>
    %86 = vector.shape_cast %85 : vector<20x8x8xf32> to vector<160x8xf32>
    %87 = vector.shape_cast %86 : vector<160x8xf32> to vector<20x8x8xf32>
    %cst_32 = arith.constant 0.000000e+00 : f32
    %88 = vector.broadcast %cst_32 : f32 to vector<1x8x8xf32>
    %89 = tpu.concatenate %88, %87, %88 in 0 : vector<1x8x8xf32>, vector<20x8x8xf32>, vector<1x8x8xf32> -> vector<22x8x8xf32>
    %c376 = arith.constant 376 : index
    %c0_33 = arith.constant 0 : index
    %90 = vector.load %arg2[%c376, %c0_33] : memref<2208x40xf32, #tpu.memory_space<vmem>>, vector<1x8xf32>
    %c377 = arith.constant 377 : index
    %c0_34 = arith.constant 0 : index
    %91 = vector.load %arg2[%c377, %c0_34] : memref<2208x40xf32, #tpu.memory_space<vmem>>, vector<1x8xf32>
    %c378 = arith.constant 378 : index
    %c0_35 = arith.constant 0 : index
    %92 = vector.load %arg2[%c378, %c0_35] : memref<2208x40xf32, #tpu.memory_space<vmem>>, vector<1x8xf32>
    %93 = vector.extract_strided_slice %89 {offsets = [0, 0, 0], sizes = [20, 8, 8], strides = [1, 1, 1]} : vector<22x8x8xf32> to vector<20x8x8xf32>
    %94 = vector.extract_strided_slice %89 {offsets = [1, 0, 0], sizes = [20, 8, 8], strides = [1, 1, 1]} : vector<22x8x8xf32> to vector<20x8x8xf32>
    %95 = vector.extract_strided_slice %89 {offsets = [2, 0, 0], sizes = [20, 8, 8], strides = [1, 1, 1]} : vector<22x8x8xf32> to vector<20x8x8xf32>
    %96 = vector.shape_cast %90 : vector<1x8xf32> to vector<1x1x8xf32>
    %97 = vector.broadcast %96 : vector<1x1x8xf32> to vector<20x8x8xf32>
    %98 = arith.mulf %93, %97 : vector<20x8x8xf32>
    %99 = vector.shape_cast %91 : vector<1x8xf32> to vector<1x1x8xf32>
    %100 = vector.broadcast %99 : vector<1x1x8xf32> to vector<20x8x8xf32>
    %101 = arith.mulf %94, %100 : vector<20x8x8xf32>
    %102 = arith.addf %98, %101 : vector<20x8x8xf32>
    %103 = vector.shape_cast %92 : vector<1x8xf32> to vector<1x1x8xf32>
    %104 = vector.broadcast %103 : vector<1x1x8xf32> to vector<20x8x8xf32>
    %105 = arith.mulf %95, %104 : vector<20x8x8xf32>
    %106 = arith.addf %102, %105 : vector<20x8x8xf32>
    %107 = vector.shape_cast %106 : vector<20x8x8xf32> to vector<160x8xf32>
    %c384 = arith.constant 384 : index
    %c0_36 = arith.constant 0 : index
    %108 = vector.load %arg2[%c384, %c0_36] : memref<2208x40xf32, #tpu.memory_space<vmem>>, vector<160x8xf32>
    %109 = arith.mulf %107, %108 : vector<160x8xf32>
    %c544 = arith.constant 544 : index
    %c0_37 = arith.constant 0 : index
    %110 = vector.load %arg2[%c544, %c0_37] : memref<2208x40xf32, #tpu.memory_space<vmem>>, vector<160x8xf32>
    %111 = arith.addf %109, %110 : vector<160x8xf32>
    %112 = vector.shape_cast %111 : vector<160x8xf32> to vector<20x8x8xf32>
    %cst_38 = arith.constant dense<0.000000e+00> : vector<8x8xf32>
    %113 = vector.multi_reduction <add>, %112, %cst_38 [0] : vector<20x8x8xf32> to vector<8x8xf32>
    %cst_39 = arith.constant 2.000000e+01 : f32
    %114 = vector.broadcast %cst_39 : f32 to vector<8x8xf32>
    %115 = arith.divf %113, %114 : vector<8x8xf32>
    %cst_40 = arith.constant 0.000000e+00 : f32
    %116 = vector.broadcast %cst_40 : f32 to vector<1x8xf32>
    %117 = tpu.concatenate %116, %115, %116 in 0 : vector<1x8xf32>, vector<8x8xf32>, vector<1x8xf32> -> vector<10x8xf32>
    %118 = vector.extract_strided_slice %117 {offsets = [0, 0], sizes = [8, 8], strides = [1, 1]} : vector<10x8xf32> to vector<8x8xf32>
    %c704 = arith.constant 704 : index
    %c0_41 = arith.constant 0 : index
    %119 = vector.load %arg2[%c704, %c0_41] : memref<2208x40xf32, #tpu.memory_space<vmem>>, vector<1x8xf32>
    %120 = vector.broadcast %119 : vector<1x8xf32> to vector<8x8xf32>
    %121 = arith.mulf %118, %120 : vector<8x8xf32>
    %122 = vector.extract_strided_slice %117 {offsets = [1, 0], sizes = [8, 8], strides = [1, 1]} : vector<10x8xf32> to vector<8x8xf32>
    %c705 = arith.constant 705 : index
    %c0_42 = arith.constant 0 : index
    %123 = vector.load %arg2[%c705, %c0_42] : memref<2208x40xf32, #tpu.memory_space<vmem>>, vector<1x8xf32>
    %124 = vector.broadcast %123 : vector<1x8xf32> to vector<8x8xf32>
    %125 = arith.mulf %122, %124 : vector<8x8xf32>
    %126 = arith.addf %121, %125 : vector<8x8xf32>
    %127 = vector.extract_strided_slice %117 {offsets = [2, 0], sizes = [8, 8], strides = [1, 1]} : vector<10x8xf32> to vector<8x8xf32>
    %c706 = arith.constant 706 : index
    %c0_43 = arith.constant 0 : index
    %128 = vector.load %arg2[%c706, %c0_43] : memref<2208x40xf32, #tpu.memory_space<vmem>>, vector<1x8xf32>
    %129 = vector.broadcast %128 : vector<1x8xf32> to vector<8x8xf32>
    %130 = arith.mulf %127, %129 : vector<8x8xf32>
    %131 = arith.addf %126, %130 : vector<8x8xf32>
    %c712 = arith.constant 712 : index
    %c0_44 = arith.constant 0 : index
    %132 = vector.load %arg2[%c712, %c0_44] : memref<2208x40xf32, #tpu.memory_space<vmem>>, vector<1x8xf32>
    %133 = vector.broadcast %132 : vector<1x8xf32> to vector<8x8xf32>
    %134 = arith.mulf %131, %133 : vector<8x8xf32>
    %c720 = arith.constant 720 : index
    %c0_45 = arith.constant 0 : index
    %135 = vector.load %arg2[%c720, %c0_45] : memref<2208x40xf32, #tpu.memory_space<vmem>>, vector<1x8xf32>
    %136 = vector.broadcast %135 : vector<1x8xf32> to vector<8x8xf32>
    %137 = arith.addf %134, %136 : vector<8x8xf32>
    %cst_46 = arith.constant 0.000000e+00 : f32
    %138 = vector.broadcast %cst_46 : f32 to vector<8x8xf32>
    %139 = arith.subf %138, %137 : vector<8x8xf32>
    %140 = math.exp %139 : vector<8x8xf32>
    %cst_47 = arith.constant 1.000000e+00 : f32
    %141 = vector.broadcast %cst_47 : f32 to vector<8x8xf32>
    %142 = arith.addf %141, %140 : vector<8x8xf32>
    %143 = tpu.reciprocal %142 {approx = true} : vector<8x8xf32> -> vector<8x8xf32>
    %144 = arith.mulf %137, %143 : vector<8x8xf32>
    %c24_48 = arith.constant 24 : index
    %c0_49 = arith.constant 0 : index
    %145 = vector.load %arg3[%c24_48, %c0_49] : memref<352x40xf32, #tpu.memory_space<vmem>>, vector<8x8xf32>
    %cst_50 = arith.constant dense<0.000000e+00> : vector<8x8xf32>
    %146 = tpu.matmul %144, %145, %cst_50 {dimension_numbers = #tpu.dot_dimension_numbers<[1], [0], [0], [1], [0, 0, 1, 1], [], []>} : vector<8x8xf32>, vector<8x8xf32>, vector<8x8xf32> -> vector<8x8xf32>
    %c728 = arith.constant 728 : index
    %c0_51 = arith.constant 0 : index
    %147 = vector.load %arg2[%c728, %c0_51] : memref<2208x40xf32, #tpu.memory_space<vmem>>, vector<1x8xf32>
    %148 = vector.broadcast %147 : vector<1x8xf32> to vector<8x8xf32>
    %149 = arith.addf %146, %148 : vector<8x8xf32>
    %150 = arith.addf %87, %112 : vector<20x8x8xf32>
    %151 = vector.shape_cast %149 : vector<8x8xf32> to vector<1x8x8xf32>
    %152 = vector.broadcast %151 : vector<1x8x8xf32> to vector<20x8x8xf32>
    %153 = arith.addf %150, %152 : vector<20x8x8xf32>
    %cst_52 = arith.constant 0.000000e+00 : f32
    %154 = vector.broadcast %cst_52 : f32 to vector<20x8x8xf32>
    %155 = arith.maximumf %153, %154 : vector<20x8x8xf32>
    %156 = vector.shape_cast %155 : vector<20x8x8xf32> to vector<160x8xf32>
    %c32 = arith.constant 32 : index
    %c0_53 = arith.constant 0 : index
    %157 = vector.load %arg3[%c32, %c0_53] : memref<352x40xf32, #tpu.memory_space<vmem>>, vector<8x12xf32>
    %cst_54 = arith.constant dense<0.000000e+00> : vector<160x12xf32>
    %158 = tpu.matmul %156, %157, %cst_54 {dimension_numbers = #tpu.dot_dimension_numbers<[1], [0], [0], [1], [0, 0, 1, 1], [], []>} : vector<160x8xf32>, vector<8x12xf32>, vector<160x12xf32> -> vector<160x12xf32>
    %c736 = arith.constant 736 : index
    %c0_55 = arith.constant 0 : index
    %159 = vector.load %arg2[%c736, %c0_55] : memref<2208x40xf32, #tpu.memory_space<vmem>>, vector<1x12xf32>
    %160 = vector.broadcast %159 : vector<1x12xf32> to vector<160x12xf32>
    %161 = arith.mulf %158, %160 : vector<160x12xf32>
    %c744 = arith.constant 744 : index
    %c0_56 = arith.constant 0 : index
    %162 = vector.load %arg2[%c744, %c0_56] : memref<2208x40xf32, #tpu.memory_space<vmem>>, vector<1x12xf32>
    %163 = vector.broadcast %162 : vector<1x12xf32> to vector<160x12xf32>
    %164 = arith.addf %161, %163 : vector<160x12xf32>
    %cst_57 = arith.constant 0.000000e+00 : f32
    %165 = vector.broadcast %cst_57 : f32 to vector<160x12xf32>
    %166 = arith.maximumf %164, %165 : vector<160x12xf32>
    %167 = vector.shape_cast %166 : vector<160x12xf32> to vector<20x8x12xf32>
    %cst_58 = arith.constant 0.000000e+00 : f32
    %168 = vector.broadcast %cst_58 : f32 to vector<1x8x12xf32>
    %169 = tpu.concatenate %168, %167, %168 in 0 : vector<1x8x12xf32>, vector<20x8x12xf32>, vector<1x8x12xf32> -> vector<22x8x12xf32>
    %c752 = arith.constant 752 : index
    %c0_59 = arith.constant 0 : index
    %170 = vector.load %arg2[%c752, %c0_59] : memref<2208x40xf32, #tpu.memory_space<vmem>>, vector<1x12xf32>
    %c753 = arith.constant 753 : index
    %c0_60 = arith.constant 0 : index
    %171 = vector.load %arg2[%c753, %c0_60] : memref<2208x40xf32, #tpu.memory_space<vmem>>, vector<1x12xf32>
    %c754 = arith.constant 754 : index
    %c0_61 = arith.constant 0 : index
    %172 = vector.load %arg2[%c754, %c0_61] : memref<2208x40xf32, #tpu.memory_space<vmem>>, vector<1x12xf32>
    %173 = vector.extract_strided_slice %169 {offsets = [0, 0, 0], sizes = [20, 8, 12], strides = [1, 1, 1]} : vector<22x8x12xf32> to vector<20x8x12xf32>
    %174 = vector.shape_cast %173 : vector<20x8x12xf32> to vector<10x2x8x12xf32>
    %175 = vector.extract_strided_slice %169 {offsets = [2, 0, 0], sizes = [20, 8, 12], strides = [1, 1, 1]} : vector<22x8x12xf32> to vector<20x8x12xf32>
    %176 = vector.shape_cast %175 : vector<20x8x12xf32> to vector<10x2x8x12xf32>
    %177 = vector.extract_strided_slice %174 {offsets = [0, 0, 0, 0], sizes = [10, 1, 8, 12], strides = [1, 1, 1, 1]} : vector<10x2x8x12xf32> to vector<10x1x8x12xf32>
    %178 = vector.shape_cast %177 : vector<10x1x8x12xf32> to vector<10x8x12xf32>
    %179 = vector.extract_strided_slice %174 {offsets = [0, 1, 0, 0], sizes = [10, 1, 8, 12], strides = [1, 1, 1, 1]} : vector<10x2x8x12xf32> to vector<10x1x8x12xf32>
    %180 = vector.shape_cast %179 : vector<10x1x8x12xf32> to vector<10x8x12xf32>
    %181 = vector.extract_strided_slice %176 {offsets = [0, 0, 0, 0], sizes = [10, 1, 8, 12], strides = [1, 1, 1, 1]} : vector<10x2x8x12xf32> to vector<10x1x8x12xf32>
    %182 = vector.shape_cast %181 : vector<10x1x8x12xf32> to vector<10x8x12xf32>
    %183 = vector.shape_cast %170 : vector<1x12xf32> to vector<1x1x12xf32>
    %184 = vector.broadcast %183 : vector<1x1x12xf32> to vector<10x8x12xf32>
    %185 = arith.mulf %178, %184 : vector<10x8x12xf32>
    %186 = vector.shape_cast %171 : vector<1x12xf32> to vector<1x1x12xf32>
    %187 = vector.broadcast %186 : vector<1x1x12xf32> to vector<10x8x12xf32>
    %188 = arith.mulf %180, %187 : vector<10x8x12xf32>
    %189 = arith.addf %185, %188 : vector<10x8x12xf32>
    %190 = vector.shape_cast %172 : vector<1x12xf32> to vector<1x1x12xf32>
    %191 = vector.broadcast %190 : vector<1x1x12xf32> to vector<10x8x12xf32>
    %192 = arith.mulf %182, %191 : vector<10x8x12xf32>
    %193 = arith.addf %189, %192 : vector<10x8x12xf32>
    %194 = vector.shape_cast %193 : vector<10x8x12xf32> to vector<80x12xf32>
    %c760 = arith.constant 760 : index
    %c0_62 = arith.constant 0 : index
    %195 = vector.load %arg2[%c760, %c0_62] : memref<2208x40xf32, #tpu.memory_space<vmem>>, vector<80x12xf32>
    %196 = arith.mulf %194, %195 : vector<80x12xf32>
    %c840 = arith.constant 840 : index
    %c0_63 = arith.constant 0 : index
    %197 = vector.load %arg2[%c840, %c0_63] : memref<2208x40xf32, #tpu.memory_space<vmem>>, vector<80x12xf32>
    %198 = arith.addf %196, %197 : vector<80x12xf32>
    %199 = vector.shape_cast %198 : vector<80x12xf32> to vector<10x8x12xf32>
    %cst_64 = arith.constant dense<0.000000e+00> : vector<8x12xf32>
    %200 = vector.multi_reduction <add>, %199, %cst_64 [0] : vector<10x8x12xf32> to vector<8x12xf32>
    %cst_65 = arith.constant 1.000000e+01 : f32
    %201 = vector.broadcast %cst_65 : f32 to vector<8x12xf32>
    %202 = arith.divf %200, %201 : vector<8x12xf32>
    %cst_66 = arith.constant 0.000000e+00 : f32
    %203 = vector.broadcast %cst_66 : f32 to vector<2x12xf32>
    %204 = tpu.concatenate %203, %202, %203 in 0 : vector<2x12xf32>, vector<8x12xf32>, vector<2x12xf32> -> vector<12x12xf32>
    %205 = vector.extract_strided_slice %204 {offsets = [0, 0], sizes = [8, 12], strides = [1, 1]} : vector<12x12xf32> to vector<8x12xf32>
    %c920 = arith.constant 920 : index
    %c0_67 = arith.constant 0 : index
    %206 = vector.load %arg2[%c920, %c0_67] : memref<2208x40xf32, #tpu.memory_space<vmem>>, vector<1x12xf32>
    %207 = vector.broadcast %206 : vector<1x12xf32> to vector<8x12xf32>
    %208 = arith.mulf %205, %207 : vector<8x12xf32>
    %209 = vector.extract_strided_slice %204 {offsets = [2, 0], sizes = [8, 12], strides = [1, 1]} : vector<12x12xf32> to vector<8x12xf32>
    %c921 = arith.constant 921 : index
    %c0_68 = arith.constant 0 : index
    %210 = vector.load %arg2[%c921, %c0_68] : memref<2208x40xf32, #tpu.memory_space<vmem>>, vector<1x12xf32>
    %211 = vector.broadcast %210 : vector<1x12xf32> to vector<8x12xf32>
    %212 = arith.mulf %209, %211 : vector<8x12xf32>
    %213 = arith.addf %208, %212 : vector<8x12xf32>
    %214 = vector.extract_strided_slice %204 {offsets = [4, 0], sizes = [8, 12], strides = [1, 1]} : vector<12x12xf32> to vector<8x12xf32>
    %c922 = arith.constant 922 : index
    %c0_69 = arith.constant 0 : index
    %215 = vector.load %arg2[%c922, %c0_69] : memref<2208x40xf32, #tpu.memory_space<vmem>>, vector<1x12xf32>
    %216 = vector.broadcast %215 : vector<1x12xf32> to vector<8x12xf32>
    %217 = arith.mulf %214, %216 : vector<8x12xf32>
    %218 = arith.addf %213, %217 : vector<8x12xf32>
    %c928 = arith.constant 928 : index
    %c0_70 = arith.constant 0 : index
    %219 = vector.load %arg2[%c928, %c0_70] : memref<2208x40xf32, #tpu.memory_space<vmem>>, vector<1x12xf32>
    %220 = vector.broadcast %219 : vector<1x12xf32> to vector<8x12xf32>
    %221 = arith.mulf %218, %220 : vector<8x12xf32>
    %c936 = arith.constant 936 : index
    %c0_71 = arith.constant 0 : index
    %222 = vector.load %arg2[%c936, %c0_71] : memref<2208x40xf32, #tpu.memory_space<vmem>>, vector<1x12xf32>
    %223 = vector.broadcast %222 : vector<1x12xf32> to vector<8x12xf32>
    %224 = arith.addf %221, %223 : vector<8x12xf32>
    %cst_72 = arith.constant 0.000000e+00 : f32
    %225 = vector.broadcast %cst_72 : f32 to vector<8x12xf32>
    %226 = arith.subf %225, %224 : vector<8x12xf32>
    %227 = math.exp %226 : vector<8x12xf32>
    %cst_73 = arith.constant 1.000000e+00 : f32
    %228 = vector.broadcast %cst_73 : f32 to vector<8x12xf32>
    %229 = arith.addf %228, %227 : vector<8x12xf32>
    %230 = tpu.reciprocal %229 {approx = true} : vector<8x12xf32> -> vector<8x12xf32>
    %231 = arith.mulf %224, %230 : vector<8x12xf32>
    %c40 = arith.constant 40 : index
    %c0_74 = arith.constant 0 : index
    %232 = vector.load %arg3[%c40, %c0_74] : memref<352x40xf32, #tpu.memory_space<vmem>>, vector<12x12xf32>
    %cst_75 = arith.constant dense<0.000000e+00> : vector<8x12xf32>
    %233 = tpu.matmul %231, %232, %cst_75 {dimension_numbers = #tpu.dot_dimension_numbers<[1], [0], [0], [1], [0, 0, 1, 1], [], []>} : vector<8x12xf32>, vector<12x12xf32>, vector<8x12xf32> -> vector<8x12xf32>
    %c944 = arith.constant 944 : index
    %c0_76 = arith.constant 0 : index
    %234 = vector.load %arg2[%c944, %c0_76] : memref<2208x40xf32, #tpu.memory_space<vmem>>, vector<1x12xf32>
    %235 = vector.broadcast %234 : vector<1x12xf32> to vector<8x12xf32>
    %236 = arith.addf %233, %235 : vector<8x12xf32>
    %237 = vector.shape_cast %198 : vector<80x12xf32> to vector<10x8x12xf32>
    %238 = vector.shape_cast %236 : vector<8x12xf32> to vector<1x8x12xf32>
    %239 = vector.broadcast %238 : vector<1x8x12xf32> to vector<10x8x12xf32>
    %240 = arith.addf %237, %239 : vector<10x8x12xf32>
    %cst_77 = arith.constant 0.000000e+00 : f32
    %241 = vector.broadcast %cst_77 : f32 to vector<10x8x12xf32>
    %242 = arith.maximumf %240, %241 : vector<10x8x12xf32>
    %243 = vector.shape_cast %242 : vector<10x8x12xf32> to vector<80x12xf32>
    %244 = vector.shape_cast %243 : vector<80x12xf32> to vector<10x8x12xf32>
    %cst_78 = arith.constant 0.000000e+00 : f32
    %245 = vector.broadcast %cst_78 : f32 to vector<1x8x12xf32>
    %246 = tpu.concatenate %245, %244, %245 in 0 : vector<1x8x12xf32>, vector<10x8x12xf32>, vector<1x8x12xf32> -> vector<12x8x12xf32>
    %c952 = arith.constant 952 : index
    %c0_79 = arith.constant 0 : index
    %247 = vector.load %arg2[%c952, %c0_79] : memref<2208x40xf32, #tpu.memory_space<vmem>>, vector<1x12xf32>
    %c953 = arith.constant 953 : index
    %c0_80 = arith.constant 0 : index
    %248 = vector.load %arg2[%c953, %c0_80] : memref<2208x40xf32, #tpu.memory_space<vmem>>, vector<1x12xf32>
    %c954 = arith.constant 954 : index
    %c0_81 = arith.constant 0 : index
    %249 = vector.load %arg2[%c954, %c0_81] : memref<2208x40xf32, #tpu.memory_space<vmem>>, vector<1x12xf32>
    %250 = vector.extract_strided_slice %246 {offsets = [0, 0, 0], sizes = [10, 8, 12], strides = [1, 1, 1]} : vector<12x8x12xf32> to vector<10x8x12xf32>
    %251 = vector.extract_strided_slice %246 {offsets = [1, 0, 0], sizes = [10, 8, 12], strides = [1, 1, 1]} : vector<12x8x12xf32> to vector<10x8x12xf32>
    %252 = vector.extract_strided_slice %246 {offsets = [2, 0, 0], sizes = [10, 8, 12], strides = [1, 1, 1]} : vector<12x8x12xf32> to vector<10x8x12xf32>
    %253 = vector.shape_cast %247 : vector<1x12xf32> to vector<1x1x12xf32>
    %254 = vector.broadcast %253 : vector<1x1x12xf32> to vector<10x8x12xf32>
    %255 = arith.mulf %250, %254 : vector<10x8x12xf32>
    %256 = vector.shape_cast %248 : vector<1x12xf32> to vector<1x1x12xf32>
    %257 = vector.broadcast %256 : vector<1x1x12xf32> to vector<10x8x12xf32>
    %258 = arith.mulf %251, %257 : vector<10x8x12xf32>
    %259 = arith.addf %255, %258 : vector<10x8x12xf32>
    %260 = vector.shape_cast %249 : vector<1x12xf32> to vector<1x1x12xf32>
    %261 = vector.broadcast %260 : vector<1x1x12xf32> to vector<10x8x12xf32>
    %262 = arith.mulf %252, %261 : vector<10x8x12xf32>
    %263 = arith.addf %259, %262 : vector<10x8x12xf32>
    %264 = vector.shape_cast %263 : vector<10x8x12xf32> to vector<80x12xf32>
    %c960 = arith.constant 960 : index
    %c0_82 = arith.constant 0 : index
    %265 = vector.load %arg2[%c960, %c0_82] : memref<2208x40xf32, #tpu.memory_space<vmem>>, vector<80x12xf32>
    %266 = arith.mulf %264, %265 : vector<80x12xf32>
    %c1040 = arith.constant 1040 : index
    %c0_83 = arith.constant 0 : index
    %267 = vector.load %arg2[%c1040, %c0_83] : memref<2208x40xf32, #tpu.memory_space<vmem>>, vector<80x12xf32>
    %268 = arith.addf %266, %267 : vector<80x12xf32>
    %269 = vector.shape_cast %268 : vector<80x12xf32> to vector<10x8x12xf32>
    %cst_84 = arith.constant dense<0.000000e+00> : vector<8x12xf32>
    %270 = vector.multi_reduction <add>, %269, %cst_84 [0] : vector<10x8x12xf32> to vector<8x12xf32>
    %cst_85 = arith.constant 1.000000e+01 : f32
    %271 = vector.broadcast %cst_85 : f32 to vector<8x12xf32>
    %272 = arith.divf %270, %271 : vector<8x12xf32>
    %cst_86 = arith.constant 0.000000e+00 : f32
    %273 = vector.broadcast %cst_86 : f32 to vector<2x12xf32>
    %274 = tpu.concatenate %273, %272, %273 in 0 : vector<2x12xf32>, vector<8x12xf32>, vector<2x12xf32> -> vector<12x12xf32>
    %275 = vector.extract_strided_slice %274 {offsets = [0, 0], sizes = [8, 12], strides = [1, 1]} : vector<12x12xf32> to vector<8x12xf32>
    %c1120 = arith.constant 1120 : index
    %c0_87 = arith.constant 0 : index
    %276 = vector.load %arg2[%c1120, %c0_87] : memref<2208x40xf32, #tpu.memory_space<vmem>>, vector<1x12xf32>
    %277 = vector.broadcast %276 : vector<1x12xf32> to vector<8x12xf32>
    %278 = arith.mulf %275, %277 : vector<8x12xf32>
    %279 = vector.extract_strided_slice %274 {offsets = [2, 0], sizes = [8, 12], strides = [1, 1]} : vector<12x12xf32> to vector<8x12xf32>
    %c1121 = arith.constant 1121 : index
    %c0_88 = arith.constant 0 : index
    %280 = vector.load %arg2[%c1121, %c0_88] : memref<2208x40xf32, #tpu.memory_space<vmem>>, vector<1x12xf32>
    %281 = vector.broadcast %280 : vector<1x12xf32> to vector<8x12xf32>
    %282 = arith.mulf %279, %281 : vector<8x12xf32>
    %283 = arith.addf %278, %282 : vector<8x12xf32>
    %284 = vector.extract_strided_slice %274 {offsets = [4, 0], sizes = [8, 12], strides = [1, 1]} : vector<12x12xf32> to vector<8x12xf32>
    %c1122 = arith.constant 1122 : index
    %c0_89 = arith.constant 0 : index
    %285 = vector.load %arg2[%c1122, %c0_89] : memref<2208x40xf32, #tpu.memory_space<vmem>>, vector<1x12xf32>
    %286 = vector.broadcast %285 : vector<1x12xf32> to vector<8x12xf32>
    %287 = arith.mulf %284, %286 : vector<8x12xf32>
    %288 = arith.addf %283, %287 : vector<8x12xf32>
    %c1128 = arith.constant 1128 : index
    %c0_90 = arith.constant 0 : index
    %289 = vector.load %arg2[%c1128, %c0_90] : memref<2208x40xf32, #tpu.memory_space<vmem>>, vector<1x12xf32>
    %290 = vector.broadcast %289 : vector<1x12xf32> to vector<8x12xf32>
    %291 = arith.mulf %288, %290 : vector<8x12xf32>
    %c1136 = arith.constant 1136 : index
    %c0_91 = arith.constant 0 : index
    %292 = vector.load %arg2[%c1136, %c0_91] : memref<2208x40xf32, #tpu.memory_space<vmem>>, vector<1x12xf32>
    %293 = vector.broadcast %292 : vector<1x12xf32> to vector<8x12xf32>
    %294 = arith.addf %291, %293 : vector<8x12xf32>
    %cst_92 = arith.constant 0.000000e+00 : f32
    %295 = vector.broadcast %cst_92 : f32 to vector<8x12xf32>
    %296 = arith.subf %295, %294 : vector<8x12xf32>
    %297 = math.exp %296 : vector<8x12xf32>
    %cst_93 = arith.constant 1.000000e+00 : f32
    %298 = vector.broadcast %cst_93 : f32 to vector<8x12xf32>
    %299 = arith.addf %298, %297 : vector<8x12xf32>
    %300 = tpu.reciprocal %299 {approx = true} : vector<8x12xf32> -> vector<8x12xf32>
    %301 = arith.mulf %294, %300 : vector<8x12xf32>
    %c56 = arith.constant 56 : index
    %c0_94 = arith.constant 0 : index
    %302 = vector.load %arg3[%c56, %c0_94] : memref<352x40xf32, #tpu.memory_space<vmem>>, vector<12x12xf32>
    %cst_95 = arith.constant dense<0.000000e+00> : vector<8x12xf32>
    %303 = tpu.matmul %301, %302, %cst_95 {dimension_numbers = #tpu.dot_dimension_numbers<[1], [0], [0], [1], [0, 0, 1, 1], [], []>} : vector<8x12xf32>, vector<12x12xf32>, vector<8x12xf32> -> vector<8x12xf32>
    %c1144 = arith.constant 1144 : index
    %c0_96 = arith.constant 0 : index
    %304 = vector.load %arg2[%c1144, %c0_96] : memref<2208x40xf32, #tpu.memory_space<vmem>>, vector<1x12xf32>
    %305 = vector.broadcast %304 : vector<1x12xf32> to vector<8x12xf32>
    %306 = arith.addf %303, %305 : vector<8x12xf32>
    %307 = arith.addf %244, %269 : vector<10x8x12xf32>
    %308 = vector.shape_cast %306 : vector<8x12xf32> to vector<1x8x12xf32>
    %309 = vector.broadcast %308 : vector<1x8x12xf32> to vector<10x8x12xf32>
    %310 = arith.addf %307, %309 : vector<10x8x12xf32>
    %cst_97 = arith.constant 0.000000e+00 : f32
    %311 = vector.broadcast %cst_97 : f32 to vector<10x8x12xf32>
    %312 = arith.maximumf %310, %311 : vector<10x8x12xf32>
    %313 = vector.shape_cast %312 : vector<10x8x12xf32> to vector<80x12xf32>
    %c72 = arith.constant 72 : index
    %c0_98 = arith.constant 0 : index
    %314 = vector.load %arg3[%c72, %c0_98] : memref<352x40xf32, #tpu.memory_space<vmem>>, vector<12x16xf32>
    %cst_99 = arith.constant dense<0.000000e+00> : vector<80x16xf32>
    %315 = tpu.matmul %313, %314, %cst_99 {dimension_numbers = #tpu.dot_dimension_numbers<[1], [0], [0], [1], [0, 0, 1, 1], [], []>} : vector<80x12xf32>, vector<12x16xf32>, vector<80x16xf32> -> vector<80x16xf32>
    %c1152 = arith.constant 1152 : index
    %c0_100 = arith.constant 0 : index
    %316 = vector.load %arg2[%c1152, %c0_100] : memref<2208x40xf32, #tpu.memory_space<vmem>>, vector<1x16xf32>
    %317 = vector.broadcast %316 : vector<1x16xf32> to vector<80x16xf32>
    %318 = arith.mulf %315, %317 : vector<80x16xf32>
    %c1160 = arith.constant 1160 : index
    %c0_101 = arith.constant 0 : index
    %319 = vector.load %arg2[%c1160, %c0_101] : memref<2208x40xf32, #tpu.memory_space<vmem>>, vector<1x16xf32>
    %320 = vector.broadcast %319 : vector<1x16xf32> to vector<80x16xf32>
    %321 = arith.addf %318, %320 : vector<80x16xf32>
    %cst_102 = arith.constant 0.000000e+00 : f32
    %322 = vector.broadcast %cst_102 : f32 to vector<80x16xf32>
    %323 = arith.maximumf %321, %322 : vector<80x16xf32>
    %324 = vector.shape_cast %323 : vector<80x16xf32> to vector<10x8x16xf32>
    %cst_103 = arith.constant 0.000000e+00 : f32
    %325 = vector.broadcast %cst_103 : f32 to vector<1x8x16xf32>
    %326 = tpu.concatenate %325, %324, %325 in 0 : vector<1x8x16xf32>, vector<10x8x16xf32>, vector<1x8x16xf32> -> vector<12x8x16xf32>
    %c1168 = arith.constant 1168 : index
    %c0_104 = arith.constant 0 : index
    %327 = vector.load %arg2[%c1168, %c0_104] : memref<2208x40xf32, #tpu.memory_space<vmem>>, vector<1x16xf32>
    %c1169 = arith.constant 1169 : index
    %c0_105 = arith.constant 0 : index
    %328 = vector.load %arg2[%c1169, %c0_105] : memref<2208x40xf32, #tpu.memory_space<vmem>>, vector<1x16xf32>
    %c1170 = arith.constant 1170 : index
    %c0_106 = arith.constant 0 : index
    %329 = vector.load %arg2[%c1170, %c0_106] : memref<2208x40xf32, #tpu.memory_space<vmem>>, vector<1x16xf32>
    %330 = vector.extract_strided_slice %326 {offsets = [0, 0, 0], sizes = [10, 8, 16], strides = [1, 1, 1]} : vector<12x8x16xf32> to vector<10x8x16xf32>
    %331 = vector.shape_cast %330 : vector<10x8x16xf32> to vector<5x2x8x16xf32>
    %332 = vector.extract_strided_slice %326 {offsets = [2, 0, 0], sizes = [10, 8, 16], strides = [1, 1, 1]} : vector<12x8x16xf32> to vector<10x8x16xf32>
    %333 = vector.shape_cast %332 : vector<10x8x16xf32> to vector<5x2x8x16xf32>
    %334 = vector.extract_strided_slice %331 {offsets = [0, 0, 0, 0], sizes = [5, 1, 8, 16], strides = [1, 1, 1, 1]} : vector<5x2x8x16xf32> to vector<5x1x8x16xf32>
    %335 = vector.shape_cast %334 : vector<5x1x8x16xf32> to vector<5x8x16xf32>
    %336 = vector.extract_strided_slice %331 {offsets = [0, 1, 0, 0], sizes = [5, 1, 8, 16], strides = [1, 1, 1, 1]} : vector<5x2x8x16xf32> to vector<5x1x8x16xf32>
    %337 = vector.shape_cast %336 : vector<5x1x8x16xf32> to vector<5x8x16xf32>
    %338 = vector.extract_strided_slice %333 {offsets = [0, 0, 0, 0], sizes = [5, 1, 8, 16], strides = [1, 1, 1, 1]} : vector<5x2x8x16xf32> to vector<5x1x8x16xf32>
    %339 = vector.shape_cast %338 : vector<5x1x8x16xf32> to vector<5x8x16xf32>
    %340 = vector.shape_cast %327 : vector<1x16xf32> to vector<1x1x16xf32>
    %341 = vector.broadcast %340 : vector<1x1x16xf32> to vector<5x8x16xf32>
    %342 = arith.mulf %335, %341 : vector<5x8x16xf32>
    %343 = vector.shape_cast %328 : vector<1x16xf32> to vector<1x1x16xf32>
    %344 = vector.broadcast %343 : vector<1x1x16xf32> to vector<5x8x16xf32>
    %345 = arith.mulf %337, %344 : vector<5x8x16xf32>
    %346 = arith.addf %342, %345 : vector<5x8x16xf32>
    %347 = vector.shape_cast %329 : vector<1x16xf32> to vector<1x1x16xf32>
    %348 = vector.broadcast %347 : vector<1x1x16xf32> to vector<5x8x16xf32>
    %349 = arith.mulf %339, %348 : vector<5x8x16xf32>
    %350 = arith.addf %346, %349 : vector<5x8x16xf32>
    %351 = vector.shape_cast %350 : vector<5x8x16xf32> to vector<40x16xf32>
    %c1176 = arith.constant 1176 : index
    %c0_107 = arith.constant 0 : index
    %352 = vector.load %arg2[%c1176, %c0_107] : memref<2208x40xf32, #tpu.memory_space<vmem>>, vector<40x16xf32>
    %353 = arith.mulf %351, %352 : vector<40x16xf32>
    %c1216 = arith.constant 1216 : index
    %c0_108 = arith.constant 0 : index
    %354 = vector.load %arg2[%c1216, %c0_108] : memref<2208x40xf32, #tpu.memory_space<vmem>>, vector<40x16xf32>
    %355 = arith.addf %353, %354 : vector<40x16xf32>
    %356 = vector.shape_cast %355 : vector<40x16xf32> to vector<5x8x16xf32>
    %cst_109 = arith.constant dense<0.000000e+00> : vector<8x16xf32>
    %357 = vector.multi_reduction <add>, %356, %cst_109 [0] : vector<5x8x16xf32> to vector<8x16xf32>
    %cst_110 = arith.constant 5.000000e+00 : f32
    %358 = vector.broadcast %cst_110 : f32 to vector<8x16xf32>
    %359 = arith.divf %357, %358 : vector<8x16xf32>
    %cst_111 = arith.constant 0.000000e+00 : f32
    %360 = vector.broadcast %cst_111 : f32 to vector<4x16xf32>
    %361 = tpu.concatenate %360, %359, %360 in 0 : vector<4x16xf32>, vector<8x16xf32>, vector<4x16xf32> -> vector<16x16xf32>
    %362 = vector.extract_strided_slice %361 {offsets = [0, 0], sizes = [8, 16], strides = [1, 1]} : vector<16x16xf32> to vector<8x16xf32>
    %c1256 = arith.constant 1256 : index
    %c0_112 = arith.constant 0 : index
    %363 = vector.load %arg2[%c1256, %c0_112] : memref<2208x40xf32, #tpu.memory_space<vmem>>, vector<1x16xf32>
    %364 = vector.broadcast %363 : vector<1x16xf32> to vector<8x16xf32>
    %365 = arith.mulf %362, %364 : vector<8x16xf32>
    %366 = vector.extract_strided_slice %361 {offsets = [4, 0], sizes = [8, 16], strides = [1, 1]} : vector<16x16xf32> to vector<8x16xf32>
    %c1257 = arith.constant 1257 : index
    %c0_113 = arith.constant 0 : index
    %367 = vector.load %arg2[%c1257, %c0_113] : memref<2208x40xf32, #tpu.memory_space<vmem>>, vector<1x16xf32>
    %368 = vector.broadcast %367 : vector<1x16xf32> to vector<8x16xf32>
    %369 = arith.mulf %366, %368 : vector<8x16xf32>
    %370 = arith.addf %365, %369 : vector<8x16xf32>
    %371 = vector.extract_strided_slice %361 {offsets = [8, 0], sizes = [8, 16], strides = [1, 1]} : vector<16x16xf32> to vector<8x16xf32>
    %c1258 = arith.constant 1258 : index
    %c0_114 = arith.constant 0 : index
    %372 = vector.load %arg2[%c1258, %c0_114] : memref<2208x40xf32, #tpu.memory_space<vmem>>, vector<1x16xf32>
    %373 = vector.broadcast %372 : vector<1x16xf32> to vector<8x16xf32>
    %374 = arith.mulf %371, %373 : vector<8x16xf32>
    %375 = arith.addf %370, %374 : vector<8x16xf32>
    %c1264 = arith.constant 1264 : index
    %c0_115 = arith.constant 0 : index
    %376 = vector.load %arg2[%c1264, %c0_115] : memref<2208x40xf32, #tpu.memory_space<vmem>>, vector<1x16xf32>
    %377 = vector.broadcast %376 : vector<1x16xf32> to vector<8x16xf32>
    %378 = arith.mulf %375, %377 : vector<8x16xf32>
    %c1272 = arith.constant 1272 : index
    %c0_116 = arith.constant 0 : index
    %379 = vector.load %arg2[%c1272, %c0_116] : memref<2208x40xf32, #tpu.memory_space<vmem>>, vector<1x16xf32>
    %380 = vector.broadcast %379 : vector<1x16xf32> to vector<8x16xf32>
    %381 = arith.addf %378, %380 : vector<8x16xf32>
    %cst_117 = arith.constant 0.000000e+00 : f32
    %382 = vector.broadcast %cst_117 : f32 to vector<8x16xf32>
    %383 = arith.subf %382, %381 : vector<8x16xf32>
    %384 = math.exp %383 : vector<8x16xf32>
    %cst_118 = arith.constant 1.000000e+00 : f32
    %385 = vector.broadcast %cst_118 : f32 to vector<8x16xf32>
    %386 = arith.addf %385, %384 : vector<8x16xf32>
    %387 = tpu.reciprocal %386 {approx = true} : vector<8x16xf32> -> vector<8x16xf32>
    %388 = arith.mulf %381, %387 : vector<8x16xf32>
    %c88 = arith.constant 88 : index
    %c0_119 = arith.constant 0 : index
    %389 = vector.load %arg3[%c88, %c0_119] : memref<352x40xf32, #tpu.memory_space<vmem>>, vector<16x16xf32>
    %cst_120 = arith.constant dense<0.000000e+00> : vector<8x16xf32>
    %390 = tpu.matmul %388, %389, %cst_120 {dimension_numbers = #tpu.dot_dimension_numbers<[1], [0], [0], [1], [0, 0, 1, 1], [], []>} : vector<8x16xf32>, vector<16x16xf32>, vector<8x16xf32> -> vector<8x16xf32>
    %c1280 = arith.constant 1280 : index
    %c0_121 = arith.constant 0 : index
    %391 = vector.load %arg2[%c1280, %c0_121] : memref<2208x40xf32, #tpu.memory_space<vmem>>, vector<1x16xf32>
    %392 = vector.broadcast %391 : vector<1x16xf32> to vector<8x16xf32>
    %393 = arith.addf %390, %392 : vector<8x16xf32>
    %394 = vector.shape_cast %355 : vector<40x16xf32> to vector<5x8x16xf32>
    %395 = vector.shape_cast %393 : vector<8x16xf32> to vector<1x8x16xf32>
    %396 = vector.broadcast %395 : vector<1x8x16xf32> to vector<5x8x16xf32>
    %397 = arith.addf %394, %396 : vector<5x8x16xf32>
    %cst_122 = arith.constant 0.000000e+00 : f32
    %398 = vector.broadcast %cst_122 : f32 to vector<5x8x16xf32>
    %399 = arith.maximumf %397, %398 : vector<5x8x16xf32>
    %400 = vector.shape_cast %399 : vector<5x8x16xf32> to vector<40x16xf32>
    %401 = vector.shape_cast %400 : vector<40x16xf32> to vector<5x8x16xf32>
    %cst_123 = arith.constant 0.000000e+00 : f32
    %402 = vector.broadcast %cst_123 : f32 to vector<1x8x16xf32>
    %403 = tpu.concatenate %402, %401, %402 in 0 : vector<1x8x16xf32>, vector<5x8x16xf32>, vector<1x8x16xf32> -> vector<7x8x16xf32>
    %c1288 = arith.constant 1288 : index
    %c0_124 = arith.constant 0 : index
    %404 = vector.load %arg2[%c1288, %c0_124] : memref<2208x40xf32, #tpu.memory_space<vmem>>, vector<1x16xf32>
    %c1289 = arith.constant 1289 : index
    %c0_125 = arith.constant 0 : index
    %405 = vector.load %arg2[%c1289, %c0_125] : memref<2208x40xf32, #tpu.memory_space<vmem>>, vector<1x16xf32>
    %c1290 = arith.constant 1290 : index
    %c0_126 = arith.constant 0 : index
    %406 = vector.load %arg2[%c1290, %c0_126] : memref<2208x40xf32, #tpu.memory_space<vmem>>, vector<1x16xf32>
    %407 = vector.extract_strided_slice %403 {offsets = [0, 0, 0], sizes = [5, 8, 16], strides = [1, 1, 1]} : vector<7x8x16xf32> to vector<5x8x16xf32>
    %408 = vector.extract_strided_slice %403 {offsets = [1, 0, 0], sizes = [5, 8, 16], strides = [1, 1, 1]} : vector<7x8x16xf32> to vector<5x8x16xf32>
    %409 = vector.extract_strided_slice %403 {offsets = [2, 0, 0], sizes = [5, 8, 16], strides = [1, 1, 1]} : vector<7x8x16xf32> to vector<5x8x16xf32>
    %410 = vector.shape_cast %404 : vector<1x16xf32> to vector<1x1x16xf32>
    %411 = vector.broadcast %410 : vector<1x1x16xf32> to vector<5x8x16xf32>
    %412 = arith.mulf %407, %411 : vector<5x8x16xf32>
    %413 = vector.shape_cast %405 : vector<1x16xf32> to vector<1x1x16xf32>
    %414 = vector.broadcast %413 : vector<1x1x16xf32> to vector<5x8x16xf32>
    %415 = arith.mulf %408, %414 : vector<5x8x16xf32>
    %416 = arith.addf %412, %415 : vector<5x8x16xf32>
    %417 = vector.shape_cast %406 : vector<1x16xf32> to vector<1x1x16xf32>
    %418 = vector.broadcast %417 : vector<1x1x16xf32> to vector<5x8x16xf32>
    %419 = arith.mulf %409, %418 : vector<5x8x16xf32>
    %420 = arith.addf %416, %419 : vector<5x8x16xf32>
    %421 = vector.shape_cast %420 : vector<5x8x16xf32> to vector<40x16xf32>
    %c1296 = arith.constant 1296 : index
    %c0_127 = arith.constant 0 : index
    %422 = vector.load %arg2[%c1296, %c0_127] : memref<2208x40xf32, #tpu.memory_space<vmem>>, vector<40x16xf32>
    %423 = arith.mulf %421, %422 : vector<40x16xf32>
    %c1336 = arith.constant 1336 : index
    %c0_128 = arith.constant 0 : index
    %424 = vector.load %arg2[%c1336, %c0_128] : memref<2208x40xf32, #tpu.memory_space<vmem>>, vector<40x16xf32>
    %425 = arith.addf %423, %424 : vector<40x16xf32>
    %426 = vector.shape_cast %425 : vector<40x16xf32> to vector<5x8x16xf32>
    %cst_129 = arith.constant dense<0.000000e+00> : vector<8x16xf32>
    %427 = vector.multi_reduction <add>, %426, %cst_129 [0] : vector<5x8x16xf32> to vector<8x16xf32>
    %cst_130 = arith.constant 5.000000e+00 : f32
    %428 = vector.broadcast %cst_130 : f32 to vector<8x16xf32>
    %429 = arith.divf %427, %428 : vector<8x16xf32>
    %cst_131 = arith.constant 0.000000e+00 : f32
    %430 = vector.broadcast %cst_131 : f32 to vector<4x16xf32>
    %431 = tpu.concatenate %430, %429, %430 in 0 : vector<4x16xf32>, vector<8x16xf32>, vector<4x16xf32> -> vector<16x16xf32>
    %432 = vector.extract_strided_slice %431 {offsets = [0, 0], sizes = [8, 16], strides = [1, 1]} : vector<16x16xf32> to vector<8x16xf32>
    %c1376 = arith.constant 1376 : index
    %c0_132 = arith.constant 0 : index
    %433 = vector.load %arg2[%c1376, %c0_132] : memref<2208x40xf32, #tpu.memory_space<vmem>>, vector<1x16xf32>
    %434 = vector.broadcast %433 : vector<1x16xf32> to vector<8x16xf32>
    %435 = arith.mulf %432, %434 : vector<8x16xf32>
    %436 = vector.extract_strided_slice %431 {offsets = [4, 0], sizes = [8, 16], strides = [1, 1]} : vector<16x16xf32> to vector<8x16xf32>
    %c1377 = arith.constant 1377 : index
    %c0_133 = arith.constant 0 : index
    %437 = vector.load %arg2[%c1377, %c0_133] : memref<2208x40xf32, #tpu.memory_space<vmem>>, vector<1x16xf32>
    %438 = vector.broadcast %437 : vector<1x16xf32> to vector<8x16xf32>
    %439 = arith.mulf %436, %438 : vector<8x16xf32>
    %440 = arith.addf %435, %439 : vector<8x16xf32>
    %441 = vector.extract_strided_slice %431 {offsets = [8, 0], sizes = [8, 16], strides = [1, 1]} : vector<16x16xf32> to vector<8x16xf32>
    %c1378 = arith.constant 1378 : index
    %c0_134 = arith.constant 0 : index
    %442 = vector.load %arg2[%c1378, %c0_134] : memref<2208x40xf32, #tpu.memory_space<vmem>>, vector<1x16xf32>
    %443 = vector.broadcast %442 : vector<1x16xf32> to vector<8x16xf32>
    %444 = arith.mulf %441, %443 : vector<8x16xf32>
    %445 = arith.addf %440, %444 : vector<8x16xf32>
    %c1384 = arith.constant 1384 : index
    %c0_135 = arith.constant 0 : index
    %446 = vector.load %arg2[%c1384, %c0_135] : memref<2208x40xf32, #tpu.memory_space<vmem>>, vector<1x16xf32>
    %447 = vector.broadcast %446 : vector<1x16xf32> to vector<8x16xf32>
    %448 = arith.mulf %445, %447 : vector<8x16xf32>
    %c1392 = arith.constant 1392 : index
    %c0_136 = arith.constant 0 : index
    %449 = vector.load %arg2[%c1392, %c0_136] : memref<2208x40xf32, #tpu.memory_space<vmem>>, vector<1x16xf32>
    %450 = vector.broadcast %449 : vector<1x16xf32> to vector<8x16xf32>
    %451 = arith.addf %448, %450 : vector<8x16xf32>
    %cst_137 = arith.constant 0.000000e+00 : f32
    %452 = vector.broadcast %cst_137 : f32 to vector<8x16xf32>
    %453 = arith.subf %452, %451 : vector<8x16xf32>
    %454 = math.exp %453 : vector<8x16xf32>
    %cst_138 = arith.constant 1.000000e+00 : f32
    %455 = vector.broadcast %cst_138 : f32 to vector<8x16xf32>
    %456 = arith.addf %455, %454 : vector<8x16xf32>
    %457 = tpu.reciprocal %456 {approx = true} : vector<8x16xf32> -> vector<8x16xf32>
    %458 = arith.mulf %451, %457 : vector<8x16xf32>
    %c104 = arith.constant 104 : index
    %c0_139 = arith.constant 0 : index
    %459 = vector.load %arg3[%c104, %c0_139] : memref<352x40xf32, #tpu.memory_space<vmem>>, vector<16x16xf32>
    %cst_140 = arith.constant dense<0.000000e+00> : vector<8x16xf32>
    %460 = tpu.matmul %458, %459, %cst_140 {dimension_numbers = #tpu.dot_dimension_numbers<[1], [0], [0], [1], [0, 0, 1, 1], [], []>} : vector<8x16xf32>, vector<16x16xf32>, vector<8x16xf32> -> vector<8x16xf32>
    %c1400 = arith.constant 1400 : index
    %c0_141 = arith.constant 0 : index
    %461 = vector.load %arg2[%c1400, %c0_141] : memref<2208x40xf32, #tpu.memory_space<vmem>>, vector<1x16xf32>
    %462 = vector.broadcast %461 : vector<1x16xf32> to vector<8x16xf32>
    %463 = arith.addf %460, %462 : vector<8x16xf32>
    %464 = arith.addf %401, %426 : vector<5x8x16xf32>
    %465 = vector.shape_cast %463 : vector<8x16xf32> to vector<1x8x16xf32>
    %466 = vector.broadcast %465 : vector<1x8x16xf32> to vector<5x8x16xf32>
    %467 = arith.addf %464, %466 : vector<5x8x16xf32>
    %cst_142 = arith.constant 0.000000e+00 : f32
    %468 = vector.broadcast %cst_142 : f32 to vector<5x8x16xf32>
    %469 = arith.maximumf %467, %468 : vector<5x8x16xf32>
    %470 = vector.shape_cast %469 : vector<5x8x16xf32> to vector<40x16xf32>
    %471 = vector.shape_cast %470 : vector<40x16xf32> to vector<5x8x16xf32>
    %cst_143 = arith.constant 0.000000e+00 : f32
    %472 = vector.broadcast %cst_143 : f32 to vector<1x8x16xf32>
    %473 = tpu.concatenate %472, %471, %472 in 0 : vector<1x8x16xf32>, vector<5x8x16xf32>, vector<1x8x16xf32> -> vector<7x8x16xf32>
    %c1408 = arith.constant 1408 : index
    %c0_144 = arith.constant 0 : index
    %474 = vector.load %arg2[%c1408, %c0_144] : memref<2208x40xf32, #tpu.memory_space<vmem>>, vector<1x16xf32>
    %c1409 = arith.constant 1409 : index
    %c0_145 = arith.constant 0 : index
    %475 = vector.load %arg2[%c1409, %c0_145] : memref<2208x40xf32, #tpu.memory_space<vmem>>, vector<1x16xf32>
    %c1410 = arith.constant 1410 : index
    %c0_146 = arith.constant 0 : index
    %476 = vector.load %arg2[%c1410, %c0_146] : memref<2208x40xf32, #tpu.memory_space<vmem>>, vector<1x16xf32>
    %477 = vector.extract_strided_slice %473 {offsets = [0, 0, 0], sizes = [5, 8, 16], strides = [1, 1, 1]} : vector<7x8x16xf32> to vector<5x8x16xf32>
    %478 = vector.extract_strided_slice %473 {offsets = [1, 0, 0], sizes = [5, 8, 16], strides = [1, 1, 1]} : vector<7x8x16xf32> to vector<5x8x16xf32>
    %479 = vector.extract_strided_slice %473 {offsets = [2, 0, 0], sizes = [5, 8, 16], strides = [1, 1, 1]} : vector<7x8x16xf32> to vector<5x8x16xf32>
    %480 = vector.shape_cast %474 : vector<1x16xf32> to vector<1x1x16xf32>
    %481 = vector.broadcast %480 : vector<1x1x16xf32> to vector<5x8x16xf32>
    %482 = arith.mulf %477, %481 : vector<5x8x16xf32>
    %483 = vector.shape_cast %475 : vector<1x16xf32> to vector<1x1x16xf32>
    %484 = vector.broadcast %483 : vector<1x1x16xf32> to vector<5x8x16xf32>
    %485 = arith.mulf %478, %484 : vector<5x8x16xf32>
    %486 = arith.addf %482, %485 : vector<5x8x16xf32>
    %487 = vector.shape_cast %476 : vector<1x16xf32> to vector<1x1x16xf32>
    %488 = vector.broadcast %487 : vector<1x1x16xf32> to vector<5x8x16xf32>
    %489 = arith.mulf %479, %488 : vector<5x8x16xf32>
    %490 = arith.addf %486, %489 : vector<5x8x16xf32>
    %491 = vector.shape_cast %490 : vector<5x8x16xf32> to vector<40x16xf32>
    %c1416 = arith.constant 1416 : index
    %c0_147 = arith.constant 0 : index
    %492 = vector.load %arg2[%c1416, %c0_147] : memref<2208x40xf32, #tpu.memory_space<vmem>>, vector<40x16xf32>
    %493 = arith.mulf %491, %492 : vector<40x16xf32>
    %c1456 = arith.constant 1456 : index
    %c0_148 = arith.constant 0 : index
    %494 = vector.load %arg2[%c1456, %c0_148] : memref<2208x40xf32, #tpu.memory_space<vmem>>, vector<40x16xf32>
    %495 = arith.addf %493, %494 : vector<40x16xf32>
    %496 = vector.shape_cast %495 : vector<40x16xf32> to vector<5x8x16xf32>
    %cst_149 = arith.constant dense<0.000000e+00> : vector<8x16xf32>
    %497 = vector.multi_reduction <add>, %496, %cst_149 [0] : vector<5x8x16xf32> to vector<8x16xf32>
    %cst_150 = arith.constant 5.000000e+00 : f32
    %498 = vector.broadcast %cst_150 : f32 to vector<8x16xf32>
    %499 = arith.divf %497, %498 : vector<8x16xf32>
    %cst_151 = arith.constant 0.000000e+00 : f32
    %500 = vector.broadcast %cst_151 : f32 to vector<4x16xf32>
    %501 = tpu.concatenate %500, %499, %500 in 0 : vector<4x16xf32>, vector<8x16xf32>, vector<4x16xf32> -> vector<16x16xf32>
    %502 = vector.extract_strided_slice %501 {offsets = [0, 0], sizes = [8, 16], strides = [1, 1]} : vector<16x16xf32> to vector<8x16xf32>
    %c1496 = arith.constant 1496 : index
    %c0_152 = arith.constant 0 : index
    %503 = vector.load %arg2[%c1496, %c0_152] : memref<2208x40xf32, #tpu.memory_space<vmem>>, vector<1x16xf32>
    %504 = vector.broadcast %503 : vector<1x16xf32> to vector<8x16xf32>
    %505 = arith.mulf %502, %504 : vector<8x16xf32>
    %506 = vector.extract_strided_slice %501 {offsets = [4, 0], sizes = [8, 16], strides = [1, 1]} : vector<16x16xf32> to vector<8x16xf32>
    %c1497 = arith.constant 1497 : index
    %c0_153 = arith.constant 0 : index
    %507 = vector.load %arg2[%c1497, %c0_153] : memref<2208x40xf32, #tpu.memory_space<vmem>>, vector<1x16xf32>
    %508 = vector.broadcast %507 : vector<1x16xf32> to vector<8x16xf32>
    %509 = arith.mulf %506, %508 : vector<8x16xf32>
    %510 = arith.addf %505, %509 : vector<8x16xf32>
    %511 = vector.extract_strided_slice %501 {offsets = [8, 0], sizes = [8, 16], strides = [1, 1]} : vector<16x16xf32> to vector<8x16xf32>
    %c1498 = arith.constant 1498 : index
    %c0_154 = arith.constant 0 : index
    %512 = vector.load %arg2[%c1498, %c0_154] : memref<2208x40xf32, #tpu.memory_space<vmem>>, vector<1x16xf32>
    %513 = vector.broadcast %512 : vector<1x16xf32> to vector<8x16xf32>
    %514 = arith.mulf %511, %513 : vector<8x16xf32>
    %515 = arith.addf %510, %514 : vector<8x16xf32>
    %c1504 = arith.constant 1504 : index
    %c0_155 = arith.constant 0 : index
    %516 = vector.load %arg2[%c1504, %c0_155] : memref<2208x40xf32, #tpu.memory_space<vmem>>, vector<1x16xf32>
    %517 = vector.broadcast %516 : vector<1x16xf32> to vector<8x16xf32>
    %518 = arith.mulf %515, %517 : vector<8x16xf32>
    %c1512 = arith.constant 1512 : index
    %c0_156 = arith.constant 0 : index
    %519 = vector.load %arg2[%c1512, %c0_156] : memref<2208x40xf32, #tpu.memory_space<vmem>>, vector<1x16xf32>
    %520 = vector.broadcast %519 : vector<1x16xf32> to vector<8x16xf32>
    %521 = arith.addf %518, %520 : vector<8x16xf32>
    %cst_157 = arith.constant 0.000000e+00 : f32
    %522 = vector.broadcast %cst_157 : f32 to vector<8x16xf32>
    %523 = arith.subf %522, %521 : vector<8x16xf32>
    %524 = math.exp %523 : vector<8x16xf32>
    %cst_158 = arith.constant 1.000000e+00 : f32
    %525 = vector.broadcast %cst_158 : f32 to vector<8x16xf32>
    %526 = arith.addf %525, %524 : vector<8x16xf32>
    %527 = tpu.reciprocal %526 {approx = true} : vector<8x16xf32> -> vector<8x16xf32>
    %528 = arith.mulf %521, %527 : vector<8x16xf32>
    %c120 = arith.constant 120 : index
    %c0_159 = arith.constant 0 : index
    %529 = vector.load %arg3[%c120, %c0_159] : memref<352x40xf32, #tpu.memory_space<vmem>>, vector<16x16xf32>
    %cst_160 = arith.constant dense<0.000000e+00> : vector<8x16xf32>
    %530 = tpu.matmul %528, %529, %cst_160 {dimension_numbers = #tpu.dot_dimension_numbers<[1], [0], [0], [1], [0, 0, 1, 1], [], []>} : vector<8x16xf32>, vector<16x16xf32>, vector<8x16xf32> -> vector<8x16xf32>
    %c1520 = arith.constant 1520 : index
    %c0_161 = arith.constant 0 : index
    %531 = vector.load %arg2[%c1520, %c0_161] : memref<2208x40xf32, #tpu.memory_space<vmem>>, vector<1x16xf32>
    %532 = vector.broadcast %531 : vector<1x16xf32> to vector<8x16xf32>
    %533 = arith.addf %530, %532 : vector<8x16xf32>
    %534 = arith.addf %471, %496 : vector<5x8x16xf32>
    %535 = vector.shape_cast %533 : vector<8x16xf32> to vector<1x8x16xf32>
    %536 = vector.broadcast %535 : vector<1x8x16xf32> to vector<5x8x16xf32>
    %537 = arith.addf %534, %536 : vector<5x8x16xf32>
    %cst_162 = arith.constant 0.000000e+00 : f32
    %538 = vector.broadcast %cst_162 : f32 to vector<5x8x16xf32>
    %539 = arith.maximumf %537, %538 : vector<5x8x16xf32>
    %540 = vector.shape_cast %539 : vector<5x8x16xf32> to vector<40x16xf32>
    %541 = vector.shape_cast %540 : vector<40x16xf32> to vector<5x8x16xf32>
    %cst_163 = arith.constant 0.000000e+00 : f32
    %542 = vector.broadcast %cst_163 : f32 to vector<1x8x16xf32>
    %543 = tpu.concatenate %542, %541, %542 in 0 : vector<1x8x16xf32>, vector<5x8x16xf32>, vector<1x8x16xf32> -> vector<7x8x16xf32>
    %c1528 = arith.constant 1528 : index
    %c0_164 = arith.constant 0 : index
    %544 = vector.load %arg2[%c1528, %c0_164] : memref<2208x40xf32, #tpu.memory_space<vmem>>, vector<1x16xf32>
    %c1529 = arith.constant 1529 : index
    %c0_165 = arith.constant 0 : index
    %545 = vector.load %arg2[%c1529, %c0_165] : memref<2208x40xf32, #tpu.memory_space<vmem>>, vector<1x16xf32>
    %c1530 = arith.constant 1530 : index
    %c0_166 = arith.constant 0 : index
    %546 = vector.load %arg2[%c1530, %c0_166] : memref<2208x40xf32, #tpu.memory_space<vmem>>, vector<1x16xf32>
    %547 = vector.extract_strided_slice %543 {offsets = [0, 0, 0], sizes = [5, 8, 16], strides = [1, 1, 1]} : vector<7x8x16xf32> to vector<5x8x16xf32>
    %548 = vector.extract_strided_slice %543 {offsets = [1, 0, 0], sizes = [5, 8, 16], strides = [1, 1, 1]} : vector<7x8x16xf32> to vector<5x8x16xf32>
    %549 = vector.extract_strided_slice %543 {offsets = [2, 0, 0], sizes = [5, 8, 16], strides = [1, 1, 1]} : vector<7x8x16xf32> to vector<5x8x16xf32>
    %550 = vector.shape_cast %544 : vector<1x16xf32> to vector<1x1x16xf32>
    %551 = vector.broadcast %550 : vector<1x1x16xf32> to vector<5x8x16xf32>
    %552 = arith.mulf %547, %551 : vector<5x8x16xf32>
    %553 = vector.shape_cast %545 : vector<1x16xf32> to vector<1x1x16xf32>
    %554 = vector.broadcast %553 : vector<1x1x16xf32> to vector<5x8x16xf32>
    %555 = arith.mulf %548, %554 : vector<5x8x16xf32>
    %556 = arith.addf %552, %555 : vector<5x8x16xf32>
    %557 = vector.shape_cast %546 : vector<1x16xf32> to vector<1x1x16xf32>
    %558 = vector.broadcast %557 : vector<1x1x16xf32> to vector<5x8x16xf32>
    %559 = arith.mulf %549, %558 : vector<5x8x16xf32>
    %560 = arith.addf %556, %559 : vector<5x8x16xf32>
    %561 = vector.shape_cast %560 : vector<5x8x16xf32> to vector<40x16xf32>
    %c1536 = arith.constant 1536 : index
    %c0_167 = arith.constant 0 : index
    %562 = vector.load %arg2[%c1536, %c0_167] : memref<2208x40xf32, #tpu.memory_space<vmem>>, vector<40x16xf32>
    %563 = arith.mulf %561, %562 : vector<40x16xf32>
    %c1576 = arith.constant 1576 : index
    %c0_168 = arith.constant 0 : index
    %564 = vector.load %arg2[%c1576, %c0_168] : memref<2208x40xf32, #tpu.memory_space<vmem>>, vector<40x16xf32>
    %565 = arith.addf %563, %564 : vector<40x16xf32>
    %566 = vector.shape_cast %565 : vector<40x16xf32> to vector<5x8x16xf32>
    %cst_169 = arith.constant dense<0.000000e+00> : vector<8x16xf32>
    %567 = vector.multi_reduction <add>, %566, %cst_169 [0] : vector<5x8x16xf32> to vector<8x16xf32>
    %cst_170 = arith.constant 5.000000e+00 : f32
    %568 = vector.broadcast %cst_170 : f32 to vector<8x16xf32>
    %569 = arith.divf %567, %568 : vector<8x16xf32>
    %cst_171 = arith.constant 0.000000e+00 : f32
    %570 = vector.broadcast %cst_171 : f32 to vector<4x16xf32>
    %571 = tpu.concatenate %570, %569, %570 in 0 : vector<4x16xf32>, vector<8x16xf32>, vector<4x16xf32> -> vector<16x16xf32>
    %572 = vector.extract_strided_slice %571 {offsets = [0, 0], sizes = [8, 16], strides = [1, 1]} : vector<16x16xf32> to vector<8x16xf32>
    %c1616 = arith.constant 1616 : index
    %c0_172 = arith.constant 0 : index
    %573 = vector.load %arg2[%c1616, %c0_172] : memref<2208x40xf32, #tpu.memory_space<vmem>>, vector<1x16xf32>
    %574 = vector.broadcast %573 : vector<1x16xf32> to vector<8x16xf32>
    %575 = arith.mulf %572, %574 : vector<8x16xf32>
    %576 = vector.extract_strided_slice %571 {offsets = [4, 0], sizes = [8, 16], strides = [1, 1]} : vector<16x16xf32> to vector<8x16xf32>
    %c1617 = arith.constant 1617 : index
    %c0_173 = arith.constant 0 : index
    %577 = vector.load %arg2[%c1617, %c0_173] : memref<2208x40xf32, #tpu.memory_space<vmem>>, vector<1x16xf32>
    %578 = vector.broadcast %577 : vector<1x16xf32> to vector<8x16xf32>
    %579 = arith.mulf %576, %578 : vector<8x16xf32>
    %580 = arith.addf %575, %579 : vector<8x16xf32>
    %581 = vector.extract_strided_slice %571 {offsets = [8, 0], sizes = [8, 16], strides = [1, 1]} : vector<16x16xf32> to vector<8x16xf32>
    %c1618 = arith.constant 1618 : index
    %c0_174 = arith.constant 0 : index
    %582 = vector.load %arg2[%c1618, %c0_174] : memref<2208x40xf32, #tpu.memory_space<vmem>>, vector<1x16xf32>
    %583 = vector.broadcast %582 : vector<1x16xf32> to vector<8x16xf32>
    %584 = arith.mulf %581, %583 : vector<8x16xf32>
    %585 = arith.addf %580, %584 : vector<8x16xf32>
    %c1624 = arith.constant 1624 : index
    %c0_175 = arith.constant 0 : index
    %586 = vector.load %arg2[%c1624, %c0_175] : memref<2208x40xf32, #tpu.memory_space<vmem>>, vector<1x16xf32>
    %587 = vector.broadcast %586 : vector<1x16xf32> to vector<8x16xf32>
    %588 = arith.mulf %585, %587 : vector<8x16xf32>
    %c1632 = arith.constant 1632 : index
    %c0_176 = arith.constant 0 : index
    %589 = vector.load %arg2[%c1632, %c0_176] : memref<2208x40xf32, #tpu.memory_space<vmem>>, vector<1x16xf32>
    %590 = vector.broadcast %589 : vector<1x16xf32> to vector<8x16xf32>
    %591 = arith.addf %588, %590 : vector<8x16xf32>
    %cst_177 = arith.constant 0.000000e+00 : f32
    %592 = vector.broadcast %cst_177 : f32 to vector<8x16xf32>
    %593 = arith.subf %592, %591 : vector<8x16xf32>
    %594 = math.exp %593 : vector<8x16xf32>
    %cst_178 = arith.constant 1.000000e+00 : f32
    %595 = vector.broadcast %cst_178 : f32 to vector<8x16xf32>
    %596 = arith.addf %595, %594 : vector<8x16xf32>
    %597 = tpu.reciprocal %596 {approx = true} : vector<8x16xf32> -> vector<8x16xf32>
    %598 = arith.mulf %591, %597 : vector<8x16xf32>
    %c136 = arith.constant 136 : index
    %c0_179 = arith.constant 0 : index
    %599 = vector.load %arg3[%c136, %c0_179] : memref<352x40xf32, #tpu.memory_space<vmem>>, vector<16x16xf32>
    %cst_180 = arith.constant dense<0.000000e+00> : vector<8x16xf32>
    %600 = tpu.matmul %598, %599, %cst_180 {dimension_numbers = #tpu.dot_dimension_numbers<[1], [0], [0], [1], [0, 0, 1, 1], [], []>} : vector<8x16xf32>, vector<16x16xf32>, vector<8x16xf32> -> vector<8x16xf32>
    %c1640 = arith.constant 1640 : index
    %c0_181 = arith.constant 0 : index
    %601 = vector.load %arg2[%c1640, %c0_181] : memref<2208x40xf32, #tpu.memory_space<vmem>>, vector<1x16xf32>
    %602 = vector.broadcast %601 : vector<1x16xf32> to vector<8x16xf32>
    %603 = arith.addf %600, %602 : vector<8x16xf32>
    %604 = arith.addf %541, %566 : vector<5x8x16xf32>
    %605 = vector.shape_cast %603 : vector<8x16xf32> to vector<1x8x16xf32>
    %606 = vector.broadcast %605 : vector<1x8x16xf32> to vector<5x8x16xf32>
    %607 = arith.addf %604, %606 : vector<5x8x16xf32>
    %cst_182 = arith.constant 0.000000e+00 : f32
    %608 = vector.broadcast %cst_182 : f32 to vector<5x8x16xf32>
    %609 = arith.maximumf %607, %608 : vector<5x8x16xf32>
    %610 = vector.shape_cast %609 : vector<5x8x16xf32> to vector<40x16xf32>
    %c152 = arith.constant 152 : index
    %c0_183 = arith.constant 0 : index
    %611 = vector.load %arg3[%c152, %c0_183] : memref<352x40xf32, #tpu.memory_space<vmem>>, vector<16x20xf32>
    %cst_184 = arith.constant dense<0.000000e+00> : vector<40x20xf32>
    %612 = tpu.matmul %610, %611, %cst_184 {dimension_numbers = #tpu.dot_dimension_numbers<[1], [0], [0], [1], [0, 0, 1, 1], [], []>} : vector<40x16xf32>, vector<16x20xf32>, vector<40x20xf32> -> vector<40x20xf32>
    %c1648 = arith.constant 1648 : index
    %c0_185 = arith.constant 0 : index
    %613 = vector.load %arg2[%c1648, %c0_185] : memref<2208x40xf32, #tpu.memory_space<vmem>>, vector<1x20xf32>
    %614 = vector.broadcast %613 : vector<1x20xf32> to vector<40x20xf32>
    %615 = arith.mulf %612, %614 : vector<40x20xf32>
    %c1656 = arith.constant 1656 : index
    %c0_186 = arith.constant 0 : index
    %616 = vector.load %arg2[%c1656, %c0_186] : memref<2208x40xf32, #tpu.memory_space<vmem>>, vector<1x20xf32>
    %617 = vector.broadcast %616 : vector<1x20xf32> to vector<40x20xf32>
    %618 = arith.addf %615, %617 : vector<40x20xf32>
    %cst_187 = arith.constant 0.000000e+00 : f32
    %619 = vector.broadcast %cst_187 : f32 to vector<40x20xf32>
    %620 = arith.maximumf %618, %619 : vector<40x20xf32>
    %621 = vector.shape_cast %620 : vector<40x20xf32> to vector<5x8x20xf32>
    %cst_188 = arith.constant 0.000000e+00 : f32
    %622 = vector.broadcast %cst_188 : f32 to vector<1x8x20xf32>
    %623 = tpu.concatenate %622, %621, %622 in 0 : vector<1x8x20xf32>, vector<5x8x20xf32>, vector<1x8x20xf32> -> vector<7x8x20xf32>
    %c1664 = arith.constant 1664 : index
    %c0_189 = arith.constant 0 : index
    %624 = vector.load %arg2[%c1664, %c0_189] : memref<2208x40xf32, #tpu.memory_space<vmem>>, vector<1x20xf32>
    %c1665 = arith.constant 1665 : index
    %c0_190 = arith.constant 0 : index
    %625 = vector.load %arg2[%c1665, %c0_190] : memref<2208x40xf32, #tpu.memory_space<vmem>>, vector<1x20xf32>
    %c1666 = arith.constant 1666 : index
    %c0_191 = arith.constant 0 : index
    %626 = vector.load %arg2[%c1666, %c0_191] : memref<2208x40xf32, #tpu.memory_space<vmem>>, vector<1x20xf32>
    %627 = vector.extract_strided_slice %623 {offsets = [0, 0, 0], sizes = [5, 8, 20], strides = [1, 1, 1]} : vector<7x8x20xf32> to vector<5x8x20xf32>
    %628 = vector.extract_strided_slice %623 {offsets = [1, 0, 0], sizes = [5, 8, 20], strides = [1, 1, 1]} : vector<7x8x20xf32> to vector<5x8x20xf32>
    %629 = vector.extract_strided_slice %623 {offsets = [2, 0, 0], sizes = [5, 8, 20], strides = [1, 1, 1]} : vector<7x8x20xf32> to vector<5x8x20xf32>
    %630 = vector.shape_cast %624 : vector<1x20xf32> to vector<1x1x20xf32>
    %631 = vector.broadcast %630 : vector<1x1x20xf32> to vector<5x8x20xf32>
    %632 = arith.mulf %627, %631 : vector<5x8x20xf32>
    %633 = vector.shape_cast %625 : vector<1x20xf32> to vector<1x1x20xf32>
    %634 = vector.broadcast %633 : vector<1x1x20xf32> to vector<5x8x20xf32>
    %635 = arith.mulf %628, %634 : vector<5x8x20xf32>
    %636 = arith.addf %632, %635 : vector<5x8x20xf32>
    %637 = vector.shape_cast %626 : vector<1x20xf32> to vector<1x1x20xf32>
    %638 = vector.broadcast %637 : vector<1x1x20xf32> to vector<5x8x20xf32>
    %639 = arith.mulf %629, %638 : vector<5x8x20xf32>
    %640 = arith.addf %636, %639 : vector<5x8x20xf32>
    %641 = vector.shape_cast %640 : vector<5x8x20xf32> to vector<40x20xf32>
    %c1672 = arith.constant 1672 : index
    %c0_192 = arith.constant 0 : index
    %642 = vector.load %arg2[%c1672, %c0_192] : memref<2208x40xf32, #tpu.memory_space<vmem>>, vector<40x20xf32>
    %643 = arith.mulf %641, %642 : vector<40x20xf32>
    %c1712 = arith.constant 1712 : index
    %c0_193 = arith.constant 0 : index
    %644 = vector.load %arg2[%c1712, %c0_193] : memref<2208x40xf32, #tpu.memory_space<vmem>>, vector<40x20xf32>
    %645 = arith.addf %643, %644 : vector<40x20xf32>
    %646 = vector.shape_cast %645 : vector<40x20xf32> to vector<5x8x20xf32>
    %cst_194 = arith.constant dense<0.000000e+00> : vector<8x20xf32>
    %647 = vector.multi_reduction <add>, %646, %cst_194 [0] : vector<5x8x20xf32> to vector<8x20xf32>
    %cst_195 = arith.constant 5.000000e+00 : f32
    %648 = vector.broadcast %cst_195 : f32 to vector<8x20xf32>
    %649 = arith.divf %647, %648 : vector<8x20xf32>
    %cst_196 = arith.constant 0.000000e+00 : f32
    %650 = vector.broadcast %cst_196 : f32 to vector<8x20xf32>
    %651 = tpu.concatenate %650, %649, %650 in 0 : vector<8x20xf32>, vector<8x20xf32>, vector<8x20xf32> -> vector<24x20xf32>
    %652 = vector.extract_strided_slice %651 {offsets = [0, 0], sizes = [8, 20], strides = [1, 1]} : vector<24x20xf32> to vector<8x20xf32>
    %c1752 = arith.constant 1752 : index
    %c0_197 = arith.constant 0 : index
    %653 = vector.load %arg2[%c1752, %c0_197] : memref<2208x40xf32, #tpu.memory_space<vmem>>, vector<1x20xf32>
    %654 = vector.broadcast %653 : vector<1x20xf32> to vector<8x20xf32>
    %655 = arith.mulf %652, %654 : vector<8x20xf32>
    %656 = vector.extract_strided_slice %651 {offsets = [8, 0], sizes = [8, 20], strides = [1, 1]} : vector<24x20xf32> to vector<8x20xf32>
    %c1753 = arith.constant 1753 : index
    %c0_198 = arith.constant 0 : index
    %657 = vector.load %arg2[%c1753, %c0_198] : memref<2208x40xf32, #tpu.memory_space<vmem>>, vector<1x20xf32>
    %658 = vector.broadcast %657 : vector<1x20xf32> to vector<8x20xf32>
    %659 = arith.mulf %656, %658 : vector<8x20xf32>
    %660 = arith.addf %655, %659 : vector<8x20xf32>
    %661 = vector.extract_strided_slice %651 {offsets = [16, 0], sizes = [8, 20], strides = [1, 1]} : vector<24x20xf32> to vector<8x20xf32>
    %c1754 = arith.constant 1754 : index
    %c0_199 = arith.constant 0 : index
    %662 = vector.load %arg2[%c1754, %c0_199] : memref<2208x40xf32, #tpu.memory_space<vmem>>, vector<1x20xf32>
    %663 = vector.broadcast %662 : vector<1x20xf32> to vector<8x20xf32>
    %664 = arith.mulf %661, %663 : vector<8x20xf32>
    %665 = arith.addf %660, %664 : vector<8x20xf32>
    %c1760 = arith.constant 1760 : index
    %c0_200 = arith.constant 0 : index
    %666 = vector.load %arg2[%c1760, %c0_200] : memref<2208x40xf32, #tpu.memory_space<vmem>>, vector<1x20xf32>
    %667 = vector.broadcast %666 : vector<1x20xf32> to vector<8x20xf32>
    %668 = arith.mulf %665, %667 : vector<8x20xf32>
    %c1768 = arith.constant 1768 : index
    %c0_201 = arith.constant 0 : index
    %669 = vector.load %arg2[%c1768, %c0_201] : memref<2208x40xf32, #tpu.memory_space<vmem>>, vector<1x20xf32>
    %670 = vector.broadcast %669 : vector<1x20xf32> to vector<8x20xf32>
    %671 = arith.addf %668, %670 : vector<8x20xf32>
    %cst_202 = arith.constant 0.000000e+00 : f32
    %672 = vector.broadcast %cst_202 : f32 to vector<8x20xf32>
    %673 = arith.subf %672, %671 : vector<8x20xf32>
    %674 = math.exp %673 : vector<8x20xf32>
    %cst_203 = arith.constant 1.000000e+00 : f32
    %675 = vector.broadcast %cst_203 : f32 to vector<8x20xf32>
    %676 = arith.addf %675, %674 : vector<8x20xf32>
    %677 = tpu.reciprocal %676 {approx = true} : vector<8x20xf32> -> vector<8x20xf32>
    %678 = arith.mulf %671, %677 : vector<8x20xf32>
    %c168 = arith.constant 168 : index
    %c0_204 = arith.constant 0 : index
    %679 = vector.load %arg3[%c168, %c0_204] : memref<352x40xf32, #tpu.memory_space<vmem>>, vector<20x20xf32>
    %cst_205 = arith.constant dense<0.000000e+00> : vector<8x20xf32>
    %680 = tpu.matmul %678, %679, %cst_205 {dimension_numbers = #tpu.dot_dimension_numbers<[1], [0], [0], [1], [0, 0, 1, 1], [], []>} : vector<8x20xf32>, vector<20x20xf32>, vector<8x20xf32> -> vector<8x20xf32>
    %c1776 = arith.constant 1776 : index
    %c0_206 = arith.constant 0 : index
    %681 = vector.load %arg2[%c1776, %c0_206] : memref<2208x40xf32, #tpu.memory_space<vmem>>, vector<1x20xf32>
    %682 = vector.broadcast %681 : vector<1x20xf32> to vector<8x20xf32>
    %683 = arith.addf %680, %682 : vector<8x20xf32>
    %684 = vector.shape_cast %645 : vector<40x20xf32> to vector<5x8x20xf32>
    %685 = vector.shape_cast %683 : vector<8x20xf32> to vector<1x8x20xf32>
    %686 = vector.broadcast %685 : vector<1x8x20xf32> to vector<5x8x20xf32>
    %687 = arith.addf %684, %686 : vector<5x8x20xf32>
    %cst_207 = arith.constant 0.000000e+00 : f32
    %688 = vector.broadcast %cst_207 : f32 to vector<5x8x20xf32>
    %689 = arith.maximumf %687, %688 : vector<5x8x20xf32>
    %690 = vector.shape_cast %689 : vector<5x8x20xf32> to vector<40x20xf32>
    %691 = vector.shape_cast %690 : vector<40x20xf32> to vector<5x8x20xf32>
    %cst_208 = arith.constant 0.000000e+00 : f32
    %692 = vector.broadcast %cst_208 : f32 to vector<1x8x20xf32>
    %693 = tpu.concatenate %692, %691, %692 in 0 : vector<1x8x20xf32>, vector<5x8x20xf32>, vector<1x8x20xf32> -> vector<7x8x20xf32>
    %c1784 = arith.constant 1784 : index
    %c0_209 = arith.constant 0 : index
    %694 = vector.load %arg2[%c1784, %c0_209] : memref<2208x40xf32, #tpu.memory_space<vmem>>, vector<1x20xf32>
    %c1785 = arith.constant 1785 : index
    %c0_210 = arith.constant 0 : index
    %695 = vector.load %arg2[%c1785, %c0_210] : memref<2208x40xf32, #tpu.memory_space<vmem>>, vector<1x20xf32>
    %c1786 = arith.constant 1786 : index
    %c0_211 = arith.constant 0 : index
    %696 = vector.load %arg2[%c1786, %c0_211] : memref<2208x40xf32, #tpu.memory_space<vmem>>, vector<1x20xf32>
    %697 = vector.extract_strided_slice %693 {offsets = [0, 0, 0], sizes = [5, 8, 20], strides = [1, 1, 1]} : vector<7x8x20xf32> to vector<5x8x20xf32>
    %698 = vector.extract_strided_slice %693 {offsets = [1, 0, 0], sizes = [5, 8, 20], strides = [1, 1, 1]} : vector<7x8x20xf32> to vector<5x8x20xf32>
    %699 = vector.extract_strided_slice %693 {offsets = [2, 0, 0], sizes = [5, 8, 20], strides = [1, 1, 1]} : vector<7x8x20xf32> to vector<5x8x20xf32>
    %700 = vector.shape_cast %694 : vector<1x20xf32> to vector<1x1x20xf32>
    %701 = vector.broadcast %700 : vector<1x1x20xf32> to vector<5x8x20xf32>
    %702 = arith.mulf %697, %701 : vector<5x8x20xf32>
    %703 = vector.shape_cast %695 : vector<1x20xf32> to vector<1x1x20xf32>
    %704 = vector.broadcast %703 : vector<1x1x20xf32> to vector<5x8x20xf32>
    %705 = arith.mulf %698, %704 : vector<5x8x20xf32>
    %706 = arith.addf %702, %705 : vector<5x8x20xf32>
    %707 = vector.shape_cast %696 : vector<1x20xf32> to vector<1x1x20xf32>
    %708 = vector.broadcast %707 : vector<1x1x20xf32> to vector<5x8x20xf32>
    %709 = arith.mulf %699, %708 : vector<5x8x20xf32>
    %710 = arith.addf %706, %709 : vector<5x8x20xf32>
    %711 = vector.shape_cast %710 : vector<5x8x20xf32> to vector<40x20xf32>
    %c1792 = arith.constant 1792 : index
    %c0_212 = arith.constant 0 : index
    %712 = vector.load %arg2[%c1792, %c0_212] : memref<2208x40xf32, #tpu.memory_space<vmem>>, vector<40x20xf32>
    %713 = arith.mulf %711, %712 : vector<40x20xf32>
    %c1832 = arith.constant 1832 : index
    %c0_213 = arith.constant 0 : index
    %714 = vector.load %arg2[%c1832, %c0_213] : memref<2208x40xf32, #tpu.memory_space<vmem>>, vector<40x20xf32>
    %715 = arith.addf %713, %714 : vector<40x20xf32>
    %716 = vector.shape_cast %715 : vector<40x20xf32> to vector<5x8x20xf32>
    %cst_214 = arith.constant dense<0.000000e+00> : vector<8x20xf32>
    %717 = vector.multi_reduction <add>, %716, %cst_214 [0] : vector<5x8x20xf32> to vector<8x20xf32>
    %cst_215 = arith.constant 5.000000e+00 : f32
    %718 = vector.broadcast %cst_215 : f32 to vector<8x20xf32>
    %719 = arith.divf %717, %718 : vector<8x20xf32>
    %cst_216 = arith.constant 0.000000e+00 : f32
    %720 = vector.broadcast %cst_216 : f32 to vector<8x20xf32>
    %721 = tpu.concatenate %720, %719, %720 in 0 : vector<8x20xf32>, vector<8x20xf32>, vector<8x20xf32> -> vector<24x20xf32>
    %722 = vector.extract_strided_slice %721 {offsets = [0, 0], sizes = [8, 20], strides = [1, 1]} : vector<24x20xf32> to vector<8x20xf32>
    %c1872 = arith.constant 1872 : index
    %c0_217 = arith.constant 0 : index
    %723 = vector.load %arg2[%c1872, %c0_217] : memref<2208x40xf32, #tpu.memory_space<vmem>>, vector<1x20xf32>
    %724 = vector.broadcast %723 : vector<1x20xf32> to vector<8x20xf32>
    %725 = arith.mulf %722, %724 : vector<8x20xf32>
    %726 = vector.extract_strided_slice %721 {offsets = [8, 0], sizes = [8, 20], strides = [1, 1]} : vector<24x20xf32> to vector<8x20xf32>
    %c1873 = arith.constant 1873 : index
    %c0_218 = arith.constant 0 : index
    %727 = vector.load %arg2[%c1873, %c0_218] : memref<2208x40xf32, #tpu.memory_space<vmem>>, vector<1x20xf32>
    %728 = vector.broadcast %727 : vector<1x20xf32> to vector<8x20xf32>
    %729 = arith.mulf %726, %728 : vector<8x20xf32>
    %730 = arith.addf %725, %729 : vector<8x20xf32>
    %731 = vector.extract_strided_slice %721 {offsets = [16, 0], sizes = [8, 20], strides = [1, 1]} : vector<24x20xf32> to vector<8x20xf32>
    %c1874 = arith.constant 1874 : index
    %c0_219 = arith.constant 0 : index
    %732 = vector.load %arg2[%c1874, %c0_219] : memref<2208x40xf32, #tpu.memory_space<vmem>>, vector<1x20xf32>
    %733 = vector.broadcast %732 : vector<1x20xf32> to vector<8x20xf32>
    %734 = arith.mulf %731, %733 : vector<8x20xf32>
    %735 = arith.addf %730, %734 : vector<8x20xf32>
    %c1880 = arith.constant 1880 : index
    %c0_220 = arith.constant 0 : index
    %736 = vector.load %arg2[%c1880, %c0_220] : memref<2208x40xf32, #tpu.memory_space<vmem>>, vector<1x20xf32>
    %737 = vector.broadcast %736 : vector<1x20xf32> to vector<8x20xf32>
    %738 = arith.mulf %735, %737 : vector<8x20xf32>
    %c1888 = arith.constant 1888 : index
    %c0_221 = arith.constant 0 : index
    %739 = vector.load %arg2[%c1888, %c0_221] : memref<2208x40xf32, #tpu.memory_space<vmem>>, vector<1x20xf32>
    %740 = vector.broadcast %739 : vector<1x20xf32> to vector<8x20xf32>
    %741 = arith.addf %738, %740 : vector<8x20xf32>
    %cst_222 = arith.constant 0.000000e+00 : f32
    %742 = vector.broadcast %cst_222 : f32 to vector<8x20xf32>
    %743 = arith.subf %742, %741 : vector<8x20xf32>
    %744 = math.exp %743 : vector<8x20xf32>
    %cst_223 = arith.constant 1.000000e+00 : f32
    %745 = vector.broadcast %cst_223 : f32 to vector<8x20xf32>
    %746 = arith.addf %745, %744 : vector<8x20xf32>
    %747 = tpu.reciprocal %746 {approx = true} : vector<8x20xf32> -> vector<8x20xf32>
    %748 = arith.mulf %741, %747 : vector<8x20xf32>
    %c192 = arith.constant 192 : index
    %c0_224 = arith.constant 0 : index
    %749 = vector.load %arg3[%c192, %c0_224] : memref<352x40xf32, #tpu.memory_space<vmem>>, vector<20x20xf32>
    %cst_225 = arith.constant dense<0.000000e+00> : vector<8x20xf32>
    %750 = tpu.matmul %748, %749, %cst_225 {dimension_numbers = #tpu.dot_dimension_numbers<[1], [0], [0], [1], [0, 0, 1, 1], [], []>} : vector<8x20xf32>, vector<20x20xf32>, vector<8x20xf32> -> vector<8x20xf32>
    %c1896 = arith.constant 1896 : index
    %c0_226 = arith.constant 0 : index
    %751 = vector.load %arg2[%c1896, %c0_226] : memref<2208x40xf32, #tpu.memory_space<vmem>>, vector<1x20xf32>
    %752 = vector.broadcast %751 : vector<1x20xf32> to vector<8x20xf32>
    %753 = arith.addf %750, %752 : vector<8x20xf32>
    %754 = arith.addf %691, %716 : vector<5x8x20xf32>
    %755 = vector.shape_cast %753 : vector<8x20xf32> to vector<1x8x20xf32>
    %756 = vector.broadcast %755 : vector<1x8x20xf32> to vector<5x8x20xf32>
    %757 = arith.addf %754, %756 : vector<5x8x20xf32>
    %cst_227 = arith.constant 0.000000e+00 : f32
    %758 = vector.broadcast %cst_227 : f32 to vector<5x8x20xf32>
    %759 = arith.maximumf %757, %758 : vector<5x8x20xf32>
    %760 = vector.shape_cast %759 : vector<5x8x20xf32> to vector<40x20xf32>
    %761 = vector.shape_cast %760 : vector<40x20xf32> to vector<5x8x20xf32>
    %cst_228 = arith.constant 0.000000e+00 : f32
    %762 = vector.broadcast %cst_228 : f32 to vector<1x8x20xf32>
    %763 = tpu.concatenate %762, %761, %762 in 0 : vector<1x8x20xf32>, vector<5x8x20xf32>, vector<1x8x20xf32> -> vector<7x8x20xf32>
    %c1904 = arith.constant 1904 : index
    %c0_229 = arith.constant 0 : index
    %764 = vector.load %arg2[%c1904, %c0_229] : memref<2208x40xf32, #tpu.memory_space<vmem>>, vector<1x20xf32>
    %c1905 = arith.constant 1905 : index
    %c0_230 = arith.constant 0 : index
    %765 = vector.load %arg2[%c1905, %c0_230] : memref<2208x40xf32, #tpu.memory_space<vmem>>, vector<1x20xf32>
    %c1906 = arith.constant 1906 : index
    %c0_231 = arith.constant 0 : index
    %766 = vector.load %arg2[%c1906, %c0_231] : memref<2208x40xf32, #tpu.memory_space<vmem>>, vector<1x20xf32>
    %767 = vector.extract_strided_slice %763 {offsets = [0, 0, 0], sizes = [5, 8, 20], strides = [1, 1, 1]} : vector<7x8x20xf32> to vector<5x8x20xf32>
    %768 = vector.extract_strided_slice %763 {offsets = [1, 0, 0], sizes = [5, 8, 20], strides = [1, 1, 1]} : vector<7x8x20xf32> to vector<5x8x20xf32>
    %769 = vector.extract_strided_slice %763 {offsets = [2, 0, 0], sizes = [5, 8, 20], strides = [1, 1, 1]} : vector<7x8x20xf32> to vector<5x8x20xf32>
    %770 = vector.shape_cast %764 : vector<1x20xf32> to vector<1x1x20xf32>
    %771 = vector.broadcast %770 : vector<1x1x20xf32> to vector<5x8x20xf32>
    %772 = arith.mulf %767, %771 : vector<5x8x20xf32>
    %773 = vector.shape_cast %765 : vector<1x20xf32> to vector<1x1x20xf32>
    %774 = vector.broadcast %773 : vector<1x1x20xf32> to vector<5x8x20xf32>
    %775 = arith.mulf %768, %774 : vector<5x8x20xf32>
    %776 = arith.addf %772, %775 : vector<5x8x20xf32>
    %777 = vector.shape_cast %766 : vector<1x20xf32> to vector<1x1x20xf32>
    %778 = vector.broadcast %777 : vector<1x1x20xf32> to vector<5x8x20xf32>
    %779 = arith.mulf %769, %778 : vector<5x8x20xf32>
    %780 = arith.addf %776, %779 : vector<5x8x20xf32>
    %781 = vector.shape_cast %780 : vector<5x8x20xf32> to vector<40x20xf32>
    %c1912 = arith.constant 1912 : index
    %c0_232 = arith.constant 0 : index
    %782 = vector.load %arg2[%c1912, %c0_232] : memref<2208x40xf32, #tpu.memory_space<vmem>>, vector<40x20xf32>
    %783 = arith.mulf %781, %782 : vector<40x20xf32>
    %c1952 = arith.constant 1952 : index
    %c0_233 = arith.constant 0 : index
    %784 = vector.load %arg2[%c1952, %c0_233] : memref<2208x40xf32, #tpu.memory_space<vmem>>, vector<40x20xf32>
    %785 = arith.addf %783, %784 : vector<40x20xf32>
    %786 = vector.shape_cast %785 : vector<40x20xf32> to vector<5x8x20xf32>
    %cst_234 = arith.constant dense<0.000000e+00> : vector<8x20xf32>
    %787 = vector.multi_reduction <add>, %786, %cst_234 [0] : vector<5x8x20xf32> to vector<8x20xf32>
    %cst_235 = arith.constant 5.000000e+00 : f32
    %788 = vector.broadcast %cst_235 : f32 to vector<8x20xf32>
    %789 = arith.divf %787, %788 : vector<8x20xf32>
    %cst_236 = arith.constant 0.000000e+00 : f32
    %790 = vector.broadcast %cst_236 : f32 to vector<8x20xf32>
    %791 = tpu.concatenate %790, %789, %790 in 0 : vector<8x20xf32>, vector<8x20xf32>, vector<8x20xf32> -> vector<24x20xf32>
    %792 = vector.extract_strided_slice %791 {offsets = [0, 0], sizes = [8, 20], strides = [1, 1]} : vector<24x20xf32> to vector<8x20xf32>
    %c1992 = arith.constant 1992 : index
    %c0_237 = arith.constant 0 : index
    %793 = vector.load %arg2[%c1992, %c0_237] : memref<2208x40xf32, #tpu.memory_space<vmem>>, vector<1x20xf32>
    %794 = vector.broadcast %793 : vector<1x20xf32> to vector<8x20xf32>
    %795 = arith.mulf %792, %794 : vector<8x20xf32>
    %796 = vector.extract_strided_slice %791 {offsets = [8, 0], sizes = [8, 20], strides = [1, 1]} : vector<24x20xf32> to vector<8x20xf32>
    %c1993 = arith.constant 1993 : index
    %c0_238 = arith.constant 0 : index
    %797 = vector.load %arg2[%c1993, %c0_238] : memref<2208x40xf32, #tpu.memory_space<vmem>>, vector<1x20xf32>
    %798 = vector.broadcast %797 : vector<1x20xf32> to vector<8x20xf32>
    %799 = arith.mulf %796, %798 : vector<8x20xf32>
    %800 = arith.addf %795, %799 : vector<8x20xf32>
    %801 = vector.extract_strided_slice %791 {offsets = [16, 0], sizes = [8, 20], strides = [1, 1]} : vector<24x20xf32> to vector<8x20xf32>
    %c1994 = arith.constant 1994 : index
    %c0_239 = arith.constant 0 : index
    %802 = vector.load %arg2[%c1994, %c0_239] : memref<2208x40xf32, #tpu.memory_space<vmem>>, vector<1x20xf32>
    %803 = vector.broadcast %802 : vector<1x20xf32> to vector<8x20xf32>
    %804 = arith.mulf %801, %803 : vector<8x20xf32>
    %805 = arith.addf %800, %804 : vector<8x20xf32>
    %c2000 = arith.constant 2000 : index
    %c0_240 = arith.constant 0 : index
    %806 = vector.load %arg2[%c2000, %c0_240] : memref<2208x40xf32, #tpu.memory_space<vmem>>, vector<1x20xf32>
    %807 = vector.broadcast %806 : vector<1x20xf32> to vector<8x20xf32>
    %808 = arith.mulf %805, %807 : vector<8x20xf32>
    %c2008 = arith.constant 2008 : index
    %c0_241 = arith.constant 0 : index
    %809 = vector.load %arg2[%c2008, %c0_241] : memref<2208x40xf32, #tpu.memory_space<vmem>>, vector<1x20xf32>
    %810 = vector.broadcast %809 : vector<1x20xf32> to vector<8x20xf32>
    %811 = arith.addf %808, %810 : vector<8x20xf32>
    %cst_242 = arith.constant 0.000000e+00 : f32
    %812 = vector.broadcast %cst_242 : f32 to vector<8x20xf32>
    %813 = arith.subf %812, %811 : vector<8x20xf32>
    %814 = math.exp %813 : vector<8x20xf32>
    %cst_243 = arith.constant 1.000000e+00 : f32
    %815 = vector.broadcast %cst_243 : f32 to vector<8x20xf32>
    %816 = arith.addf %815, %814 : vector<8x20xf32>
    %817 = tpu.reciprocal %816 {approx = true} : vector<8x20xf32> -> vector<8x20xf32>
    %818 = arith.mulf %811, %817 : vector<8x20xf32>
    %c216 = arith.constant 216 : index
    %c0_244 = arith.constant 0 : index
    %819 = vector.load %arg3[%c216, %c0_244] : memref<352x40xf32, #tpu.memory_space<vmem>>, vector<20x20xf32>
    %cst_245 = arith.constant dense<0.000000e+00> : vector<8x20xf32>
    %820 = tpu.matmul %818, %819, %cst_245 {dimension_numbers = #tpu.dot_dimension_numbers<[1], [0], [0], [1], [0, 0, 1, 1], [], []>} : vector<8x20xf32>, vector<20x20xf32>, vector<8x20xf32> -> vector<8x20xf32>
    %c2016 = arith.constant 2016 : index
    %c0_246 = arith.constant 0 : index
    %821 = vector.load %arg2[%c2016, %c0_246] : memref<2208x40xf32, #tpu.memory_space<vmem>>, vector<1x20xf32>
    %822 = vector.broadcast %821 : vector<1x20xf32> to vector<8x20xf32>
    %823 = arith.addf %820, %822 : vector<8x20xf32>
    %824 = arith.addf %761, %786 : vector<5x8x20xf32>
    %825 = vector.shape_cast %823 : vector<8x20xf32> to vector<1x8x20xf32>
    %826 = vector.broadcast %825 : vector<1x8x20xf32> to vector<5x8x20xf32>
    %827 = arith.addf %824, %826 : vector<5x8x20xf32>
    %cst_247 = arith.constant 0.000000e+00 : f32
    %828 = vector.broadcast %cst_247 : f32 to vector<5x8x20xf32>
    %829 = arith.maximumf %827, %828 : vector<5x8x20xf32>
    %830 = vector.shape_cast %829 : vector<5x8x20xf32> to vector<40x20xf32>
    %831 = vector.shape_cast %830 : vector<40x20xf32> to vector<5x8x20xf32>
    %cst_248 = arith.constant 0.000000e+00 : f32
    %832 = vector.broadcast %cst_248 : f32 to vector<1x8x20xf32>
    %833 = tpu.concatenate %832, %831, %832 in 0 : vector<1x8x20xf32>, vector<5x8x20xf32>, vector<1x8x20xf32> -> vector<7x8x20xf32>
    %c2024 = arith.constant 2024 : index
    %c0_249 = arith.constant 0 : index
    %834 = vector.load %arg2[%c2024, %c0_249] : memref<2208x40xf32, #tpu.memory_space<vmem>>, vector<1x20xf32>
    %c2025 = arith.constant 2025 : index
    %c0_250 = arith.constant 0 : index
    %835 = vector.load %arg2[%c2025, %c0_250] : memref<2208x40xf32, #tpu.memory_space<vmem>>, vector<1x20xf32>
    %c2026 = arith.constant 2026 : index
    %c0_251 = arith.constant 0 : index
    %836 = vector.load %arg2[%c2026, %c0_251] : memref<2208x40xf32, #tpu.memory_space<vmem>>, vector<1x20xf32>
    %837 = vector.extract_strided_slice %833 {offsets = [0, 0, 0], sizes = [5, 8, 20], strides = [1, 1, 1]} : vector<7x8x20xf32> to vector<5x8x20xf32>
    %838 = vector.extract_strided_slice %833 {offsets = [1, 0, 0], sizes = [5, 8, 20], strides = [1, 1, 1]} : vector<7x8x20xf32> to vector<5x8x20xf32>
    %839 = vector.extract_strided_slice %833 {offsets = [2, 0, 0], sizes = [5, 8, 20], strides = [1, 1, 1]} : vector<7x8x20xf32> to vector<5x8x20xf32>
    %840 = vector.shape_cast %834 : vector<1x20xf32> to vector<1x1x20xf32>
    %841 = vector.broadcast %840 : vector<1x1x20xf32> to vector<5x8x20xf32>
    %842 = arith.mulf %837, %841 : vector<5x8x20xf32>
    %843 = vector.shape_cast %835 : vector<1x20xf32> to vector<1x1x20xf32>
    %844 = vector.broadcast %843 : vector<1x1x20xf32> to vector<5x8x20xf32>
    %845 = arith.mulf %838, %844 : vector<5x8x20xf32>
    %846 = arith.addf %842, %845 : vector<5x8x20xf32>
    %847 = vector.shape_cast %836 : vector<1x20xf32> to vector<1x1x20xf32>
    %848 = vector.broadcast %847 : vector<1x1x20xf32> to vector<5x8x20xf32>
    %849 = arith.mulf %839, %848 : vector<5x8x20xf32>
    %850 = arith.addf %846, %849 : vector<5x8x20xf32>
    %851 = vector.shape_cast %850 : vector<5x8x20xf32> to vector<40x20xf32>
    %c2032 = arith.constant 2032 : index
    %c0_252 = arith.constant 0 : index
    %852 = vector.load %arg2[%c2032, %c0_252] : memref<2208x40xf32, #tpu.memory_space<vmem>>, vector<40x20xf32>
    %853 = arith.mulf %851, %852 : vector<40x20xf32>
    %c2072 = arith.constant 2072 : index
    %c0_253 = arith.constant 0 : index
    %854 = vector.load %arg2[%c2072, %c0_253] : memref<2208x40xf32, #tpu.memory_space<vmem>>, vector<40x20xf32>
    %855 = arith.addf %853, %854 : vector<40x20xf32>
    %856 = vector.shape_cast %855 : vector<40x20xf32> to vector<5x8x20xf32>
    %cst_254 = arith.constant dense<0.000000e+00> : vector<8x20xf32>
    %857 = vector.multi_reduction <add>, %856, %cst_254 [0] : vector<5x8x20xf32> to vector<8x20xf32>
    %cst_255 = arith.constant 5.000000e+00 : f32
    %858 = vector.broadcast %cst_255 : f32 to vector<8x20xf32>
    %859 = arith.divf %857, %858 : vector<8x20xf32>
    %cst_256 = arith.constant 0.000000e+00 : f32
    %860 = vector.broadcast %cst_256 : f32 to vector<8x20xf32>
    %861 = tpu.concatenate %860, %859, %860 in 0 : vector<8x20xf32>, vector<8x20xf32>, vector<8x20xf32> -> vector<24x20xf32>
    %862 = vector.extract_strided_slice %861 {offsets = [0, 0], sizes = [8, 20], strides = [1, 1]} : vector<24x20xf32> to vector<8x20xf32>
    %c2112 = arith.constant 2112 : index
    %c0_257 = arith.constant 0 : index
    %863 = vector.load %arg2[%c2112, %c0_257] : memref<2208x40xf32, #tpu.memory_space<vmem>>, vector<1x20xf32>
    %864 = vector.broadcast %863 : vector<1x20xf32> to vector<8x20xf32>
    %865 = arith.mulf %862, %864 : vector<8x20xf32>
    %866 = vector.extract_strided_slice %861 {offsets = [8, 0], sizes = [8, 20], strides = [1, 1]} : vector<24x20xf32> to vector<8x20xf32>
    %c2113 = arith.constant 2113 : index
    %c0_258 = arith.constant 0 : index
    %867 = vector.load %arg2[%c2113, %c0_258] : memref<2208x40xf32, #tpu.memory_space<vmem>>, vector<1x20xf32>
    %868 = vector.broadcast %867 : vector<1x20xf32> to vector<8x20xf32>
    %869 = arith.mulf %866, %868 : vector<8x20xf32>
    %870 = arith.addf %865, %869 : vector<8x20xf32>
    %871 = vector.extract_strided_slice %861 {offsets = [16, 0], sizes = [8, 20], strides = [1, 1]} : vector<24x20xf32> to vector<8x20xf32>
    %c2114 = arith.constant 2114 : index
    %c0_259 = arith.constant 0 : index
    %872 = vector.load %arg2[%c2114, %c0_259] : memref<2208x40xf32, #tpu.memory_space<vmem>>, vector<1x20xf32>
    %873 = vector.broadcast %872 : vector<1x20xf32> to vector<8x20xf32>
    %874 = arith.mulf %871, %873 : vector<8x20xf32>
    %875 = arith.addf %870, %874 : vector<8x20xf32>
    %c2120 = arith.constant 2120 : index
    %c0_260 = arith.constant 0 : index
    %876 = vector.load %arg2[%c2120, %c0_260] : memref<2208x40xf32, #tpu.memory_space<vmem>>, vector<1x20xf32>
    %877 = vector.broadcast %876 : vector<1x20xf32> to vector<8x20xf32>
    %878 = arith.mulf %875, %877 : vector<8x20xf32>
    %c2128 = arith.constant 2128 : index
    %c0_261 = arith.constant 0 : index
    %879 = vector.load %arg2[%c2128, %c0_261] : memref<2208x40xf32, #tpu.memory_space<vmem>>, vector<1x20xf32>
    %880 = vector.broadcast %879 : vector<1x20xf32> to vector<8x20xf32>
    %881 = arith.addf %878, %880 : vector<8x20xf32>
    %cst_262 = arith.constant 0.000000e+00 : f32
    %882 = vector.broadcast %cst_262 : f32 to vector<8x20xf32>
    %883 = arith.subf %882, %881 : vector<8x20xf32>
    %884 = math.exp %883 : vector<8x20xf32>
    %cst_263 = arith.constant 1.000000e+00 : f32
    %885 = vector.broadcast %cst_263 : f32 to vector<8x20xf32>
    %886 = arith.addf %885, %884 : vector<8x20xf32>
    %887 = tpu.reciprocal %886 {approx = true} : vector<8x20xf32> -> vector<8x20xf32>
    %888 = arith.mulf %881, %887 : vector<8x20xf32>
    %c240 = arith.constant 240 : index
    %c0_264 = arith.constant 0 : index
    %889 = vector.load %arg3[%c240, %c0_264] : memref<352x40xf32, #tpu.memory_space<vmem>>, vector<20x20xf32>
    %cst_265 = arith.constant dense<0.000000e+00> : vector<8x20xf32>
    %890 = tpu.matmul %888, %889, %cst_265 {dimension_numbers = #tpu.dot_dimension_numbers<[1], [0], [0], [1], [0, 0, 1, 1], [], []>} : vector<8x20xf32>, vector<20x20xf32>, vector<8x20xf32> -> vector<8x20xf32>
    %c2136 = arith.constant 2136 : index
    %c0_266 = arith.constant 0 : index
    %891 = vector.load %arg2[%c2136, %c0_266] : memref<2208x40xf32, #tpu.memory_space<vmem>>, vector<1x20xf32>
    %892 = vector.broadcast %891 : vector<1x20xf32> to vector<8x20xf32>
    %893 = arith.addf %890, %892 : vector<8x20xf32>
    %894 = arith.addf %831, %856 : vector<5x8x20xf32>
    %895 = vector.shape_cast %893 : vector<8x20xf32> to vector<1x8x20xf32>
    %896 = vector.broadcast %895 : vector<1x8x20xf32> to vector<5x8x20xf32>
    %897 = arith.addf %894, %896 : vector<5x8x20xf32>
    %cst_267 = arith.constant 0.000000e+00 : f32
    %898 = vector.broadcast %cst_267 : f32 to vector<5x8x20xf32>
    %899 = arith.maximumf %897, %898 : vector<5x8x20xf32>
    %900 = vector.shape_cast %899 : vector<5x8x20xf32> to vector<40x20xf32>
    %901 = vector.shape_cast %900 : vector<40x20xf32> to vector<5x8x20xf32>
    %902 = vector.extract_strided_slice %901 {offsets = [0, 0, 0], sizes = [1, 8, 20], strides = [1, 1, 1]} : vector<5x8x20xf32> to vector<1x8x20xf32>
    %903 = vector.shape_cast %902 : vector<1x8x20xf32> to vector<8x20xf32>
    %904 = vector.extract_strided_slice %903 {offsets = [0, 0], sizes = [4, 20], strides = [1, 1]} : vector<8x20xf32> to vector<4x20xf32>
    %c2152 = arith.constant 2152 : index
    %c0_268 = arith.constant 0 : index
    %905 = vector.load %arg2[%c2152, %c0_268] : memref<2208x40xf32, #tpu.memory_space<vmem>>, vector<1x20xf32>
    %906 = vector.broadcast %905 : vector<1x20xf32> to vector<4x20xf32>
    %907 = arith.mulf %904, %906 : vector<4x20xf32>
    %908 = vector.extract_strided_slice %903 {offsets = [1, 0], sizes = [4, 20], strides = [1, 1]} : vector<8x20xf32> to vector<4x20xf32>
    %c2153 = arith.constant 2153 : index
    %c0_269 = arith.constant 0 : index
    %909 = vector.load %arg2[%c2153, %c0_269] : memref<2208x40xf32, #tpu.memory_space<vmem>>, vector<1x20xf32>
    %910 = vector.broadcast %909 : vector<1x20xf32> to vector<4x20xf32>
    %911 = arith.mulf %908, %910 : vector<4x20xf32>
    %912 = arith.addf %907, %911 : vector<4x20xf32>
    %913 = vector.extract_strided_slice %903 {offsets = [2, 0], sizes = [4, 20], strides = [1, 1]} : vector<8x20xf32> to vector<4x20xf32>
    %c2154 = arith.constant 2154 : index
    %c0_270 = arith.constant 0 : index
    %914 = vector.load %arg2[%c2154, %c0_270] : memref<2208x40xf32, #tpu.memory_space<vmem>>, vector<1x20xf32>
    %915 = vector.broadcast %914 : vector<1x20xf32> to vector<4x20xf32>
    %916 = arith.mulf %913, %915 : vector<4x20xf32>
    %917 = arith.addf %912, %916 : vector<4x20xf32>
    %918 = vector.extract_strided_slice %903 {offsets = [3, 0], sizes = [4, 20], strides = [1, 1]} : vector<8x20xf32> to vector<4x20xf32>
    %c2155 = arith.constant 2155 : index
    %c0_271 = arith.constant 0 : index
    %919 = vector.load %arg2[%c2155, %c0_271] : memref<2208x40xf32, #tpu.memory_space<vmem>>, vector<1x20xf32>
    %920 = vector.broadcast %919 : vector<1x20xf32> to vector<4x20xf32>
    %921 = arith.mulf %918, %920 : vector<4x20xf32>
    %922 = arith.addf %917, %921 : vector<4x20xf32>
    %923 = vector.extract_strided_slice %903 {offsets = [4, 0], sizes = [4, 20], strides = [1, 1]} : vector<8x20xf32> to vector<4x20xf32>
    %c2156 = arith.constant 2156 : index
    %c0_272 = arith.constant 0 : index
    %924 = vector.load %arg2[%c2156, %c0_272] : memref<2208x40xf32, #tpu.memory_space<vmem>>, vector<1x20xf32>
    %925 = vector.broadcast %924 : vector<1x20xf32> to vector<4x20xf32>
    %926 = arith.mulf %923, %925 : vector<4x20xf32>
    %927 = arith.addf %922, %926 : vector<4x20xf32>
    %928 = vector.extract_strided_slice %901 {offsets = [1, 0, 0], sizes = [1, 8, 20], strides = [1, 1, 1]} : vector<5x8x20xf32> to vector<1x8x20xf32>
    %929 = vector.shape_cast %928 : vector<1x8x20xf32> to vector<8x20xf32>
    %930 = vector.extract_strided_slice %929 {offsets = [0, 0], sizes = [4, 20], strides = [1, 1]} : vector<8x20xf32> to vector<4x20xf32>
    %c2157 = arith.constant 2157 : index
    %c0_273 = arith.constant 0 : index
    %931 = vector.load %arg2[%c2157, %c0_273] : memref<2208x40xf32, #tpu.memory_space<vmem>>, vector<1x20xf32>
    %932 = vector.broadcast %931 : vector<1x20xf32> to vector<4x20xf32>
    %933 = arith.mulf %930, %932 : vector<4x20xf32>
    %934 = arith.addf %927, %933 : vector<4x20xf32>
    %935 = vector.extract_strided_slice %929 {offsets = [1, 0], sizes = [4, 20], strides = [1, 1]} : vector<8x20xf32> to vector<4x20xf32>
    %c2158 = arith.constant 2158 : index
    %c0_274 = arith.constant 0 : index
    %936 = vector.load %arg2[%c2158, %c0_274] : memref<2208x40xf32, #tpu.memory_space<vmem>>, vector<1x20xf32>
    %937 = vector.broadcast %936 : vector<1x20xf32> to vector<4x20xf32>
    %938 = arith.mulf %935, %937 : vector<4x20xf32>
    %939 = arith.addf %934, %938 : vector<4x20xf32>
    %940 = vector.extract_strided_slice %929 {offsets = [2, 0], sizes = [4, 20], strides = [1, 1]} : vector<8x20xf32> to vector<4x20xf32>
    %c2159 = arith.constant 2159 : index
    %c0_275 = arith.constant 0 : index
    %941 = vector.load %arg2[%c2159, %c0_275] : memref<2208x40xf32, #tpu.memory_space<vmem>>, vector<1x20xf32>
    %942 = vector.broadcast %941 : vector<1x20xf32> to vector<4x20xf32>
    %943 = arith.mulf %940, %942 : vector<4x20xf32>
    %944 = arith.addf %939, %943 : vector<4x20xf32>
    %945 = vector.extract_strided_slice %929 {offsets = [3, 0], sizes = [4, 20], strides = [1, 1]} : vector<8x20xf32> to vector<4x20xf32>
    %c2160 = arith.constant 2160 : index
    %c0_276 = arith.constant 0 : index
    %946 = vector.load %arg2[%c2160, %c0_276] : memref<2208x40xf32, #tpu.memory_space<vmem>>, vector<1x20xf32>
    %947 = vector.broadcast %946 : vector<1x20xf32> to vector<4x20xf32>
    %948 = arith.mulf %945, %947 : vector<4x20xf32>
    %949 = arith.addf %944, %948 : vector<4x20xf32>
    %950 = vector.extract_strided_slice %929 {offsets = [4, 0], sizes = [4, 20], strides = [1, 1]} : vector<8x20xf32> to vector<4x20xf32>
    %c2161 = arith.constant 2161 : index
    %c0_277 = arith.constant 0 : index
    %951 = vector.load %arg2[%c2161, %c0_277] : memref<2208x40xf32, #tpu.memory_space<vmem>>, vector<1x20xf32>
    %952 = vector.broadcast %951 : vector<1x20xf32> to vector<4x20xf32>
    %953 = arith.mulf %950, %952 : vector<4x20xf32>
    %954 = arith.addf %949, %953 : vector<4x20xf32>
    %955 = vector.extract_strided_slice %901 {offsets = [2, 0, 0], sizes = [1, 8, 20], strides = [1, 1, 1]} : vector<5x8x20xf32> to vector<1x8x20xf32>
    %956 = vector.shape_cast %955 : vector<1x8x20xf32> to vector<8x20xf32>
    %957 = vector.extract_strided_slice %956 {offsets = [0, 0], sizes = [4, 20], strides = [1, 1]} : vector<8x20xf32> to vector<4x20xf32>
    %c2162 = arith.constant 2162 : index
    %c0_278 = arith.constant 0 : index
    %958 = vector.load %arg2[%c2162, %c0_278] : memref<2208x40xf32, #tpu.memory_space<vmem>>, vector<1x20xf32>
    %959 = vector.broadcast %958 : vector<1x20xf32> to vector<4x20xf32>
    %960 = arith.mulf %957, %959 : vector<4x20xf32>
    %961 = arith.addf %954, %960 : vector<4x20xf32>
    %962 = vector.extract_strided_slice %956 {offsets = [1, 0], sizes = [4, 20], strides = [1, 1]} : vector<8x20xf32> to vector<4x20xf32>
    %c2163 = arith.constant 2163 : index
    %c0_279 = arith.constant 0 : index
    %963 = vector.load %arg2[%c2163, %c0_279] : memref<2208x40xf32, #tpu.memory_space<vmem>>, vector<1x20xf32>
    %964 = vector.broadcast %963 : vector<1x20xf32> to vector<4x20xf32>
    %965 = arith.mulf %962, %964 : vector<4x20xf32>
    %966 = arith.addf %961, %965 : vector<4x20xf32>
    %967 = vector.extract_strided_slice %956 {offsets = [2, 0], sizes = [4, 20], strides = [1, 1]} : vector<8x20xf32> to vector<4x20xf32>
    %c2164 = arith.constant 2164 : index
    %c0_280 = arith.constant 0 : index
    %968 = vector.load %arg2[%c2164, %c0_280] : memref<2208x40xf32, #tpu.memory_space<vmem>>, vector<1x20xf32>
    %969 = vector.broadcast %968 : vector<1x20xf32> to vector<4x20xf32>
    %970 = arith.mulf %967, %969 : vector<4x20xf32>
    %971 = arith.addf %966, %970 : vector<4x20xf32>
    %972 = vector.extract_strided_slice %956 {offsets = [3, 0], sizes = [4, 20], strides = [1, 1]} : vector<8x20xf32> to vector<4x20xf32>
    %c2165 = arith.constant 2165 : index
    %c0_281 = arith.constant 0 : index
    %973 = vector.load %arg2[%c2165, %c0_281] : memref<2208x40xf32, #tpu.memory_space<vmem>>, vector<1x20xf32>
    %974 = vector.broadcast %973 : vector<1x20xf32> to vector<4x20xf32>
    %975 = arith.mulf %972, %974 : vector<4x20xf32>
    %976 = arith.addf %971, %975 : vector<4x20xf32>
    %977 = vector.extract_strided_slice %956 {offsets = [4, 0], sizes = [4, 20], strides = [1, 1]} : vector<8x20xf32> to vector<4x20xf32>
    %c2166 = arith.constant 2166 : index
    %c0_282 = arith.constant 0 : index
    %978 = vector.load %arg2[%c2166, %c0_282] : memref<2208x40xf32, #tpu.memory_space<vmem>>, vector<1x20xf32>
    %979 = vector.broadcast %978 : vector<1x20xf32> to vector<4x20xf32>
    %980 = arith.mulf %977, %979 : vector<4x20xf32>
    %981 = arith.addf %976, %980 : vector<4x20xf32>
    %982 = vector.extract_strided_slice %901 {offsets = [3, 0, 0], sizes = [1, 8, 20], strides = [1, 1, 1]} : vector<5x8x20xf32> to vector<1x8x20xf32>
    %983 = vector.shape_cast %982 : vector<1x8x20xf32> to vector<8x20xf32>
    %984 = vector.extract_strided_slice %983 {offsets = [0, 0], sizes = [4, 20], strides = [1, 1]} : vector<8x20xf32> to vector<4x20xf32>
    %c2167 = arith.constant 2167 : index
    %c0_283 = arith.constant 0 : index
    %985 = vector.load %arg2[%c2167, %c0_283] : memref<2208x40xf32, #tpu.memory_space<vmem>>, vector<1x20xf32>
    %986 = vector.broadcast %985 : vector<1x20xf32> to vector<4x20xf32>
    %987 = arith.mulf %984, %986 : vector<4x20xf32>
    %988 = arith.addf %981, %987 : vector<4x20xf32>
    %989 = vector.extract_strided_slice %983 {offsets = [1, 0], sizes = [4, 20], strides = [1, 1]} : vector<8x20xf32> to vector<4x20xf32>
    %c2168 = arith.constant 2168 : index
    %c0_284 = arith.constant 0 : index
    %990 = vector.load %arg2[%c2168, %c0_284] : memref<2208x40xf32, #tpu.memory_space<vmem>>, vector<1x20xf32>
    %991 = vector.broadcast %990 : vector<1x20xf32> to vector<4x20xf32>
    %992 = arith.mulf %989, %991 : vector<4x20xf32>
    %993 = arith.addf %988, %992 : vector<4x20xf32>
    %994 = vector.extract_strided_slice %983 {offsets = [2, 0], sizes = [4, 20], strides = [1, 1]} : vector<8x20xf32> to vector<4x20xf32>
    %c2169 = arith.constant 2169 : index
    %c0_285 = arith.constant 0 : index
    %995 = vector.load %arg2[%c2169, %c0_285] : memref<2208x40xf32, #tpu.memory_space<vmem>>, vector<1x20xf32>
    %996 = vector.broadcast %995 : vector<1x20xf32> to vector<4x20xf32>
    %997 = arith.mulf %994, %996 : vector<4x20xf32>
    %998 = arith.addf %993, %997 : vector<4x20xf32>
    %999 = vector.extract_strided_slice %983 {offsets = [3, 0], sizes = [4, 20], strides = [1, 1]} : vector<8x20xf32> to vector<4x20xf32>
    %c2170 = arith.constant 2170 : index
    %c0_286 = arith.constant 0 : index
    %1000 = vector.load %arg2[%c2170, %c0_286] : memref<2208x40xf32, #tpu.memory_space<vmem>>, vector<1x20xf32>
    %1001 = vector.broadcast %1000 : vector<1x20xf32> to vector<4x20xf32>
    %1002 = arith.mulf %999, %1001 : vector<4x20xf32>
    %1003 = arith.addf %998, %1002 : vector<4x20xf32>
    %1004 = vector.extract_strided_slice %983 {offsets = [4, 0], sizes = [4, 20], strides = [1, 1]} : vector<8x20xf32> to vector<4x20xf32>
    %c2171 = arith.constant 2171 : index
    %c0_287 = arith.constant 0 : index
    %1005 = vector.load %arg2[%c2171, %c0_287] : memref<2208x40xf32, #tpu.memory_space<vmem>>, vector<1x20xf32>
    %1006 = vector.broadcast %1005 : vector<1x20xf32> to vector<4x20xf32>
    %1007 = arith.mulf %1004, %1006 : vector<4x20xf32>
    %1008 = arith.addf %1003, %1007 : vector<4x20xf32>
    %1009 = vector.extract_strided_slice %901 {offsets = [4, 0, 0], sizes = [1, 8, 20], strides = [1, 1, 1]} : vector<5x8x20xf32> to vector<1x8x20xf32>
    %1010 = vector.shape_cast %1009 : vector<1x8x20xf32> to vector<8x20xf32>
    %1011 = vector.extract_strided_slice %1010 {offsets = [0, 0], sizes = [4, 20], strides = [1, 1]} : vector<8x20xf32> to vector<4x20xf32>
    %c2172 = arith.constant 2172 : index
    %c0_288 = arith.constant 0 : index
    %1012 = vector.load %arg2[%c2172, %c0_288] : memref<2208x40xf32, #tpu.memory_space<vmem>>, vector<1x20xf32>
    %1013 = vector.broadcast %1012 : vector<1x20xf32> to vector<4x20xf32>
    %1014 = arith.mulf %1011, %1013 : vector<4x20xf32>
    %1015 = arith.addf %1008, %1014 : vector<4x20xf32>
    %1016 = vector.extract_strided_slice %1010 {offsets = [1, 0], sizes = [4, 20], strides = [1, 1]} : vector<8x20xf32> to vector<4x20xf32>
    %c2173 = arith.constant 2173 : index
    %c0_289 = arith.constant 0 : index
    %1017 = vector.load %arg2[%c2173, %c0_289] : memref<2208x40xf32, #tpu.memory_space<vmem>>, vector<1x20xf32>
    %1018 = vector.broadcast %1017 : vector<1x20xf32> to vector<4x20xf32>
    %1019 = arith.mulf %1016, %1018 : vector<4x20xf32>
    %1020 = arith.addf %1015, %1019 : vector<4x20xf32>
    %1021 = vector.extract_strided_slice %1010 {offsets = [2, 0], sizes = [4, 20], strides = [1, 1]} : vector<8x20xf32> to vector<4x20xf32>
    %c2174 = arith.constant 2174 : index
    %c0_290 = arith.constant 0 : index
    %1022 = vector.load %arg2[%c2174, %c0_290] : memref<2208x40xf32, #tpu.memory_space<vmem>>, vector<1x20xf32>
    %1023 = vector.broadcast %1022 : vector<1x20xf32> to vector<4x20xf32>
    %1024 = arith.mulf %1021, %1023 : vector<4x20xf32>
    %1025 = arith.addf %1020, %1024 : vector<4x20xf32>
    %1026 = vector.extract_strided_slice %1010 {offsets = [3, 0], sizes = [4, 20], strides = [1, 1]} : vector<8x20xf32> to vector<4x20xf32>
    %c2175 = arith.constant 2175 : index
    %c0_291 = arith.constant 0 : index
    %1027 = vector.load %arg2[%c2175, %c0_291] : memref<2208x40xf32, #tpu.memory_space<vmem>>, vector<1x20xf32>
    %1028 = vector.broadcast %1027 : vector<1x20xf32> to vector<4x20xf32>
    %1029 = arith.mulf %1026, %1028 : vector<4x20xf32>
    %1030 = arith.addf %1025, %1029 : vector<4x20xf32>
    %1031 = vector.extract_strided_slice %1010 {offsets = [4, 0], sizes = [4, 20], strides = [1, 1]} : vector<8x20xf32> to vector<4x20xf32>
    %c2176 = arith.constant 2176 : index
    %c0_292 = arith.constant 0 : index
    %1032 = vector.load %arg2[%c2176, %c0_292] : memref<2208x40xf32, #tpu.memory_space<vmem>>, vector<1x20xf32>
    %1033 = vector.broadcast %1032 : vector<1x20xf32> to vector<4x20xf32>
    %1034 = arith.mulf %1031, %1033 : vector<4x20xf32>
    %1035 = arith.addf %1030, %1034 : vector<4x20xf32>
    %c2184 = arith.constant 2184 : index
    %c0_293 = arith.constant 0 : index
    %1036 = vector.load %arg2[%c2184, %c0_293] : memref<2208x40xf32, #tpu.memory_space<vmem>>, vector<1x20xf32>
    %1037 = vector.broadcast %1036 : vector<1x20xf32> to vector<4x20xf32>
    %1038 = arith.addf %1035, %1037 : vector<4x20xf32>
    %c296 = arith.constant 296 : index
    %c0_294 = arith.constant 0 : index
    %1039 = vector.load %arg3[%c296, %c0_294] : memref<352x40xf32, #tpu.memory_space<vmem>>, vector<20x32xf32>
    %cst_295 = arith.constant dense<0.000000e+00> : vector<4x32xf32>
    %1040 = tpu.matmul %1038, %1039, %cst_295 {dimension_numbers = #tpu.dot_dimension_numbers<[1], [0], [0], [1], [0, 0, 1, 1], [], []>} : vector<4x20xf32>, vector<20x32xf32>, vector<4x32xf32> -> vector<4x32xf32>
    %c2192 = arith.constant 2192 : index
    %c0_296 = arith.constant 0 : index
    %1041 = vector.load %arg2[%c2192, %c0_296] : memref<2208x40xf32, #tpu.memory_space<vmem>>, vector<1x32xf32>
    %1042 = vector.broadcast %1041 : vector<1x32xf32> to vector<4x32xf32>
    %1043 = arith.addf %1040, %1042 : vector<4x32xf32>
    %cst_297 = arith.constant dense<0.000000e+00> : vector<32xf32>
    %1044 = vector.multi_reduction <add>, %1043, %cst_297 [0] : vector<4x32xf32> to vector<32xf32>
    %1045 = vector.shape_cast %1044 : vector<32xf32> to vector<1x32xf32>
    %cst_298 = arith.constant 4.000000e+00 : f32
    %1046 = vector.broadcast %cst_298 : f32 to vector<1x32xf32>
    %1047 = arith.divf %1045, %1046 : vector<1x32xf32>
    %c320 = arith.constant 320 : index
    %c0_299 = arith.constant 0 : index
    %1048 = vector.load %arg3[%c320, %c0_299] : memref<352x40xf32, #tpu.memory_space<vmem>>, vector<32x35xf32>
    %cst_300 = arith.constant dense<0.000000e+00> : vector<1x35xf32>
    %1049 = tpu.matmul %1047, %1048, %cst_300 {dimension_numbers = #tpu.dot_dimension_numbers<[1], [0], [0], [1], [0, 0, 1, 1], [], []>} : vector<1x32xf32>, vector<32x35xf32>, vector<1x35xf32> -> vector<1x35xf32>
    %c2200 = arith.constant 2200 : index
    %c0_301 = arith.constant 0 : index
    %1050 = vector.load %arg2[%c2200, %c0_301] : memref<2208x40xf32, #tpu.memory_space<vmem>>, vector<1x35xf32>
    %1051 = arith.addf %1049, %1050 : vector<1x35xf32>
    %cst_302 = arith.constant dense<0xFF800000> : vector<1xf32>
    %1052 = vector.multi_reduction <maximumf>, %1051, %cst_302 [1] : vector<1x35xf32> to vector<1xf32>
    %1053 = vector.shape_cast %1052 : vector<1xf32> to vector<1x1xf32>
    %1054 = vector.broadcast %1053 : vector<1x1xf32> to vector<1x35xf32>
    %1055 = arith.subf %1051, %1054 : vector<1x35xf32>
    %1056 = math.exp %1055 : vector<1x35xf32>
    %cst_303 = arith.constant dense<0.000000e+00> : vector<1xf32>
    %1057 = vector.multi_reduction <add>, %1056, %cst_303 [1] : vector<1x35xf32> to vector<1xf32>
    %1058 = vector.shape_cast %1057 : vector<1xf32> to vector<1x1xf32>
    %1059 = math.log %1058 : vector<1x1xf32>
    %1060 = vector.broadcast %1059 : vector<1x1xf32> to vector<1x35xf32>
    %1061 = arith.subf %1055, %1060 : vector<1x35xf32>
    %c0_304 = arith.constant 0 : index
    %c0_305 = arith.constant 0 : index
    %c0_306 = arith.constant 0 : index
    %1062 = vector.load %arg4[%c0_304, %c0_305, %c0_306] : memref<1x1x35xf32, #tpu.memory_space<vmem>>, vector<1x1x35xf32>
    %1063 = vector.shape_cast %1062 : vector<1x1x35xf32> to vector<1x35xf32>
    %1064 = vector.shape_cast %1061 : vector<1x35xf32> to vector<1x1x35xf32>
    tpu.vector_store %arg4[%c0_304, %c0_305, %c0_306], %1064 {strides = array<i32>} : memref<1x1x35xf32, #tpu.memory_space<vmem>>, vector<1x1x35xf32>,
    return
  }
  func.func @transform_0(%arg0: i32) -> (i32, i32, i32) {
    %c0_i32 = arith.constant 0 : i32
    %c0_i32_0 = arith.constant 0 : i32
    %c0_i32_1 = arith.constant 0 : i32
    return %arg0, %c0_i32, %c0_i32_0 : i32, i32, i32
  }
  func.func @transform_1(%arg0: i32) -> (i32, i32) {
    %c0_i32 = arith.constant 0 : i32
    %c0_i32_0 = arith.constant 0 : i32
    %c0_i32_1 = arith.constant 0 : i32
    return %c0_i32, %c0_i32_0 : i32, i32
  }
  func.func @transform_2(%arg0: i32) -> (i32, i32) {
    %c0_i32 = arith.constant 0 : i32
    %c0_i32_0 = arith.constant 0 : i32
    %c0_i32_1 = arith.constant 0 : i32
    return %c0_i32, %c0_i32_0 : i32, i32
  }
  func.func @transform_3(%arg0: i32) -> (i32, i32, i32) {
    %c0_i32 = arith.constant 0 : i32
    %c0_i32_0 = arith.constant 0 : i32
    %c0_i32_1 = arith.constant 0 : i32
    return %arg0, %c0_i32, %c0_i32_0 : i32, i32, i32
  }
}

</mosaic_0001>

<llo_original>
// kernel: forward.1
$region0: #{forward.1}
  #allocation0 [shape = 'u32[]', space=smem, size = 0x4, offset = 0x4, fixed_abs, tag = 'smem constant byte address 0x4 - core index']
  #allocation1 [shape = 'u32[144,128]{1,0:T(1,128)}', space=vmem, size = 0x12000, scoped, tag = 'internal scratch']
  %s0 = inlined_call_operand.vmem [shape: f32[2,160,25], index: 0, kind: input, shape index: {}]
  %s1 = inlined_call_operand.vmem [shape: f32[2208,40], index: 1, kind: input, shape index: {}]
  %s2 = inlined_call_operand.vmem [shape: f32[352,40], index: 2, kind: input, shape index: {}]
  %s3 = inlined_call_operand.hbm [shape: f32[2,1,35], index: 3, kind: output, shape index: {}]
  %s4 = sld [smem:[#allocation0]]
  $region45: #{forward.1} parent=0
    _
  %s6 = ssub.s32 1, %s4
  %s7 = scalar_select 0, %s6, %s4
  $region1: #{forward.1} parent=0
    #allocation2 [shape = 'u8[1024]{0}', space=vmem, size = 0x400, scoped, tag = 'output window, operand 0']
    #allocation3 [shape = 's32[2]{0}', space=sflag, size = 0x8, scoped, tag = 'scoped memory for forward.1']
    %8 = vsyncpa [#allocation3], 0
    %s9 = scalar_lea.sflag [#allocation3], 1
    %10 = vsyncpa %s9, 0
    loop: start=0, step=1, limit=4
    $region2: #{forward.1} parent=1 // loop_pre_header
      _
    $region3: #{forward.1} parent=1 // loop_header
      %s12 = sphi 0, %s16
      %p13 = scmp.ge.s32.totalorder %s12, 4
      %s22 = sphi 0, %s24
      %s25 = sphi 0, %s22
      %s26 = sphi 0, %s25
      %s42 = sphi 0, %s26
      %s46 = sphi 0, %s46
      %s48 = sphi 0, %s46
      %s49 = sphi 0, %s48
      %s63 = sphi 0, %s49
      %s67 = sphi 0, %s67
      %s69 = sphi 0, %s67
      %s70 = sphi 0, %s69
      %s84 = sphi 0, %s70
      %s90 = sphi 0, %s92
      %s93 = sphi 0, %s90
      %s94 = sphi 0, %s93
      %s110 = sphi 0, %s94
    $region4: #{forward.1} parent=1 // loop_header_branch
      %15 = sbr.rel (%p13) target = $region8
    $region5: #{forward.1} parent=1 // loop_body
      %s17 = ssub.s32 %s12, 1
      %s18 = ssub.s32 %s12, 2
      %s19 = sadd.s32 %s12, 1
      %s20 = ssub.s32 %s12, %s19
      %p21 = scmp.eq.s32.totalorder %s20, 0
      %s23 = sadd.s32 %s22, 1
      %s24 = scalar_select %p21, %s22, %s23
      %p27 = pneg %p21
      %p28 = scmp.eq.s32.totalorder %s12, 1
      %p29 = por %p27, %p28
      %p30 = scmp.ne.s32.totalorder %s22, %s25
      %p31 = scmp.eq.s32.totalorder %s12, 0
      %p32 = por %p30, %p31
      %p33 = scmp.ne.s32.totalorder %s22, %s25
      %p34 = scmp.eq.s32.totalorder %s17, 1
      %p35 = por %p33, %p34
      %p36 = scmp.ne.s32.totalorder %s25, %s26
      %p37 = scmp.eq.s32.totalorder %s17, 0
      %p38 = por %p36, %p37
      %p39 = scmp.ne.s32.totalorder %s25, %s26
      %p40 = scmp.eq.s32.totalorder %s18, 1
      %p41 = por %p39, %p40
      %p43 = scmp.ne.s32.totalorder %s26, %s42
      %p44 = scmp.eq.s32.totalorder %s18, 0
      %p45 = por %p43, %p44
      %s47 = sadd.s32 %s46, 1
      %p50 = scmp.eq.s32.totalorder %s12, 1
      %p51 = scmp.ne.s32.totalorder %s46, %s48
      %p52 = scmp.eq.s32.totalorder %s12, 0
      %p53 = por %p51, %p52
      %p54 = scmp.ne.s32.totalorder %s46, %s48
      %p55 = scmp.eq.s32.totalorder %s17, 1
      %p56 = por %p54, %p55
      %p57 = scmp.ne.s32.totalorder %s48, %s49
      %p58 = scmp.eq.s32.totalorder %s17, 0
      %p59 = por %p57, %p58
      %p60 = scmp.ne.s32.totalorder %s48, %s49
      %p61 = scmp.eq.s32.totalorder %s18, 1
      %p62 = por %p60, %p61
      %p64 = scmp.ne.s32.totalorder %s49, %s63
      %p65 = scmp.eq.s32.totalorder %s18, 0
      %p66 = por %p64, %p65
      %s68 = sadd.s32 %s67, 1
      %p71 = scmp.eq.s32.totalorder %s12, 1
      %p72 = scmp.ne.s32.totalorder %s67, %s69
      %p73 = scmp.eq.s32.totalorder %s12, 0
      %p74 = por %p72, %p73
      %p75 = scmp.ne.s32.totalorder %s67, %s69
      %p76 = scmp.eq.s32.totalorder %s17, 1
      %p77 = por %p75, %p76
      %p78 = scmp.ne.s32.totalorder %s69, %s70
      %p79 = scmp.eq.s32.totalorder %s17, 0
      %p80 = por %p78, %p79
      %p81 = scmp.ne.s32.totalorder %s69, %s70
      %p82 = scmp.eq.s32.totalorder %s18, 1
      %p83 = por %p81, %p82
      %p85 = scmp.ne.s32.totalorder %s70, %s84
      %p86 = scmp.eq.s32.totalorder %s18, 0
      %p87 = por %p85, %p86
      %s88 = ssub.s32 %s12, %s19
      %p89 = scmp.eq.s32.totalorder %s88, 0
      %s91 = sadd.s32 %s90, 1
      %s92 = scalar_select %p89, %s90, %s91
      %p95 = pneg %p89
      %p96 = scmp.eq.s32.totalorder %s12, 1
      %p97 = por %p95, %p96
      %p98 = scmp.ne.s32.totalorder %s90, %s93
      %p99 = scmp.eq.s32.totalorder %s12, 0
      %p100 = por %p98, %p99
      %p101 = scmp.ne.s32.totalorder %s90, %s93
      %p102 = scmp.eq.s32.totalorder %s17, 1
      %p103 = por %p101, %p102
      %p104 = scmp.ne.s32.totalorder %s93, %s94
      %p105 = scmp.eq.s32.totalorder %s17, 0
      %p106 = por %p104, %p105
      %p107 = scmp.ne.s32.totalorder %s93, %s94
      %p108 = scmp.eq.s32.totalorder %s18, 1
      %p109 = por %p107, %p108
      %p111 = scmp.ne.s32.totalorder %s94, %s110
      %p112 = scmp.eq.s32.totalorder %s18, 0
      %p113 = por %p111, %p112
      %p114 = scmp.le.s32.totalorder 1, %s12
      %p115 = scmp.lt.s32.totalorder %s12, 3
      %p116 = pnand %p114, %p115
      %p117 = pneg %p116
      // Predicated region
      $region9: #{forward.1} parent=5 // pred_check
        _
      $region10: #{forward.1} parent=5 // pred_check_branch
        %119 = sbr.rel (%p116) target = $region12
      $region11: #{forward.1} parent=5 // pred_region
        %s120 = ssub.s32 %s12, 1
        // Predicated region
        $region13: #{forward.1} parent=11 // pred_check
          %p121 = pneg %p59
        $region14: #{forward.1} parent=11 // pred_check_branch
          %123 = sbr.rel (%p121) target = $region16
        $region15: #{forward.1} parent=11 // pred_region
          _
        $region16: #{forward.1} parent=11 // pred_fallthru
          _
        // Predicated region
        $region17: #{forward.1} parent=11 // pred_check
          %p124 = pneg %p80
        $region18: #{forward.1} parent=11 // pred_check_branch
          %126 = sbr.rel (%p124) target = $region20
        $region19: #{forward.1} parent=11 // pred_region
          _
        $region20: #{forward.1} parent=11 // pred_fallthru
          _
      $region12: #{forward.1} parent=5 // pred_fallthru
        _
      %p127 = scmp.lt.s32.totalorder %s12, 2
      // Predicated region
      $region21: #{forward.1} parent=5 // pred_check
        %p128 = pneg %p127
      $region22: #{forward.1} parent=5 // pred_check_branch
        %130 = sbr.rel (%p128) target = $region24
      $region23: #{forward.1} parent=5 // pred_region
        // Predicated region
        $region25: #{forward.1} parent=23 // pred_check
          %p131 = pneg %p32
        $region26: #{forward.1} parent=23 // pred_check_branch
          %133 = sbr.rel (%p131) target = $region28
        $region27: #{forward.1} parent=23 // pred_region
          %p134 = scmp.lt.s32.totalorder %s12, 1
          %s135 = scalar_select %p134, %s12, 1
          %s136 = smul.addr %s135, 20
          %s137 = smul.addr %s136, 8
          %s138 = scalar_lea.vmem %s0, %s137
        $region28: #{forward.1} parent=23 // pred_fallthru
          _
      $region24: #{forward.1} parent=5 // pred_fallthru
        _
      %p139 = scmp.le.s32.totalorder 1, %s12
      %p140 = scmp.lt.s32.totalorder %s12, 3
      %p141 = pnand %p139, %p140
      %p142 = pneg %p141
      // Predicated region
      $region29: #{forward.1} parent=5 // pred_check
        _
      $region30: #{forward.1} parent=5 // pred_check_branch
        %144 = sbr.rel (%p141) target = $region32
      $region31: #{forward.1} parent=5 // pred_region
        %s145 = ssub.s32 %s12, 1
        %p146 = scmp.lt.s32.totalorder %s17, 1
        %s147 = scalar_select %p146, %s17, 1
        %s148 = smul.addr %s147, 20
        %s149 = smul.addr %s148, 8
        %s150 = scalar_lea.vmem %s0, %s149
        %p151 = pneg %p38
        %p152 = pneg %p35
        %p153 = pneg %p59
        %p154 = pneg %p56
        %p155 = pneg %p80
        %p156 = pneg %p77
        %p157 = pneg %p106
        %p158 = pneg %p103
        %s159 = sand.u32 %s93, 1
        %s160 = scalar_lea.sflag [#allocation3], %s159
        %s161 = sand.u32 %s93, 1
        %s162 = scalar_lea.vmem [#allocation2], %s161
        %p163 = scmp.lt.s32.totalorder %s17, 1
        %s164 = scalar_select %p163, %s17, 1
        %s165 = smul.addr %s164, 20
        %s166 = smul.addr %s165, 8
        %s167 = scalar_lea.vmem %s0, %s166
        %v168 = vld [vmem:[%s167] sm:$0xff]
        %v169 = vld [vmem:[%s167 + $0x8] sm:$0xff]
        %v170 = vld [vmem:[%s167 + $0x10] sm:$0xff]
        %v171 = vld [vmem:[%s167 + $0x18] sm:$0xff]
        %v172 = vld [vmem:[%s167 + $0x20] sm:$0xff]
        %v173 = vld [vmem:[%s167 + $0x28] sm:$0xff]
        %v174 = vld [vmem:[%s167 + $0x30] sm:$0xff]
        %v175 = vld [vmem:[%s167 + $0x38] sm:$0xff]
        %v176 = vld [vmem:[%s167 + $0x40] sm:$0xff]
        %v177 = vld [vmem:[%s167 + $0x48] sm:$0xff]
        %v178 = vld [vmem:[%s167 + $0x50] sm:$0xff]
        %v179 = vld [vmem:[%s167 + $0x58] sm:$0xff]
        %v180 = vld [vmem:[%s167 + $0x60] sm:$0xff]
        %v181 = vld [vmem:[%s167 + $0x68] sm:$0xff]
        %v182 = vld [vmem:[%s167 + $0x70] sm:$0xff]
        %v183 = vld [vmem:[%s167 + $0x78] sm:$0xff]
        %v184 = vld [vmem:[%s167 + $0x80] sm:$0xff]
        %v185 = vld [vmem:[%s167 + $0x88] sm:$0xff]
        %v186 = vld [vmem:[%s167 + $0x90] sm:$0xff]
        %v187 = vld [vmem:[%s167 + $0x98] sm:$0xff]
        %v188 = vld [vmem:[%s2 + $0x108] sm:$0xff]
        %v189 = vld [vmem:[%s2 + $0x110] sm:$0xff]
        %v190 = vld [vmem:[%s2 + $0x118] sm:$0xff]
        %v191 = vld [vmem:[%s2 + $0x120] sm:$0x1]
        %v192 = vld [vmem:[%s1 + $0x860] sm:$0x1]
        %v193 = vlaneseq
        %v194 = vshrl.u32 %v193, 7
        %v195 = vsub.s32 0, %v194
        %v196 = vrot.slane %v192, %v195
        %vm197 = vcmask 203776
        %v199 = vsel %vm197, %v168, 0
        %v202 = vsel %vm197, %v169, 0
        %v205 = vsel %vm197, %v170, 0
        %v208 = vsel %vm197, %v171, 0
        %v211 = vsel %vm197, %v172, 0
        %v214 = vsel %vm197, %v173, 0
        %v217 = vsel %vm197, %v174, 0
        %v220 = vsel %vm197, %v175, 0
        %v223 = vsel %vm197, %v176, 0
        %v226 = vsel %vm197, %v177, 0
        %v229 = vsel %vm197, %v178, 0
        %v232 = vsel %vm197, %v179, 0
        %v235 = vsel %vm197, %v180, 0
        %v238 = vsel %vm197, %v181, 0
        %v241 = vsel %vm197, %v182, 0
        %v244 = vsel %vm197, %v183, 0
        %v247 = vsel %vm197, %v184, 0
        %v250 = vsel %vm197, %v185, 0
        %v253 = vsel %vm197, %v186, 0
        %v256 = vsel %vm197, %v187, 0
        %vm258 = vcmask 1040384
        %v260 = vsel %vm258, %v191, 0
        %262 = vmatprep.subr.mxu0 0.0
        %263 = vmatpush1.msra.mxu0 0.0
        %264 = vmatprep.subr.mxu0 0.0
        %265 = vmatpush1.msra.mxu0 0.0
        %266 = vmatprep.subr.mxu0 0.0
        %267 = vmatpush1.msra.mxu0 0.0
        %268 = vmatprep.subr.mxu0 0.0
        %269 = vmatpush1.msra.mxu0 0.0
        %270 = vmatprep.subr.mxu0 0.0
        %271 = vmatpush1.msra.mxu0 0.0
        %272 = vmatprep.subr.mxu0 0.0
        %273 = vmatpush1.msra.mxu0 0.0
        %274 = vmatprep.subr.mxu0 0.0
        %275 = vmatpush1.msra.mxu0 0.0
        %276 = vmatprep.subr.mxu0 0.0
        %277 = vmatpush1.msra.mxu0 0.0
        %278 = vmatprep.subr.mxu0 0.0
        %279 = vmatpush1.msra.mxu0 0.0
        %280 = vmatprep.subr.mxu0 0.0
        %281 = vmatpush1.msra.mxu0 0.0
        %282 = vmatprep.subr.mxu0 0.0
        %283 = vmatpush1.msra.mxu0 0.0
        %284 = vmatprep.subr.mxu0 0.0
        %285 = vmatpush1.msra.mxu0 0.0
        %286 = vmatprep.subr.mxu0 0.0
        %287 = vmatpush1.msra.mxu0 %v260
        %288 = vmatprep.subr.mxu0 0.0
        %289 = vmatpush1.msra.mxu0 %v190
        %290 = vmatprep.subr.mxu0 0.0
        %291 = vmatpush1.msra.mxu0 %v189
        %292 = vmatprep.subr.mxu0 0.0
        %293 = vmatpush1.msra.mxu0 %v188
        %294 = vmatprep.subr.mxu0 0.0
        %295 = vmatpush2.msra.mxu0 0.0
        %296 = vmatprep.subr.mxu0 0.0
        %297 = vmatpush2.msra.mxu0 0.0
        %298 = vmatprep.subr.mxu0 0.0
        %299 = vmatpush2.msra.mxu0 0.0
        %300 = vmatprep.subr.mxu0 0.0
        %301 = vmatpush2.msra.mxu0 0.0
        %302 = vmatprep.subr.mxu0 0.0
        %303 = vmatpush2.msra.mxu0 0.0
        %304 = vmatprep.subr.mxu0 0.0
        %305 = vmatpush2.msra.mxu0 0.0
        %306 = vmatprep.subr.mxu0 0.0
        %307 = vmatpush2.msra.mxu0 0.0
        %308 = vmatprep.subr.mxu0 0.0
        %309 = vmatpush2.msra.mxu0 0.0
        %310 = vmatprep.subr.mxu0 0.0
        %311 = vmatpush2.msra.mxu0 0.0
        %312 = vmatprep.subr.mxu0 0.0
        %313 = vmatpush2.msra.mxu0 0.0
        %314 = vmatprep.subr.mxu0 0.0
        %315 = vmatpush2.msra.mxu0 0.0
        %316 = vmatprep.subr.mxu0 0.0
        %317 = vmatpush2.msra.mxu0 0.0
        %318 = vmatprep.subr.mxu0 0.0
        %319 = vmatpush2.msra.mxu0 0.0
        %320 = vmatprep.subr.mxu0 0.0
        %321 = vmatpush2.msra.mxu0 0.0
        %322 = vmatprep.subr.mxu0 0.0
        %323 = vmatpush2.msra.mxu0 0.0
        %324 = vmatprep.subr.mxu0 0.0
        %325 = vmatpush2.msra.mxu0 0.0
        %326 = vmatprep.mubr.f32.mxu0 0.0
        %327 = vmatmul.mubr.f32.gmra.mxu0 %v199
        %v328 = vpop.f32.mrf.mxu0
        %v329 = vadd.f32 %v196, %v328
        %v330 = vpop.f32.mrf.mxu0
        %331 = vmatprep.mubr.f32.mxu0 0.0
        %332 = vmatmul.mubr.f32.gmra.mxu0 %v202
        %v333 = vpop.f32.mrf.mxu0
        %v334 = vadd.f32 %v196, %v333
        %v335 = vpop.f32.mrf.mxu0
        %336 = vmatprep.mubr.f32.mxu0 0.0
        %337 = vmatmul.mubr.f32.gmra.mxu0 %v205
        %v338 = vpop.f32.mrf.mxu0
        %v339 = vadd.f32 %v196, %v338
        %v340 = vpop.f32.mrf.mxu0
        %341 = vmatprep.mubr.f32.mxu0 0.0
        %342 = vmatmul.mubr.f32.gmra.mxu0 %v208
        %v343 = vpop.f32.mrf.mxu0
        %v344 = vadd.f32 %v196, %v343
        %v345 = vpop.f32.mrf.mxu0
        %346 = vmatprep.mubr.f32.mxu0 0.0
        %347 = vmatmul.mubr.f32.gmra.mxu0 %v211
        %v348 = vpop.f32.mrf.mxu0
        %v349 = vadd.f32 %v196, %v348
        %v350 = vpop.f32.mrf.mxu0
        %351 = vmatprep.mubr.f32.mxu0 0.0
        %352 = vmatmul.mubr.f32.gmra.mxu0 %v214
        %v353 = vpop.f32.mrf.mxu0
        %v354 = vadd.f32 %v196, %v353
        %v355 = vpop.f32.mrf.mxu0
        %356 = vmatprep.mubr.f32.mxu0 0.0
        %357 = vmatmul.mubr.f32.gmra.mxu0 %v217
        %v358 = vpop.f32.mrf.mxu0
        %v359 = vadd.f32 %v196, %v358
        %v360 = vpop.f32.mrf.mxu0
        %361 = vmatprep.mubr.f32.mxu0 0.0
        %362 = vmatmul.mubr.f32.gmra.mxu0 %v220
        %v363 = vpop.f32.mrf.mxu0
        %v364 = vadd.f32 %v196, %v363
        %v365 = vpop.f32.mrf.mxu0
        %366 = vmatprep.mubr.f32.mxu0 0.0
        %367 = vmatmul.mubr.f32.gmra.mxu0 %v223
        %v368 = vpop.f32.mrf.mxu0
        %v369 = vadd.f32 %v196, %v368
        %v370 = vpop.f32.mrf.mxu0
        %371 = vmatprep.mubr.f32.mxu0 0.0
        %372 = vmatmul.mubr.f32.gmra.mxu0 %v226
        %v373 = vpop.f32.mrf.mxu0
        %v374 = vadd.f32 %v196, %v373
        %v375 = vpop.f32.mrf.mxu0
        %376 = vmatprep.mubr.f32.mxu0 0.0
        %377 = vmatmul.mubr.f32.gmra.mxu0 %v229
        %v378 = vpop.f32.mrf.mxu0
        %v379 = vadd.f32 %v196, %v378
        %v380 = vpop.f32.mrf.mxu0
        %381 = vmatprep.mubr.f32.mxu0 0.0
        %382 = vmatmul.mubr.f32.gmra.mxu0 %v232
        %v383 = vpop.f32.mrf.mxu0
        %v384 = vadd.f32 %v196, %v383
        %v385 = vpop.f32.mrf.mxu0
        %386 = vmatprep.mubr.f32.mxu0 0.0
        %387 = vmatmul.mubr.f32.gmra.mxu0 %v235
        %v388 = vpop.f32.mrf.mxu0
        %v389 = vadd.f32 %v196, %v388
        %v390 = vpop.f32.mrf.mxu0
        %391 = vmatprep.mubr.f32.mxu0 0.0
        %392 = vmatmul.mubr.f32.gmra.mxu0 %v238
        %v393 = vpop.f32.mrf.mxu0
        %v394 = vadd.f32 %v196, %v393
        %v395 = vpop.f32.mrf.mxu0
        %396 = vmatprep.mubr.f32.mxu0 0.0
        %397 = vmatmul.mubr.f32.gmra.mxu0 %v241
        %v398 = vpop.f32.mrf.mxu0
        %v399 = vadd.f32 %v196, %v398
        %v400 = vpop.f32.mrf.mxu0
        %401 = vmatprep.mubr.f32.mxu0 0.0
        %402 = vmatmul.mubr.f32.gmra.mxu0 %v244
        %v403 = vpop.f32.mrf.mxu0
        %v404 = vadd.f32 %v196, %v403
        %v405 = vpop.f32.mrf.mxu0
        %406 = vmatprep.mubr.f32.mxu0 0.0
        %407 = vmatmul.mubr.f32.gmra.mxu0 %v247
        %v408 = vpop.f32.mrf.mxu0
        %v409 = vadd.f32 %v196, %v408
        %v410 = vpop.f32.mrf.mxu0
        %411 = vmatprep.mubr.f32.mxu0 0.0
        %412 = vmatmul.mubr.f32.gmra.mxu0 %v250
        %v413 = vpop.f32.mrf.mxu0
        %v414 = vadd.f32 %v196, %v413
        %v415 = vpop.f32.mrf.mxu0
        %416 = vmatprep.mubr.f32.mxu0 0.0
        %417 = vmatmul.mubr.f32.gmra.mxu0 %v253
        %v418 = vpop.f32.mrf.mxu0
        %v419 = vadd.f32 %v196, %v418
        %v420 = vpop.f32.mrf.mxu0
        %421 = vmatprep.mubr.f32.mxu0 0.0
        %422 = vmatmul.mubr.f32.gmra.mxu0 %v256
        %v423 = vpop.f32.mrf.mxu0
        %v424 = vadd.f32 %v196, %v423
        %v425 = vpop.f32.mrf.mxu0
        %426 = vdwg.mxu0
        %v427 = vld [vmem:[%s2] sm:$0xff]
        %v428 = vld [vmem:[%s2 + $0x8] sm:$0xff]
        %vm429 = vcmask 130048
        %v431 = vsel %vm429, %v329, 0
        %v434 = vsel %vm429, %v334, 0
        %v437 = vsel %vm429, %v339, 0
        %v440 = vsel %vm429, %v344, 0
        %v443 = vsel %vm429, %v349, 0
        %v446 = vsel %vm429, %v354, 0
        %v449 = vsel %vm429, %v359, 0
        %v452 = vsel %vm429, %v364, 0
        %v455 = vsel %vm429, %v369, 0
        %v458 = vsel %vm429, %v374, 0
        %v461 = vsel %vm429, %v379, 0
        %v464 = vsel %vm429, %v384, 0
        %v467 = vsel %vm429, %v389, 0
        %v470 = vsel %vm429, %v394, 0
        %v473 = vsel %vm429, %v399, 0
        %v476 = vsel %vm429, %v404, 0
        %v479 = vsel %vm429, %v409, 0
        %v482 = vsel %vm429, %v414, 0
        %v485 = vsel %vm429, %v419, 0
        %v488 = vsel %vm429, %v424, 0
        %490 = vmatprep.subr.mxu0 0.0
        %491 = vmatpush1.msra.mxu0 0.0
        %492 = vmatprep.subr.mxu0 0.0
        %493 = vmatpush1.msra.mxu0 0.0
        %494 = vmatprep.subr.mxu0 0.0
        %495 = vmatpush1.msra.mxu0 0.0
        %496 = vmatprep.subr.mxu0 0.0
        %497 = vmatpush1.msra.mxu0 0.0
        %498 = vmatprep.subr.mxu0 0.0
        %499 = vmatpush1.msra.mxu0 0.0
        %500 = vmatprep.subr.mxu0 0.0
        %501 = vmatpush1.msra.mxu0 0.0
        %502 = vmatprep.subr.mxu0 0.0
        %503 = vmatpush1.msra.mxu0 0.0
        %504 = vmatprep.subr.mxu0 0.0
        %505 = vmatpush1.msra.mxu0 0.0
        %506 = vmatprep.subr.mxu0 0.0
        %507 = vmatpush1.msra.mxu0 0.0
        %508 = vmatprep.subr.mxu0 0.0
        %509 = vmatpush1.msra.mxu0 0.0
        %510 = vmatprep.subr.mxu0 0.0
        %511 = vmatpush1.msra.mxu0 0.0
        %512 = vmatprep.subr.mxu0 0.0
        %513 = vmatpush1.msra.mxu0 0.0
        %514 = vmatprep.subr.mxu0 0.0
        %515 = vmatpush1.msra.mxu0 0.0
        %516 = vmatprep.subr.mxu0 0.0
        %517 = vmatpush1.msra.mxu0 0.0
        %518 = vmatprep.subr.mxu0 0.0
        %519 = vmatpush1.msra.mxu0 %v428
        %520 = vmatprep.subr.mxu0 0.0
        %521 = vmatpush1.msra.mxu0 %v427
        %522 = vmatprep.subr.mxu0 0.0
        %523 = vmatpush2.msra.mxu0 0.0
        %524 = vmatprep.subr.mxu0 0.0
        %525 = vmatpush2.msra.mxu0 0.0
        %526 = vmatprep.subr.mxu0 0.0
        %527 = vmatpush2.msra.mxu0 0.0
        %528 = vmatprep.subr.mxu0 0.0
        %529 = vmatpush2.msra.mxu0 0.0
        %530 = vmatprep.subr.mxu0 0.0
        %531 = vmatpush2.msra.mxu0 0.0
        %532 = vmatprep.subr.mxu0 0.0
        %533 = vmatpush2.msra.mxu0 0.0
        %534 = vmatprep.subr.mxu0 0.0
        %535 = vmatpush2.msra.mxu0 0.0
        %536 = vmatprep.subr.mxu0 0.0
        %537 = vmatpush2.msra.mxu0 0.0
        %538 = vmatprep.subr.mxu0 0.0
        %539 = vmatpush2.msra.mxu0 0.0
        %540 = vmatprep.subr.mxu0 0.0
        %541 = vmatpush2.msra.mxu0 0.0
        %542 = vmatprep.subr.mxu0 0.0
        %543 = vmatpush2.msra.mxu0 0.0
        %544 = vmatprep.subr.mxu0 0.0
        %545 = vmatpush2.msra.mxu0 0.0
        %546 = vmatprep.subr.mxu0 0.0
        %547 = vmatpush2.msra.mxu0 0.0
        %548 = vmatprep.subr.mxu0 0.0
        %549 = vmatpush2.msra.mxu0 0.0
        %550 = vmatprep.subr.mxu0 0.0
        %551 = vmatpush2.msra.mxu0 0.0
        %552 = vmatprep.subr.mxu0 0.0
        %553 = vmatpush2.msra.mxu0 0.0
        %554 = vmatprep.mubr.f32.mxu0 0.0
        %555 = vmatmul.mubr.f32.gmra.mxu0 %v431
        %v556 = vpop.f32.mrf.mxu0
        %v557 = vadd.f32 0.0, %v556
        %v558 = vpop.f32.mrf.mxu0
        %559 = vmatprep.mubr.f32.mxu0 0.0
        %560 = vmatmul.mubr.f32.gmra.mxu0 %v434
        %v561 = vpop.f32.mrf.mxu0
        %v562 = vadd.f32 0.0, %v561
        %v563 = vpop.f32.mrf.mxu0
        %564 = vmatprep.mubr.f32.mxu0 0.0
        %565 = vmatmul.mubr.f32.gmra.mxu0 %v437
        %v566 = vpop.f32.mrf.mxu0
        %v567 = vadd.f32 0.0, %v566
        %v568 = vpop.f32.mrf.mxu0
        %569 = vmatprep.mubr.f32.mxu0 0.0
        %570 = vmatmul.mubr.f32.gmra.mxu0 %v440
        %v571 = vpop.f32.mrf.mxu0
        %v572 = vadd.f32 0.0, %v571
        %v573 = vpop.f32.mrf.mxu0
        %574 = vmatprep.mubr.f32.mxu0 0.0
        %575 = vmatmul.mubr.f32.gmra.mxu0 %v443
        %v576 = vpop.f32.mrf.mxu0
        %v577 = vadd.f32 0.0, %v576
        %v578 = vpop.f32.mrf.mxu0
        %579 = vmatprep.mubr.f32.mxu0 0.0
        %580 = vmatmul.mubr.f32.gmra.mxu0 %v446
        %v581 = vpop.f32.mrf.mxu0
        %v582 = vadd.f32 0.0, %v581
        %v583 = vpop.f32.mrf.mxu0
        %584 = vmatprep.mubr.f32.mxu0 0.0
        %585 = vmatmul.mubr.f32.gmra.mxu0 %v449
        %v586 = vpop.f32.mrf.mxu0
        %v587 = vadd.f32 0.0, %v586
        %v588 = vpop.f32.mrf.mxu0
        %589 = vmatprep.mubr.f32.mxu0 0.0
        %590 = vmatmul.mubr.f32.gmra.mxu0 %v452
        %v591 = vpop.f32.mrf.mxu0
        %v592 = vadd.f32 0.0, %v591
        %v593 = vpop.f32.mrf.mxu0
        %594 = vmatprep.mubr.f32.mxu0 0.0
        %595 = vmatmul.mubr.f32.gmra.mxu0 %v455
        %v596 = vpop.f32.mrf.mxu0
        %v597 = vadd.f32 0.0, %v596
        %v598 = vpop.f32.mrf.mxu0
        %599 = vmatprep.mubr.f32.mxu0 0.0
        %600 = vmatmul.mubr.f32.gmra.mxu0 %v458
        %v601 = vpop.f32.mrf.mxu0
        %v602 = vadd.f32 0.0, %v601
        %v603 = vpop.f32.mrf.mxu0
        %604 = vmatprep.mubr.f32.mxu0 0.0
        %605 = vmatmul.mubr.f32.gmra.mxu0 %v461
        %v606 = vpop.f32.mrf.mxu0
        %v607 = vadd.f32 0.0, %v606
        %v608 = vpop.f32.mrf.mxu0
        %609 = vmatprep.mubr.f32.mxu0 0.0
        %610 = vmatmul.mubr.f32.gmra.mxu0 %v464
        %v611 = vpop.f32.mrf.mxu0
        %v612 = vadd.f32 0.0, %v611
        %v613 = vpop.f32.mrf.mxu0
        %614 = vmatprep.mubr.f32.mxu0 0.0
        %615 = vmatmul.mubr.f32.gmra.mxu0 %v467
        %v616 = vpop.f32.mrf.mxu0
        %v617 = vadd.f32 0.0, %v616
        %v618 = vpop.f32.mrf.mxu0
        %619 = vmatprep.mubr.f32.mxu0 0.0
        %620 = vmatmul.mubr.f32.gmra.mxu0 %v470
        %v621 = vpop.f32.mrf.mxu0
        %v622 = vadd.f32 0.0, %v621
        %v623 = vpop.f32.mrf.mxu0
        %624 = vmatprep.mubr.f32.mxu0 0.0
        %625 = vmatmul.mubr.f32.gmra.mxu0 %v473
        %v626 = vpop.f32.mrf.mxu0
        %v627 = vadd.f32 0.0, %v626
        %v628 = vpop.f32.mrf.mxu0
        %629 = vmatprep.mubr.f32.mxu0 0.0
        %630 = vmatmul.mubr.f32.gmra.mxu0 %v476
        %v631 = vpop.f32.mrf.mxu0
        %v632 = vadd.f32 0.0, %v631
        %v633 = vpop.f32.mrf.mxu0
        %634 = vmatprep.mubr.f32.mxu0 0.0
        %635 = vmatmul.mubr.f32.gmra.mxu0 %v479
        %v636 = vpop.f32.mrf.mxu0
        %v637 = vadd.f32 0.0, %v636
        %v638 = vpop.f32.mrf.mxu0
        %639 = vmatprep.mubr.f32.mxu0 0.0
        %640 = vmatmul.mubr.f32.gmra.mxu0 %v482
        %v641 = vpop.f32.mrf.mxu0
        %v642 = vadd.f32 0.0, %v641
        %v643 = vpop.f32.mrf.mxu0
        %644 = vmatprep.mubr.f32.mxu0 0.0
        %645 = vmatmul.mubr.f32.gmra.mxu0 %v485
        %v646 = vpop.f32.mrf.mxu0
        %v647 = vadd.f32 0.0, %v646
        %v648 = vpop.f32.mrf.mxu0
        %649 = vmatprep.mubr.f32.mxu0 0.0
        %650 = vmatmul.mubr.f32.gmra.mxu0 %v488
        %v651 = vpop.f32.mrf.mxu0
        %v652 = vadd.f32 0.0, %v651
        %v653 = vpop.f32.mrf.mxu0
        %654 = vdwg.mxu0
        %v655 = vld [vmem:[%s1] sm:$0x1]
        %v656 = vlaneseq
        %v657 = vshrl.u32 %v656, 7
        %v658 = vsub.s32 0, %v657
        %v659 = vrot.slane %v655, %v658
        %v660 = vmul.f32 %v557, %v659
        %v661 = vmul.f32 %v562, %v659
        %v662 = vmul.f32 %v567, %v659
        %v663 = vmul.f32 %v572, %v659
        %v664 = vmul.f32 %v577, %v659
        %v665 = vmul.f32 %v582, %v659
        %v666 = vmul.f32 %v587, %v659
        %v667 = vmul.f32 %v592, %v659
        %v668 = vmul.f32 %v597, %v659
        %v669 = vmul.f32 %v602, %v659
        %v670 = vmul.f32 %v607, %v659
        %v671 = vmul.f32 %v612, %v659
        %v672 = vmul.f32 %v617, %v659
        %v673 = vmul.f32 %v622, %v659
        %v674 = vmul.f32 %v627, %v659
        %v675 = vmul.f32 %v632, %v659
        %v676 = vmul.f32 %v637, %v659
        %v677 = vmul.f32 %v642, %v659
        %v678 = vmul.f32 %v647, %v659
        %v679 = vmul.f32 %v652, %v659
        %v680 = vld [vmem:[%s1 + $0x8] sm:$0x1]
        %v681 = vlaneseq
        %v682 = vshrl.u32 %v681, 7
        %v683 = vsub.s32 0, %v682
        %v684 = vrot.slane %v680, %v683
        %v685 = vadd.f32 %v660, %v684
        %v686 = vadd.f32 %v661, %v684
        %v687 = vadd.f32 %v662, %v684
        %v688 = vadd.f32 %v663, %v684
        %v689 = vadd.f32 %v664, %v684
        %v690 = vadd.f32 %v665, %v684
        %v691 = vadd.f32 %v666, %v684
        %v692 = vadd.f32 %v667, %v684
        %v693 = vadd.f32 %v668, %v684
        %v694 = vadd.f32 %v669, %v684
        %v695 = vadd.f32 %v670, %v684
        %v696 = vadd.f32 %v671, %v684
        %v697 = vadd.f32 %v672, %v684
        %v698 = vadd.f32 %v673, %v684
        %v699 = vadd.f32 %v674, %v684
        %v700 = vadd.f32 %v675, %v684
        %v701 = vadd.f32 %v676, %v684
        %v702 = vadd.f32 %v677, %v684
        %v703 = vadd.f32 %v678, %v684
        %v704 = vadd.f32 %v679, %v684
        %v705 = vmax.f32 %v685, 0.0
        %v706 = vmax.f32 %v686, 0.0
        %v707 = vmax.f32 %v687, 0.0
        %v708 = vmax.f32 %v688, 0.0
        %v709 = vmax.f32 %v689, 0.0
        %v710 = vmax.f32 %v690, 0.0
        %v711 = vmax.f32 %v691, 0.0
        %v712 = vmax.f32 %v692, 0.0
        %v713 = vmax.f32 %v693, 0.0
        %v714 = vmax.f32 %v694, 0.0
        %v715 = vmax.f32 %v695, 0.0
        %v716 = vmax.f32 %v696, 0.0
        %v717 = vmax.f32 %v697, 0.0
        %v718 = vmax.f32 %v698, 0.0
        %v719 = vmax.f32 %v699, 0.0
        %v720 = vmax.f32 %v700, 0.0
        %v721 = vmax.f32 %v701, 0.0
        %v722 = vmax.f32 %v702, 0.0
        %v723 = vmax.f32 %v703, 0.0
        %v724 = vmax.f32 %v704, 0.0
        %v725 = vld [vmem:[%s1 + $0x10] sm:$0x1]
        %v726 = vld [vmem:[%s1 + $0x11] sm:$0x1]
        %v727 = vld [vmem:[%s1 + $0x12] sm:$0x1]
        %v728 = vlaneseq
        %v729 = vshrl.u32 %v728, 7
        %v730 = vsub.s32 0, %v729
        %v731 = vrot.slane %v725, %v730
        %v732 = vmul.f32 %v731, 0.0
        %v733 = vmul.f32 %v705, %v731
        %v734 = vmul.f32 %v706, %v731
        %v735 = vmul.f32 %v707, %v731
        %v736 = vmul.f32 %v708, %v731
        %v737 = vmul.f32 %v709, %v731
        %v738 = vmul.f32 %v710, %v731
        %v739 = vmul.f32 %v711, %v731
        %v740 = vmul.f32 %v712, %v731
        %v741 = vmul.f32 %v713, %v731
        %v742 = vmul.f32 %v714, %v731
        %v743 = vmul.f32 %v715, %v731
        %v744 = vmul.f32 %v716, %v731
        %v745 = vmul.f32 %v717, %v731
        %v746 = vmul.f32 %v718, %v731
        %v747 = vmul.f32 %v719, %v731
        %v748 = vmul.f32 %v720, %v731
        %v749 = vmul.f32 %v721, %v731
        %v750 = vmul.f32 %v722, %v731
        %v751 = vmul.f32 %v723, %v731
        %v752 = vlaneseq
        %v753 = vshrl.u32 %v752, 7
        %v754 = vsub.s32 0, %v753
        %v755 = vrot.slane %v726, %v754
        %v756 = vmul.f32 %v705, %v755
        %v757 = vmul.f32 %v706, %v755
        %v758 = vmul.f32 %v707, %v755
        %v759 = vmul.f32 %v708, %v755
        %v760 = vmul.f32 %v709, %v755
        %v761 = vmul.f32 %v710, %v755
        %v762 = vmul.f32 %v711, %v755
        %v763 = vmul.f32 %v712, %v755
        %v764 = vmul.f32 %v713, %v755
        %v765 = vmul.f32 %v714, %v755
        %v766 = vmul.f32 %v715, %v755
        %v767 = vmul.f32 %v716, %v755
        %v768 = vmul.f32 %v717, %v755
        %v769 = vmul.f32 %v718, %v755
        %v770 = vmul.f32 %v719, %v755
        %v771 = vmul.f32 %v720, %v755
        %v772 = vmul.f32 %v721, %v755
        %v773 = vmul.f32 %v722, %v755
        %v774 = vmul.f32 %v723, %v755
        %v775 = vmul.f32 %v724, %v755
        %v776 = vadd.f32 %v732, %v756
        %v777 = vadd.f32 %v733, %v757
        %v778 = vadd.f32 %v734, %v758
        %v779 = vadd.f32 %v735, %v759
        %v780 = vadd.f32 %v736, %v760
        %v781 = vadd.f32 %v737, %v761
        %v782 = vadd.f32 %v738, %v762
        %v783 = vadd.f32 %v739, %v763
        %v784 = vadd.f32 %v740, %v764
        %v785 = vadd.f32 %v741, %v765
        %v786 = vadd.f32 %v742, %v766
        %v787 = vadd.f32 %v743, %v767
        %v788 = vadd.f32 %v744, %v768
        %v789 = vadd.f32 %v745, %v769
        %v790 = vadd.f32 %v746, %v770
        %v791 = vadd.f32 %v747, %v771
        %v792 = vadd.f32 %v748, %v772
        %v793 = vadd.f32 %v749, %v773
        %v794 = vadd.f32 %v750, %v774
        %v795 = vadd.f32 %v751, %v775
        %v796 = vlaneseq
        %v797 = vshrl.u32 %v796, 7
        %v798 = vsub.s32 0, %v797
        %v799 = vrot.slane %v727, %v798
        %v800 = vmul.f32 %v706, %v799
        %v801 = vmul.f32 %v707, %v799
        %v802 = vmul.f32 %v708, %v799
        %v803 = vmul.f32 %v709, %v799
        %v804 = vmul.f32 %v710, %v799
        %v805 = vmul.f32 %v711, %v799
        %v806 = vmul.f32 %v712, %v799
        %v807 = vmul.f32 %v713, %v799
        %v808 = vmul.f32 %v714, %v799
        %v809 = vmul.f32 %v715, %v799
        %v810 = vmul.f32 %v716, %v799
        %v811 = vmul.f32 %v717, %v799
        %v812 = vmul.f32 %v718, %v799
        %v813 = vmul.f32 %v719, %v799
        %v814 = vmul.f32 %v720, %v799
        %v815 = vmul.f32 %v721, %v799
        %v816 = vmul.f32 %v722, %v799
        %v817 = vmul.f32 %v723, %v799
        %v818 = vmul.f32 %v724, %v799
        %v819 = vmul.f32 %v799, 0.0
        %v820 = vadd.f32 %v776, %v800
        %v821 = vadd.f32 %v777, %v801
        %v822 = vadd.f32 %v778, %v802
        %v823 = vadd.f32 %v779, %v803
        %v824 = vadd.f32 %v780, %v804
        %v825 = vadd.f32 %v781, %v805
        %v826 = vadd.f32 %v782, %v806
        %v827 = vadd.f32 %v783, %v807
        %v828 = vadd.f32 %v784, %v808
        %v829 = vadd.f32 %v785, %v809
        %v830 = vadd.f32 %v786, %v810
        %v831 = vadd.f32 %v787, %v811
        %v832 = vadd.f32 %v788, %v812
        %v833 = vadd.f32 %v789, %v813
        %v834 = vadd.f32 %v790, %v814
        %v835 = vadd.f32 %v791, %v815
        %v836 = vadd.f32 %v792, %v816
        %v837 = vadd.f32 %v793, %v817
        %v838 = vadd.f32 %v794, %v818
        %v839 = vadd.f32 %v795, %v819
        %v840 = vld [vmem:[%s1 + $0x18] sm:$0xff]
        %v841 = vld [vmem:[%s1 + $0x20] sm:$0xff]
        %v842 = vld [vmem:[%s1 + $0x28] sm:$0xff]
        %v843 = vld [vmem:[%s1 + $0x30] sm:$0xff]
        %v844 = vld [vmem:[%s1 + $0x38] sm:$0xff]
        %v845 = vld [vmem:[%s1 + $0x40] sm:$0xff]
        %v846 = vld [vmem:[%s1 + $0x48] sm:$0xff]
        %v847 = vld [vmem:[%s1 + $0x50] sm:$0xff]
        %v848 = vld [vmem:[%s1 + $0x58] sm:$0xff]
        %v849 = vld [vmem:[%s1 + $0x60] sm:$0xff]
        %v850 = vld [vmem:[%s1 + $0x68] sm:$0xff]
        %v851 = vld [vmem:[%s1 + $0x70] sm:$0xff]
        %v852 = vld [vmem:[%s1 + $0x78] sm:$0xff]
        %v853 = vld [vmem:[%s1 + $0x80] sm:$0xff]
        %v854 = vld [vmem:[%s1 + $0x88] sm:$0xff]
        %v855 = vld [vmem:[%s1 + $0x90] sm:$0xff]
        %v856 = vld [vmem:[%s1 + $0x98] sm:$0xff]
        %v857 = vld [vmem:[%s1 + $0xa0] sm:$0xff]
        %v858 = vld [vmem:[%s1 + $0xa8] sm:$0xff]
        %v859 = vld [vmem:[%s1 + $0xb0] sm:$0xff]
        %v860 = vmul.f32 %v820, %v840
        %v861 = vmul.f32 %v821, %v841
        %v862 = vmul.f32 %v822, %v842
        %v863 = vmul.f32 %v823, %v843
        %v864 = vmul.f32 %v824, %v844
        %v865 = vmul.f32 %v825, %v845
        %v866 = vmul.f32 %v826, %v846
        %v867 = vmul.f32 %v827, %v847
        %v868 = vmul.f32 %v828, %v848
        %v869 = vmul.f32 %v829, %v849
        %v870 = vmul.f32 %v830, %v850
        %v871 = vmul.f32 %v831, %v851
        %v872 = vmul.f32 %v832, %v852
        %v873 = vmul.f32 %v833, %v853
        %v874 = vmul.f32 %v834, %v854
        %v875 = vmul.f32 %v835, %v855
        %v876 = vmul.f32 %v836, %v856
        %v877 = vmul.f32 %v837, %v857
        %v878 = vmul.f32 %v838, %v858
        %v879 = vmul.f32 %v839, %v859
        %v880 = vld [vmem:[%s1 + $0xb8] sm:$0xff]
        %v881 = vld [vmem:[%s1 + $0xc0] sm:$0xff]
        %v882 = vld [vmem:[%s1 + $0xc8] sm:$0xff]
        %v883 = vld [vmem:[%s1 + $0xd0] sm:$0xff]
        %v884 = vld [vmem:[%s1 + $0xd8] sm:$0xff]
        %v885 = vld [vmem:[%s1 + $0xe0] sm:$0xff]
        %v886 = vld [vmem:[%s1 + $0xe8] sm:$0xff]
        %v887 = vld [vmem:[%s1 + $0xf0] sm:$0xff]
        %v888 = vld [vmem:[%s1 + $0xf8] sm:$0xff]
        %v889 = vld [vmem:[%s1 + $0x100] sm:$0xff]
        %v890 = vld [vmem:[%s1 + $0x108] sm:$0xff]
        %v891 = vld [vmem:[%s1 + $0x110] sm:$0xff]
        %v892 = vld [vmem:[%s1 + $0x118] sm:$0xff]
        %v893 = vld [vmem:[%s1 + $0x120] sm:$0xff]
        %v894 = vld [vmem:[%s1 + $0x128] sm:$0xff]
        %v895 = vld [vmem:[%s1 + $0x130] sm:$0xff]
        %v896 = vld [vmem:[%s1 + $0x138] sm:$0xff]
        %v897 = vld [vmem:[%s1 + $0x140] sm:$0xff]
        %v898 = vld [vmem:[%s1 + $0x148] sm:$0xff]
        %v899 = vld [vmem:[%s1 + $0x150] sm:$0xff]
        %v900 = vadd.f32 %v860, %v880
        %v901 = vadd.f32 %v861, %v881
        %v902 = vadd.f32 %v862, %v882
        %v903 = vadd.f32 %v863, %v883
        %v904 = vadd.f32 %v864, %v884
        %v905 = vadd.f32 %v865, %v885
        %v906 = vadd.f32 %v866, %v886
        %v907 = vadd.f32 %v867, %v887
        %v908 = vadd.f32 %v868, %v888
        %v909 = vadd.f32 %v869, %v889
        %v910 = vadd.f32 %v870, %v890
        %v911 = vadd.f32 %v871, %v891
        %v912 = vadd.f32 %v872, %v892
        %v913 = vadd.f32 %v873, %v893
        %v914 = vadd.f32 %v874, %v894
        %v915 = vadd.f32 %v875, %v895
        %v916 = vadd.f32 %v876, %v896
        %v917 = vadd.f32 %v877, %v897
        %v918 = vadd.f32 %v878, %v898
        %v919 = vadd.f32 %v879, %v899
        %vm920 = vcmask 64512
        %v921 = vsel %vm920, %v900, 0.0
        %v922 = vsel %vm920, %v901, 0.0
        %v923 = vadd.f32 %v921, %v922
        %v924 = vsel %vm920, %v902, 0.0
        %v925 = vadd.f32 %v923, %v924
        %v926 = vsel %vm920, %v903, 0.0
        %v927 = vadd.f32 %v925, %v926
        %v928 = vsel %vm920, %v904, 0.0
        %v929 = vadd.f32 %v927, %v928
        %v930 = vsel %vm920, %v905, 0.0
        %v931 = vadd.f32 %v929, %v930
        %v932 = vsel %vm920, %v906, 0.0
        %v933 = vadd.f32 %v931, %v932
        %v934 = vsel %vm920, %v907, 0.0
        %v935 = vadd.f32 %v933, %v934
        %v936 = vsel %vm920, %v908, 0.0
        %v937 = vadd.f32 %v935, %v936
        %v938 = vsel %vm920, %v909, 0.0
        %v939 = vadd.f32 %v937, %v938
        %v940 = vsel %vm920, %v910, 0.0
        %v941 = vadd.f32 %v939, %v940
        %v942 = vsel %vm920, %v911, 0.0
        %v943 = vadd.f32 %v941, %v942
        %v944 = vsel %vm920, %v912, 0.0
        %v945 = vadd.f32 %v943, %v944
        %v946 = vsel %vm920, %v913, 0.0
        %v947 = vadd.f32 %v945, %v946
        %v948 = vsel %vm920, %v914, 0.0
        %v949 = vadd.f32 %v947, %v948
        %v950 = vsel %vm920, %v915, 0.0
        %v951 = vadd.f32 %v949, %v950
        %v952 = vsel %vm920, %v916, 0.0
        %v953 = vadd.f32 %v951, %v952
        %v954 = vsel %vm920, %v917, 0.0
        %v955 = vadd.f32 %v953, %v954
        %v956 = vsel %vm920, %v918, 0.0
        %v957 = vadd.f32 %v955, %v956
        %v958 = vsel %vm920, %v919, 0.0
        %v959 = vadd.f32 %v957, %v958
        %v960 = vrcp.pop 20.0
        %v961 = vmul.f32 %v959, %v960
        %v963 = vrot.slane %v961, 7
        %v965 = vsel %vm258, 0.0, %v963
        %v966 = vsel %vm258, %v963, 0.0
        %v967 = vld [vmem:[%s1 + $0x158] sm:$0x1]
        %v968 = vlaneseq
        %v969 = vshrl.u32 %v968, 7
        %v970 = vsub.s32 0, %v969
        %v971 = vrot.slane %v967, %v970
        %v972 = vmul.f32 %v965, %v971
        %v973 = vld [vmem:[%s1 + $0x159] sm:$0x1]
        %v974 = vlaneseq
        %v975 = vshrl.u32 %v974, 7
        %v976 = vsub.s32 0, %v975
        %v977 = vrot.slane %v973, %v976
        %v978 = vmul.f32 %v965, %v977
        %v979 = vmul.f32 %v966, %v977
        %vm982 = vcmask 1046528
        %v983 = vrot.slane %v978, 1
        %v984 = vrot.slane %v979, 1
        %v985 = vsel %vm982, %v983, %v984
        %v987 = vadd.f32 %v972, %v985
        %v988 = vld [vmem:[%s1 + $0x15a] sm:$0x1]
        %v989 = vlaneseq
        %v990 = vshrl.u32 %v989, 7
        %v991 = vsub.s32 0, %v990
        %v992 = vrot.slane %v988, %v991
        %v993 = vmul.f32 %v965, %v992
        %v994 = vmul.f32 %v966, %v992
        %vm997 = vcmask 1045504
        %v998 = vrot.slane %v993, 2
        %v999 = vrot.slane %v994, 2
        %v1000 = vsel %vm997, %v998, %v999
        %v1002 = vadd.f32 %v987, %v1000
        %v1003 = vld [vmem:[%s1 + $0x160] sm:$0x1]
        %v1004 = vlaneseq
        %v1005 = vshrl.u32 %v1004, 7
        %v1006 = vsub.s32 0, %v1005
        %v1007 = vrot.slane %v1003, %v1006
        %v1008 = vmul.f32 %v1002, %v1007
        %v1009 = vld [vmem:[%s1 + $0x168] sm:$0x1]
        %v1010 = vlaneseq
        %v1011 = vshrl.u32 %v1010, 7
        %v1012 = vsub.s32 0, %v1011
        %v1013 = vrot.slane %v1009, %v1012
        %v1014 = vadd.f32 %v1008, %v1013
        %v1015 = vsub.f32 0.0, %v1014
        %v1016 = vmul.f32 %v1015, 1.442695
        %v1017 = vpow.pop %v1016
        %v1018 = vadd.f32 %v1017, 1.0
        %v1019 = vrcp.pop %v1018
        %v1020 = vmul.f32 %v1014, %v1019
        %v1021 = vld [vmem:[%s2 + $0x10] sm:$0xff]
        %v1022 = vld [vmem:[%s1 + $0x170] sm:$0x1]
        %v1023 = vlaneseq
        %v1024 = vshrl.u32 %v1023, 7
        %v1025 = vsub.s32 0, %v1024
        %v1026 = vrot.slane %v1022, %v1025
        %v1028 = vsel %vm920, %v1020, 0
        %1030 = vmatprep.subr.mxu0 0.0
        %1031 = vmatpush1.msra.mxu0 0.0
        %1032 = vmatprep.subr.mxu0 0.0
        %1033 = vmatpush1.msra.mxu0 0.0
        %1034 = vmatprep.subr.mxu0 0.0
        %1035 = vmatpush1.msra.mxu0 0.0
        %1036 = vmatprep.subr.mxu0 0.0
        %1037 = vmatpush1.msra.mxu0 0.0
        %1038 = vmatprep.subr.mxu0 0.0
        %1039 = vmatpush1.msra.mxu0 0.0
        %1040 = vmatprep.subr.mxu0 0.0
        %1041 = vmatpush1.msra.mxu0 0.0
        %1042 = vmatprep.subr.mxu0 0.0
        %1043 = vmatpush1.msra.mxu0 0.0
        %1044 = vmatprep.subr.mxu0 0.0
        %1045 = vmatpush1.msra.mxu0 0.0
        %1046 = vmatprep.subr.mxu0 0.0
        %1047 = vmatpush1.msra.mxu0 0.0
        %1048 = vmatprep.subr.mxu0 0.0
        %1049 = vmatpush1.msra.mxu0 0.0
        %1050 = vmatprep.subr.mxu0 0.0
        %1051 = vmatpush1.msra.mxu0 0.0
        %1052 = vmatprep.subr.mxu0 0.0
        %1053 = vmatpush1.msra.mxu0 0.0
        %1054 = vmatprep.subr.mxu0 0.0
        %1055 = vmatpush1.msra.mxu0 0.0
        %1056 = vmatprep.subr.mxu0 0.0
        %1057 = vmatpush1.msra.mxu0 0.0
        %1058 = vmatprep.subr.mxu0 0.0
        %1059 = vmatpush1.msra.mxu0 0.0
        %1060 = vmatprep.subr.mxu0 0.0
        %1061 = vmatpush1.msra.mxu0 %v1021
        %1062 = vmatprep.subr.mxu0 0.0
        %1063 = vmatpush2.msra.mxu0 0.0
        %1064 = vmatprep.subr.mxu0 0.0
        %1065 = vmatpush2.msra.mxu0 0.0
        %1066 = vmatprep.subr.mxu0 0.0
        %1067 = vmatpush2.msra.mxu0 0.0
        %1068 = vmatprep.subr.mxu0 0.0
        %1069 = vmatpush2.msra.mxu0 0.0
        %1070 = vmatprep.subr.mxu0 0.0
        %1071 = vmatpush2.msra.mxu0 0.0
        %1072 = vmatprep.subr.mxu0 0.0
        %1073 = vmatpush2.msra.mxu0 0.0
        %1074 = vmatprep.subr.mxu0 0.0
        %1075 = vmatpush2.msra.mxu0 0.0
        %1076 = vmatprep.subr.mxu0 0.0
        %1077 = vmatpush2.msra.mxu0 0.0
        %1078 = vmatprep.subr.mxu0 0.0
        %1079 = vmatpush2.msra.mxu0 0.0
        %1080 = vmatprep.subr.mxu0 0.0
        %1081 = vmatpush2.msra.mxu0 0.0
        %1082 = vmatprep.subr.mxu0 0.0
        %1083 = vmatpush2.msra.mxu0 0.0
        %1084 = vmatprep.subr.mxu0 0.0
        %1085 = vmatpush2.msra.mxu0 0.0
        %1086 = vmatprep.subr.mxu0 0.0
        %1087 = vmatpush2.msra.mxu0 0.0
        %1088 = vmatprep.subr.mxu0 0.0
        %1089 = vmatpush2.msra.mxu0 0.0
        %1090 = vmatprep.subr.mxu0 0.0
        %1091 = vmatpush2.msra.mxu0 0.0
        %1092 = vmatprep.subr.mxu0 0.0
        %1093 = vmatpush2.msra.mxu0 0.0
        %1094 = vmatprep.mubr.f32.mxu0 0.0
        %1095 = vmatmul.mubr.f32.gmra.mxu0 %v1028
        %v1096 = vpop.f32.mrf.mxu0
        %v1097 = vadd.f32 %v1026, %v1096
        %v1098 = vpop.f32.mrf.mxu0
        %1099 = vdwg.mxu0
        %v1100 = vadd.f32 %v900, %v1097
        %v1101 = vadd.f32 %v901, %v1097
        %v1102 = vadd.f32 %v902, %v1097
        %v1103 = vadd.f32 %v903, %v1097
        %v1104 = vadd.f32 %v904, %v1097
        %v1105 = vadd.f32 %v905, %v1097
        %v1106 = vadd.f32 %v906, %v1097
        %v1107 = vadd.f32 %v907, %v1097
        %v1108 = vadd.f32 %v908, %v1097
        %v1109 = vadd.f32 %v909, %v1097
        %v1110 = vadd.f32 %v910, %v1097
        %v1111 = vadd.f32 %v911, %v1097
        %v1112 = vadd.f32 %v912, %v1097
        %v1113 = vadd.f32 %v913, %v1097
        %v1114 = vadd.f32 %v914, %v1097
        %v1115 = vadd.f32 %v915, %v1097
        %v1116 = vadd.f32 %v916, %v1097
        %v1117 = vadd.f32 %v917, %v1097
        %v1118 = vadd.f32 %v918, %v1097
        %v1119 = vadd.f32 %v919, %v1097
        %v1120 = vmax.f32 %v1100, 0.0
        %v1121 = vmax.f32 %v1101, 0.0
        %v1122 = vmax.f32 %v1102, 0.0
        %v1123 = vmax.f32 %v1103, 0.0
        %v1124 = vmax.f32 %v1104, 0.0
        %v1125 = vmax.f32 %v1105, 0.0
        %v1126 = vmax.f32 %v1106, 0.0
        %v1127 = vmax.f32 %v1107, 0.0
        %v1128 = vmax.f32 %v1108, 0.0
        %v1129 = vmax.f32 %v1109, 0.0
        %v1130 = vmax.f32 %v1110, 0.0
        %v1131 = vmax.f32 %v1111, 0.0
        %v1132 = vmax.f32 %v1112, 0.0
        %v1133 = vmax.f32 %v1113, 0.0
        %v1134 = vmax.f32 %v1114, 0.0
        %v1135 = vmax.f32 %v1115, 0.0
        %v1136 = vmax.f32 %v1116, 0.0
        %v1137 = vmax.f32 %v1117, 0.0
        %v1138 = vmax.f32 %v1118, 0.0
        %v1139 = vmax.f32 %v1119, 0.0
        %v1140 = vld [vmem:[%s1 + $0x178] sm:$0x1]
        %v1141 = vld [vmem:[%s1 + $0x179] sm:$0x1]
        %v1142 = vld [vmem:[%s1 + $0x17a] sm:$0x1]
        %v1143 = vlaneseq
        %v1144 = vshrl.u32 %v1143, 7
        %v1145 = vsub.s32 0, %v1144
        %v1146 = vrot.slane %v1140, %v1145
        %v1147 = vmul.f32 %v1146, 0.0
        %v1148 = vmul.f32 %v1120, %v1146
        %v1149 = vmul.f32 %v1121, %v1146
        %v1150 = vmul.f32 %v1122, %v1146
        %v1151 = vmul.f32 %v1123, %v1146
        %v1152 = vmul.f32 %v1124, %v1146
        %v1153 = vmul.f32 %v1125, %v1146
        %v1154 = vmul.f32 %v1126, %v1146
        %v1155 = vmul.f32 %v1127, %v1146
        %v1156 = vmul.f32 %v1128, %v1146
        %v1157 = vmul.f32 %v1129, %v1146
        %v1158 = vmul.f32 %v1130, %v1146
        %v1159 = vmul.f32 %v1131, %v1146
        %v1160 = vmul.f32 %v1132, %v1146
        %v1161 = vmul.f32 %v1133, %v1146
        %v1162 = vmul.f32 %v1134, %v1146
        %v1163 = vmul.f32 %v1135, %v1146
        %v1164 = vmul.f32 %v1136, %v1146
        %v1165 = vmul.f32 %v1137, %v1146
        %v1166 = vmul.f32 %v1138, %v1146
        %v1167 = vlaneseq
        %v1168 = vshrl.u32 %v1167, 7
        %v1169 = vsub.s32 0, %v1168
        %v1170 = vrot.slane %v1141, %v1169
        %v1171 = vmul.f32 %v1120, %v1170
        %v1172 = vmul.f32 %v1121, %v1170
        %v1173 = vmul.f32 %v1122, %v1170
        %v1174 = vmul.f32 %v1123, %v1170
        %v1175 = vmul.f32 %v1124, %v1170
        %v1176 = vmul.f32 %v1125, %v1170
        %v1177 = vmul.f32 %v1126, %v1170
        %v1178 = vmul.f32 %v1127, %v1170
        %v1179 = vmul.f32 %v1128, %v1170
        %v1180 = vmul.f32 %v1129, %v1170
        %v1181 = vmul.f32 %v1130, %v1170
        %v1182 = vmul.f32 %v1131, %v1170
        %v1183 = vmul.f32 %v1132, %v1170
        %v1184 = vmul.f32 %v1133, %v1170
        %v1185 = vmul.f32 %v1134, %v1170
        %v1186 = vmul.f32 %v1135, %v1170
        %v1187 = vmul.f32 %v1136, %v1170
        %v1188 = vmul.f32 %v1137, %v1170
        %v1189 = vmul.f32 %v1138, %v1170
        %v1190 = vmul.f32 %v1139, %v1170
        %v1191 = vadd.f32 %v1147, %v1171
        %v1192 = vadd.f32 %v1148, %v1172
        %v1193 = vadd.f32 %v1149, %v1173
        %v1194 = vadd.f32 %v1150, %v1174
        %v1195 = vadd.f32 %v1151, %v1175
        %v1196 = vadd.f32 %v1152, %v1176
        %v1197 = vadd.f32 %v1153, %v1177
        %v1198 = vadd.f32 %v1154, %v1178
        %v1199 = vadd.f32 %v1155, %v1179
        %v1200 = vadd.f32 %v1156, %v1180
        %v1201 = vadd.f32 %v1157, %v1181
        %v1202 = vadd.f32 %v1158, %v1182
        %v1203 = vadd.f32 %v1159, %v1183
        %v1204 = vadd.f32 %v1160, %v1184
        %v1205 = vadd.f32 %v1161, %v1185
        %v1206 = vadd.f32 %v1162, %v1186
        %v1207 = vadd.f32 %v1163, %v1187
        %v1208 = vadd.f32 %v1164, %v1188
        %v1209 = vadd.f32 %v1165, %v1189
        %v1210 = vadd.f32 %v1166, %v1190
        %v1211 = vlaneseq
        %v1212 = vshrl.u32 %v1211, 7
        %v1213 = vsub.s32 0, %v1212
        %v1214 = vrot.slane %v1142, %v1213
        %v1215 = vmul.f32 %v1121, %v1214
        %v1216 = vmul.f32 %v1122, %v1214
        %v1217 = vmul.f32 %v1123, %v1214
        %v1218 = vmul.f32 %v1124, %v1214
        %v1219 = vmul.f32 %v1125, %v1214
        %v1220 = vmul.f32 %v1126, %v1214
        %v1221 = vmul.f32 %v1127, %v1214
        %v1222 = vmul.f32 %v1128, %v1214
        %v1223 = vmul.f32 %v1129, %v1214
        %v1224 = vmul.f32 %v1130, %v1214
        %v1225 = vmul.f32 %v1131, %v1214
        %v1226 = vmul.f32 %v1132, %v1214
        %v1227 = vmul.f32 %v1133, %v1214
        %v1228 = vmul.f32 %v1134, %v1214
        %v1229 = vmul.f32 %v1135, %v1214
        %v1230 = vmul.f32 %v1136, %v1214
        %v1231 = vmul.f32 %v1137, %v1214
        %v1232 = vmul.f32 %v1138, %v1214
        %v1233 = vmul.f32 %v1139, %v1214
        %v1234 = vmul.f32 %v1214, 0.0
        %v1235 = vadd.f32 %v1191, %v1215
        %v1236 = vadd.f32 %v1192, %v1216
        %v1237 = vadd.f32 %v1193, %v1217
        %v1238 = vadd.f32 %v1194, %v1218
        %v1239 = vadd.f32 %v1195, %v1219
        %v1240 = vadd.f32 %v1196, %v1220
        %v1241 = vadd.f32 %v1197, %v1221
        %v1242 = vadd.f32 %v1198, %v1222
        %v1243 = vadd.f32 %v1199, %v1223
        %v1244 = vadd.f32 %v1200, %v1224
        %v1245 = vadd.f32 %v1201, %v1225
        %v1246 = vadd.f32 %v1202, %v1226
        %v1247 = vadd.f32 %v1203, %v1227
        %v1248 = vadd.f32 %v1204, %v1228
        %v1249 = vadd.f32 %v1205, %v1229
        %v1250 = vadd.f32 %v1206, %v1230
        %v1251 = vadd.f32 %v1207, %v1231
        %v1252 = vadd.f32 %v1208, %v1232
        %v1253 = vadd.f32 %v1209, %v1233
        %v1254 = vadd.f32 %v1210, %v1234
        %v1255 = vld [vmem:[%s1 + $0x180] sm:$0xff]
        %v1256 = vld [vmem:[%s1 + $0x188] sm:$0xff]
        %v1257 = vld [vmem:[%s1 + $0x190] sm:$0xff]
        %v1258 = vld [vmem:[%s1 + $0x198] sm:$0xff]
        %v1259 = vld [vmem:[%s1 + $0x1a0] sm:$0xff]
        %v1260 = vld [vmem:[%s1 + $0x1a8] sm:$0xff]
        %v1261 = vld [vmem:[%s1 + $0x1b0] sm:$0xff]
        %v1262 = vld [vmem:[%s1 + $0x1b8] sm:$0xff]
        %v1263 = vld [vmem:[%s1 + $0x1c0] sm:$0xff]
        %v1264 = vld [vmem:[%s1 + $0x1c8] sm:$0xff]
        %v1265 = vld [vmem:[%s1 + $0x1d0] sm:$0xff]
        %v1266 = vld [vmem:[%s1 + $0x1d8] sm:$0xff]
        %v1267 = vld [vmem:[%s1 + $0x1e0] sm:$0xff]
        %v1268 = vld [vmem:[%s1 + $0x1e8] sm:$0xff]
        %v1269 = vld [vmem:[%s1 + $0x1f0] sm:$0xff]
        %v1270 = vld [vmem:[%s1 + $0x1f8] sm:$0xff]
        %v1271 = vld [vmem:[%s1 + $0x200] sm:$0xff]
        %v1272 = vld [vmem:[%s1 + $0x208] sm:$0xff]
        %v1273 = vld [vmem:[%s1 + $0x210] sm:$0xff]
        %v1274 = vld [vmem:[%s1 + $0x218] sm:$0xff]
        %v1275 = vmul.f32 %v1235, %v1255
        %v1276 = vmul.f32 %v1236, %v1256
        %v1277 = vmul.f32 %v1237, %v1257
        %v1278 = vmul.f32 %v1238, %v1258
        %v1279 = vmul.f32 %v1239, %v1259
        %v1280 = vmul.f32 %v1240, %v1260
        %v1281 = vmul.f32 %v1241, %v1261
        %v1282 = vmul.f32 %v1242, %v1262
        %v1283 = vmul.f32 %v1243, %v1263
        %v1284 = vmul.f32 %v1244, %v1264
        %v1285 = vmul.f32 %v1245, %v1265
        %v1286 = vmul.f32 %v1246, %v1266
        %v1287 = vmul.f32 %v1247, %v1267
        %v1288 = vmul.f32 %v1248, %v1268
        %v1289 = vmul.f32 %v1249, %v1269
        %v1290 = vmul.f32 %v1250, %v1270
        %v1291 = vmul.f32 %v1251, %v1271
        %v1292 = vmul.f32 %v1252, %v1272
        %v1293 = vmul.f32 %v1253, %v1273
        %v1294 = vmul.f32 %v1254, %v1274
        %v1295 = vld [vmem:[%s1 + $0x220] sm:$0xff]
        %v1296 = vld [vmem:[%s1 + $0x228] sm:$0xff]
        %v1297 = vld [vmem:[%s1 + $0x230] sm:$0xff]
        %v1298 = vld [vmem:[%s1 + $0x238] sm:$0xff]
        %v1299 = vld [vmem:[%s1 + $0x240] sm:$0xff]
        %v1300 = vld [vmem:[%s1 + $0x248] sm:$0xff]
        %v1301 = vld [vmem:[%s1 + $0x250] sm:$0xff]
        %v1302 = vld [vmem:[%s1 + $0x258] sm:$0xff]
        %v1303 = vld [vmem:[%s1 + $0x260] sm:$0xff]
        %v1304 = vld [vmem:[%s1 + $0x268] sm:$0xff]
        %v1305 = vld [vmem:[%s1 + $0x270] sm:$0xff]
        %v1306 = vld [vmem:[%s1 + $0x278] sm:$0xff]
        %v1307 = vld [vmem:[%s1 + $0x280] sm:$0xff]
        %v1308 = vld [vmem:[%s1 + $0x288] sm:$0xff]
        %v1309 = vld [vmem:[%s1 + $0x290] sm:$0xff]
        %v1310 = vld [vmem:[%s1 + $0x298] sm:$0xff]
        %v1311 = vld [vmem:[%s1 + $0x2a0] sm:$0xff]
        %v1312 = vld [vmem:[%s1 + $0x2a8] sm:$0xff]
        %v1313 = vld [vmem:[%s1 + $0x2b0] sm:$0xff]
        %v1314 = vld [vmem:[%s1 + $0x2b8] sm:$0xff]
        %v1315 = vadd.f32 %v1275, %v1295
        %v1316 = vadd.f32 %v1276, %v1296
        %v1317 = vadd.f32 %v1277, %v1297
        %v1318 = vadd.f32 %v1278, %v1298
        %v1319 = vadd.f32 %v1279, %v1299
        %v1320 = vadd.f32 %v1280, %v1300
        %v1321 = vadd.f32 %v1281, %v1301
        %v1322 = vadd.f32 %v1282, %v1302
        %v1323 = vadd.f32 %v1283, %v1303
        %v1324 = vadd.f32 %v1284, %v1304
        %v1325 = vadd.f32 %v1285, %v1305
        %v1326 = vadd.f32 %v1286, %v1306
        %v1327 = vadd.f32 %v1287, %v1307
        %v1328 = vadd.f32 %v1288, %v1308
        %v1329 = vadd.f32 %v1289, %v1309
        %v1330 = vadd.f32 %v1290, %v1310
        %v1331 = vadd.f32 %v1291, %v1311
        %v1332 = vadd.f32 %v1292, %v1312
        %v1333 = vadd.f32 %v1293, %v1313
        %v1334 = vadd.f32 %v1294, %v1314
        %v1335 = vsel %vm920, %v1315, 0.0
        %v1336 = vsel %vm920, %v1316, 0.0
        %v1337 = vadd.f32 %v1335, %v1336
        %v1338 = vsel %vm920, %v1317, 0.0
        %v1339 = vadd.f32 %v1337, %v1338
        %v1340 = vsel %vm920, %v1318, 0.0
        %v1341 = vadd.f32 %v1339, %v1340
        %v1342 = vsel %vm920, %v1319, 0.0
        %v1343 = vadd.f32 %v1341, %v1342
        %v1344 = vsel %vm920, %v1320, 0.0
        %v1345 = vadd.f32 %v1343, %v1344
        %v1346 = vsel %vm920, %v1321, 0.0
        %v1347 = vadd.f32 %v1345, %v1346
        %v1348 = vsel %vm920, %v1322, 0.0
        %v1349 = vadd.f32 %v1347, %v1348
        %v1350 = vsel %vm920, %v1323, 0.0
        %v1351 = vadd.f32 %v1349, %v1350
        %v1352 = vsel %vm920, %v1324, 0.0
        %v1353 = vadd.f32 %v1351, %v1352
        %v1354 = vsel %vm920, %v1325, 0.0
        %v1355 = vadd.f32 %v1353, %v1354
        %v1356 = vsel %vm920, %v1326, 0.0
        %v1357 = vadd.f32 %v1355, %v1356
        %v1358 = vsel %vm920, %v1327, 0.0
        %v1359 = vadd.f32 %v1357, %v1358
        %v1360 = vsel %vm920, %v1328, 0.0
        %v1361 = vadd.f32 %v1359, %v1360
        %v1362 = vsel %vm920, %v1329, 0.0
        %v1363 = vadd.f32 %v1361, %v1362
        %v1364 = vsel %vm920, %v1330, 0.0
        %v1365 = vadd.f32 %v1363, %v1364
        %v1366 = vsel %vm920, %v1331, 0.0
        %v1367 = vadd.f32 %v1365, %v1366
        %v1368 = vsel %vm920, %v1332, 0.0
        %v1369 = vadd.f32 %v1367, %v1368
        %v1370 = vsel %vm920, %v1333, 0.0
        %v1371 = vadd.f32 %v1369, %v1370
        %v1372 = vsel %vm920, %v1334, 0.0
        %v1373 = vadd.f32 %v1371, %v1372
        %v1374 = vmul.f32 %v1373, %v960
        %v1376 = vrot.slane %v1374, 7
        %v1378 = vsel %vm258, 0.0, %v1376
        %v1379 = vsel %vm258, %v1376, 0.0
        %v1380 = vld [vmem:[%s1 + $0x2c0] sm:$0x1]
        %v1381 = vlaneseq
        %v1382 = vshrl.u32 %v1381, 7
        %v1383 = vsub.s32 0, %v1382
        %v1384 = vrot.slane %v1380, %v1383
        %v1385 = vmul.f32 %v1378, %v1384
        %v1386 = vld [vmem:[%s1 + $0x2c1] sm:$0x1]
        %v1387 = vlaneseq
        %v1388 = vshrl.u32 %v1387, 7
        %v1389 = vsub.s32 0, %v1388
        %v1390 = vrot.slane %v1386, %v1389
        %v1391 = vmul.f32 %v1378, %v1390
        %v1392 = vmul.f32 %v1379, %v1390
        %v1395 = vrot.slane %v1391, 1
        %v1396 = vrot.slane %v1392, 1
        %v1397 = vsel %vm982, %v1395, %v1396
        %v1399 = vadd.f32 %v1385, %v1397
        %v1400 = vld [vmem:[%s1 + $0x2c2] sm:$0x1]
        %v1401 = vlaneseq
        %v1402 = vshrl.u32 %v1401, 7
        %v1403 = vsub.s32 0, %v1402
        %v1404 = vrot.slane %v1400, %v1403
        %v1405 = vmul.f32 %v1378, %v1404
        %v1406 = vmul.f32 %v1379, %v1404
        %v1409 = vrot.slane %v1405, 2
        %v1410 = vrot.slane %v1406, 2
        %v1411 = vsel %vm997, %v1409, %v1410
        %v1413 = vadd.f32 %v1399, %v1411
        %v1414 = vld [vmem:[%s1 + $0x2c8] sm:$0x1]
        %v1415 = vlaneseq
        %v1416 = vshrl.u32 %v1415, 7
        %v1417 = vsub.s32 0, %v1416
        %v1418 = vrot.slane %v1414, %v1417
        %v1419 = vmul.f32 %v1413, %v1418
        %v1420 = vld [vmem:[%s1 + $0x2d0] sm:$0x1]
        %v1421 = vlaneseq
        %v1422 = vshrl.u32 %v1421, 7
        %v1423 = vsub.s32 0, %v1422
        %v1424 = vrot.slane %v1420, %v1423
        %v1425 = vadd.f32 %v1419, %v1424
        %v1426 = vsub.f32 0.0, %v1425
        %v1427 = vmul.f32 %v1426, 1.442695
        %v1428 = vpow.pop %v1427
        %v1429 = vadd.f32 %v1428, 1.0
        %v1430 = vrcp.pop %v1429
        %v1431 = vmul.f32 %v1425, %v1430
        %v1432 = vld [vmem:[%s2 + $0x18] sm:$0xff]
        %v1433 = vld [vmem:[%s1 + $0x2d8] sm:$0x1]
        %v1434 = vlaneseq
        %v1435 = vshrl.u32 %v1434, 7
        %v1436 = vsub.s32 0, %v1435
        %v1437 = vrot.slane %v1433, %v1436
        %v1439 = vsel %vm920, %v1431, 0
        %1441 = vmatprep.subr.mxu0 0.0
        %1442 = vmatpush1.msra.mxu0 0.0
        %1443 = vmatprep.subr.mxu0 0.0
        %1444 = vmatpush1.msra.mxu0 0.0
        %1445 = vmatprep.subr.mxu0 0.0
        %1446 = vmatpush1.msra.mxu0 0.0
        %1447 = vmatprep.subr.mxu0 0.0
        %1448 = vmatpush1.msra.mxu0 0.0
        %1449 = vmatprep.subr.mxu0 0.0
        %1450 = vmatpush1.msra.mxu0 0.0
        %1451 = vmatprep.subr.mxu0 0.0
        %1452 = vmatpush1.msra.mxu0 0.0
        %1453 = vmatprep.subr.mxu0 0.0
        %1454 = vmatpush1.msra.mxu0 0.0
        %1455 = vmatprep.subr.mxu0 0.0
        %1456 = vmatpush1.msra.mxu0 0.0
        %1457 = vmatprep.subr.mxu0 0.0
        %1458 = vmatpush1.msra.mxu0 0.0
        %1459 = vmatprep.subr.mxu0 0.0
        %1460 = vmatpush1.msra.mxu0 0.0
        %1461 = vmatprep.subr.mxu0 0.0
        %1462 = vmatpush1.msra.mxu0 0.0
        %1463 = vmatprep.subr.mxu0 0.0
        %1464 = vmatpush1.msra.mxu0 0.0
        %1465 = vmatprep.subr.mxu0 0.0
        %1466 = vmatpush1.msra.mxu0 0.0
        %1467 = vmatprep.subr.mxu0 0.0
        %1468 = vmatpush1.msra.mxu0 0.0
        %1469 = vmatprep.subr.mxu0 0.0
        %1470 = vmatpush1.msra.mxu0 0.0
        %1471 = vmatprep.subr.mxu0 0.0
        %1472 = vmatpush1.msra.mxu0 %v1432
        %1473 = vmatprep.subr.mxu0 0.0
        %1474 = vmatpush2.msra.mxu0 0.0
        %1475 = vmatprep.subr.mxu0 0.0
        %1476 = vmatpush2.msra.mxu0 0.0
        %1477 = vmatprep.subr.mxu0 0.0
        %1478 = vmatpush2.msra.mxu0 0.0
        %1479 = vmatprep.subr.mxu0 0.0
        %1480 = vmatpush2.msra.mxu0 0.0
        %1481 = vmatprep.subr.mxu0 0.0
        %1482 = vmatpush2.msra.mxu0 0.0
        %1483 = vmatprep.subr.mxu0 0.0
        %1484 = vmatpush2.msra.mxu0 0.0
        %1485 = vmatprep.subr.mxu0 0.0
        %1486 = vmatpush2.msra.mxu0 0.0
        %1487 = vmatprep.subr.mxu0 0.0
        %1488 = vmatpush2.msra.mxu0 0.0
        %1489 = vmatprep.subr.mxu0 0.0
        %1490 = vmatpush2.msra.mxu0 0.0
        %1491 = vmatprep.subr.mxu0 0.0
        %1492 = vmatpush2.msra.mxu0 0.0
        %1493 = vmatprep.subr.mxu0 0.0
        %1494 = vmatpush2.msra.mxu0 0.0
        %1495 = vmatprep.subr.mxu0 0.0
        %1496 = vmatpush2.msra.mxu0 0.0
        %1497 = vmatprep.subr.mxu0 0.0
        %1498 = vmatpush2.msra.mxu0 0.0
        %1499 = vmatprep.subr.mxu0 0.0
        %1500 = vmatpush2.msra.mxu0 0.0
        %1501 = vmatprep.subr.mxu0 0.0
        %1502 = vmatpush2.msra.mxu0 0.0
        %1503 = vmatprep.subr.mxu0 0.0
        %1504 = vmatpush2.msra.mxu0 0.0
        %1505 = vmatprep.mubr.f32.mxu0 0.0
        %1506 = vmatmul.mubr.f32.gmra.mxu0 %v1439
        %v1507 = vpop.f32.mrf.mxu0
        %v1508 = vadd.f32 %v1437, %v1507
        %v1509 = vpop.f32.mrf.mxu0
        %1510 = vdwg.mxu0
        %v1511 = vadd.f32 %v1120, %v1315
        %v1512 = vadd.f32 %v1121, %v1316
        %v1513 = vadd.f32 %v1122, %v1317
        %v1514 = vadd.f32 %v1123, %v1318
        %v1515 = vadd.f32 %v1124, %v1319
        %v1516 = vadd.f32 %v1125, %v1320
        %v1517 = vadd.f32 %v1126, %v1321
        %v1518 = vadd.f32 %v1127, %v1322
        %v1519 = vadd.f32 %v1128, %v1323
        %v1520 = vadd.f32 %v1129, %v1324
        %v1521 = vadd.f32 %v1130, %v1325
        %v1522 = vadd.f32 %v1131, %v1326
        %v1523 = vadd.f32 %v1132, %v1327
        %v1524 = vadd.f32 %v1133, %v1328
        %v1525 = vadd.f32 %v1134, %v1329
        %v1526 = vadd.f32 %v1135, %v1330
        %v1527 = vadd.f32 %v1136, %v1331
        %v1528 = vadd.f32 %v1137, %v1332
        %v1529 = vadd.f32 %v1138, %v1333
        %v1530 = vadd.f32 %v1139, %v1334
        %v1531 = vadd.f32 %v1511, %v1508
        %v1532 = vadd.f32 %v1512, %v1508
        %v1533 = vadd.f32 %v1513, %v1508
        %v1534 = vadd.f32 %v1514, %v1508
        %v1535 = vadd.f32 %v1515, %v1508
        %v1536 = vadd.f32 %v1516, %v1508
        %v1537 = vadd.f32 %v1517, %v1508
        %v1538 = vadd.f32 %v1518, %v1508
        %v1539 = vadd.f32 %v1519, %v1508
        %v1540 = vadd.f32 %v1520, %v1508
        %v1541 = vadd.f32 %v1521, %v1508
        %v1542 = vadd.f32 %v1522, %v1508
        %v1543 = vadd.f32 %v1523, %v1508
        %v1544 = vadd.f32 %v1524, %v1508
        %v1545 = vadd.f32 %v1525, %v1508
        %v1546 = vadd.f32 %v1526, %v1508
        %v1547 = vadd.f32 %v1527, %v1508
        %v1548 = vadd.f32 %v1528, %v1508
        %v1549 = vadd.f32 %v1529, %v1508
        %v1550 = vadd.f32 %v1530, %v1508
        %v1551 = vmax.f32 %v1531, 0.0
        %v1552 = vmax.f32 %v1532, 0.0
        %v1553 = vmax.f32 %v1533, 0.0
        %v1554 = vmax.f32 %v1534, 0.0
        %v1555 = vmax.f32 %v1535, 0.0
        %v1556 = vmax.f32 %v1536, 0.0
        %v1557 = vmax.f32 %v1537, 0.0
        %v1558 = vmax.f32 %v1538, 0.0
        %v1559 = vmax.f32 %v1539, 0.0
        %v1560 = vmax.f32 %v1540, 0.0
        %v1561 = vmax.f32 %v1541, 0.0
        %v1562 = vmax.f32 %v1542, 0.0
        %v1563 = vmax.f32 %v1543, 0.0
        %v1564 = vmax.f32 %v1544, 0.0
        %v1565 = vmax.f32 %v1545, 0.0
        %v1566 = vmax.f32 %v1546, 0.0
        %v1567 = vmax.f32 %v1547, 0.0
        %v1568 = vmax.f32 %v1548, 0.0
        %v1569 = vmax.f32 %v1549, 0.0
        %v1570 = vmax.f32 %v1550, 0.0
        %v1571 = vld [vmem:[%s2 + $0x20] sm:$0xff]
        %v1573 = vsel %vm920, %v1551, 0
        %v1576 = vsel %vm920, %v1552, 0
        %v1579 = vsel %vm920, %v1553, 0
        %v1582 = vsel %vm920, %v1554, 0
        %v1585 = vsel %vm920, %v1555, 0
        %v1588 = vsel %vm920, %v1556, 0
        %v1591 = vsel %vm920, %v1557, 0
        %v1594 = vsel %vm920, %v1558, 0
        %v1597 = vsel %vm920, %v1559, 0
        %v1600 = vsel %vm920, %v1560, 0
        %v1603 = vsel %vm920, %v1561, 0
        %v1606 = vsel %vm920, %v1562, 0
        %v1609 = vsel %vm920, %v1563, 0
        %v1612 = vsel %vm920, %v1564, 0
        %v1615 = vsel %vm920, %v1565, 0
        %v1618 = vsel %vm920, %v1566, 0
        %v1621 = vsel %vm920, %v1567, 0
        %v1624 = vsel %vm920, %v1568, 0
        %v1627 = vsel %vm920, %v1569, 0
        %v1630 = vsel %vm920, %v1570, 0
        %1632 = vmatprep.subr.mxu0 0.0
        %1633 = vmatpush1.msra.mxu0 0.0
        %1634 = vmatprep.subr.mxu0 0.0
        %1635 = vmatpush1.msra.mxu0 0.0
        %1636 = vmatprep.subr.mxu0 0.0
        %1637 = vmatpush1.msra.mxu0 0.0
        %1638 = vmatprep.subr.mxu0 0.0
        %1639 = vmatpush1.msra.mxu0 0.0
        %1640 = vmatprep.subr.mxu0 0.0
        %1641 = vmatpush1.msra.mxu0 0.0
        %1642 = vmatprep.subr.mxu0 0.0
        %1643 = vmatpush1.msra.mxu0 0.0
        %1644 = vmatprep.subr.mxu0 0.0
        %1645 = vmatpush1.msra.mxu0 0.0
        %1646 = vmatprep.subr.mxu0 0.0
        %1647 = vmatpush1.msra.mxu0 0.0
        %1648 = vmatprep.subr.mxu0 0.0
        %1649 = vmatpush1.msra.mxu0 0.0
        %1650 = vmatprep.subr.mxu0 0.0
        %1651 = vmatpush1.msra.mxu0 0.0
        %1652 = vmatprep.subr.mxu0 0.0
        %1653 = vmatpush1.msra.mxu0 0.0
        %1654 = vmatprep.subr.mxu0 0.0
        %1655 = vmatpush1.msra.mxu0 0.0
        %1656 = vmatprep.subr.mxu0 0.0
        %1657 = vmatpush1.msra.mxu0 0.0
        %1658 = vmatprep.subr.mxu0 0.0
        %1659 = vmatpush1.msra.mxu0 0.0
        %1660 = vmatprep.subr.mxu0 0.0
        %1661 = vmatpush1.msra.mxu0 0.0
        %1662 = vmatprep.subr.mxu0 0.0
        %1663 = vmatpush1.msra.mxu0 %v1571
        %1664 = vmatprep.subr.mxu0 0.0
        %1665 = vmatpush2.msra.mxu0 0.0
        %1666 = vmatprep.subr.mxu0 0.0
        %1667 = vmatpush2.msra.mxu0 0.0
        %1668 = vmatprep.subr.mxu0 0.0
        %1669 = vmatpush2.msra.mxu0 0.0
        %1670 = vmatprep.subr.mxu0 0.0
        %1671 = vmatpush2.msra.mxu0 0.0
        %1672 = vmatprep.subr.mxu0 0.0
        %1673 = vmatpush2.msra.mxu0 0.0
        %1674 = vmatprep.subr.mxu0 0.0
        %1675 = vmatpush2.msra.mxu0 0.0
        %1676 = vmatprep.subr.mxu0 0.0
        %1677 = vmatpush2.msra.mxu0 0.0
        %1678 = vmatprep.subr.mxu0 0.0
        %1679 = vmatpush2.msra.mxu0 0.0
        %1680 = vmatprep.subr.mxu0 0.0
        %1681 = vmatpush2.msra.mxu0 0.0
        %1682 = vmatprep.subr.mxu0 0.0
        %1683 = vmatpush2.msra.mxu0 0.0
        %1684 = vmatprep.subr.mxu0 0.0
        %1685 = vmatpush2.msra.mxu0 0.0
        %1686 = vmatprep.subr.mxu0 0.0
        %1687 = vmatpush2.msra.mxu0 0.0
        %1688 = vmatprep.subr.mxu0 0.0
        %1689 = vmatpush2.msra.mxu0 0.0
        %1690 = vmatprep.subr.mxu0 0.0
        %1691 = vmatpush2.msra.mxu0 0.0
        %1692 = vmatprep.subr.mxu0 0.0
        %1693 = vmatpush2.msra.mxu0 0.0
        %1694 = vmatprep.subr.mxu0 0.0
        %1695 = vmatpush2.msra.mxu0 0.0
        %1696 = vmatprep.mubr.f32.mxu0 0.0
        %1697 = vmatmul.mubr.f32.gmra.mxu0 %v1573
        %v1698 = vpop.f32.mrf.mxu0
        %v1699 = vadd.f32 0.0, %v1698
        %v1700 = vpop.f32.mrf.mxu0
        %1701 = vmatprep.mubr.f32.mxu0 0.0
        %1702 = vmatmul.mubr.f32.gmra.mxu0 %v1576
        %v1703 = vpop.f32.mrf.mxu0
        %v1704 = vadd.f32 0.0, %v1703
        %v1705 = vpop.f32.mrf.mxu0
        %1706 = vmatprep.mubr.f32.mxu0 0.0
        %1707 = vmatmul.mubr.f32.gmra.mxu0 %v1579
        %v1708 = vpop.f32.mrf.mxu0
        %v1709 = vadd.f32 0.0, %v1708
        %v1710 = vpop.f32.mrf.mxu0
        %1711 = vmatprep.mubr.f32.mxu0 0.0
        %1712 = vmatmul.mubr.f32.gmra.mxu0 %v1582
        %v1713 = vpop.f32.mrf.mxu0
        %v1714 = vadd.f32 0.0, %v1713
        %v1715 = vpop.f32.mrf.mxu0
        %1716 = vmatprep.mubr.f32.mxu0 0.0
        %1717 = vmatmul.mubr.f32.gmra.mxu0 %v1585
        %v1718 = vpop.f32.mrf.mxu0
        %v1719 = vadd.f32 0.0, %v1718
        %v1720 = vpop.f32.mrf.mxu0
        %1721 = vmatprep.mubr.f32.mxu0 0.0
        %1722 = vmatmul.mubr.f32.gmra.mxu0 %v1588
        %v1723 = vpop.f32.mrf.mxu0
        %v1724 = vadd.f32 0.0, %v1723
        %v1725 = vpop.f32.mrf.mxu0
        %1726 = vmatprep.mubr.f32.mxu0 0.0
        %1727 = vmatmul.mubr.f32.gmra.mxu0 %v1591
        %v1728 = vpop.f32.mrf.mxu0
        %v1729 = vadd.f32 0.0, %v1728
        %v1730 = vpop.f32.mrf.mxu0
        %1731 = vmatprep.mubr.f32.mxu0 0.0
        %1732 = vmatmul.mubr.f32.gmra.mxu0 %v1594
        %v1733 = vpop.f32.mrf.mxu0
        %v1734 = vadd.f32 0.0, %v1733
        %v1735 = vpop.f32.mrf.mxu0
        %1736 = vmatprep.mubr.f32.mxu0 0.0
        %1737 = vmatmul.mubr.f32.gmra.mxu0 %v1597
        %v1738 = vpop.f32.mrf.mxu0
        %v1739 = vadd.f32 0.0, %v1738
        %v1740 = vpop.f32.mrf.mxu0
        %1741 = vmatprep.mubr.f32.mxu0 0.0
        %1742 = vmatmul.mubr.f32.gmra.mxu0 %v1600
        %v1743 = vpop.f32.mrf.mxu0
        %v1744 = vadd.f32 0.0, %v1743
        %v1745 = vpop.f32.mrf.mxu0
        %1746 = vmatprep.mubr.f32.mxu0 0.0
        %1747 = vmatmul.mubr.f32.gmra.mxu0 %v1603
        %v1748 = vpop.f32.mrf.mxu0
        %v1749 = vadd.f32 0.0, %v1748
        %v1750 = vpop.f32.mrf.mxu0
        %1751 = vmatprep.mubr.f32.mxu0 0.0
        %1752 = vmatmul.mubr.f32.gmra.mxu0 %v1606
        %v1753 = vpop.f32.mrf.mxu0
        %v1754 = vadd.f32 0.0, %v1753
        %v1755 = vpop.f32.mrf.mxu0
        %1756 = vmatprep.mubr.f32.mxu0 0.0
        %1757 = vmatmul.mubr.f32.gmra.mxu0 %v1609
        %v1758 = vpop.f32.mrf.mxu0
        %v1759 = vadd.f32 0.0, %v1758
        %v1760 = vpop.f32.mrf.mxu0
        %1761 = vmatprep.mubr.f32.mxu0 0.0
        %1762 = vmatmul.mubr.f32.gmra.mxu0 %v1612
        %v1763 = vpop.f32.mrf.mxu0
        %v1764 = vadd.f32 0.0, %v1763
        %v1765 = vpop.f32.mrf.mxu0
        %1766 = vmatprep.mubr.f32.mxu0 0.0
        %1767 = vmatmul.mubr.f32.gmra.mxu0 %v1615
        %v1768 = vpop.f32.mrf.mxu0
        %v1769 = vadd.f32 0.0, %v1768
        %v1770 = vpop.f32.mrf.mxu0
        %1771 = vmatprep.mubr.f32.mxu0 0.0
        %1772 = vmatmul.mubr.f32.gmra.mxu0 %v1618
        %v1773 = vpop.f32.mrf.mxu0
        %v1774 = vadd.f32 0.0, %v1773
        %v1775 = vpop.f32.mrf.mxu0
        %1776 = vmatprep.mubr.f32.mxu0 0.0
        %1777 = vmatmul.mubr.f32.gmra.mxu0 %v1621
        %v1778 = vpop.f32.mrf.mxu0
        %v1779 = vadd.f32 0.0, %v1778
        %v1780 = vpop.f32.mrf.mxu0
        %1781 = vmatprep.mubr.f32.mxu0 0.0
        %1782 = vmatmul.mubr.f32.gmra.mxu0 %v1624
        %v1783 = vpop.f32.mrf.mxu0
        %v1784 = vadd.f32 0.0, %v1783
        %v1785 = vpop.f32.mrf.mxu0
        %1786 = vmatprep.mubr.f32.mxu0 0.0
        %1787 = vmatmul.mubr.f32.gmra.mxu0 %v1627
        %v1788 = vpop.f32.mrf.mxu0
        %v1789 = vadd.f32 0.0, %v1788
        %v1790 = vpop.f32.mrf.mxu0
        %1791 = vmatprep.mubr.f32.mxu0 0.0
        %1792 = vmatmul.mubr.f32.gmra.mxu0 %v1630
        %v1793 = vpop.f32.mrf.mxu0
        %v1794 = vadd.f32 0.0, %v1793
        %v1795 = vpop.f32.mrf.mxu0
        %1796 = vdwg.mxu0
        %v1797 = vld [vmem:[%s1 + $0x2e0] sm:$0x1]
        %v1798 = vlaneseq
        %v1799 = vshrl.u32 %v1798, 7
        %v1800 = vsub.s32 0, %v1799
        %v1801 = vrot.slane %v1797, %v1800
        %v1802 = vmul.f32 %v1699, %v1801
        %v1803 = vmul.f32 %v1704, %v1801
        %v1804 = vmul.f32 %v1709, %v1801
        %v1805 = vmul.f32 %v1714, %v1801
        %v1806 = vmul.f32 %v1719, %v1801
        %v1807 = vmul.f32 %v1724, %v1801
        %v1808 = vmul.f32 %v1729, %v1801
        %v1809 = vmul.f32 %v1734, %v1801
        %v1810 = vmul.f32 %v1739, %v1801
        %v1811 = vmul.f32 %v1744, %v1801
        %v1812 = vmul.f32 %v1749, %v1801
        %v1813 = vmul.f32 %v1754, %v1801
        %v1814 = vmul.f32 %v1759, %v1801
        %v1815 = vmul.f32 %v1764, %v1801
        %v1816 = vmul.f32 %v1769, %v1801
        %v1817 = vmul.f32 %v1774, %v1801
        %v1818 = vmul.f32 %v1779, %v1801
        %v1819 = vmul.f32 %v1784, %v1801
        %v1820 = vmul.f32 %v1789, %v1801
        %v1821 = vmul.f32 %v1794, %v1801
        %v1822 = vld [vmem:[%s1 + $0x2e8] sm:$0x1]
        %v1823 = vlaneseq
        %v1824 = vshrl.u32 %v1823, 7
        %v1825 = vsub.s32 0, %v1824
        %v1826 = vrot.slane %v1822, %v1825
        %v1827 = vadd.f32 %v1802, %v1826
        %v1828 = vadd.f32 %v1803, %v1826
        %v1829 = vadd.f32 %v1804, %v1826
        %v1830 = vadd.f32 %v1805, %v1826
        %v1831 = vadd.f32 %v1806, %v1826
        %v1832 = vadd.f32 %v1807, %v1826
        %v1833 = vadd.f32 %v1808, %v1826
        %v1834 = vadd.f32 %v1809, %v1826
        %v1835 = vadd.f32 %v1810, %v1826
        %v1836 = vadd.f32 %v1811, %v1826
        %v1837 = vadd.f32 %v1812, %v1826
        %v1838 = vadd.f32 %v1813, %v1826
        %v1839 = vadd.f32 %v1814, %v1826
        %v1840 = vadd.f32 %v1815, %v1826
        %v1841 = vadd.f32 %v1816, %v1826
        %v1842 = vadd.f32 %v1817, %v1826
        %v1843 = vadd.f32 %v1818, %v1826
        %v1844 = vadd.f32 %v1819, %v1826
        %v1845 = vadd.f32 %v1820, %v1826
        %v1846 = vadd.f32 %v1821, %v1826
        %v1847 = vmax.f32 %v1827, 0.0
        %v1848 = vmax.f32 %v1828, 0.0
        %v1849 = vmax.f32 %v1829, 0.0
        %v1850 = vmax.f32 %v1830, 0.0
        %v1851 = vmax.f32 %v1831, 0.0
        %v1852 = vmax.f32 %v1832, 0.0
        %v1853 = vmax.f32 %v1833, 0.0
        %v1854 = vmax.f32 %v1834, 0.0
        %v1855 = vmax.f32 %v1835, 0.0
        %v1856 = vmax.f32 %v1836, 0.0
        %v1857 = vmax.f32 %v1837, 0.0
        %v1858 = vmax.f32 %v1838, 0.0
        %v1859 = vmax.f32 %v1839, 0.0
        %v1860 = vmax.f32 %v1840, 0.0
        %v1861 = vmax.f32 %v1841, 0.0
        %v1862 = vmax.f32 %v1842, 0.0
        %v1863 = vmax.f32 %v1843, 0.0
        %v1864 = vmax.f32 %v1844, 0.0
        %v1865 = vmax.f32 %v1845, 0.0
        %v1866 = vmax.f32 %v1846, 0.0
        %v1867 = vld [vmem:[%s1 + $0x2f0] sm:$0x1]
        %v1868 = vld [vmem:[%s1 + $0x2f1] sm:$0x1]
        %v1869 = vld [vmem:[%s1 + $0x2f2] sm:$0x1]
        %v1870 = vlaneseq
        %v1871 = vshrl.u32 %v1870, 7
        %v1872 = vsub.s32 0, %v1871
        %v1873 = vrot.slane %v1867, %v1872
        %v1874 = vmul.f32 %v1873, 0.0
        %v1875 = vmul.f32 %v1848, %v1873
        %v1876 = vmul.f32 %v1850, %v1873
        %v1877 = vmul.f32 %v1852, %v1873
        %v1878 = vmul.f32 %v1854, %v1873
        %v1879 = vmul.f32 %v1856, %v1873
        %v1880 = vmul.f32 %v1858, %v1873
        %v1881 = vmul.f32 %v1860, %v1873
        %v1882 = vmul.f32 %v1862, %v1873
        %v1883 = vmul.f32 %v1864, %v1873
        %v1884 = vlaneseq
        %v1885 = vshrl.u32 %v1884, 7
        %v1886 = vsub.s32 0, %v1885
        %v1887 = vrot.slane %v1868, %v1886
        %v1888 = vmul.f32 %v1847, %v1887
        %v1889 = vmul.f32 %v1849, %v1887
        %v1890 = vmul.f32 %v1851, %v1887
        %v1891 = vmul.f32 %v1853, %v1887
        %v1892 = vmul.f32 %v1855, %v1887
        %v1893 = vmul.f32 %v1857, %v1887
        %v1894 = vmul.f32 %v1859, %v1887
        %v1895 = vmul.f32 %v1861, %v1887
        %v1896 = vmul.f32 %v1863, %v1887
        %v1897 = vmul.f32 %v1865, %v1887
        %v1898 = vadd.f32 %v1874, %v1888
        %v1899 = vadd.f32 %v1875, %v1889
        %v1900 = vadd.f32 %v1876, %v1890
        %v1901 = vadd.f32 %v1877, %v1891
        %v1902 = vadd.f32 %v1878, %v1892
        %v1903 = vadd.f32 %v1879, %v1893
        %v1904 = vadd.f32 %v1880, %v1894
        %v1905 = vadd.f32 %v1881, %v1895
        %v1906 = vadd.f32 %v1882, %v1896
        %v1907 = vadd.f32 %v1883, %v1897
        %v1908 = vlaneseq
        %v1909 = vshrl.u32 %v1908, 7
        %v1910 = vsub.s32 0, %v1909
        %v1911 = vrot.slane %v1869, %v1910
        %v1912 = vmul.f32 %v1848, %v1911
        %v1913 = vmul.f32 %v1850, %v1911
        %v1914 = vmul.f32 %v1852, %v1911
        %v1915 = vmul.f32 %v1854, %v1911
        %v1916 = vmul.f32 %v1856, %v1911
        %v1917 = vmul.f32 %v1858, %v1911
        %v1918 = vmul.f32 %v1860, %v1911
        %v1919 = vmul.f32 %v1862, %v1911
        %v1920 = vmul.f32 %v1864, %v1911
        %v1921 = vmul.f32 %v1866, %v1911
        %v1922 = vadd.f32 %v1898, %v1912
        %v1923 = vadd.f32 %v1899, %v1913
        %v1924 = vadd.f32 %v1900, %v1914
        %v1925 = vadd.f32 %v1901, %v1915
        %v1926 = vadd.f32 %v1902, %v1916
        %v1927 = vadd.f32 %v1903, %v1917
        %v1928 = vadd.f32 %v1904, %v1918
        %v1929 = vadd.f32 %v1905, %v1919
        %v1930 = vadd.f32 %v1906, %v1920
        %v1931 = vadd.f32 %v1907, %v1921
        %v1932 = vld [vmem:[%s1 + $0x2f8] sm:$0xff]
        %v1933 = vld [vmem:[%s1 + $0x300] sm:$0xff]
        %v1934 = vld [vmem:[%s1 + $0x308] sm:$0xff]
        %v1935 = vld [vmem:[%s1 + $0x310] sm:$0xff]
        %v1936 = vld [vmem:[%s1 + $0x318] sm:$0xff]
        %v1937 = vld [vmem:[%s1 + $0x320] sm:$0xff]
        %v1938 = vld [vmem:[%s1 + $0x328] sm:$0xff]
        %v1939 = vld [vmem:[%s1 + $0x330] sm:$0xff]
        %v1940 = vld [vmem:[%s1 + $0x338] sm:$0xff]
        %v1941 = vld [vmem:[%s1 + $0x340] sm:$0xff]
        %v1942 = vmul.f32 %v1922, %v1932
        %v1943 = vmul.f32 %v1923, %v1933
        %v1944 = vmul.f32 %v1924, %v1934
        %v1945 = vmul.f32 %v1925, %v1935
        %v1946 = vmul.f32 %v1926, %v1936
        %v1947 = vmul.f32 %v1927, %v1937
        %v1948 = vmul.f32 %v1928, %v1938
        %v1949 = vmul.f32 %v1929, %v1939
        %v1950 = vmul.f32 %v1930, %v1940
        %v1951 = vmul.f32 %v1931, %v1941
        %v1952 = vld [vmem:[%s1 + $0x348] sm:$0xff]
        %v1953 = vld [vmem:[%s1 + $0x350] sm:$0xff]
        %v1954 = vld [vmem:[%s1 + $0x358] sm:$0xff]
        %v1955 = vld [vmem:[%s1 + $0x360] sm:$0xff]
        %v1956 = vld [vmem:[%s1 + $0x368] sm:$0xff]
        %v1957 = vld [vmem:[%s1 + $0x370] sm:$0xff]
        %v1958 = vld [vmem:[%s1 + $0x378] sm:$0xff]
        %v1959 = vld [vmem:[%s1 + $0x380] sm:$0xff]
        %v1960 = vld [vmem:[%s1 + $0x388] sm:$0xff]
        %v1961 = vld [vmem:[%s1 + $0x390] sm:$0xff]
        %v1962 = vadd.f32 %v1942, %v1952
        %v1963 = vadd.f32 %v1943, %v1953
        %v1964 = vadd.f32 %v1944, %v1954
        %v1965 = vadd.f32 %v1945, %v1955
        %v1966 = vadd.f32 %v1946, %v1956
        %v1967 = vadd.f32 %v1947, %v1957
        %v1968 = vadd.f32 %v1948, %v1958
        %v1969 = vadd.f32 %v1949, %v1959
        %v1970 = vadd.f32 %v1950, %v1960
        %v1971 = vadd.f32 %v1951, %v1961
        %vm1972 = vcmask 97280
        %v1973 = vsel %vm1972, %v1962, 0.0
        %v1974 = vsel %vm1972, %v1963, 0.0
        %v1975 = vadd.f32 %v1973, %v1974
        %v1976 = vsel %vm1972, %v1964, 0.0
        %v1977 = vadd.f32 %v1975, %v1976
        %v1978 = vsel %vm1972, %v1965, 0.0
        %v1979 = vadd.f32 %v1977, %v1978
        %v1980 = vsel %vm1972, %v1966, 0.0
        %v1981 = vadd.f32 %v1979, %v1980
        %v1982 = vsel %vm1972, %v1967, 0.0
        %v1983 = vadd.f32 %v1981, %v1982
        %v1984 = vsel %vm1972, %v1968, 0.0
        %v1985 = vadd.f32 %v1983, %v1984
        %v1986 = vsel %vm1972, %v1969, 0.0
        %v1987 = vadd.f32 %v1985, %v1986
        %v1988 = vsel %vm1972, %v1970, 0.0
        %v1989 = vadd.f32 %v1987, %v1988
        %v1990 = vsel %vm1972, %v1971, 0.0
        %v1991 = vadd.f32 %v1989, %v1990
        %v1992 = vrcp.pop 10.0
        %v1993 = vmul.f32 %v1991, %v1992
        %v1995 = vrot.slane %v1993, 6
        %vm1997 = vcmask 1041408
        %v1998 = vsel %vm1997, 0.0, %v1995
        %v1999 = vsel %vm1997, %v1995, 0.0
        %v2000 = vld [vmem:[%s1 + $0x398] sm:$0x1]
        %v2001 = vlaneseq
        %v2002 = vshrl.u32 %v2001, 7
        %v2003 = vsub.s32 0, %v2002
        %v2004 = vrot.slane %v2000, %v2003
        %v2005 = vmul.f32 %v1998, %v2004
        %v2006 = vld [vmem:[%s1 + $0x399] sm:$0x1]
        %v2007 = vlaneseq
        %v2008 = vshrl.u32 %v2007, 7
        %v2009 = vsub.s32 0, %v2008
        %v2010 = vrot.slane %v2006, %v2009
        %v2011 = vmul.f32 %v1998, %v2010
        %v2012 = vmul.f32 %v1999, %v2010
        %v2015 = vrot.slane %v2011, 2
        %v2016 = vrot.slane %v2012, 2
        %v2017 = vsel %vm997, %v2015, %v2016
        %v2019 = vadd.f32 %v2005, %v2017
        %v2020 = vld [vmem:[%s1 + $0x39a] sm:$0x1]
        %v2021 = vlaneseq
        %v2022 = vshrl.u32 %v2021, 7
        %v2023 = vsub.s32 0, %v2022
        %v2024 = vrot.slane %v2020, %v2023
        %v2025 = vmul.f32 %v1998, %v2024
        %v2026 = vmul.f32 %v1999, %v2024
        %vm2029 = vcmask 1043456
        %v2030 = vrot.slane %v2025, 4
        %v2031 = vrot.slane %v2026, 4
        %v2032 = vsel %vm2029, %v2030, %v2031
        %v2034 = vadd.f32 %v2019, %v2032
        %v2035 = vld [vmem:[%s1 + $0x3a0] sm:$0x1]
        %v2036 = vlaneseq
        %v2037 = vshrl.u32 %v2036, 7
        %v2038 = vsub.s32 0, %v2037
        %v2039 = vrot.slane %v2035, %v2038
        %v2040 = vmul.f32 %v2034, %v2039
        %v2041 = vld [vmem:[%s1 + $0x3a8] sm:$0x1]
        %v2042 = vlaneseq
        %v2043 = vshrl.u32 %v2042, 7
        %v2044 = vsub.s32 0, %v2043
        %v2045 = vrot.slane %v2041, %v2044
        %v2046 = vadd.f32 %v2040, %v2045
        %v2047 = vsub.f32 0.0, %v2046
        %v2048 = vmul.f32 %v2047, 1.442695
        %v2049 = vpow.pop %v2048
        %v2050 = vadd.f32 %v2049, 1.0
        %v2051 = vrcp.pop %v2050
        %v2052 = vmul.f32 %v2046, %v2051
        %v2053 = vld [vmem:[%s2 + $0x28] sm:$0xff]
        %v2054 = vld [vmem:[%s2 + $0x30] sm:$0xf]
        %v2055 = vld [vmem:[%s1 + $0x3b0] sm:$0x1]
        %v2056 = vlaneseq
        %v2057 = vshrl.u32 %v2056, 7
        %v2058 = vsub.s32 0, %v2057
        %v2059 = vrot.slane %v2055, %v2058
        %v2061 = vsel %vm1972, %v2052, 0
        %v2064 = vsel %vm2029, %v2054, 0
        %2066 = vmatprep.subr.mxu0 0.0
        %2067 = vmatpush1.msra.mxu0 0.0
        %2068 = vmatprep.subr.mxu0 0.0
        %2069 = vmatpush1.msra.mxu0 0.0
        %2070 = vmatprep.subr.mxu0 0.0
        %2071 = vmatpush1.msra.mxu0 0.0
        %2072 = vmatprep.subr.mxu0 0.0
        %2073 = vmatpush1.msra.mxu0 0.0
        %2074 = vmatprep.subr.mxu0 0.0
        %2075 = vmatpush1.msra.mxu0 0.0
        %2076 = vmatprep.subr.mxu0 0.0
        %2077 = vmatpush1.msra.mxu0 0.0
        %2078 = vmatprep.subr.mxu0 0.0
        %2079 = vmatpush1.msra.mxu0 0.0
        %2080 = vmatprep.subr.mxu0 0.0
        %2081 = vmatpush1.msra.mxu0 0.0
        %2082 = vmatprep.subr.mxu0 0.0
        %2083 = vmatpush1.msra.mxu0 0.0
        %2084 = vmatprep.subr.mxu0 0.0
        %2085 = vmatpush1.msra.mxu0 0.0
        %2086 = vmatprep.subr.mxu0 0.0
        %2087 = vmatpush1.msra.mxu0 0.0
        %2088 = vmatprep.subr.mxu0 0.0
        %2089 = vmatpush1.msra.mxu0 0.0
        %2090 = vmatprep.subr.mxu0 0.0
        %2091 = vmatpush1.msra.mxu0 0.0
        %2092 = vmatprep.subr.mxu0 0.0
        %2093 = vmatpush1.msra.mxu0 0.0
        %2094 = vmatprep.subr.mxu0 0.0
        %2095 = vmatpush1.msra.mxu0 %v2064
        %2096 = vmatprep.subr.mxu0 0.0
        %2097 = vmatpush1.msra.mxu0 %v2053
        %2098 = vmatprep.subr.mxu0 0.0
        %2099 = vmatpush2.msra.mxu0 0.0
        %2100 = vmatprep.subr.mxu0 0.0
        %2101 = vmatpush2.msra.mxu0 0.0
        %2102 = vmatprep.subr.mxu0 0.0
        %2103 = vmatpush2.msra.mxu0 0.0
        %2104 = vmatprep.subr.mxu0 0.0
        %2105 = vmatpush2.msra.mxu0 0.0
        %2106 = vmatprep.subr.mxu0 0.0
        %2107 = vmatpush2.msra.mxu0 0.0
        %2108 = vmatprep.subr.mxu0 0.0
        %2109 = vmatpush2.msra.mxu0 0.0
        %2110 = vmatprep.subr.mxu0 0.0
        %2111 = vmatpush2.msra.mxu0 0.0
        %2112 = vmatprep.subr.mxu0 0.0
        %2113 = vmatpush2.msra.mxu0 0.0
        %2114 = vmatprep.subr.mxu0 0.0
        %2115 = vmatpush2.msra.mxu0 0.0
        %2116 = vmatprep.subr.mxu0 0.0
        %2117 = vmatpush2.msra.mxu0 0.0
        %2118 = vmatprep.subr.mxu0 0.0
        %2119 = vmatpush2.msra.mxu0 0.0
        %2120 = vmatprep.subr.mxu0 0.0
        %2121 = vmatpush2.msra.mxu0 0.0
        %2122 = vmatprep.subr.mxu0 0.0
        %2123 = vmatpush2.msra.mxu0 0.0
        %2124 = vmatprep.subr.mxu0 0.0
        %2125 = vmatpush2.msra.mxu0 0.0
        %2126 = vmatprep.subr.mxu0 0.0
        %2127 = vmatpush2.msra.mxu0 0.0
        %2128 = vmatprep.subr.mxu0 0.0
        %2129 = vmatpush2.msra.mxu0 0.0
        %2130 = vmatprep.mubr.f32.mxu0 0.0
        %2131 = vmatmul.mubr.f32.gmra.mxu0 %v2061
        %v2132 = vpop.f32.mrf.mxu0
        %v2133 = vadd.f32 %v2059, %v2132
        %v2134 = vpop.f32.mrf.mxu0
        %2135 = vdwg.mxu0
        %v2136 = vadd.f32 %v1962, %v2133
        %v2137 = vadd.f32 %v1963, %v2133
        %v2138 = vadd.f32 %v1964, %v2133
        %v2139 = vadd.f32 %v1965, %v2133
        %v2140 = vadd.f32 %v1966, %v2133
        %v2141 = vadd.f32 %v1967, %v2133
        %v2142 = vadd.f32 %v1968, %v2133
        %v2143 = vadd.f32 %v1969, %v2133
        %v2144 = vadd.f32 %v1970, %v2133
        %v2145 = vadd.f32 %v1971, %v2133
        %v2146 = vmax.f32 %v2136, 0.0
        %v2147 = vmax.f32 %v2137, 0.0
        %v2148 = vmax.f32 %v2138, 0.0
        %v2149 = vmax.f32 %v2139, 0.0
        %v2150 = vmax.f32 %v2140, 0.0
        %v2151 = vmax.f32 %v2141, 0.0
        %v2152 = vmax.f32 %v2142, 0.0
        %v2153 = vmax.f32 %v2143, 0.0
        %v2154 = vmax.f32 %v2144, 0.0
        %v2155 = vmax.f32 %v2145, 0.0
        %v2156 = vld [vmem:[%s1 + $0x3b8] sm:$0x1]
        %v2157 = vld [vmem:[%s1 + $0x3b9] sm:$0x1]
        %v2158 = vld [vmem:[%s1 + $0x3ba] sm:$0x1]
        %v2159 = vlaneseq
        %v2160 = vshrl.u32 %v2159, 7
        %v2161 = vsub.s32 0, %v2160
        %v2162 = vrot.slane %v2156, %v2161
        %v2163 = vmul.f32 %v2162, 0.0
        %v2164 = vmul.f32 %v2146, %v2162
        %v2165 = vmul.f32 %v2147, %v2162
        %v2166 = vmul.f32 %v2148, %v2162
        %v2167 = vmul.f32 %v2149, %v2162
        %v2168 = vmul.f32 %v2150, %v2162
        %v2169 = vmul.f32 %v2151, %v2162
        %v2170 = vmul.f32 %v2152, %v2162
        %v2171 = vmul.f32 %v2153, %v2162
        %v2172 = vmul.f32 %v2154, %v2162
        %v2173 = vlaneseq
        %v2174 = vshrl.u32 %v2173, 7
        %v2175 = vsub.s32 0, %v2174
        %v2176 = vrot.slane %v2157, %v2175
        %v2177 = vmul.f32 %v2146, %v2176
        %v2178 = vmul.f32 %v2147, %v2176
        %v2179 = vmul.f32 %v2148, %v2176
        %v2180 = vmul.f32 %v2149, %v2176
        %v2181 = vmul.f32 %v2150, %v2176
        %v2182 = vmul.f32 %v2151, %v2176
        %v2183 = vmul.f32 %v2152, %v2176
        %v2184 = vmul.f32 %v2153, %v2176
        %v2185 = vmul.f32 %v2154, %v2176
        %v2186 = vmul.f32 %v2155, %v2176
        %v2187 = vadd.f32 %v2163, %v2177
        %v2188 = vadd.f32 %v2164, %v2178
        %v2189 = vadd.f32 %v2165, %v2179
        %v2190 = vadd.f32 %v2166, %v2180
        %v2191 = vadd.f32 %v2167, %v2181
        %v2192 = vadd.f32 %v2168, %v2182
        %v2193 = vadd.f32 %v2169, %v2183
        %v2194 = vadd.f32 %v2170, %v2184
        %v2195 = vadd.f32 %v2171, %v2185
        %v2196 = vadd.f32 %v2172, %v2186
        %v2197 = vlaneseq
        %v2198 = vshrl.u32 %v2197, 7
        %v2199 = vsub.s32 0, %v2198
        %v2200 = vrot.slane %v2158, %v2199
        %v2201 = vmul.f32 %v2147, %v2200
        %v2202 = vmul.f32 %v2148, %v2200
        %v2203 = vmul.f32 %v2149, %v2200
        %v2204 = vmul.f32 %v2150, %v2200
        %v2205 = vmul.f32 %v2151, %v2200
        %v2206 = vmul.f32 %v2152, %v2200
        %v2207 = vmul.f32 %v2153, %v2200
        %v2208 = vmul.f32 %v2154, %v2200
        %v2209 = vmul.f32 %v2155, %v2200
        %v2210 = vmul.f32 %v2200, 0.0
        %v2211 = vadd.f32 %v2187, %v2201
        %v2212 = vadd.f32 %v2188, %v2202
        %v2213 = vadd.f32 %v2189, %v2203
        %v2214 = vadd.f32 %v2190, %v2204
        %v2215 = vadd.f32 %v2191, %v2205
        %v2216 = vadd.f32 %v2192, %v2206
        %v2217 = vadd.f32 %v2193, %v2207
        %v2218 = vadd.f32 %v2194, %v2208
        %v2219 = vadd.f32 %v2195, %v2209
        %v2220 = vadd.f32 %v2196, %v2210
        %v2221 = vld [vmem:[%s1 + $0x3c0] sm:$0xff]
        %v2222 = vld [vmem:[%s1 + $0x3c8] sm:$0xff]
        %v2223 = vld [vmem:[%s1 + $0x3d0] sm:$0xff]
        %v2224 = vld [vmem:[%s1 + $0x3d8] sm:$0xff]
        %v2225 = vld [vmem:[%s1 + $0x3e0] sm:$0xff]
        %v2226 = vld [vmem:[%s1 + $0x3e8] sm:$0xff]
        %v2227 = vld [vmem:[%s1 + $0x3f0] sm:$0xff]
        %v2228 = vld [vmem:[%s1 + $0x3f8] sm:$0xff]
        %v2229 = vld [vmem:[%s1 + $0x400] sm:$0xff]
        %v2230 = vld [vmem:[%s1 + $0x408] sm:$0xff]
        %v2231 = vmul.f32 %v2211, %v2221
        %v2232 = vmul.f32 %v2212, %v2222
        %v2233 = vmul.f32 %v2213, %v2223
        %v2234 = vmul.f32 %v2214, %v2224
        %v2235 = vmul.f32 %v2215, %v2225
        %v2236 = vmul.f32 %v2216, %v2226
        %v2237 = vmul.f32 %v2217, %v2227
        %v2238 = vmul.f32 %v2218, %v2228
        %v2239 = vmul.f32 %v2219, %v2229
        %v2240 = vmul.f32 %v2220, %v2230
        %v2241 = vld [vmem:[%s1 + $0x410] sm:$0xff]
        %v2242 = vld [vmem:[%s1 + $0x418] sm:$0xff]
        %v2243 = vld [vmem:[%s1 + $0x420] sm:$0xff]
        %v2244 = vld [vmem:[%s1 + $0x428] sm:$0xff]
        %v2245 = vld [vmem:[%s1 + $0x430] sm:$0xff]
        %v2246 = vld [vmem:[%s1 + $0x438] sm:$0xff]
        %v2247 = vld [vmem:[%s1 + $0x440] sm:$0xff]
        %v2248 = vld [vmem:[%s1 + $0x448] sm:$0xff]
        %v2249 = vld [vmem:[%s1 + $0x450] sm:$0xff]
        %v2250 = vld [vmem:[%s1 + $0x458] sm:$0xff]
        %v2251 = vadd.f32 %v2231, %v2241
        %v2252 = vadd.f32 %v2232, %v2242
        %v2253 = vadd.f32 %v2233, %v2243
        %v2254 = vadd.f32 %v2234, %v2244
        %v2255 = vadd.f32 %v2235, %v2245
        %v2256 = vadd.f32 %v2236, %v2246
        %v2257 = vadd.f32 %v2237, %v2247
        %v2258 = vadd.f32 %v2238, %v2248
        %v2259 = vadd.f32 %v2239, %v2249
        %v2260 = vadd.f32 %v2240, %v2250
        %v2261 = vsel %vm1972, %v2251, 0.0
        %v2262 = vsel %vm1972, %v2252, 0.0
        %v2263 = vadd.f32 %v2261, %v2262
        %v2264 = vsel %vm1972, %v2253, 0.0
        %v2265 = vadd.f32 %v2263, %v2264
        %v2266 = vsel %vm1972, %v2254, 0.0
        %v2267 = vadd.f32 %v2265, %v2266
        %v2268 = vsel %vm1972, %v2255, 0.0
        %v2269 = vadd.f32 %v2267, %v2268
        %v2270 = vsel %vm1972, %v2256, 0.0
        %v2271 = vadd.f32 %v2269, %v2270
        %v2272 = vsel %vm1972, %v2257, 0.0
        %v2273 = vadd.f32 %v2271, %v2272
        %v2274 = vsel %vm1972, %v2258, 0.0
        %v2275 = vadd.f32 %v2273, %v2274
        %v2276 = vsel %vm1972, %v2259, 0.0
        %v2277 = vadd.f32 %v2275, %v2276
        %v2278 = vsel %vm1972, %v2260, 0.0
        %v2279 = vadd.f32 %v2277, %v2278
        %v2280 = vmul.f32 %v2279, %v1992
        %v2282 = vrot.slane %v2280, 6
        %v2284 = vsel %vm1997, 0.0, %v2282
        %v2285 = vsel %vm1997, %v2282, 0.0
        %v2286 = vld [vmem:[%s1 + $0x460] sm:$0x1]
        %v2287 = vlaneseq
        %v2288 = vshrl.u32 %v2287, 7
        %v2289 = vsub.s32 0, %v2288
        %v2290 = vrot.slane %v2286, %v2289
        %v2291 = vmul.f32 %v2284, %v2290
        %v2292 = vld [vmem:[%s1 + $0x461] sm:$0x1]
        %v2293 = vlaneseq
        %v2294 = vshrl.u32 %v2293, 7
        %v2295 = vsub.s32 0, %v2294
        %v2296 = vrot.slane %v2292, %v2295
        %v2297 = vmul.f32 %v2284, %v2296
        %v2298 = vmul.f32 %v2285, %v2296
        %v2301 = vrot.slane %v2297, 2
        %v2302 = vrot.slane %v2298, 2
        %v2303 = vsel %vm997, %v2301, %v2302
        %v2305 = vadd.f32 %v2291, %v2303
        %v2306 = vld [vmem:[%s1 + $0x462] sm:$0x1]
        %v2307 = vlaneseq
        %v2308 = vshrl.u32 %v2307, 7
        %v2309 = vsub.s32 0, %v2308
        %v2310 = vrot.slane %v2306, %v2309
        %v2311 = vmul.f32 %v2284, %v2310
        %v2312 = vmul.f32 %v2285, %v2310
        %v2315 = vrot.slane %v2311, 4
        %v2316 = vrot.slane %v2312, 4
        %v2317 = vsel %vm2029, %v2315, %v2316
        %v2319 = vadd.f32 %v2305, %v2317
        %v2320 = vld [vmem:[%s1 + $0x468] sm:$0x1]
        %v2321 = vlaneseq
        %v2322 = vshrl.u32 %v2321, 7
        %v2323 = vsub.s32 0, %v2322
        %v2324 = vrot.slane %v2320, %v2323
        %v2325 = vmul.f32 %v2319, %v2324
        %v2326 = vld [vmem:[%s1 + $0x470] sm:$0x1]
        %v2327 = vlaneseq
        %v2328 = vshrl.u32 %v2327, 7
        %v2329 = vsub.s32 0, %v2328
        %v2330 = vrot.slane %v2326, %v2329
        %v2331 = vadd.f32 %v2325, %v2330
        %v2332 = vsub.f32 0.0, %v2331
        %v2333 = vmul.f32 %v2332, 1.442695
        %v2334 = vpow.pop %v2333
        %v2335 = vadd.f32 %v2334, 1.0
        %v2336 = vrcp.pop %v2335
        %v2337 = vmul.f32 %v2331, %v2336
        %v2338 = vld [vmem:[%s2 + $0x38] sm:$0xff]
        %v2339 = vld [vmem:[%s2 + $0x40] sm:$0xf]
        %v2340 = vld [vmem:[%s1 + $0x478] sm:$0x1]
        %v2341 = vlaneseq
        %v2342 = vshrl.u32 %v2341, 7
        %v2343 = vsub.s32 0, %v2342
        %v2344 = vrot.slane %v2340, %v2343
        %v2346 = vsel %vm1972, %v2337, 0
        %v2349 = vsel %vm2029, %v2339, 0
        %2351 = vmatprep.subr.mxu0 0.0
        %2352 = vmatpush1.msra.mxu0 0.0
        %2353 = vmatprep.subr.mxu0 0.0
        %2354 = vmatpush1.msra.mxu0 0.0
        %2355 = vmatprep.subr.mxu0 0.0
        %2356 = vmatpush1.msra.mxu0 0.0
        %2357 = vmatprep.subr.mxu0 0.0
        %2358 = vmatpush1.msra.mxu0 0.0
        %2359 = vmatprep.subr.mxu0 0.0
        %2360 = vmatpush1.msra.mxu0 0.0
        %2361 = vmatprep.subr.mxu0 0.0
        %2362 = vmatpush1.msra.mxu0 0.0
        %2363 = vmatprep.subr.mxu0 0.0
        %2364 = vmatpush1.msra.mxu0 0.0
        %2365 = vmatprep.subr.mxu0 0.0
        %2366 = vmatpush1.msra.mxu0 0.0
        %2367 = vmatprep.subr.mxu0 0.0
        %2368 = vmatpush1.msra.mxu0 0.0
        %2369 = vmatprep.subr.mxu0 0.0
        %2370 = vmatpush1.msra.mxu0 0.0
        %2371 = vmatprep.subr.mxu0 0.0
        %2372 = vmatpush1.msra.mxu0 0.0
        %2373 = vmatprep.subr.mxu0 0.0
        %2374 = vmatpush1.msra.mxu0 0.0
        %2375 = vmatprep.subr.mxu0 0.0
        %2376 = vmatpush1.msra.mxu0 0.0
        %2377 = vmatprep.subr.mxu0 0.0
        %2378 = vmatpush1.msra.mxu0 0.0
        %2379 = vmatprep.subr.mxu0 0.0
        %2380 = vmatpush1.msra.mxu0 %v2349
        %2381 = vmatprep.subr.mxu0 0.0
        %2382 = vmatpush1.msra.mxu0 %v2338
        %2383 = vmatprep.subr.mxu0 0.0
        %2384 = vmatpush2.msra.mxu0 0.0
        %2385 = vmatprep.subr.mxu0 0.0
        %2386 = vmatpush2.msra.mxu0 0.0
        %2387 = vmatprep.subr.mxu0 0.0
        %2388 = vmatpush2.msra.mxu0 0.0
        %2389 = vmatprep.subr.mxu0 0.0
        %2390 = vmatpush2.msra.mxu0 0.0
        %2391 = vmatprep.subr.mxu0 0.0
        %2392 = vmatpush2.msra.mxu0 0.0
        %2393 = vmatprep.subr.mxu0 0.0
        %2394 = vmatpush2.msra.mxu0 0.0
        %2395 = vmatprep.subr.mxu0 0.0
        %2396 = vmatpush2.msra.mxu0 0.0
        %2397 = vmatprep.subr.mxu0 0.0
        %2398 = vmatpush2.msra.mxu0 0.0
        %2399 = vmatprep.subr.mxu0 0.0
        %2400 = vmatpush2.msra.mxu0 0.0
        %2401 = vmatprep.subr.mxu0 0.0
        %2402 = vmatpush2.msra.mxu0 0.0
        %2403 = vmatprep.subr.mxu0 0.0
        %2404 = vmatpush2.msra.mxu0 0.0
        %2405 = vmatprep.subr.mxu0 0.0
        %2406 = vmatpush2.msra.mxu0 0.0
        %2407 = vmatprep.subr.mxu0 0.0
        %2408 = vmatpush2.msra.mxu0 0.0
        %2409 = vmatprep.subr.mxu0 0.0
        %2410 = vmatpush2.msra.mxu0 0.0
        %2411 = vmatprep.subr.mxu0 0.0
        %2412 = vmatpush2.msra.mxu0 0.0
        %2413 = vmatprep.subr.mxu0 0.0
        %2414 = vmatpush2.msra.mxu0 0.0
        %2415 = vmatprep.mubr.f32.mxu0 0.0
        %2416 = vmatmul.mubr.f32.gmra.mxu0 %v2346
        %v2417 = vpop.f32.mrf.mxu0
        %v2418 = vadd.f32 %v2344, %v2417
        %v2419 = vpop.f32.mrf.mxu0
        %2420 = vdwg.mxu0
        %v2421 = vadd.f32 %v2146, %v2251
        %v2422 = vadd.f32 %v2147, %v2252
        %v2423 = vadd.f32 %v2148, %v2253
        %v2424 = vadd.f32 %v2149, %v2254
        %v2425 = vadd.f32 %v2150, %v2255
        %v2426 = vadd.f32 %v2151, %v2256
        %v2427 = vadd.f32 %v2152, %v2257
        %v2428 = vadd.f32 %v2153, %v2258
        %v2429 = vadd.f32 %v2154, %v2259
        %v2430 = vadd.f32 %v2155, %v2260
        %v2431 = vadd.f32 %v2421, %v2418
        %v2432 = vadd.f32 %v2422, %v2418
        %v2433 = vadd.f32 %v2423, %v2418
        %v2434 = vadd.f32 %v2424, %v2418
        %v2435 = vadd.f32 %v2425, %v2418
        %v2436 = vadd.f32 %v2426, %v2418
        %v2437 = vadd.f32 %v2427, %v2418
        %v2438 = vadd.f32 %v2428, %v2418
        %v2439 = vadd.f32 %v2429, %v2418
        %v2440 = vadd.f32 %v2430, %v2418
        %v2441 = vmax.f32 %v2431, 0.0
        %v2442 = vmax.f32 %v2432, 0.0
        %v2443 = vmax.f32 %v2433, 0.0
        %v2444 = vmax.f32 %v2434, 0.0
        %v2445 = vmax.f32 %v2435, 0.0
        %v2446 = vmax.f32 %v2436, 0.0
        %v2447 = vmax.f32 %v2437, 0.0
        %v2448 = vmax.f32 %v2438, 0.0
        %v2449 = vmax.f32 %v2439, 0.0
        %v2450 = vmax.f32 %v2440, 0.0
        %v2451 = vld [vmem:[%s2 + $0x48] sm:$0xff]
        %v2452 = vld [vmem:[%s2 + $0x50] sm:$0xf]
        %v2454 = vsel %vm1972, %v2441, 0
        %v2457 = vsel %vm1972, %v2442, 0
        %v2460 = vsel %vm1972, %v2443, 0
        %v2463 = vsel %vm1972, %v2444, 0
        %v2466 = vsel %vm1972, %v2445, 0
        %v2469 = vsel %vm1972, %v2446, 0
        %v2472 = vsel %vm1972, %v2447, 0
        %v2475 = vsel %vm1972, %v2448, 0
        %v2478 = vsel %vm1972, %v2449, 0
        %v2481 = vsel %vm1972, %v2450, 0
        %v2484 = vsel %vm2029, %v2452, 0
        %2486 = vmatprep.subr.mxu0 0.0
        %2487 = vmatpush1.msra.mxu0 0.0
        %2488 = vmatprep.subr.mxu0 0.0
        %2489 = vmatpush1.msra.mxu0 0.0
        %2490 = vmatprep.subr.mxu0 0.0
        %2491 = vmatpush1.msra.mxu0 0.0
        %2492 = vmatprep.subr.mxu0 0.0
        %2493 = vmatpush1.msra.mxu0 0.0
        %2494 = vmatprep.subr.mxu0 0.0
        %2495 = vmatpush1.msra.mxu0 0.0
        %2496 = vmatprep.subr.mxu0 0.0
        %2497 = vmatpush1.msra.mxu0 0.0
        %2498 = vmatprep.subr.mxu0 0.0
        %2499 = vmatpush1.msra.mxu0 0.0
        %2500 = vmatprep.subr.mxu0 0.0
        %2501 = vmatpush1.msra.mxu0 0.0
        %2502 = vmatprep.subr.mxu0 0.0
        %2503 = vmatpush1.msra.mxu0 0.0
        %2504 = vmatprep.subr.mxu0 0.0
        %2505 = vmatpush1.msra.mxu0 0.0
        %2506 = vmatprep.subr.mxu0 0.0
        %2507 = vmatpush1.msra.mxu0 0.0
        %2508 = vmatprep.subr.mxu0 0.0
        %2509 = vmatpush1.msra.mxu0 0.0
        %2510 = vmatprep.subr.mxu0 0.0
        %2511 = vmatpush1.msra.mxu0 0.0
        %2512 = vmatprep.subr.mxu0 0.0
        %2513 = vmatpush1.msra.mxu0 0.0
        %2514 = vmatprep.subr.mxu0 0.0
        %2515 = vmatpush1.msra.mxu0 %v2484
        %2516 = vmatprep.subr.mxu0 0.0
        %2517 = vmatpush1.msra.mxu0 %v2451
        %2518 = vmatprep.subr.mxu0 0.0
        %2519 = vmatpush2.msra.mxu0 0.0
        %2520 = vmatprep.subr.mxu0 0.0
        %2521 = vmatpush2.msra.mxu0 0.0
        %2522 = vmatprep.subr.mxu0 0.0
        %2523 = vmatpush2.msra.mxu0 0.0
        %2524 = vmatprep.subr.mxu0 0.0
        %2525 = vmatpush2.msra.mxu0 0.0
        %2526 = vmatprep.subr.mxu0 0.0
        %2527 = vmatpush2.msra.mxu0 0.0
        %2528 = vmatprep.subr.mxu0 0.0
        %2529 = vmatpush2.msra.mxu0 0.0
        %2530 = vmatprep.subr.mxu0 0.0
        %2531 = vmatpush2.msra.mxu0 0.0
        %2532 = vmatprep.subr.mxu0 0.0
        %2533 = vmatpush2.msra.mxu0 0.0
        %2534 = vmatprep.subr.mxu0 0.0
        %2535 = vmatpush2.msra.mxu0 0.0
        %2536 = vmatprep.subr.mxu0 0.0
        %2537 = vmatpush2.msra.mxu0 0.0
        %2538 = vmatprep.subr.mxu0 0.0
        %2539 = vmatpush2.msra.mxu0 0.0
        %2540 = vmatprep.subr.mxu0 0.0
        %2541 = vmatpush2.msra.mxu0 0.0
        %2542 = vmatprep.subr.mxu0 0.0
        %2543 = vmatpush2.msra.mxu0 0.0
        %2544 = vmatprep.subr.mxu0 0.0
        %2545 = vmatpush2.msra.mxu0 0.0
        %2546 = vmatprep.subr.mxu0 0.0
        %2547 = vmatpush2.msra.mxu0 0.0
        %2548 = vmatprep.subr.mxu0 0.0
        %2549 = vmatpush2.msra.mxu0 0.0
        %2550 = vmatprep.mubr.f32.mxu0 0.0
        %2551 = vmatmul.mubr.f32.gmra.mxu0 %v2454
        %v2552 = vpop.f32.mrf.mxu0
        %v2553 = vadd.f32 0.0, %v2552
        %v2554 = vpop.f32.mrf.mxu0
        %2555 = vmatprep.mubr.f32.mxu0 0.0
        %2556 = vmatmul.mubr.f32.gmra.mxu0 %v2457
        %v2557 = vpop.f32.mrf.mxu0
        %v2558 = vadd.f32 0.0, %v2557
        %v2559 = vpop.f32.mrf.mxu0
        %2560 = vmatprep.mubr.f32.mxu0 0.0
        %2561 = vmatmul.mubr.f32.gmra.mxu0 %v2460
        %v2562 = vpop.f32.mrf.mxu0
        %v2563 = vadd.f32 0.0, %v2562
        %v2564 = vpop.f32.mrf.mxu0
        %2565 = vmatprep.mubr.f32.mxu0 0.0
        %2566 = vmatmul.mubr.f32.gmra.mxu0 %v2463
        %v2567 = vpop.f32.mrf.mxu0
        %v2568 = vadd.f32 0.0, %v2567
        %v2569 = vpop.f32.mrf.mxu0
        %2570 = vmatprep.mubr.f32.mxu0 0.0
        %2571 = vmatmul.mubr.f32.gmra.mxu0 %v2466
        %v2572 = vpop.f32.mrf.mxu0
        %v2573 = vadd.f32 0.0, %v2572
        %v2574 = vpop.f32.mrf.mxu0
        %2575 = vmatprep.mubr.f32.mxu0 0.0
        %2576 = vmatmul.mubr.f32.gmra.mxu0 %v2469
        %v2577 = vpop.f32.mrf.mxu0
        %v2578 = vadd.f32 0.0, %v2577
        %v2579 = vpop.f32.mrf.mxu0
        %2580 = vmatprep.mubr.f32.mxu0 0.0
        %2581 = vmatmul.mubr.f32.gmra.mxu0 %v2472
        %v2582 = vpop.f32.mrf.mxu0
        %v2583 = vadd.f32 0.0, %v2582
        %v2584 = vpop.f32.mrf.mxu0
        %2585 = vmatprep.mubr.f32.mxu0 0.0
        %2586 = vmatmul.mubr.f32.gmra.mxu0 %v2475
        %v2587 = vpop.f32.mrf.mxu0
        %v2588 = vadd.f32 0.0, %v2587
        %v2589 = vpop.f32.mrf.mxu0
        %2590 = vmatprep.mubr.f32.mxu0 0.0
        %2591 = vmatmul.mubr.f32.gmra.mxu0 %v2478
        %v2592 = vpop.f32.mrf.mxu0
        %v2593 = vadd.f32 0.0, %v2592
        %v2594 = vpop.f32.mrf.mxu0
        %2595 = vmatprep.mubr.f32.mxu0 0.0
        %2596 = vmatmul.mubr.f32.gmra.mxu0 %v2481
        %v2597 = vpop.f32.mrf.mxu0
        %v2598 = vadd.f32 0.0, %v2597
        %v2599 = vpop.f32.mrf.mxu0
        %2600 = vdwg.mxu0
        %v2601 = vld [vmem:[%s1 + $0x480] sm:$0x1]
        %v2602 = vlaneseq
        %v2603 = vshrl.u32 %v2602, 7
        %v2604 = vsub.s32 0, %v2603
        %v2605 = vrot.slane %v2601, %v2604
        %v2606 = vmul.f32 %v2553, %v2605
        %v2607 = vmul.f32 %v2558, %v2605
        %v2608 = vmul.f32 %v2563, %v2605
        %v2609 = vmul.f32 %v2568, %v2605
        %v2610 = vmul.f32 %v2573, %v2605
        %v2611 = vmul.f32 %v2578, %v2605
        %v2612 = vmul.f32 %v2583, %v2605
        %v2613 = vmul.f32 %v2588, %v2605
        %v2614 = vmul.f32 %v2593, %v2605
        %v2615 = vmul.f32 %v2598, %v2605
        %v2616 = vld [vmem:[%s1 + $0x488] sm:$0x1]
        %v2617 = vlaneseq
        %v2618 = vshrl.u32 %v2617, 7
        %v2619 = vsub.s32 0, %v2618
        %v2620 = vrot.slane %v2616, %v2619
        %v2621 = vadd.f32 %v2606, %v2620
        %v2622 = vadd.f32 %v2607, %v2620
        %v2623 = vadd.f32 %v2608, %v2620
        %v2624 = vadd.f32 %v2609, %v2620
        %v2625 = vadd.f32 %v2610, %v2620
        %v2626 = vadd.f32 %v2611, %v2620
        %v2627 = vadd.f32 %v2612, %v2620
        %v2628 = vadd.f32 %v2613, %v2620
        %v2629 = vadd.f32 %v2614, %v2620
        %v2630 = vadd.f32 %v2615, %v2620
        %v2631 = vmax.f32 %v2621, 0.0
        %v2632 = vmax.f32 %v2622, 0.0
        %v2633 = vmax.f32 %v2623, 0.0
        %v2634 = vmax.f32 %v2624, 0.0
        %v2635 = vmax.f32 %v2625, 0.0
        %v2636 = vmax.f32 %v2626, 0.0
        %v2637 = vmax.f32 %v2627, 0.0
        %v2638 = vmax.f32 %v2628, 0.0
        %v2639 = vmax.f32 %v2629, 0.0
        %v2640 = vmax.f32 %v2630, 0.0
        %v2641 = vld [vmem:[%s1 + $0x490] sm:$0x1]
        %v2642 = vld [vmem:[%s1 + $0x491] sm:$0x1]
        %v2643 = vld [vmem:[%s1 + $0x492] sm:$0x1]
        %v2644 = vlaneseq
        %v2645 = vshrl.u32 %v2644, 7
        %v2646 = vsub.s32 0, %v2645
        %v2647 = vrot.slane %v2641, %v2646
        %v2648 = vmul.f32 %v2647, 0.0
        %v2649 = vmul.f32 %v2632, %v2647
        %v2650 = vmul.f32 %v2634, %v2647
        %v2651 = vmul.f32 %v2636, %v2647
        %v2652 = vmul.f32 %v2638, %v2647
        %v2653 = vlaneseq
        %v2654 = vshrl.u32 %v2653, 7
        %v2655 = vsub.s32 0, %v2654
        %v2656 = vrot.slane %v2642, %v2655
        %v2657 = vmul.f32 %v2631, %v2656
        %v2658 = vmul.f32 %v2633, %v2656
        %v2659 = vmul.f32 %v2635, %v2656
        %v2660 = vmul.f32 %v2637, %v2656
        %v2661 = vmul.f32 %v2639, %v2656
        %v2662 = vadd.f32 %v2648, %v2657
        %v2663 = vadd.f32 %v2649, %v2658
        %v2664 = vadd.f32 %v2650, %v2659
        %v2665 = vadd.f32 %v2651, %v2660
        %v2666 = vadd.f32 %v2652, %v2661
        %v2667 = vlaneseq
        %v2668 = vshrl.u32 %v2667, 7
        %v2669 = vsub.s32 0, %v2668
        %v2670 = vrot.slane %v2643, %v2669
        %v2671 = vmul.f32 %v2632, %v2670
        %v2672 = vmul.f32 %v2634, %v2670
        %v2673 = vmul.f32 %v2636, %v2670
        %v2674 = vmul.f32 %v2638, %v2670
        %v2675 = vmul.f32 %v2640, %v2670
        %v2676 = vadd.f32 %v2662, %v2671
        %v2677 = vadd.f32 %v2663, %v2672
        %v2678 = vadd.f32 %v2664, %v2673
        %v2679 = vadd.f32 %v2665, %v2674
        %v2680 = vadd.f32 %v2666, %v2675
        %v2681 = vld [vmem:[%s1 + $0x498] sm:$0xff]
        %v2682 = vld [vmem:[%s1 + $0x4a0] sm:$0xff]
        %v2683 = vld [vmem:[%s1 + $0x4a8] sm:$0xff]
        %v2684 = vld [vmem:[%s1 + $0x4b0] sm:$0xff]
        %v2685 = vld [vmem:[%s1 + $0x4b8] sm:$0xff]
        %v2686 = vmul.f32 %v2676, %v2681
        %v2687 = vmul.f32 %v2677, %v2682
        %v2688 = vmul.f32 %v2678, %v2683
        %v2689 = vmul.f32 %v2679, %v2684
        %v2690 = vmul.f32 %v2680, %v2685
        %v2691 = vld [vmem:[%s1 + $0x4c0] sm:$0xff]
        %v2692 = vld [vmem:[%s1 + $0x4c8] sm:$0xff]
        %v2693 = vld [vmem:[%s1 + $0x4d0] sm:$0xff]
        %v2694 = vld [vmem:[%s1 + $0x4d8] sm:$0xff]
        %v2695 = vld [vmem:[%s1 + $0x4e0] sm:$0xff]
        %v2696 = vadd.f32 %v2686, %v2691
        %v2697 = vadd.f32 %v2687, %v2692
        %v2698 = vadd.f32 %v2688, %v2693
        %v2699 = vadd.f32 %v2689, %v2694
        %v2700 = vadd.f32 %v2690, %v2695
        %v2701 = vsel %vm429, %v2696, 0.0
        %v2702 = vsel %vm429, %v2697, 0.0
        %v2703 = vadd.f32 %v2701, %v2702
        %v2704 = vsel %vm429, %v2698, 0.0
        %v2705 = vadd.f32 %v2703, %v2704
        %v2706 = vsel %vm429, %v2699, 0.0
        %v2707 = vadd.f32 %v2705, %v2706
        %v2708 = vsel %vm429, %v2700, 0.0
        %v2709 = vadd.f32 %v2707, %v2708
        %v2710 = vrcp.pop 5.0
        %v2711 = vmul.f32 %v2709, %v2710
        %v2713 = vrot.slane %v2711, 4
        %v2715 = vsel %vm2029, 0.0, %v2713
        %v2716 = vsel %vm2029, %v2713, 0.0
        %v2717 = vld [vmem:[%s1 + $0x4e8] sm:$0x1]
        %v2718 = vlaneseq
        %v2719 = vshrl.u32 %v2718, 7
        %v2720 = vsub.s32 0, %v2719
        %v2721 = vrot.slane %v2717, %v2720
        %v2722 = vmul.f32 %v2715, %v2721
        %v2723 = vld [vmem:[%s1 + $0x4e9] sm:$0x1]
        %v2724 = vlaneseq
        %v2725 = vshrl.u32 %v2724, 7
        %v2726 = vsub.s32 0, %v2725
        %v2727 = vrot.slane %v2723, %v2726
        %v2728 = vmul.f32 %v2715, %v2727
        %v2729 = vmul.f32 %v2716, %v2727
        %v2732 = vrot.slane %v2728, 4
        %v2733 = vrot.slane %v2729, 4
        %v2734 = vsel %vm2029, %v2732, %v2733
        %v2736 = vadd.f32 %v2722, %v2734
        %v2737 = vld [vmem:[%s1 + $0x4ea] sm:$0x1]
        %v2738 = vlaneseq
        %v2739 = vshrl.u32 %v2738, 7
        %v2740 = vsub.s32 0, %v2739
        %v2741 = vrot.slane %v2737, %v2740
        %v2742 = vmul.f32 %v2716, %v2741
        %v2743 = vadd.f32 %v2736, %v2742
        %v2744 = vld [vmem:[%s1 + $0x4f0] sm:$0x1]
        %v2745 = vlaneseq
        %v2746 = vshrl.u32 %v2745, 7
        %v2747 = vsub.s32 0, %v2746
        %v2748 = vrot.slane %v2744, %v2747
        %v2749 = vmul.f32 %v2743, %v2748
        %v2750 = vld [vmem:[%s1 + $0x4f8] sm:$0x1]
        %v2751 = vlaneseq
        %v2752 = vshrl.u32 %v2751, 7
        %v2753 = vsub.s32 0, %v2752
        %v2754 = vrot.slane %v2750, %v2753
        %v2755 = vadd.f32 %v2749, %v2754
        %v2756 = vsub.f32 0.0, %v2755
        %v2757 = vmul.f32 %v2756, 1.442695
        %v2758 = vpow.pop %v2757
        %v2759 = vadd.f32 %v2758, 1.0
        %v2760 = vrcp.pop %v2759
        %v2761 = vmul.f32 %v2755, %v2760
        %v2762 = vld [vmem:[%s2 + $0x58] sm:$0xff]
        %v2763 = vld [vmem:[%s2 + $0x60] sm:$0xff]
        %v2764 = vld [vmem:[%s1 + $0x500] sm:$0x1]
        %v2765 = vlaneseq
        %v2766 = vshrl.u32 %v2765, 7
        %v2767 = vsub.s32 0, %v2766
        %v2768 = vrot.slane %v2764, %v2767
        %v2770 = vsel %vm429, %v2761, 0
        %2772 = vmatprep.subr.mxu0 0.0
        %2773 = vmatpush1.msra.mxu0 0.0
        %2774 = vmatprep.subr.mxu0 0.0
        %2775 = vmatpush1.msra.mxu0 0.0
        %2776 = vmatprep.subr.mxu0 0.0
        %2777 = vmatpush1.msra.mxu0 0.0
        %2778 = vmatprep.subr.mxu0 0.0
        %2779 = vmatpush1.msra.mxu0 0.0
        %2780 = vmatprep.subr.mxu0 0.0
        %2781 = vmatpush1.msra.mxu0 0.0
        %2782 = vmatprep.subr.mxu0 0.0
        %2783 = vmatpush1.msra.mxu0 0.0
        %2784 = vmatprep.subr.mxu0 0.0
        %2785 = vmatpush1.msra.mxu0 0.0
        %2786 = vmatprep.subr.mxu0 0.0
        %2787 = vmatpush1.msra.mxu0 0.0
        %2788 = vmatprep.subr.mxu0 0.0
        %2789 = vmatpush1.msra.mxu0 0.0
        %2790 = vmatprep.subr.mxu0 0.0
        %2791 = vmatpush1.msra.mxu0 0.0
        %2792 = vmatprep.subr.mxu0 0.0
        %2793 = vmatpush1.msra.mxu0 0.0
        %2794 = vmatprep.subr.mxu0 0.0
        %2795 = vmatpush1.msra.mxu0 0.0
        %2796 = vmatprep.subr.mxu0 0.0
        %2797 = vmatpush1.msra.mxu0 0.0
        %2798 = vmatprep.subr.mxu0 0.0
        %2799 = vmatpush1.msra.mxu0 0.0
        %2800 = vmatprep.subr.mxu0 0.0
        %2801 = vmatpush1.msra.mxu0 %v2763
        %2802 = vmatprep.subr.mxu0 0.0
        %2803 = vmatpush1.msra.mxu0 %v2762
        %2804 = vmatprep.subr.mxu0 0.0
        %2805 = vmatpush2.msra.mxu0 0.0
        %2806 = vmatprep.subr.mxu0 0.0
        %2807 = vmatpush2.msra.mxu0 0.0
        %2808 = vmatprep.subr.mxu0 0.0
        %2809 = vmatpush2.msra.mxu0 0.0
        %2810 = vmatprep.subr.mxu0 0.0
        %2811 = vmatpush2.msra.mxu0 0.0
        %2812 = vmatprep.subr.mxu0 0.0
        %2813 = vmatpush2.msra.mxu0 0.0
        %2814 = vmatprep.subr.mxu0 0.0
        %2815 = vmatpush2.msra.mxu0 0.0
        %2816 = vmatprep.subr.mxu0 0.0
        %2817 = vmatpush2.msra.mxu0 0.0
        %2818 = vmatprep.subr.mxu0 0.0
        %2819 = vmatpush2.msra.mxu0 0.0
        %2820 = vmatprep.subr.mxu0 0.0
        %2821 = vmatpush2.msra.mxu0 0.0
        %2822 = vmatprep.subr.mxu0 0.0
        %2823 = vmatpush2.msra.mxu0 0.0
        %2824 = vmatprep.subr.mxu0 0.0
        %2825 = vmatpush2.msra.mxu0 0.0
        %2826 = vmatprep.subr.mxu0 0.0
        %2827 = vmatpush2.msra.mxu0 0.0
        %2828 = vmatprep.subr.mxu0 0.0
        %2829 = vmatpush2.msra.mxu0 0.0
        %2830 = vmatprep.subr.mxu0 0.0
        %2831 = vmatpush2.msra.mxu0 0.0
        %2832 = vmatprep.subr.mxu0 0.0
        %2833 = vmatpush2.msra.mxu0 0.0
        %2834 = vmatprep.subr.mxu0 0.0
        %2835 = vmatpush2.msra.mxu0 0.0
        %2836 = vmatprep.mubr.f32.mxu0 0.0
        %2837 = vmatmul.mubr.f32.gmra.mxu0 %v2770
        %v2838 = vpop.f32.mrf.mxu0
        %v2839 = vadd.f32 %v2768, %v2838
        %v2840 = vpop.f32.mrf.mxu0
        %2841 = vdwg.mxu0
        %v2842 = vadd.f32 %v2696, %v2839
        %v2843 = vadd.f32 %v2697, %v2839
        %v2844 = vadd.f32 %v2698, %v2839
        %v2845 = vadd.f32 %v2699, %v2839
        %v2846 = vadd.f32 %v2700, %v2839
        %v2847 = vmax.f32 %v2842, 0.0
        %v2848 = vmax.f32 %v2843, 0.0
        %v2849 = vmax.f32 %v2844, 0.0
        %v2850 = vmax.f32 %v2845, 0.0
        %v2851 = vmax.f32 %v2846, 0.0
        %v2852 = vld [vmem:[%s1 + $0x508] sm:$0x1]
        %v2853 = vld [vmem:[%s1 + $0x509] sm:$0x1]
        %v2854 = vld [vmem:[%s1 + $0x50a] sm:$0x1]
        %v2855 = vlaneseq
        %v2856 = vshrl.u32 %v2855, 7
        %v2857 = vsub.s32 0, %v2856
        %v2858 = vrot.slane %v2852, %v2857
        %v2859 = vmul.f32 %v2858, 0.0
        %v2860 = vmul.f32 %v2847, %v2858
        %v2861 = vmul.f32 %v2848, %v2858
        %v2862 = vmul.f32 %v2849, %v2858
        %v2863 = vmul.f32 %v2850, %v2858
        %v2864 = vlaneseq
        %v2865 = vshrl.u32 %v2864, 7
        %v2866 = vsub.s32 0, %v2865
        %v2867 = vrot.slane %v2853, %v2866
        %v2868 = vmul.f32 %v2847, %v2867
        %v2869 = vmul.f32 %v2848, %v2867
        %v2870 = vmul.f32 %v2849, %v2867
        %v2871 = vmul.f32 %v2850, %v2867
        %v2872 = vmul.f32 %v2851, %v2867
        %v2873 = vadd.f32 %v2859, %v2868
        %v2874 = vadd.f32 %v2860, %v2869
        %v2875 = vadd.f32 %v2861, %v2870
        %v2876 = vadd.f32 %v2862, %v2871
        %v2877 = vadd.f32 %v2863, %v2872
        %v2878 = vlaneseq
        %v2879 = vshrl.u32 %v2878, 7
        %v2880 = vsub.s32 0, %v2879
        %v2881 = vrot.slane %v2854, %v2880
        %v2882 = vmul.f32 %v2848, %v2881
        %v2883 = vmul.f32 %v2849, %v2881
        %v2884 = vmul.f32 %v2850, %v2881
        %v2885 = vmul.f32 %v2851, %v2881
        %v2886 = vmul.f32 %v2881, 0.0
        %v2887 = vadd.f32 %v2873, %v2882
        %v2888 = vadd.f32 %v2874, %v2883
        %v2889 = vadd.f32 %v2875, %v2884
        %v2890 = vadd.f32 %v2876, %v2885
        %v2891 = vadd.f32 %v2877, %v2886
        %v2892 = vld [vmem:[%s1 + $0x510] sm:$0xff]
        %v2893 = vld [vmem:[%s1 + $0x518] sm:$0xff]
        %v2894 = vld [vmem:[%s1 + $0x520] sm:$0xff]
        %v2895 = vld [vmem:[%s1 + $0x528] sm:$0xff]
        %v2896 = vld [vmem:[%s1 + $0x530] sm:$0xff]
        %v2897 = vmul.f32 %v2887, %v2892
        %v2898 = vmul.f32 %v2888, %v2893
        %v2899 = vmul.f32 %v2889, %v2894
        %v2900 = vmul.f32 %v2890, %v2895
        %v2901 = vmul.f32 %v2891, %v2896
        %v2902 = vld [vmem:[%s1 + $0x538] sm:$0xff]
        %v2903 = vld [vmem:[%s1 + $0x540] sm:$0xff]
        %v2904 = vld [vmem:[%s1 + $0x548] sm:$0xff]
        %v2905 = vld [vmem:[%s1 + $0x550] sm:$0xff]
        %v2906 = vld [vmem:[%s1 + $0x558] sm:$0xff]
        %v2907 = vadd.f32 %v2897, %v2902
        %v2908 = vadd.f32 %v2898, %v2903
        %v2909 = vadd.f32 %v2899, %v2904
        %v2910 = vadd.f32 %v2900, %v2905
        %v2911 = vadd.f32 %v2901, %v2906
        %v2912 = vsel %vm429, %v2907, 0.0
        %v2913 = vsel %vm429, %v2908, 0.0
        %v2914 = vadd.f32 %v2912, %v2913
        %v2915 = vsel %vm429, %v2909, 0.0
        %v2916 = vadd.f32 %v2914, %v2915
        %v2917 = vsel %vm429, %v2910, 0.0
        %v2918 = vadd.f32 %v2916, %v2917
        %v2919 = vsel %vm429, %v2911, 0.0
        %v2920 = vadd.f32 %v2918, %v2919
        %v2921 = vmul.f32 %v2920, %v2710
        %v2923 = vrot.slane %v2921, 4
        %v2925 = vsel %vm2029, 0.0, %v2923
        %v2926 = vsel %vm2029, %v2923, 0.0
        %v2927 = vld [vmem:[%s1 + $0x560] sm:$0x1]
        %v2928 = vlaneseq
        %v2929 = vshrl.u32 %v2928, 7
        %v2930 = vsub.s32 0, %v2929
        %v2931 = vrot.slane %v2927, %v2930
        %v2932 = vmul.f32 %v2925, %v2931
        %v2933 = vld [vmem:[%s1 + $0x561] sm:$0x1]
        %v2934 = vlaneseq
        %v2935 = vshrl.u32 %v2934, 7
        %v2936 = vsub.s32 0, %v2935
        %v2937 = vrot.slane %v2933, %v2936
        %v2938 = vmul.f32 %v2925, %v2937
        %v2939 = vmul.f32 %v2926, %v2937
        %v2942 = vrot.slane %v2938, 4
        %v2943 = vrot.slane %v2939, 4
        %v2944 = vsel %vm2029, %v2942, %v2943
        %v2946 = vadd.f32 %v2932, %v2944
        %v2947 = vld [vmem:[%s1 + $0x562] sm:$0x1]
        %v2948 = vlaneseq
        %v2949 = vshrl.u32 %v2948, 7
        %v2950 = vsub.s32 0, %v2949
        %v2951 = vrot.slane %v2947, %v2950
        %v2952 = vmul.f32 %v2926, %v2951
        %v2953 = vadd.f32 %v2946, %v2952
        %v2954 = vld [vmem:[%s1 + $0x568] sm:$0x1]
        %v2955 = vlaneseq
        %v2956 = vshrl.u32 %v2955, 7
        %v2957 = vsub.s32 0, %v2956
        %v2958 = vrot.slane %v2954, %v2957
        %v2959 = vmul.f32 %v2953, %v2958
        %v2960 = vld [vmem:[%s1 + $0x570] sm:$0x1]
        %v2961 = vlaneseq
        %v2962 = vshrl.u32 %v2961, 7
        %v2963 = vsub.s32 0, %v2962
        %v2964 = vrot.slane %v2960, %v2963
        %v2965 = vadd.f32 %v2959, %v2964
        %v2966 = vsub.f32 0.0, %v2965
        %v2967 = vmul.f32 %v2966, 1.442695
        %v2968 = vpow.pop %v2967
        %v2969 = vadd.f32 %v2968, 1.0
        %v2970 = vrcp.pop %v2969
        %v2971 = vmul.f32 %v2965, %v2970
        %v2972 = vld [vmem:[%s2 + $0x68] sm:$0xff]
        %v2973 = vld [vmem:[%s2 + $0x70] sm:$0xff]
        %v2974 = vld [vmem:[%s1 + $0x578] sm:$0x1]
        %v2975 = vlaneseq
        %v2976 = vshrl.u32 %v2975, 7
        %v2977 = vsub.s32 0, %v2976
        %v2978 = vrot.slane %v2974, %v2977
        %v2980 = vsel %vm429, %v2971, 0
        %2982 = vmatprep.subr.mxu0 0.0
        %2983 = vmatpush1.msra.mxu0 0.0
        %2984 = vmatprep.subr.mxu0 0.0
        %2985 = vmatpush1.msra.mxu0 0.0
        %2986 = vmatprep.subr.mxu0 0.0
        %2987 = vmatpush1.msra.mxu0 0.0
        %2988 = vmatprep.subr.mxu0 0.0
        %2989 = vmatpush1.msra.mxu0 0.0
        %2990 = vmatprep.subr.mxu0 0.0
        %2991 = vmatpush1.msra.mxu0 0.0
        %2992 = vmatprep.subr.mxu0 0.0
        %2993 = vmatpush1.msra.mxu0 0.0
        %2994 = vmatprep.subr.mxu0 0.0
        %2995 = vmatpush1.msra.mxu0 0.0
        %2996 = vmatprep.subr.mxu0 0.0
        %2997 = vmatpush1.msra.mxu0 0.0
        %2998 = vmatprep.subr.mxu0 0.0
        %2999 = vmatpush1.msra.mxu0 0.0
        %3000 = vmatprep.subr.mxu0 0.0
        %3001 = vmatpush1.msra.mxu0 0.0
        %3002 = vmatprep.subr.mxu0 0.0
        %3003 = vmatpush1.msra.mxu0 0.0
        %3004 = vmatprep.subr.mxu0 0.0
        %3005 = vmatpush1.msra.mxu0 0.0
        %3006 = vmatprep.subr.mxu0 0.0
        %3007 = vmatpush1.msra.mxu0 0.0
        %3008 = vmatprep.subr.mxu0 0.0
        %3009 = vmatpush1.msra.mxu0 0.0
        %3010 = vmatprep.subr.mxu0 0.0
        %3011 = vmatpush1.msra.mxu0 %v2973
        %3012 = vmatprep.subr.mxu0 0.0
        %3013 = vmatpush1.msra.mxu0 %v2972
        %3014 = vmatprep.subr.mxu0 0.0
        %3015 = vmatpush2.msra.mxu0 0.0
        %3016 = vmatprep.subr.mxu0 0.0
        %3017 = vmatpush2.msra.mxu0 0.0
        %3018 = vmatprep.subr.mxu0 0.0
        %3019 = vmatpush2.msra.mxu0 0.0
        %3020 = vmatprep.subr.mxu0 0.0
        %3021 = vmatpush2.msra.mxu0 0.0
        %3022 = vmatprep.subr.mxu0 0.0
        %3023 = vmatpush2.msra.mxu0 0.0
        %3024 = vmatprep.subr.mxu0 0.0
        %3025 = vmatpush2.msra.mxu0 0.0
        %3026 = vmatprep.subr.mxu0 0.0
        %3027 = vmatpush2.msra.mxu0 0.0
        %3028 = vmatprep.subr.mxu0 0.0
        %3029 = vmatpush2.msra.mxu0 0.0
        %3030 = vmatprep.subr.mxu0 0.0
        %3031 = vmatpush2.msra.mxu0 0.0
        %3032 = vmatprep.subr.mxu0 0.0
        %3033 = vmatpush2.msra.mxu0 0.0
        %3034 = vmatprep.subr.mxu0 0.0
        %3035 = vmatpush2.msra.mxu0 0.0
        %3036 = vmatprep.subr.mxu0 0.0
        %3037 = vmatpush2.msra.mxu0 0.0
        %3038 = vmatprep.subr.mxu0 0.0
        %3039 = vmatpush2.msra.mxu0 0.0
        %3040 = vmatprep.subr.mxu0 0.0
        %3041 = vmatpush2.msra.mxu0 0.0
        %3042 = vmatprep.subr.mxu0 0.0
        %3043 = vmatpush2.msra.mxu0 0.0
        %3044 = vmatprep.subr.mxu0 0.0
        %3045 = vmatpush2.msra.mxu0 0.0
        %3046 = vmatprep.mubr.f32.mxu0 0.0
        %3047 = vmatmul.mubr.f32.gmra.mxu0 %v2980
        %v3048 = vpop.f32.mrf.mxu0
        %v3049 = vadd.f32 %v2978, %v3048
        %v3050 = vpop.f32.mrf.mxu0
        %3051 = vdwg.mxu0
        %v3052 = vadd.f32 %v2847, %v2907
        %v3053 = vadd.f32 %v2848, %v2908
        %v3054 = vadd.f32 %v2849, %v2909
        %v3055 = vadd.f32 %v2850, %v2910
        %v3056 = vadd.f32 %v2851, %v2911
        %v3057 = vadd.f32 %v3052, %v3049
        %v3058 = vadd.f32 %v3053, %v3049
        %v3059 = vadd.f32 %v3054, %v3049
        %v3060 = vadd.f32 %v3055, %v3049
        %v3061 = vadd.f32 %v3056, %v3049
        %v3062 = vmax.f32 %v3057, 0.0
        %v3063 = vmax.f32 %v3058, 0.0
        %v3064 = vmax.f32 %v3059, 0.0
        %v3065 = vmax.f32 %v3060, 0.0
        %v3066 = vmax.f32 %v3061, 0.0
        %v3067 = vld [vmem:[%s1 + $0x580] sm:$0x1]
        %v3068 = vld [vmem:[%s1 + $0x581] sm:$0x1]
        %v3069 = vld [vmem:[%s1 + $0x582] sm:$0x1]
        %v3070 = vlaneseq
        %v3071 = vshrl.u32 %v3070, 7
        %v3072 = vsub.s32 0, %v3071
        %v3073 = vrot.slane %v3067, %v3072
        %v3074 = vmul.f32 %v3073, 0.0
        %v3075 = vmul.f32 %v3062, %v3073
        %v3076 = vmul.f32 %v3063, %v3073
        %v3077 = vmul.f32 %v3064, %v3073
        %v3078 = vmul.f32 %v3065, %v3073
        %v3079 = vlaneseq
        %v3080 = vshrl.u32 %v3079, 7
        %v3081 = vsub.s32 0, %v3080
        %v3082 = vrot.slane %v3068, %v3081
        %v3083 = vmul.f32 %v3062, %v3082
        %v3084 = vmul.f32 %v3063, %v3082
        %v3085 = vmul.f32 %v3064, %v3082
        %v3086 = vmul.f32 %v3065, %v3082
        %v3087 = vmul.f32 %v3066, %v3082
        %v3088 = vadd.f32 %v3074, %v3083
        %v3089 = vadd.f32 %v3075, %v3084
        %v3090 = vadd.f32 %v3076, %v3085
        %v3091 = vadd.f32 %v3077, %v3086
        %v3092 = vadd.f32 %v3078, %v3087
        %v3093 = vlaneseq
        %v3094 = vshrl.u32 %v3093, 7
        %v3095 = vsub.s32 0, %v3094
        %v3096 = vrot.slane %v3069, %v3095
        %v3097 = vmul.f32 %v3063, %v3096
        %v3098 = vmul.f32 %v3064, %v3096
        %v3099 = vmul.f32 %v3065, %v3096
        %v3100 = vmul.f32 %v3066, %v3096
        %v3101 = vmul.f32 %v3096, 0.0
        %v3102 = vadd.f32 %v3088, %v3097
        %v3103 = vadd.f32 %v3089, %v3098
        %v3104 = vadd.f32 %v3090, %v3099
        %v3105 = vadd.f32 %v3091, %v3100
        %v3106 = vadd.f32 %v3092, %v3101
        %v3107 = vld [vmem:[%s1 + $0x588] sm:$0xff]
        %v3108 = vld [vmem:[%s1 + $0x590] sm:$0xff]
        %v3109 = vld [vmem:[%s1 + $0x598] sm:$0xff]
        %v3110 = vld [vmem:[%s1 + $0x5a0] sm:$0xff]
        %v3111 = vld [vmem:[%s1 + $0x5a8] sm:$0xff]
        %v3112 = vmul.f32 %v3102, %v3107
        %v3113 = vmul.f32 %v3103, %v3108
        %v3114 = vmul.f32 %v3104, %v3109
        %v3115 = vmul.f32 %v3105, %v3110
        %v3116 = vmul.f32 %v3106, %v3111
        %v3117 = vld [vmem:[%s1 + $0x5b0] sm:$0xff]
        %v3118 = vld [vmem:[%s1 + $0x5b8] sm:$0xff]
        %v3119 = vld [vmem:[%s1 + $0x5c0] sm:$0xff]
        %v3120 = vld [vmem:[%s1 + $0x5c8] sm:$0xff]
        %v3121 = vld [vmem:[%s1 + $0x5d0] sm:$0xff]
        %v3122 = vadd.f32 %v3112, %v3117
        %v3123 = vadd.f32 %v3113, %v3118
        %v3124 = vadd.f32 %v3114, %v3119
        %v3125 = vadd.f32 %v3115, %v3120
        %v3126 = vadd.f32 %v3116, %v3121
        %v3127 = vsel %vm429, %v3122, 0.0
        %v3128 = vsel %vm429, %v3123, 0.0
        %v3129 = vadd.f32 %v3127, %v3128
        %v3130 = vsel %vm429, %v3124, 0.0
        %v3131 = vadd.f32 %v3129, %v3130
        %v3132 = vsel %vm429, %v3125, 0.0
        %v3133 = vadd.f32 %v3131, %v3132
        %v3134 = vsel %vm429, %v3126, 0.0
        %v3135 = vadd.f32 %v3133, %v3134
        %v3136 = vmul.f32 %v3135, %v2710
        %v3138 = vrot.slane %v3136, 4
        %v3140 = vsel %vm2029, 0.0, %v3138
        %v3141 = vsel %vm2029, %v3138, 0.0
        %v3142 = vld [vmem:[%s1 + $0x5d8] sm:$0x1]
        %v3143 = vlaneseq
        %v3144 = vshrl.u32 %v3143, 7
        %v3145 = vsub.s32 0, %v3144
        %v3146 = vrot.slane %v3142, %v3145
        %v3147 = vmul.f32 %v3140, %v3146
        %v3148 = vld [vmem:[%s1 + $0x5d9] sm:$0x1]
        %v3149 = vlaneseq
        %v3150 = vshrl.u32 %v3149, 7
        %v3151 = vsub.s32 0, %v3150
        %v3152 = vrot.slane %v3148, %v3151
        %v3153 = vmul.f32 %v3140, %v3152
        %v3154 = vmul.f32 %v3141, %v3152
        %v3157 = vrot.slane %v3153, 4
        %v3158 = vrot.slane %v3154, 4
        %v3159 = vsel %vm2029, %v3157, %v3158
        %v3161 = vadd.f32 %v3147, %v3159
        %v3162 = vld [vmem:[%s1 + $0x5da] sm:$0x1]
        %v3163 = vlaneseq
        %v3164 = vshrl.u32 %v3163, 7
        %v3165 = vsub.s32 0, %v3164
        %v3166 = vrot.slane %v3162, %v3165
        %v3167 = vmul.f32 %v3141, %v3166
        %v3168 = vadd.f32 %v3161, %v3167
        %v3169 = vld [vmem:[%s1 + $0x5e0] sm:$0x1]
        %v3170 = vlaneseq
        %v3171 = vshrl.u32 %v3170, 7
        %v3172 = vsub.s32 0, %v3171
        %v3173 = vrot.slane %v3169, %v3172
        %v3174 = vmul.f32 %v3168, %v3173
        %v3175 = vld [vmem:[%s1 + $0x5e8] sm:$0x1]
        %v3176 = vlaneseq
        %v3177 = vshrl.u32 %v3176, 7
        %v3178 = vsub.s32 0, %v3177
        %v3179 = vrot.slane %v3175, %v3178
        %v3180 = vadd.f32 %v3174, %v3179
        %v3181 = vsub.f32 0.0, %v3180
        %v3182 = vmul.f32 %v3181, 1.442695
        %v3183 = vpow.pop %v3182
        %v3184 = vadd.f32 %v3183, 1.0
        %v3185 = vrcp.pop %v3184
        %v3186 = vmul.f32 %v3180, %v3185
        %v3187 = vld [vmem:[%s2 + $0x78] sm:$0xff]
        %v3188 = vld [vmem:[%s2 + $0x80] sm:$0xff]
        %v3189 = vld [vmem:[%s1 + $0x5f0] sm:$0x1]
        %v3190 = vlaneseq
        %v3191 = vshrl.u32 %v3190, 7
        %v3192 = vsub.s32 0, %v3191
        %v3193 = vrot.slane %v3189, %v3192
        %v3195 = vsel %vm429, %v3186, 0
        %3197 = vmatprep.subr.mxu0 0.0
        %3198 = vmatpush1.msra.mxu0 0.0
        %3199 = vmatprep.subr.mxu0 0.0
        %3200 = vmatpush1.msra.mxu0 0.0
        %3201 = vmatprep.subr.mxu0 0.0
        %3202 = vmatpush1.msra.mxu0 0.0
        %3203 = vmatprep.subr.mxu0 0.0
        %3204 = vmatpush1.msra.mxu0 0.0
        %3205 = vmatprep.subr.mxu0 0.0
        %3206 = vmatpush1.msra.mxu0 0.0
        %3207 = vmatprep.subr.mxu0 0.0
        %3208 = vmatpush1.msra.mxu0 0.0
        %3209 = vmatprep.subr.mxu0 0.0
        %3210 = vmatpush1.msra.mxu0 0.0
        %3211 = vmatprep.subr.mxu0 0.0
        %3212 = vmatpush1.msra.mxu0 0.0
        %3213 = vmatprep.subr.mxu0 0.0
        %3214 = vmatpush1.msra.mxu0 0.0
        %3215 = vmatprep.subr.mxu0 0.0
        %3216 = vmatpush1.msra.mxu0 0.0
        %3217 = vmatprep.subr.mxu0 0.0
        %3218 = vmatpush1.msra.mxu0 0.0
        %3219 = vmatprep.subr.mxu0 0.0
        %3220 = vmatpush1.msra.mxu0 0.0
        %3221 = vmatprep.subr.mxu0 0.0
        %3222 = vmatpush1.msra.mxu0 0.0
        %3223 = vmatprep.subr.mxu0 0.0
        %3224 = vmatpush1.msra.mxu0 0.0
        %3225 = vmatprep.subr.mxu0 0.0
        %3226 = vmatpush1.msra.mxu0 %v3188
        %3227 = vmatprep.subr.mxu0 0.0
        %3228 = vmatpush1.msra.mxu0 %v3187
        %3229 = vmatprep.subr.mxu0 0.0
        %3230 = vmatpush2.msra.mxu0 0.0
        %3231 = vmatprep.subr.mxu0 0.0
        %3232 = vmatpush2.msra.mxu0 0.0
        %3233 = vmatprep.subr.mxu0 0.0
        %3234 = vmatpush2.msra.mxu0 0.0
        %3235 = vmatprep.subr.mxu0 0.0
        %3236 = vmatpush2.msra.mxu0 0.0
        %3237 = vmatprep.subr.mxu0 0.0
        %3238 = vmatpush2.msra.mxu0 0.0
        %3239 = vmatprep.subr.mxu0 0.0
        %3240 = vmatpush2.msra.mxu0 0.0
        %3241 = vmatprep.subr.mxu0 0.0
        %3242 = vmatpush2.msra.mxu0 0.0
        %3243 = vmatprep.subr.mxu0 0.0
        %3244 = vmatpush2.msra.mxu0 0.0
        %3245 = vmatprep.subr.mxu0 0.0
        %3246 = vmatpush2.msra.mxu0 0.0
        %3247 = vmatprep.subr.mxu0 0.0
        %3248 = vmatpush2.msra.mxu0 0.0
        %3249 = vmatprep.subr.mxu0 0.0
        %3250 = vmatpush2.msra.mxu0 0.0
        %3251 = vmatprep.subr.mxu0 0.0
        %3252 = vmatpush2.msra.mxu0 0.0
        %3253 = vmatprep.subr.mxu0 0.0
        %3254 = vmatpush2.msra.mxu0 0.0
        %3255 = vmatprep.subr.mxu0 0.0
        %3256 = vmatpush2.msra.mxu0 0.0
        %3257 = vmatprep.subr.mxu0 0.0
        %3258 = vmatpush2.msra.mxu0 0.0
        %3259 = vmatprep.subr.mxu0 0.0
        %3260 = vmatpush2.msra.mxu0 0.0
        %3261 = vmatprep.mubr.f32.mxu0 0.0
        %3262 = vmatmul.mubr.f32.gmra.mxu0 %v3195
        %v3263 = vpop.f32.mrf.mxu0
        %v3264 = vadd.f32 %v3193, %v3263
        %v3265 = vpop.f32.mrf.mxu0
        %3266 = vdwg.mxu0
        %v3267 = vadd.f32 %v3062, %v3122
        %v3268 = vadd.f32 %v3063, %v3123
        %v3269 = vadd.f32 %v3064, %v3124
        %v3270 = vadd.f32 %v3065, %v3125
        %v3271 = vadd.f32 %v3066, %v3126
        %v3272 = vadd.f32 %v3267, %v3264
        %v3273 = vadd.f32 %v3268, %v3264
        %v3274 = vadd.f32 %v3269, %v3264
        %v3275 = vadd.f32 %v3270, %v3264
        %v3276 = vadd.f32 %v3271, %v3264
        %v3277 = vmax.f32 %v3272, 0.0
        %v3278 = vmax.f32 %v3273, 0.0
        %v3279 = vmax.f32 %v3274, 0.0
        %v3280 = vmax.f32 %v3275, 0.0
        %v3281 = vmax.f32 %v3276, 0.0
        %v3282 = vld [vmem:[%s1 + $0x5f8] sm:$0x1]
        %v3283 = vld [vmem:[%s1 + $0x5f9] sm:$0x1]
        %v3284 = vld [vmem:[%s1 + $0x5fa] sm:$0x1]
        %v3285 = vlaneseq
        %v3286 = vshrl.u32 %v3285, 7
        %v3287 = vsub.s32 0, %v3286
        %v3288 = vrot.slane %v3282, %v3287
        %v3289 = vmul.f32 %v3288, 0.0
        %v3290 = vmul.f32 %v3277, %v3288
        %v3291 = vmul.f32 %v3278, %v3288
        %v3292 = vmul.f32 %v3279, %v3288
        %v3293 = vmul.f32 %v3280, %v3288
        %v3294 = vlaneseq
        %v3295 = vshrl.u32 %v3294, 7
        %v3296 = vsub.s32 0, %v3295
        %v3297 = vrot.slane %v3283, %v3296
        %v3298 = vmul.f32 %v3277, %v3297
        %v3299 = vmul.f32 %v3278, %v3297
        %v3300 = vmul.f32 %v3279, %v3297
        %v3301 = vmul.f32 %v3280, %v3297
        %v3302 = vmul.f32 %v3281, %v3297
        %v3303 = vadd.f32 %v3289, %v3298
        %v3304 = vadd.f32 %v3290, %v3299
        %v3305 = vadd.f32 %v3291, %v3300
        %v3306 = vadd.f32 %v3292, %v3301
        %v3307 = vadd.f32 %v3293, %v3302
        %v3308 = vlaneseq
        %v3309 = vshrl.u32 %v3308, 7
        %v3310 = vsub.s32 0, %v3309
        %v3311 = vrot.slane %v3284, %v3310
        %v3312 = vmul.f32 %v3278, %v3311
        %v3313 = vmul.f32 %v3279, %v3311
        %v3314 = vmul.f32 %v3280, %v3311
        %v3315 = vmul.f32 %v3281, %v3311
        %v3316 = vmul.f32 %v3311, 0.0
        %v3317 = vadd.f32 %v3303, %v3312
        %v3318 = vadd.f32 %v3304, %v3313
        %v3319 = vadd.f32 %v3305, %v3314
        %v3320 = vadd.f32 %v3306, %v3315
        %v3321 = vadd.f32 %v3307, %v3316
        %v3322 = vld [vmem:[%s1 + $0x600] sm:$0xff]
        %v3323 = vld [vmem:[%s1 + $0x608] sm:$0xff]
        %v3324 = vld [vmem:[%s1 + $0x610] sm:$0xff]
        %v3325 = vld [vmem:[%s1 + $0x618] sm:$0xff]
        %v3326 = vld [vmem:[%s1 + $0x620] sm:$0xff]
        %v3327 = vmul.f32 %v3317, %v3322
        %v3328 = vmul.f32 %v3318, %v3323
        %v3329 = vmul.f32 %v3319, %v3324
        %v3330 = vmul.f32 %v3320, %v3325
        %v3331 = vmul.f32 %v3321, %v3326
        %v3332 = vld [vmem:[%s1 + $0x628] sm:$0xff]
        %v3333 = vld [vmem:[%s1 + $0x630] sm:$0xff]
        %v3334 = vld [vmem:[%s1 + $0x638] sm:$0xff]
        %v3335 = vld [vmem:[%s1 + $0x640] sm:$0xff]
        %v3336 = vld [vmem:[%s1 + $0x648] sm:$0xff]
        %v3337 = vadd.f32 %v3327, %v3332
        %v3338 = vadd.f32 %v3328, %v3333
        %v3339 = vadd.f32 %v3329, %v3334
        %v3340 = vadd.f32 %v3330, %v3335
        %v3341 = vadd.f32 %v3331, %v3336
        %v3342 = vsel %vm429, %v3337, 0.0
        %v3343 = vsel %vm429, %v3338, 0.0
        %v3344 = vadd.f32 %v3342, %v3343
        %v3345 = vsel %vm429, %v3339, 0.0
        %v3346 = vadd.f32 %v3344, %v3345
        %v3347 = vsel %vm429, %v3340, 0.0
        %v3348 = vadd.f32 %v3346, %v3347
        %v3349 = vsel %vm429, %v3341, 0.0
        %v3350 = vadd.f32 %v3348, %v3349
        %v3351 = vmul.f32 %v3350, %v2710
        %v3353 = vrot.slane %v3351, 4
        %v3355 = vsel %vm2029, 0.0, %v3353
        %v3356 = vsel %vm2029, %v3353, 0.0
        %v3357 = vld [vmem:[%s1 + $0x650] sm:$0x1]
        %v3358 = vlaneseq
        %v3359 = vshrl.u32 %v3358, 7
        %v3360 = vsub.s32 0, %v3359
        %v3361 = vrot.slane %v3357, %v3360
        %v3362 = vmul.f32 %v3355, %v3361
        %v3363 = vld [vmem:[%s1 + $0x651] sm:$0x1]
        %v3364 = vlaneseq
        %v3365 = vshrl.u32 %v3364, 7
        %v3366 = vsub.s32 0, %v3365
        %v3367 = vrot.slane %v3363, %v3366
        %v3368 = vmul.f32 %v3355, %v3367
        %v3369 = vmul.f32 %v3356, %v3367
        %v3372 = vrot.slane %v3368, 4
        %v3373 = vrot.slane %v3369, 4
        %v3374 = vsel %vm2029, %v3372, %v3373
        %v3376 = vadd.f32 %v3362, %v3374
        %v3377 = vld [vmem:[%s1 + $0x652] sm:$0x1]
        %v3378 = vlaneseq
        %v3379 = vshrl.u32 %v3378, 7
        %v3380 = vsub.s32 0, %v3379
        %v3381 = vrot.slane %v3377, %v3380
        %v3382 = vmul.f32 %v3356, %v3381
        %v3383 = vadd.f32 %v3376, %v3382
        %v3384 = vld [vmem:[%s1 + $0x658] sm:$0x1]
        %v3385 = vlaneseq
        %v3386 = vshrl.u32 %v3385, 7
        %v3387 = vsub.s32 0, %v3386
        %v3388 = vrot.slane %v3384, %v3387
        %v3389 = vmul.f32 %v3383, %v3388
        %v3390 = vld [vmem:[%s1 + $0x660] sm:$0x1]
        %v3391 = vlaneseq
        %v3392 = vshrl.u32 %v3391, 7
        %v3393 = vsub.s32 0, %v3392
        %v3394 = vrot.slane %v3390, %v3393
        %v3395 = vadd.f32 %v3389, %v3394
        %v3396 = vsub.f32 0.0, %v3395
        %v3397 = vmul.f32 %v3396, 1.442695
        %v3398 = vpow.pop %v3397
        %v3399 = vadd.f32 %v3398, 1.0
        %v3400 = vrcp.pop %v3399
        %v3401 = vmul.f32 %v3395, %v3400
        %v3402 = vld [vmem:[%s2 + $0x88] sm:$0xff]
        %v3403 = vld [vmem:[%s2 + $0x90] sm:$0xff]
        %v3404 = vld [vmem:[%s1 + $0x668] sm:$0x1]
        %v3405 = vlaneseq
        %v3406 = vshrl.u32 %v3405, 7
        %v3407 = vsub.s32 0, %v3406
        %v3408 = vrot.slane %v3404, %v3407
        %v3410 = vsel %vm429, %v3401, 0
        %3412 = vmatprep.subr.mxu0 0.0
        %3413 = vmatpush1.msra.mxu0 0.0
        %3414 = vmatprep.subr.mxu0 0.0
        %3415 = vmatpush1.msra.mxu0 0.0
        %3416 = vmatprep.subr.mxu0 0.0
        %3417 = vmatpush1.msra.mxu0 0.0
        %3418 = vmatprep.subr.mxu0 0.0
        %3419 = vmatpush1.msra.mxu0 0.0
        %3420 = vmatprep.subr.mxu0 0.0
        %3421 = vmatpush1.msra.mxu0 0.0
        %3422 = vmatprep.subr.mxu0 0.0
        %3423 = vmatpush1.msra.mxu0 0.0
        %3424 = vmatprep.subr.mxu0 0.0
        %3425 = vmatpush1.msra.mxu0 0.0
        %3426 = vmatprep.subr.mxu0 0.0
        %3427 = vmatpush1.msra.mxu0 0.0
        %3428 = vmatprep.subr.mxu0 0.0
        %3429 = vmatpush1.msra.mxu0 0.0
        %3430 = vmatprep.subr.mxu0 0.0
        %3431 = vmatpush1.msra.mxu0 0.0
        %3432 = vmatprep.subr.mxu0 0.0
        %3433 = vmatpush1.msra.mxu0 0.0
        %3434 = vmatprep.subr.mxu0 0.0
        %3435 = vmatpush1.msra.mxu0 0.0
        %3436 = vmatprep.subr.mxu0 0.0
        %3437 = vmatpush1.msra.mxu0 0.0
        %3438 = vmatprep.subr.mxu0 0.0
        %3439 = vmatpush1.msra.mxu0 0.0
        %3440 = vmatprep.subr.mxu0 0.0
        %3441 = vmatpush1.msra.mxu0 %v3403
        %3442 = vmatprep.subr.mxu0 0.0
        %3443 = vmatpush1.msra.mxu0 %v3402
        %3444 = vmatprep.subr.mxu0 0.0
        %3445 = vmatpush2.msra.mxu0 0.0
        %3446 = vmatprep.subr.mxu0 0.0
        %3447 = vmatpush2.msra.mxu0 0.0
        %3448 = vmatprep.subr.mxu0 0.0
        %3449 = vmatpush2.msra.mxu0 0.0
        %3450 = vmatprep.subr.mxu0 0.0
        %3451 = vmatpush2.msra.mxu0 0.0
        %3452 = vmatprep.subr.mxu0 0.0
        %3453 = vmatpush2.msra.mxu0 0.0
        %3454 = vmatprep.subr.mxu0 0.0
        %3455 = vmatpush2.msra.mxu0 0.0
        %3456 = vmatprep.subr.mxu0 0.0
        %3457 = vmatpush2.msra.mxu0 0.0
        %3458 = vmatprep.subr.mxu0 0.0
        %3459 = vmatpush2.msra.mxu0 0.0
        %3460 = vmatprep.subr.mxu0 0.0
        %3461 = vmatpush2.msra.mxu0 0.0
        %3462 = vmatprep.subr.mxu0 0.0
        %3463 = vmatpush2.msra.mxu0 0.0
        %3464 = vmatprep.subr.mxu0 0.0
        %3465 = vmatpush2.msra.mxu0 0.0
        %3466 = vmatprep.subr.mxu0 0.0
        %3467 = vmatpush2.msra.mxu0 0.0
        %3468 = vmatprep.subr.mxu0 0.0
        %3469 = vmatpush2.msra.mxu0 0.0
        %3470 = vmatprep.subr.mxu0 0.0
        %3471 = vmatpush2.msra.mxu0 0.0
        %3472 = vmatprep.subr.mxu0 0.0
        %3473 = vmatpush2.msra.mxu0 0.0
        %3474 = vmatprep.subr.mxu0 0.0
        %3475 = vmatpush2.msra.mxu0 0.0
        %3476 = vmatprep.mubr.f32.mxu0 0.0
        %3477 = vmatmul.mubr.f32.gmra.mxu0 %v3410
        %v3478 = vpop.f32.mrf.mxu0
        %v3479 = vadd.f32 %v3408, %v3478
        %v3480 = vpop.f32.mrf.mxu0
        %3481 = vdwg.mxu0
        %v3482 = vadd.f32 %v3277, %v3337
        %v3483 = vadd.f32 %v3278, %v3338
        %v3484 = vadd.f32 %v3279, %v3339
        %v3485 = vadd.f32 %v3280, %v3340
        %v3486 = vadd.f32 %v3281, %v3341
        %v3487 = vadd.f32 %v3482, %v3479
        %v3488 = vadd.f32 %v3483, %v3479
        %v3489 = vadd.f32 %v3484, %v3479
        %v3490 = vadd.f32 %v3485, %v3479
        %v3491 = vadd.f32 %v3486, %v3479
        %v3492 = vmax.f32 %v3487, 0.0
        %v3493 = vmax.f32 %v3488, 0.0
        %v3494 = vmax.f32 %v3489, 0.0
        %v3495 = vmax.f32 %v3490, 0.0
        %v3496 = vmax.f32 %v3491, 0.0
        %v3497 = vld [vmem:[%s2 + $0x98] sm:$0xff]
        %v3498 = vld [vmem:[%s2 + $0xa0] sm:$0xff]
        %v3500 = vsel %vm429, %v3492, 0
        %v3503 = vsel %vm429, %v3493, 0
        %v3506 = vsel %vm429, %v3494, 0
        %v3509 = vsel %vm429, %v3495, 0
        %v3512 = vsel %vm429, %v3496, 0
        %3514 = vmatprep.subr.mxu0 0.0
        %3515 = vmatpush1.msra.mxu0 0.0
        %3516 = vmatprep.subr.mxu0 0.0
        %3517 = vmatpush1.msra.mxu0 0.0
        %3518 = vmatprep.subr.mxu0 0.0
        %3519 = vmatpush1.msra.mxu0 0.0
        %3520 = vmatprep.subr.mxu0 0.0
        %3521 = vmatpush1.msra.mxu0 0.0
        %3522 = vmatprep.subr.mxu0 0.0
        %3523 = vmatpush1.msra.mxu0 0.0
        %3524 = vmatprep.subr.mxu0 0.0
        %3525 = vmatpush1.msra.mxu0 0.0
        %3526 = vmatprep.subr.mxu0 0.0
        %3527 = vmatpush1.msra.mxu0 0.0
        %3528 = vmatprep.subr.mxu0 0.0
        %3529 = vmatpush1.msra.mxu0 0.0
        %3530 = vmatprep.subr.mxu0 0.0
        %3531 = vmatpush1.msra.mxu0 0.0
        %3532 = vmatprep.subr.mxu0 0.0
        %3533 = vmatpush1.msra.mxu0 0.0
        %3534 = vmatprep.subr.mxu0 0.0
        %3535 = vmatpush1.msra.mxu0 0.0
        %3536 = vmatprep.subr.mxu0 0.0
        %3537 = vmatpush1.msra.mxu0 0.0
        %3538 = vmatprep.subr.mxu0 0.0
        %3539 = vmatpush1.msra.mxu0 0.0
        %3540 = vmatprep.subr.mxu0 0.0
        %3541 = vmatpush1.msra.mxu0 0.0
        %3542 = vmatprep.subr.mxu0 0.0
        %3543 = vmatpush1.msra.mxu0 %v3498
        %3544 = vmatprep.subr.mxu0 0.0
        %3545 = vmatpush1.msra.mxu0 %v3497
        %3546 = vmatprep.subr.mxu0 0.0
        %3547 = vmatpush2.msra.mxu0 0.0
        %3548 = vmatprep.subr.mxu0 0.0
        %3549 = vmatpush2.msra.mxu0 0.0
        %3550 = vmatprep.subr.mxu0 0.0
        %3551 = vmatpush2.msra.mxu0 0.0
        %3552 = vmatprep.subr.mxu0 0.0
        %3553 = vmatpush2.msra.mxu0 0.0
        %3554 = vmatprep.subr.mxu0 0.0
        %3555 = vmatpush2.msra.mxu0 0.0
        %3556 = vmatprep.subr.mxu0 0.0
        %3557 = vmatpush2.msra.mxu0 0.0
        %3558 = vmatprep.subr.mxu0 0.0
        %3559 = vmatpush2.msra.mxu0 0.0
        %3560 = vmatprep.subr.mxu0 0.0
        %3561 = vmatpush2.msra.mxu0 0.0
        %3562 = vmatprep.subr.mxu0 0.0
        %3563 = vmatpush2.msra.mxu0 0.0
        %3564 = vmatprep.subr.mxu0 0.0
        %3565 = vmatpush2.msra.mxu0 0.0
        %3566 = vmatprep.subr.mxu0 0.0
        %3567 = vmatpush2.msra.mxu0 0.0
        %3568 = vmatprep.subr.mxu0 0.0
        %3569 = vmatpush2.msra.mxu0 0.0
        %3570 = vmatprep.subr.mxu0 0.0
        %3571 = vmatpush2.msra.mxu0 0.0
        %3572 = vmatprep.subr.mxu0 0.0
        %3573 = vmatpush2.msra.mxu0 0.0
        %3574 = vmatprep.subr.mxu0 0.0
        %3575 = vmatpush2.msra.mxu0 0.0
        %3576 = vmatprep.subr.mxu0 0.0
        %3577 = vmatpush2.msra.mxu0 0.0
        %3578 = vmatprep.mubr.f32.mxu0 0.0
        %3579 = vmatmul.mubr.f32.gmra.mxu0 %v3500
        %v3580 = vpop.f32.mrf.mxu0
        %v3581 = vadd.f32 0.0, %v3580
        %v3582 = vpop.f32.mrf.mxu0
        %3583 = vmatprep.mubr.f32.mxu0 0.0
        %3584 = vmatmul.mubr.f32.gmra.mxu0 %v3503
        %v3585 = vpop.f32.mrf.mxu0
        %v3586 = vadd.f32 0.0, %v3585
        %v3587 = vpop.f32.mrf.mxu0
        %3588 = vmatprep.mubr.f32.mxu0 0.0
        %3589 = vmatmul.mubr.f32.gmra.mxu0 %v3506
        %v3590 = vpop.f32.mrf.mxu0
        %v3591 = vadd.f32 0.0, %v3590
        %v3592 = vpop.f32.mrf.mxu0
        %3593 = vmatprep.mubr.f32.mxu0 0.0
        %3594 = vmatmul.mubr.f32.gmra.mxu0 %v3509
        %v3595 = vpop.f32.mrf.mxu0
        %v3596 = vadd.f32 0.0, %v3595
        %v3597 = vpop.f32.mrf.mxu0
        %3598 = vmatprep.mubr.f32.mxu0 0.0
        %3599 = vmatmul.mubr.f32.gmra.mxu0 %v3512
        %v3600 = vpop.f32.mrf.mxu0
        %v3601 = vadd.f32 0.0, %v3600
        %v3602 = vpop.f32.mrf.mxu0
        %3603 = vdwg.mxu0
        %v3604 = vld [vmem:[%s1 + $0x670] sm:$0x1]
        %v3605 = vlaneseq
        %v3606 = vshrl.u32 %v3605, 7
        %v3607 = vsub.s32 0, %v3606
        %v3608 = vrot.slane %v3604, %v3607
        %v3609 = vmul.f32 %v3581, %v3608
        %v3610 = vmul.f32 %v3586, %v3608
        %v3611 = vmul.f32 %v3591, %v3608
        %v3612 = vmul.f32 %v3596, %v3608
        %v3613 = vmul.f32 %v3601, %v3608
        %v3614 = vld [vmem:[%s1 + $0x678] sm:$0x1]
        %v3615 = vlaneseq
        %v3616 = vshrl.u32 %v3615, 7
        %v3617 = vsub.s32 0, %v3616
        %v3618 = vrot.slane %v3614, %v3617
        %v3619 = vadd.f32 %v3609, %v3618
        %v3620 = vadd.f32 %v3610, %v3618
        %v3621 = vadd.f32 %v3611, %v3618
        %v3622 = vadd.f32 %v3612, %v3618
        %v3623 = vadd.f32 %v3613, %v3618
        %v3624 = vmax.f32 %v3619, 0.0
        %v3625 = vmax.f32 %v3620, 0.0
        %v3626 = vmax.f32 %v3621, 0.0
        %v3627 = vmax.f32 %v3622, 0.0
        %v3628 = vmax.f32 %v3623, 0.0
        %v3629 = vld [vmem:[%s1 + $0x680] sm:$0x1]
        %v3630 = vld [vmem:[%s1 + $0x681] sm:$0x1]
        %v3631 = vld [vmem:[%s1 + $0x682] sm:$0x1]
        %v3632 = vlaneseq
        %v3633 = vshrl.u32 %v3632, 7
        %v3634 = vsub.s32 0, %v3633
        %v3635 = vrot.slane %v3629, %v3634
        %v3636 = vmul.f32 %v3635, 0.0
        %v3637 = vmul.f32 %v3624, %v3635
        %v3638 = vmul.f32 %v3625, %v3635
        %v3639 = vmul.f32 %v3626, %v3635
        %v3640 = vmul.f32 %v3627, %v3635
        %v3641 = vlaneseq
        %v3642 = vshrl.u32 %v3641, 7
        %v3643 = vsub.s32 0, %v3642
        %v3644 = vrot.slane %v3630, %v3643
        %v3645 = vmul.f32 %v3624, %v3644
        %v3646 = vmul.f32 %v3625, %v3644
        %v3647 = vmul.f32 %v3626, %v3644
        %v3648 = vmul.f32 %v3627, %v3644
        %v3649 = vmul.f32 %v3628, %v3644
        %v3650 = vadd.f32 %v3636, %v3645
        %v3651 = vadd.f32 %v3637, %v3646
        %v3652 = vadd.f32 %v3638, %v3647
        %v3653 = vadd.f32 %v3639, %v3648
        %v3654 = vadd.f32 %v3640, %v3649
        %v3655 = vlaneseq
        %v3656 = vshrl.u32 %v3655, 7
        %v3657 = vsub.s32 0, %v3656
        %v3658 = vrot.slane %v3631, %v3657
        %v3659 = vmul.f32 %v3625, %v3658
        %v3660 = vmul.f32 %v3626, %v3658
        %v3661 = vmul.f32 %v3627, %v3658
        %v3662 = vmul.f32 %v3628, %v3658
        %v3663 = vmul.f32 %v3658, 0.0
        %v3664 = vadd.f32 %v3650, %v3659
        %v3665 = vadd.f32 %v3651, %v3660
        %v3666 = vadd.f32 %v3652, %v3661
        %v3667 = vadd.f32 %v3653, %v3662
        %v3668 = vadd.f32 %v3654, %v3663
        %v3669 = vld [vmem:[%s1 + $0x688] sm:$0xff]
        %v3670 = vld [vmem:[%s1 + $0x690] sm:$0xff]
        %v3671 = vld [vmem:[%s1 + $0x698] sm:$0xff]
        %v3672 = vld [vmem:[%s1 + $0x6a0] sm:$0xff]
        %v3673 = vld [vmem:[%s1 + $0x6a8] sm:$0xff]
        %v3674 = vmul.f32 %v3664, %v3669
        %v3675 = vmul.f32 %v3665, %v3670
        %v3676 = vmul.f32 %v3666, %v3671
        %v3677 = vmul.f32 %v3667, %v3672
        %v3678 = vmul.f32 %v3668, %v3673
        %v3679 = vld [vmem:[%s1 + $0x6b0] sm:$0xff]
        %v3680 = vld [vmem:[%s1 + $0x6b8] sm:$0xff]
        %v3681 = vld [vmem:[%s1 + $0x6c0] sm:$0xff]
        %v3682 = vld [vmem:[%s1 + $0x6c8] sm:$0xff]
        %v3683 = vld [vmem:[%s1 + $0x6d0] sm:$0xff]
        %v3684 = vadd.f32 %v3674, %v3679
        %v3685 = vadd.f32 %v3675, %v3680
        %v3686 = vadd.f32 %v3676, %v3681
        %v3687 = vadd.f32 %v3677, %v3682
        %v3688 = vadd.f32 %v3678, %v3683
        %vm3689 = vcmask 162816
        %v3690 = vsel %vm3689, %v3684, 0.0
        %v3691 = vsel %vm3689, %v3685, 0.0
        %v3692 = vadd.f32 %v3690, %v3691
        %v3693 = vsel %vm3689, %v3686, 0.0
        %v3694 = vadd.f32 %v3692, %v3693
        %v3695 = vsel %vm3689, %v3687, 0.0
        %v3696 = vadd.f32 %v3694, %v3695
        %v3697 = vsel %vm3689, %v3688, 0.0
        %v3698 = vadd.f32 %v3696, %v3697
        %v3699 = vmul.f32 %v3698, %v2710
        %v3700 = vld [vmem:[%s1 + $0x6d8] sm:$0x1]
        %v3701 = vlaneseq
        %v3702 = vshrl.u32 %v3701, 7
        %v3703 = vsub.s32 0, %v3702
        %v3704 = vrot.slane %v3700, %v3703
        %v3705 = vmul.f32 %v3704, 0.0
        %v3706 = vld [vmem:[%s1 + $0x6d9] sm:$0x1]
        %v3707 = vlaneseq
        %v3708 = vshrl.u32 %v3707, 7
        %v3709 = vsub.s32 0, %v3708
        %v3710 = vrot.slane %v3706, %v3709
        %v3711 = vmul.f32 %v3699, %v3710
        %v3712 = vadd.f32 %v3705, %v3711
        %v3713 = vld [vmem:[%s1 + $0x6da] sm:$0x1]
        %v3714 = vlaneseq
        %v3715 = vshrl.u32 %v3714, 7
        %v3716 = vsub.s32 0, %v3715
        %v3717 = vrot.slane %v3713, %v3716
        %v3718 = vmul.f32 %v3717, 0.0
        %v3719 = vadd.f32 %v3712, %v3718
        %v3720 = vld [vmem:[%s1 + $0x6e0] sm:$0x1]
        %v3721 = vlaneseq
        %v3722 = vshrl.u32 %v3721, 7
        %v3723 = vsub.s32 0, %v3722
        %v3724 = vrot.slane %v3720, %v3723
        %v3725 = vmul.f32 %v3719, %v3724
        %v3726 = vld [vmem:[%s1 + $0x6e8] sm:$0x1]
        %v3727 = vlaneseq
        %v3728 = vshrl.u32 %v3727, 7
        %v3729 = vsub.s32 0, %v3728
        %v3730 = vrot.slane %v3726, %v3729
        %v3731 = vadd.f32 %v3725, %v3730
        %v3732 = vsub.f32 0.0, %v3731
        %v3733 = vmul.f32 %v3732, 1.442695
        %v3734 = vpow.pop %v3733
        %v3735 = vadd.f32 %v3734, 1.0
        %v3736 = vrcp.pop %v3735
        %v3737 = vmul.f32 %v3731, %v3736
        %v3738 = vld [vmem:[%s2 + $0xa8] sm:$0xff]
        %v3739 = vld [vmem:[%s2 + $0xb0] sm:$0xff]
        %v3740 = vld [vmem:[%s2 + $0xb8] sm:$0xf]
        %v3741 = vld [vmem:[%s1 + $0x6f0] sm:$0x1]
        %v3742 = vlaneseq
        %v3743 = vshrl.u32 %v3742, 7
        %v3744 = vsub.s32 0, %v3743
        %v3745 = vrot.slane %v3741, %v3744
        %v3747 = vsel %vm3689, %v3737, 0
        %v3750 = vsel %vm2029, %v3740, 0
        %3752 = vmatprep.subr.mxu0 0.0
        %3753 = vmatpush1.msra.mxu0 0.0
        %3754 = vmatprep.subr.mxu0 0.0
        %3755 = vmatpush1.msra.mxu0 0.0
        %3756 = vmatprep.subr.mxu0 0.0
        %3757 = vmatpush1.msra.mxu0 0.0
        %3758 = vmatprep.subr.mxu0 0.0
        %3759 = vmatpush1.msra.mxu0 0.0
        %3760 = vmatprep.subr.mxu0 0.0
        %3761 = vmatpush1.msra.mxu0 0.0
        %3762 = vmatprep.subr.mxu0 0.0
        %3763 = vmatpush1.msra.mxu0 0.0
        %3764 = vmatprep.subr.mxu0 0.0
        %3765 = vmatpush1.msra.mxu0 0.0
        %3766 = vmatprep.subr.mxu0 0.0
        %3767 = vmatpush1.msra.mxu0 0.0
        %3768 = vmatprep.subr.mxu0 0.0
        %3769 = vmatpush1.msra.mxu0 0.0
        %3770 = vmatprep.subr.mxu0 0.0
        %3771 = vmatpush1.msra.mxu0 0.0
        %3772 = vmatprep.subr.mxu0 0.0
        %3773 = vmatpush1.msra.mxu0 0.0
        %3774 = vmatprep.subr.mxu0 0.0
        %3775 = vmatpush1.msra.mxu0 0.0
        %3776 = vmatprep.subr.mxu0 0.0
        %3777 = vmatpush1.msra.mxu0 0.0
        %3778 = vmatprep.subr.mxu0 0.0
        %3779 = vmatpush1.msra.mxu0 %v3750
        %3780 = vmatprep.subr.mxu0 0.0
        %3781 = vmatpush1.msra.mxu0 %v3739
        %3782 = vmatprep.subr.mxu0 0.0
        %3783 = vmatpush1.msra.mxu0 %v3738
        %3784 = vmatprep.subr.mxu0 0.0
        %3785 = vmatpush2.msra.mxu0 0.0
        %3786 = vmatprep.subr.mxu0 0.0
        %3787 = vmatpush2.msra.mxu0 0.0
        %3788 = vmatprep.subr.mxu0 0.0
        %3789 = vmatpush2.msra.mxu0 0.0
        %3790 = vmatprep.subr.mxu0 0.0
        %3791 = vmatpush2.msra.mxu0 0.0
        %3792 = vmatprep.subr.mxu0 0.0
        %3793 = vmatpush2.msra.mxu0 0.0
        %3794 = vmatprep.subr.mxu0 0.0
        %3795 = vmatpush2.msra.mxu0 0.0
        %3796 = vmatprep.subr.mxu0 0.0
        %3797 = vmatpush2.msra.mxu0 0.0
        %3798 = vmatprep.subr.mxu0 0.0
        %3799 = vmatpush2.msra.mxu0 0.0
        %3800 = vmatprep.subr.mxu0 0.0
        %3801 = vmatpush2.msra.mxu0 0.0
        %3802 = vmatprep.subr.mxu0 0.0
        %3803 = vmatpush2.msra.mxu0 0.0
        %3804 = vmatprep.subr.mxu0 0.0
        %3805 = vmatpush2.msra.mxu0 0.0
        %3806 = vmatprep.subr.mxu0 0.0
        %3807 = vmatpush2.msra.mxu0 0.0
        %3808 = vmatprep.subr.mxu0 0.0
        %3809 = vmatpush2.msra.mxu0 0.0
        %3810 = vmatprep.subr.mxu0 0.0
        %3811 = vmatpush2.msra.mxu0 0.0
        %3812 = vmatprep.subr.mxu0 0.0
        %3813 = vmatpush2.msra.mxu0 0.0
        %3814 = vmatprep.subr.mxu0 0.0
        %3815 = vmatpush2.msra.mxu0 0.0
        %3816 = vmatprep.mubr.f32.mxu0 0.0
        %3817 = vmatmul.mubr.f32.gmra.mxu0 %v3747
        %v3818 = vpop.f32.mrf.mxu0
        %v3819 = vadd.f32 %v3745, %v3818
        %v3820 = vpop.f32.mrf.mxu0
        %3821 = vdwg.mxu0
        %v3822 = vadd.f32 %v3684, %v3819
        %v3823 = vadd.f32 %v3685, %v3819
        %v3824 = vadd.f32 %v3686, %v3819
        %v3825 = vadd.f32 %v3687, %v3819
        %v3826 = vadd.f32 %v3688, %v3819
        %v3827 = vmax.f32 %v3822, 0.0
        %v3828 = vmax.f32 %v3823, 0.0
        %v3829 = vmax.f32 %v3824, 0.0
        %v3830 = vmax.f32 %v3825, 0.0
        %v3831 = vmax.f32 %v3826, 0.0
        %v3832 = vld [vmem:[%s1 + $0x6f8] sm:$0x1]
        %v3833 = vld [vmem:[%s1 + $0x6f9] sm:$0x1]
        %v3834 = vld [vmem:[%s1 + $0x6fa] sm:$0x1]
        %v3835 = vlaneseq
        %v3836 = vshrl.u32 %v3835, 7
        %v3837 = vsub.s32 0, %v3836
        %v3838 = vrot.slane %v3832, %v3837
        %v3839 = vmul.f32 %v3838, 0.0
        %v3840 = vmul.f32 %v3827, %v3838
        %v3841 = vmul.f32 %v3828, %v3838
        %v3842 = vmul.f32 %v3829, %v3838
        %v3843 = vmul.f32 %v3830, %v3838
        %v3844 = vlaneseq
        %v3845 = vshrl.u32 %v3844, 7
        %v3846 = vsub.s32 0, %v3845
        %v3847 = vrot.slane %v3833, %v3846
        %v3848 = vmul.f32 %v3827, %v3847
        %v3849 = vmul.f32 %v3828, %v3847
        %v3850 = vmul.f32 %v3829, %v3847
        %v3851 = vmul.f32 %v3830, %v3847
        %v3852 = vmul.f32 %v3831, %v3847
        %v3853 = vadd.f32 %v3839, %v3848
        %v3854 = vadd.f32 %v3840, %v3849
        %v3855 = vadd.f32 %v3841, %v3850
        %v3856 = vadd.f32 %v3842, %v3851
        %v3857 = vadd.f32 %v3843, %v3852
        %v3858 = vlaneseq
        %v3859 = vshrl.u32 %v3858, 7
        %v3860 = vsub.s32 0, %v3859
        %v3861 = vrot.slane %v3834, %v3860
        %v3862 = vmul.f32 %v3828, %v3861
        %v3863 = vmul.f32 %v3829, %v3861
        %v3864 = vmul.f32 %v3830, %v3861
        %v3865 = vmul.f32 %v3831, %v3861
        %v3866 = vmul.f32 %v3861, 0.0
        %v3867 = vadd.f32 %v3853, %v3862
        %v3868 = vadd.f32 %v3854, %v3863
        %v3869 = vadd.f32 %v3855, %v3864
        %v3870 = vadd.f32 %v3856, %v3865
        %v3871 = vadd.f32 %v3857, %v3866
        %v3872 = vld [vmem:[%s1 + $0x700] sm:$0xff]
        %v3873 = vld [vmem:[%s1 + $0x708] sm:$0xff]
        %v3874 = vld [vmem:[%s1 + $0x710] sm:$0xff]
        %v3875 = vld [vmem:[%s1 + $0x718] sm:$0xff]
        %v3876 = vld [vmem:[%s1 + $0x720] sm:$0xff]
        %v3877 = vmul.f32 %v3867, %v3872
        %v3878 = vmul.f32 %v3868, %v3873
        %v3879 = vmul.f32 %v3869, %v3874
        %v3880 = vmul.f32 %v3870, %v3875
        %v3881 = vmul.f32 %v3871, %v3876
        %v3882 = vld [vmem:[%s1 + $0x728] sm:$0xff]
        %v3883 = vld [vmem:[%s1 + $0x730] sm:$0xff]
        %v3884 = vld [vmem:[%s1 + $0x738] sm:$0xff]
        %v3885 = vld [vmem:[%s1 + $0x740] sm:$0xff]
        %v3886 = vld [vmem:[%s1 + $0x748] sm:$0xff]
        %v3887 = vadd.f32 %v3877, %v3882
        %v3888 = vadd.f32 %v3878, %v3883
        %v3889 = vadd.f32 %v3879, %v3884
        %v3890 = vadd.f32 %v3880, %v3885
        %v3891 = vadd.f32 %v3881, %v3886
        %v3892 = vsel %vm3689, %v3887, 0.0
        %v3893 = vsel %vm3689, %v3888, 0.0
        %v3894 = vadd.f32 %v3892, %v3893
        %v3895 = vsel %vm3689, %v3889, 0.0
        %v3896 = vadd.f32 %v3894, %v3895
        %v3897 = vsel %vm3689, %v3890, 0.0
        %v3898 = vadd.f32 %v3896, %v3897
        %v3899 = vsel %vm3689, %v3891, 0.0
        %v3900 = vadd.f32 %v3898, %v3899
        %v3901 = vmul.f32 %v3900, %v2710
        %v3902 = vld [vmem:[%s1 + $0x750] sm:$0x1]
        %v3903 = vlaneseq
        %v3904 = vshrl.u32 %v3903, 7
        %v3905 = vsub.s32 0, %v3904
        %v3906 = vrot.slane %v3902, %v3905
        %v3907 = vmul.f32 %v3906, 0.0
        %v3908 = vld [vmem:[%s1 + $0x751] sm:$0x1]
        %v3909 = vlaneseq
        %v3910 = vshrl.u32 %v3909, 7
        %v3911 = vsub.s32 0, %v3910
        %v3912 = vrot.slane %v3908, %v3911
        %v3913 = vmul.f32 %v3901, %v3912
        %v3914 = vadd.f32 %v3907, %v3913
        %v3915 = vld [vmem:[%s1 + $0x752] sm:$0x1]
        %v3916 = vlaneseq
        %v3917 = vshrl.u32 %v3916, 7
        %v3918 = vsub.s32 0, %v3917
        %v3919 = vrot.slane %v3915, %v3918
        %v3920 = vmul.f32 %v3919, 0.0
        %v3921 = vadd.f32 %v3914, %v3920
        %v3922 = vld [vmem:[%s1 + $0x758] sm:$0x1]
        %v3923 = vlaneseq
        %v3924 = vshrl.u32 %v3923, 7
        %v3925 = vsub.s32 0, %v3924
        %v3926 = vrot.slane %v3922, %v3925
        %v3927 = vmul.f32 %v3921, %v3926
        %v3928 = vld [vmem:[%s1 + $0x760] sm:$0x1]
        %v3929 = vlaneseq
        %v3930 = vshrl.u32 %v3929, 7
        %v3931 = vsub.s32 0, %v3930
        %v3932 = vrot.slane %v3928, %v3931
        %v3933 = vadd.f32 %v3927, %v3932
        %v3934 = vsub.f32 0.0, %v3933
        %v3935 = vmul.f32 %v3934, 1.442695
        %v3936 = vpow.pop %v3935
        %v3937 = vadd.f32 %v3936, 1.0
        %v3938 = vrcp.pop %v3937
        %v3939 = vmul.f32 %v3933, %v3938
        %v3940 = vld [vmem:[%s2 + $0xc0] sm:$0xff]
        %v3941 = vld [vmem:[%s2 + $0xc8] sm:$0xff]
        %v3942 = vld [vmem:[%s2 + $0xd0] sm:$0xf]
        %v3943 = vld [vmem:[%s1 + $0x768] sm:$0x1]
        %v3944 = vlaneseq
        %v3945 = vshrl.u32 %v3944, 7
        %v3946 = vsub.s32 0, %v3945
        %v3947 = vrot.slane %v3943, %v3946
        %v3949 = vsel %vm3689, %v3939, 0
        %v3952 = vsel %vm2029, %v3942, 0
        %3954 = vmatprep.subr.mxu0 0.0
        %3955 = vmatpush1.msra.mxu0 0.0
        %3956 = vmatprep.subr.mxu0 0.0
        %3957 = vmatpush1.msra.mxu0 0.0
        %3958 = vmatprep.subr.mxu0 0.0
        %3959 = vmatpush1.msra.mxu0 0.0
        %3960 = vmatprep.subr.mxu0 0.0
        %3961 = vmatpush1.msra.mxu0 0.0
        %3962 = vmatprep.subr.mxu0 0.0
        %3963 = vmatpush1.msra.mxu0 0.0
        %3964 = vmatprep.subr.mxu0 0.0
        %3965 = vmatpush1.msra.mxu0 0.0
        %3966 = vmatprep.subr.mxu0 0.0
        %3967 = vmatpush1.msra.mxu0 0.0
        %3968 = vmatprep.subr.mxu0 0.0
        %3969 = vmatpush1.msra.mxu0 0.0
        %3970 = vmatprep.subr.mxu0 0.0
        %3971 = vmatpush1.msra.mxu0 0.0
        %3972 = vmatprep.subr.mxu0 0.0
        %3973 = vmatpush1.msra.mxu0 0.0
        %3974 = vmatprep.subr.mxu0 0.0
        %3975 = vmatpush1.msra.mxu0 0.0
        %3976 = vmatprep.subr.mxu0 0.0
        %3977 = vmatpush1.msra.mxu0 0.0
        %3978 = vmatprep.subr.mxu0 0.0
        %3979 = vmatpush1.msra.mxu0 0.0
        %3980 = vmatprep.subr.mxu0 0.0
        %3981 = vmatpush1.msra.mxu0 %v3952
        %3982 = vmatprep.subr.mxu0 0.0
        %3983 = vmatpush1.msra.mxu0 %v3941
        %3984 = vmatprep.subr.mxu0 0.0
        %3985 = vmatpush1.msra.mxu0 %v3940
        %3986 = vmatprep.subr.mxu0 0.0
        %3987 = vmatpush2.msra.mxu0 0.0
        %3988 = vmatprep.subr.mxu0 0.0
        %3989 = vmatpush2.msra.mxu0 0.0
        %3990 = vmatprep.subr.mxu0 0.0
        %3991 = vmatpush2.msra.mxu0 0.0
        %3992 = vmatprep.subr.mxu0 0.0
        %3993 = vmatpush2.msra.mxu0 0.0
        %3994 = vmatprep.subr.mxu0 0.0
        %3995 = vmatpush2.msra.mxu0 0.0
        %3996 = vmatprep.subr.mxu0 0.0
        %3997 = vmatpush2.msra.mxu0 0.0
        %3998 = vmatprep.subr.mxu0 0.0
        %3999 = vmatpush2.msra.mxu0 0.0
        %4000 = vmatprep.subr.mxu0 0.0
        %4001 = vmatpush2.msra.mxu0 0.0
        %4002 = vmatprep.subr.mxu0 0.0
        %4003 = vmatpush2.msra.mxu0 0.0
        %4004 = vmatprep.subr.mxu0 0.0
        %4005 = vmatpush2.msra.mxu0 0.0
        %4006 = vmatprep.subr.mxu0 0.0
        %4007 = vmatpush2.msra.mxu0 0.0
        %4008 = vmatprep.subr.mxu0 0.0
        %4009 = vmatpush2.msra.mxu0 0.0
        %4010 = vmatprep.subr.mxu0 0.0
        %4011 = vmatpush2.msra.mxu0 0.0
        %4012 = vmatprep.subr.mxu0 0.0
        %4013 = vmatpush2.msra.mxu0 0.0
        %4014 = vmatprep.subr.mxu0 0.0
        %4015 = vmatpush2.msra.mxu0 0.0
        %4016 = vmatprep.subr.mxu0 0.0
        %4017 = vmatpush2.msra.mxu0 0.0
        %4018 = vmatprep.mubr.f32.mxu0 0.0
        %4019 = vmatmul.mubr.f32.gmra.mxu0 %v3949
        %v4020 = vpop.f32.mrf.mxu0
        %v4021 = vadd.f32 %v3947, %v4020
        %v4022 = vpop.f32.mrf.mxu0
        %4023 = vdwg.mxu0
        %v4024 = vadd.f32 %v3827, %v3887
        %v4025 = vadd.f32 %v3828, %v3888
        %v4026 = vadd.f32 %v3829, %v3889
        %v4027 = vadd.f32 %v3830, %v3890
        %v4028 = vadd.f32 %v3831, %v3891
        %v4029 = vadd.f32 %v4024, %v4021
        %v4030 = vadd.f32 %v4025, %v4021
        %v4031 = vadd.f32 %v4026, %v4021
        %v4032 = vadd.f32 %v4027, %v4021
        %v4033 = vadd.f32 %v4028, %v4021
        %v4034 = vmax.f32 %v4029, 0.0
        %v4035 = vmax.f32 %v4030, 0.0
        %v4036 = vmax.f32 %v4031, 0.0
        %v4037 = vmax.f32 %v4032, 0.0
        %v4038 = vmax.f32 %v4033, 0.0
        %v4039 = vld [vmem:[%s1 + $0x770] sm:$0x1]
        %v4040 = vld [vmem:[%s1 + $0x771] sm:$0x1]
        %v4041 = vld [vmem:[%s1 + $0x772] sm:$0x1]
        %v4042 = vlaneseq
        %v4043 = vshrl.u32 %v4042, 7
        %v4044 = vsub.s32 0, %v4043
        %v4045 = vrot.slane %v4039, %v4044
        %v4046 = vmul.f32 %v4045, 0.0
        %v4047 = vmul.f32 %v4034, %v4045
        %v4048 = vmul.f32 %v4035, %v4045
        %v4049 = vmul.f32 %v4036, %v4045
        %v4050 = vmul.f32 %v4037, %v4045
        %v4051 = vlaneseq
        %v4052 = vshrl.u32 %v4051, 7
        %v4053 = vsub.s32 0, %v4052
        %v4054 = vrot.slane %v4040, %v4053
        %v4055 = vmul.f32 %v4034, %v4054
        %v4056 = vmul.f32 %v4035, %v4054
        %v4057 = vmul.f32 %v4036, %v4054
        %v4058 = vmul.f32 %v4037, %v4054
        %v4059 = vmul.f32 %v4038, %v4054
        %v4060 = vadd.f32 %v4046, %v4055
        %v4061 = vadd.f32 %v4047, %v4056
        %v4062 = vadd.f32 %v4048, %v4057
        %v4063 = vadd.f32 %v4049, %v4058
        %v4064 = vadd.f32 %v4050, %v4059
        %v4065 = vlaneseq
        %v4066 = vshrl.u32 %v4065, 7
        %v4067 = vsub.s32 0, %v4066
        %v4068 = vrot.slane %v4041, %v4067
        %v4069 = vmul.f32 %v4035, %v4068
        %v4070 = vmul.f32 %v4036, %v4068
        %v4071 = vmul.f32 %v4037, %v4068
        %v4072 = vmul.f32 %v4038, %v4068
        %v4073 = vmul.f32 %v4068, 0.0
        %v4074 = vadd.f32 %v4060, %v4069
        %v4075 = vadd.f32 %v4061, %v4070
        %v4076 = vadd.f32 %v4062, %v4071
        %v4077 = vadd.f32 %v4063, %v4072
        %v4078 = vadd.f32 %v4064, %v4073
        %v4079 = vld [vmem:[%s1 + $0x778] sm:$0xff]
        %v4080 = vld [vmem:[%s1 + $0x780] sm:$0xff]
        %v4081 = vld [vmem:[%s1 + $0x788] sm:$0xff]
        %v4082 = vld [vmem:[%s1 + $0x790] sm:$0xff]
        %v4083 = vld [vmem:[%s1 + $0x798] sm:$0xff]
        %v4084 = vmul.f32 %v4074, %v4079
        %v4085 = vmul.f32 %v4075, %v4080
        %v4086 = vmul.f32 %v4076, %v4081
        %v4087 = vmul.f32 %v4077, %v4082
        %v4088 = vmul.f32 %v4078, %v4083
        %v4089 = vld [vmem:[%s1 + $0x7a0] sm:$0xff]
        %v4090 = vld [vmem:[%s1 + $0x7a8] sm:$0xff]
        %v4091 = vld [vmem:[%s1 + $0x7b0] sm:$0xff]
        %v4092 = vld [vmem:[%s1 + $0x7b8] sm:$0xff]
        %v4093 = vld [vmem:[%s1 + $0x7c0] sm:$0xff]
        %v4094 = vadd.f32 %v4084, %v4089
        %v4095 = vadd.f32 %v4085, %v4090
        %v4096 = vadd.f32 %v4086, %v4091
        %v4097 = vadd.f32 %v4087, %v4092
        %v4098 = vadd.f32 %v4088, %v4093
        %v4099 = vsel %vm3689, %v4094, 0.0
        %v4100 = vsel %vm3689, %v4095, 0.0
        %v4101 = vadd.f32 %v4099, %v4100
        %v4102 = vsel %vm3689, %v4096, 0.0
        %v4103 = vadd.f32 %v4101, %v4102
        %v4104 = vsel %vm3689, %v4097, 0.0
        %v4105 = vadd.f32 %v4103, %v4104
        %v4106 = vsel %vm3689, %v4098, 0.0
        %v4107 = vadd.f32 %v4105, %v4106
        %v4108 = vmul.f32 %v4107, %v2710
        %v4109 = vld [vmem:[%s1 + $0x7c8] sm:$0x1]
        %v4110 = vlaneseq
        %v4111 = vshrl.u32 %v4110, 7
        %v4112 = vsub.s32 0, %v4111
        %v4113 = vrot.slane %v4109, %v4112
        %v4114 = vmul.f32 %v4113, 0.0
        %v4115 = vld [vmem:[%s1 + $0x7c9] sm:$0x1]
        %v4116 = vlaneseq
        %v4117 = vshrl.u32 %v4116, 7
        %v4118 = vsub.s32 0, %v4117
        %v4119 = vrot.slane %v4115, %v4118
        %v4120 = vmul.f32 %v4108, %v4119
        %v4121 = vadd.f32 %v4114, %v4120
        %v4122 = vld [vmem:[%s1 + $0x7ca] sm:$0x1]
        %v4123 = vlaneseq
        %v4124 = vshrl.u32 %v4123, 7
        %v4125 = vsub.s32 0, %v4124
        %v4126 = vrot.slane %v4122, %v4125
        %v4127 = vmul.f32 %v4126, 0.0
        %v4128 = vadd.f32 %v4121, %v4127
        %v4129 = vld [vmem:[%s1 + $0x7d0] sm:$0x1]
        %v4130 = vlaneseq
        %v4131 = vshrl.u32 %v4130, 7
        %v4132 = vsub.s32 0, %v4131
        %v4133 = vrot.slane %v4129, %v4132
        %v4134 = vmul.f32 %v4128, %v4133
        %v4135 = vld [vmem:[%s1 + $0x7d8] sm:$0x1]
        %v4136 = vlaneseq
        %v4137 = vshrl.u32 %v4136, 7
        %v4138 = vsub.s32 0, %v4137
        %v4139 = vrot.slane %v4135, %v4138
        %v4140 = vadd.f32 %v4134, %v4139
        %v4141 = vsub.f32 0.0, %v4140
        %v4142 = vmul.f32 %v4141, 1.442695
        %v4143 = vpow.pop %v4142
        %v4144 = vadd.f32 %v4143, 1.0
        %v4145 = vrcp.pop %v4144
        %v4146 = vmul.f32 %v4140, %v4145
        %v4147 = vld [vmem:[%s2 + $0xd8] sm:$0xff]
        %v4148 = vld [vmem:[%s2 + $0xe0] sm:$0xff]
        %v4149 = vld [vmem:[%s2 + $0xe8] sm:$0xf]
        %v4150 = vld [vmem:[%s1 + $0x7e0] sm:$0x1]
        %v4151 = vlaneseq
        %v4152 = vshrl.u32 %v4151, 7
        %v4153 = vsub.s32 0, %v4152
        %v4154 = vrot.slane %v4150, %v4153
        %v4156 = vsel %vm3689, %v4146, 0
        %v4159 = vsel %vm2029, %v4149, 0
        %4161 = vmatprep.subr.mxu0 0.0
        %4162 = vmatpush1.msra.mxu0 0.0
        %4163 = vmatprep.subr.mxu0 0.0
        %4164 = vmatpush1.msra.mxu0 0.0
        %4165 = vmatprep.subr.mxu0 0.0
        %4166 = vmatpush1.msra.mxu0 0.0
        %4167 = vmatprep.subr.mxu0 0.0
        %4168 = vmatpush1.msra.mxu0 0.0
        %4169 = vmatprep.subr.mxu0 0.0
        %4170 = vmatpush1.msra.mxu0 0.0
        %4171 = vmatprep.subr.mxu0 0.0
        %4172 = vmatpush1.msra.mxu0 0.0
        %4173 = vmatprep.subr.mxu0 0.0
        %4174 = vmatpush1.msra.mxu0 0.0
        %4175 = vmatprep.subr.mxu0 0.0
        %4176 = vmatpush1.msra.mxu0 0.0
        %4177 = vmatprep.subr.mxu0 0.0
        %4178 = vmatpush1.msra.mxu0 0.0
        %4179 = vmatprep.subr.mxu0 0.0
        %4180 = vmatpush1.msra.mxu0 0.0
        %4181 = vmatprep.subr.mxu0 0.0
        %4182 = vmatpush1.msra.mxu0 0.0
        %4183 = vmatprep.subr.mxu0 0.0
        %4184 = vmatpush1.msra.mxu0 0.0
        %4185 = vmatprep.subr.mxu0 0.0
        %4186 = vmatpush1.msra.mxu0 0.0
        %4187 = vmatprep.subr.mxu0 0.0
        %4188 = vmatpush1.msra.mxu0 %v4159
        %4189 = vmatprep.subr.mxu0 0.0
        %4190 = vmatpush1.msra.mxu0 %v4148
        %4191 = vmatprep.subr.mxu0 0.0
        %4192 = vmatpush1.msra.mxu0 %v4147
        %4193 = vmatprep.subr.mxu0 0.0
        %4194 = vmatpush2.msra.mxu0 0.0
        %4195 = vmatprep.subr.mxu0 0.0
        %4196 = vmatpush2.msra.mxu0 0.0
        %4197 = vmatprep.subr.mxu0 0.0
        %4198 = vmatpush2.msra.mxu0 0.0
        %4199 = vmatprep.subr.mxu0 0.0
        %4200 = vmatpush2.msra.mxu0 0.0
        %4201 = vmatprep.subr.mxu0 0.0
        %4202 = vmatpush2.msra.mxu0 0.0
        %4203 = vmatprep.subr.mxu0 0.0
        %4204 = vmatpush2.msra.mxu0 0.0
        %4205 = vmatprep.subr.mxu0 0.0
        %4206 = vmatpush2.msra.mxu0 0.0
        %4207 = vmatprep.subr.mxu0 0.0
        %4208 = vmatpush2.msra.mxu0 0.0
        %4209 = vmatprep.subr.mxu0 0.0
        %4210 = vmatpush2.msra.mxu0 0.0
        %4211 = vmatprep.subr.mxu0 0.0
        %4212 = vmatpush2.msra.mxu0 0.0
        %4213 = vmatprep.subr.mxu0 0.0
        %4214 = vmatpush2.msra.mxu0 0.0
        %4215 = vmatprep.subr.mxu0 0.0
        %4216 = vmatpush2.msra.mxu0 0.0
        %4217 = vmatprep.subr.mxu0 0.0
        %4218 = vmatpush2.msra.mxu0 0.0
        %4219 = vmatprep.subr.mxu0 0.0
        %4220 = vmatpush2.msra.mxu0 0.0
        %4221 = vmatprep.subr.mxu0 0.0
        %4222 = vmatpush2.msra.mxu0 0.0
        %4223 = vmatprep.subr.mxu0 0.0
        %4224 = vmatpush2.msra.mxu0 0.0
        %4225 = vmatprep.mubr.f32.mxu0 0.0
        %4226 = vmatmul.mubr.f32.gmra.mxu0 %v4156
        %v4227 = vpop.f32.mrf.mxu0
        %v4228 = vadd.f32 %v4154, %v4227
        %v4229 = vpop.f32.mrf.mxu0
        %4230 = vdwg.mxu0
        %v4231 = vadd.f32 %v4034, %v4094
        %v4232 = vadd.f32 %v4035, %v4095
        %v4233 = vadd.f32 %v4036, %v4096
        %v4234 = vadd.f32 %v4037, %v4097
        %v4235 = vadd.f32 %v4038, %v4098
        %v4236 = vadd.f32 %v4231, %v4228
        %v4237 = vadd.f32 %v4232, %v4228
        %v4238 = vadd.f32 %v4233, %v4228
        %v4239 = vadd.f32 %v4234, %v4228
        %v4240 = vadd.f32 %v4235, %v4228
        %v4241 = vmax.f32 %v4236, 0.0
        %v4242 = vmax.f32 %v4237, 0.0
        %v4243 = vmax.f32 %v4238, 0.0
        %v4244 = vmax.f32 %v4239, 0.0
        %v4245 = vmax.f32 %v4240, 0.0
        %v4246 = vld [vmem:[%s1 + $0x7e8] sm:$0x1]
        %v4247 = vld [vmem:[%s1 + $0x7e9] sm:$0x1]
        %v4248 = vld [vmem:[%s1 + $0x7ea] sm:$0x1]
        %v4249 = vlaneseq
        %v4250 = vshrl.u32 %v4249, 7
        %v4251 = vsub.s32 0, %v4250
        %v4252 = vrot.slane %v4246, %v4251
        %v4253 = vmul.f32 %v4252, 0.0
        %v4254 = vmul.f32 %v4241, %v4252
        %v4255 = vmul.f32 %v4242, %v4252
        %v4256 = vmul.f32 %v4243, %v4252
        %v4257 = vmul.f32 %v4244, %v4252
        %v4258 = vlaneseq
        %v4259 = vshrl.u32 %v4258, 7
        %v4260 = vsub.s32 0, %v4259
        %v4261 = vrot.slane %v4247, %v4260
        %v4262 = vmul.f32 %v4241, %v4261
        %v4263 = vmul.f32 %v4242, %v4261
        %v4264 = vmul.f32 %v4243, %v4261
        %v4265 = vmul.f32 %v4244, %v4261
        %v4266 = vmul.f32 %v4245, %v4261
        %v4267 = vadd.f32 %v4253, %v4262
        %v4268 = vadd.f32 %v4254, %v4263
        %v4269 = vadd.f32 %v4255, %v4264
        %v4270 = vadd.f32 %v4256, %v4265
        %v4271 = vadd.f32 %v4257, %v4266
        %v4272 = vlaneseq
        %v4273 = vshrl.u32 %v4272, 7
        %v4274 = vsub.s32 0, %v4273
        %v4275 = vrot.slane %v4248, %v4274
        %v4276 = vmul.f32 %v4242, %v4275
        %v4277 = vmul.f32 %v4243, %v4275
        %v4278 = vmul.f32 %v4244, %v4275
        %v4279 = vmul.f32 %v4245, %v4275
        %v4280 = vmul.f32 %v4275, 0.0
        %v4281 = vadd.f32 %v4267, %v4276
        %v4282 = vadd.f32 %v4268, %v4277
        %v4283 = vadd.f32 %v4269, %v4278
        %v4284 = vadd.f32 %v4270, %v4279
        %v4285 = vadd.f32 %v4271, %v4280
        %v4286 = vld [vmem:[%s1 + $0x7f0] sm:$0xff]
        %v4287 = vld [vmem:[%s1 + $0x7f8] sm:$0xff]
        %v4288 = vld [vmem:[%s1 + $0x800] sm:$0xff]
        %v4289 = vld [vmem:[%s1 + $0x808] sm:$0xff]
        %v4290 = vld [vmem:[%s1 + $0x810] sm:$0xff]
        %v4291 = vmul.f32 %v4281, %v4286
        %v4292 = vmul.f32 %v4282, %v4287
        %v4293 = vmul.f32 %v4283, %v4288
        %v4294 = vmul.f32 %v4284, %v4289
        %v4295 = vmul.f32 %v4285, %v4290
        %v4296 = vld [vmem:[%s1 + $0x818] sm:$0xff]
        %v4297 = vld [vmem:[%s1 + $0x820] sm:$0xff]
        %v4298 = vld [vmem:[%s1 + $0x828] sm:$0xff]
        %v4299 = vld [vmem:[%s1 + $0x830] sm:$0xff]
        %v4300 = vld [vmem:[%s1 + $0x838] sm:$0xff]
        %v4301 = vadd.f32 %v4291, %v4296
        %v4302 = vadd.f32 %v4292, %v4297
        %v4303 = vadd.f32 %v4293, %v4298
        %v4304 = vadd.f32 %v4294, %v4299
        %v4305 = vadd.f32 %v4295, %v4300
        %v4306 = vsel %vm3689, %v4301, 0.0
        %v4307 = vsel %vm3689, %v4302, 0.0
        %v4308 = vadd.f32 %v4306, %v4307
        %v4309 = vsel %vm3689, %v4303, 0.0
        %v4310 = vadd.f32 %v4308, %v4309
        %v4311 = vsel %vm3689, %v4304, 0.0
        %v4312 = vadd.f32 %v4310, %v4311
        %v4313 = vsel %vm3689, %v4305, 0.0
        %v4314 = vadd.f32 %v4312, %v4313
        %v4315 = vmul.f32 %v4314, %v2710
        %v4316 = vld [vmem:[%s1 + $0x840] sm:$0x1]
        %v4317 = vlaneseq
        %v4318 = vshrl.u32 %v4317, 7
        %v4319 = vsub.s32 0, %v4318
        %v4320 = vrot.slane %v4316, %v4319
        %v4321 = vmul.f32 %v4320, 0.0
        %v4322 = vld [vmem:[%s1 + $0x841] sm:$0x1]
        %v4323 = vlaneseq
        %v4324 = vshrl.u32 %v4323, 7
        %v4325 = vsub.s32 0, %v4324
        %v4326 = vrot.slane %v4322, %v4325
        %v4327 = vmul.f32 %v4315, %v4326
        %v4328 = vadd.f32 %v4321, %v4327
        %v4329 = vld [vmem:[%s1 + $0x842] sm:$0x1]
        %v4330 = vlaneseq
        %v4331 = vshrl.u32 %v4330, 7
        %v4332 = vsub.s32 0, %v4331
        %v4333 = vrot.slane %v4329, %v4332
        %v4334 = vmul.f32 %v4333, 0.0
        %v4335 = vadd.f32 %v4328, %v4334
        %v4336 = vld [vmem:[%s1 + $0x848] sm:$0x1]
        %v4337 = vlaneseq
        %v4338 = vshrl.u32 %v4337, 7
        %v4339 = vsub.s32 0, %v4338
        %v4340 = vrot.slane %v4336, %v4339
        %v4341 = vmul.f32 %v4335, %v4340
        %v4342 = vld [vmem:[%s1 + $0x850] sm:$0x1]
        %v4343 = vlaneseq
        %v4344 = vshrl.u32 %v4343, 7
        %v4345 = vsub.s32 0, %v4344
        %v4346 = vrot.slane %v4342, %v4345
        %v4347 = vadd.f32 %v4341, %v4346
        %v4348 = vsub.f32 0.0, %v4347
        %v4349 = vmul.f32 %v4348, 1.442695
        %v4350 = vpow.pop %v4349
        %v4351 = vadd.f32 %v4350, 1.0
        %v4352 = vrcp.pop %v4351
        %v4353 = vmul.f32 %v4347, %v4352
        %v4354 = vld [vmem:[%s2 + $0xf0] sm:$0xff]
        %v4355 = vld [vmem:[%s2 + $0xf8] sm:$0xff]
        %v4356 = vld [vmem:[%s2 + $0x100] sm:$0xf]
        %v4357 = vld [vmem:[%s1 + $0x858] sm:$0x1]
        %v4358 = vlaneseq
        %v4359 = vshrl.u32 %v4358, 7
        %v4360 = vsub.s32 0, %v4359
        %v4361 = vrot.slane %v4357, %v4360
        %v4363 = vsel %vm3689, %v4353, 0
        %v4366 = vsel %vm2029, %v4356, 0
        %4368 = vmatprep.subr.mxu0 0.0
        %4369 = vmatpush1.msra.mxu0 0.0
        %4370 = vmatprep.subr.mxu0 0.0
        %4371 = vmatpush1.msra.mxu0 0.0
        %4372 = vmatprep.subr.mxu0 0.0
        %4373 = vmatpush1.msra.mxu0 0.0
        %4374 = vmatprep.subr.mxu0 0.0
        %4375 = vmatpush1.msra.mxu0 0.0
        %4376 = vmatprep.subr.mxu0 0.0
        %4377 = vmatpush1.msra.mxu0 0.0
        %4378 = vmatprep.subr.mxu0 0.0
        %4379 = vmatpush1.msra.mxu0 0.0
        %4380 = vmatprep.subr.mxu0 0.0
        %4381 = vmatpush1.msra.mxu0 0.0
        %4382 = vmatprep.subr.mxu0 0.0
        %4383 = vmatpush1.msra.mxu0 0.0
        %4384 = vmatprep.subr.mxu0 0.0
        %4385 = vmatpush1.msra.mxu0 0.0
        %4386 = vmatprep.subr.mxu0 0.0
        %4387 = vmatpush1.msra.mxu0 0.0
        %4388 = vmatprep.subr.mxu0 0.0
        %4389 = vmatpush1.msra.mxu0 0.0
        %4390 = vmatprep.subr.mxu0 0.0
        %4391 = vmatpush1.msra.mxu0 0.0
        %4392 = vmatprep.subr.mxu0 0.0
        %4393 = vmatpush1.msra.mxu0 0.0
        %4394 = vmatprep.subr.mxu0 0.0
        %4395 = vmatpush1.msra.mxu0 %v4366
        %4396 = vmatprep.subr.mxu0 0.0
        %4397 = vmatpush1.msra.mxu0 %v4355
        %4398 = vmatprep.subr.mxu0 0.0
        %4399 = vmatpush1.msra.mxu0 %v4354
        %4400 = vmatprep.subr.mxu0 0.0
        %4401 = vmatpush2.msra.mxu0 0.0
        %4402 = vmatprep.subr.mxu0 0.0
        %4403 = vmatpush2.msra.mxu0 0.0
        %4404 = vmatprep.subr.mxu0 0.0
        %4405 = vmatpush2.msra.mxu0 0.0
        %4406 = vmatprep.subr.mxu0 0.0
        %4407 = vmatpush2.msra.mxu0 0.0
        %4408 = vmatprep.subr.mxu0 0.0
        %4409 = vmatpush2.msra.mxu0 0.0
        %4410 = vmatprep.subr.mxu0 0.0
        %4411 = vmatpush2.msra.mxu0 0.0
        %4412 = vmatprep.subr.mxu0 0.0
        %4413 = vmatpush2.msra.mxu0 0.0
        %4414 = vmatprep.subr.mxu0 0.0
        %4415 = vmatpush2.msra.mxu0 0.0
        %4416 = vmatprep.subr.mxu0 0.0
        %4417 = vmatpush2.msra.mxu0 0.0
        %4418 = vmatprep.subr.mxu0 0.0
        %4419 = vmatpush2.msra.mxu0 0.0
        %4420 = vmatprep.subr.mxu0 0.0
        %4421 = vmatpush2.msra.mxu0 0.0
        %4422 = vmatprep.subr.mxu0 0.0
        %4423 = vmatpush2.msra.mxu0 0.0
        %4424 = vmatprep.subr.mxu0 0.0
        %4425 = vmatpush2.msra.mxu0 0.0
        %4426 = vmatprep.subr.mxu0 0.0
        %4427 = vmatpush2.msra.mxu0 0.0
        %4428 = vmatprep.subr.mxu0 0.0
        %4429 = vmatpush2.msra.mxu0 0.0
        %4430 = vmatprep.subr.mxu0 0.0
        %4431 = vmatpush2.msra.mxu0 0.0
        %4432 = vmatprep.mubr.f32.mxu0 0.0
        %4433 = vmatmul.mubr.f32.gmra.mxu0 %v4363
        %v4434 = vpop.f32.mrf.mxu0
        %v4435 = vadd.f32 %v4361, %v4434
        %v4436 = vpop.f32.mrf.mxu0
        %4437 = vdwg.mxu0
        %v4438 = vadd.f32 %v4241, %v4301
        %v4439 = vadd.f32 %v4242, %v4302
        %v4440 = vadd.f32 %v4243, %v4303
        %v4441 = vadd.f32 %v4244, %v4304
        %v4442 = vadd.f32 %v4245, %v4305
        %v4443 = vadd.f32 %v4438, %v4435
        %v4444 = vadd.f32 %v4439, %v4435
        %v4445 = vadd.f32 %v4440, %v4435
        %v4446 = vadd.f32 %v4441, %v4435
        %v4447 = vadd.f32 %v4442, %v4435
        %v4448 = vmax.f32 %v4443, 0.0
        %v4449 = vmax.f32 %v4444, 0.0
        %v4450 = vmax.f32 %v4445, 0.0
        %v4451 = vmax.f32 %v4446, 0.0
        %v4452 = vmax.f32 %v4447, 0.0
        %v4453 = vld [vmem:[%s1 + $0x868] sm:$0x1]
        %v4454 = vlaneseq
        %v4455 = vshrl.u32 %v4454, 7
        %v4456 = vsub.s32 0, %v4455
        %v4457 = vrot.slane %v4453, %v4456
        %v4458 = vmul.f32 %v4448, %v4457
        %v4459 = vld [vmem:[%s1 + $0x869] sm:$0x1]
        %v4460 = vlaneseq
        %v4461 = vshrl.u32 %v4460, 7
        %v4462 = vsub.s32 0, %v4461
        %v4463 = vrot.slane %v4459, %v4462
        %v4464 = vmul.f32 %v4448, %v4463
        %v4466 = vrot.slane %v4464, 1
        %v4468 = vadd.f32 %v4458, %v4466
        %v4469 = vld [vmem:[%s1 + $0x86a] sm:$0x1]
        %v4470 = vlaneseq
        %v4471 = vshrl.u32 %v4470, 7
        %v4472 = vsub.s32 0, %v4471
        %v4473 = vrot.slane %v4469, %v4472
        %v4474 = vmul.f32 %v4448, %v4473
        %v4476 = vrot.slane %v4474, 2
        %v4478 = vadd.f32 %v4468, %v4476
        %v4479 = vld [vmem:[%s1 + $0x86b] sm:$0x1]
        %v4480 = vlaneseq
        %v4481 = vshrl.u32 %v4480, 7
        %v4482 = vsub.s32 0, %v4481
        %v4483 = vrot.slane %v4479, %v4482
        %v4484 = vmul.f32 %v4448, %v4483
        %v4486 = vrot.slane %v4484, 3
        %v4488 = vadd.f32 %v4478, %v4486
        %v4489 = vld [vmem:[%s1 + $0x86c] sm:$0x1]
        %v4490 = vlaneseq
        %v4491 = vshrl.u32 %v4490, 7
        %v4492 = vsub.s32 0, %v4491
        %v4493 = vrot.slane %v4489, %v4492
        %v4494 = vmul.f32 %v4448, %v4493
        %v4496 = vrot.slane %v4494, 4
        %v4498 = vadd.f32 %v4488, %v4496
        %v4499 = vld [vmem:[%s1 + $0x86d] sm:$0x1]
        %v4500 = vlaneseq
        %v4501 = vshrl.u32 %v4500, 7
        %v4502 = vsub.s32 0, %v4501
        %v4503 = vrot.slane %v4499, %v4502
        %v4504 = vmul.f32 %v4449, %v4503
        %v4505 = vadd.f32 %v4498, %v4504
        %v4506 = vld [vmem:[%s1 + $0x86e] sm:$0x1]
        %v4507 = vlaneseq
        %v4508 = vshrl.u32 %v4507, 7
        %v4509 = vsub.s32 0, %v4508
        %v4510 = vrot.slane %v4506, %v4509
        %v4511 = vmul.f32 %v4449, %v4510
        %v4513 = vrot.slane %v4511, 1
        %v4515 = vadd.f32 %v4505, %v4513
        %v4516 = vld [vmem:[%s1 + $0x86f] sm:$0x1]
        %v4517 = vlaneseq
        %v4518 = vshrl.u32 %v4517, 7
        %v4519 = vsub.s32 0, %v4518
        %v4520 = vrot.slane %v4516, %v4519
        %v4521 = vmul.f32 %v4449, %v4520
        %v4523 = vrot.slane %v4521, 2
        %v4525 = vadd.f32 %v4515, %v4523
        %v4526 = vld [vmem:[%s1 + $0x870] sm:$0x1]
        %v4527 = vlaneseq
        %v4528 = vshrl.u32 %v4527, 7
        %v4529 = vsub.s32 0, %v4528
        %v4530 = vrot.slane %v4526, %v4529
        %v4531 = vmul.f32 %v4449, %v4530
        %v4533 = vrot.slane %v4531, 3
        %v4535 = vadd.f32 %v4525, %v4533
        %v4536 = vld [vmem:[%s1 + $0x871] sm:$0x1]
        %v4537 = vlaneseq
        %v4538 = vshrl.u32 %v4537, 7
        %v4539 = vsub.s32 0, %v4538
        %v4540 = vrot.slane %v4536, %v4539
        %v4541 = vmul.f32 %v4449, %v4540
        %v4543 = vrot.slane %v4541, 4
        %v4545 = vadd.f32 %v4535, %v4543
        %v4546 = vld [vmem:[%s1 + $0x872] sm:$0x1]
        %v4547 = vlaneseq
        %v4548 = vshrl.u32 %v4547, 7
        %v4549 = vsub.s32 0, %v4548
        %v4550 = vrot.slane %v4546, %v4549
        %v4551 = vmul.f32 %v4450, %v4550
        %v4552 = vadd.f32 %v4545, %v4551
        %v4553 = vld [vmem:[%s1 + $0x873] sm:$0x1]
        %v4554 = vlaneseq
        %v4555 = vshrl.u32 %v4554, 7
        %v4556 = vsub.s32 0, %v4555
        %v4557 = vrot.slane %v4553, %v4556
        %v4558 = vmul.f32 %v4450, %v4557
        %v4560 = vrot.slane %v4558, 1
        %v4562 = vadd.f32 %v4552, %v4560
        %v4563 = vld [vmem:[%s1 + $0x874] sm:$0x1]
        %v4564 = vlaneseq
        %v4565 = vshrl.u32 %v4564, 7
        %v4566 = vsub.s32 0, %v4565
        %v4567 = vrot.slane %v4563, %v4566
        %v4568 = vmul.f32 %v4450, %v4567
        %v4570 = vrot.slane %v4568, 2
        %v4572 = vadd.f32 %v4562, %v4570
        %v4573 = vld [vmem:[%s1 + $0x875] sm:$0x1]
        %v4574 = vlaneseq
        %v4575 = vshrl.u32 %v4574, 7
        %v4576 = vsub.s32 0, %v4575
        %v4577 = vrot.slane %v4573, %v4576
        %v4578 = vmul.f32 %v4450, %v4577
        %v4580 = vrot.slane %v4578, 3
        %v4582 = vadd.f32 %v4572, %v4580
        %v4583 = vld [vmem:[%s1 + $0x876] sm:$0x1]
        %v4584 = vlaneseq
        %v4585 = vshrl.u32 %v4584, 7
        %v4586 = vsub.s32 0, %v4585
        %v4587 = vrot.slane %v4583, %v4586
        %v4588 = vmul.f32 %v4450, %v4587
        %v4590 = vrot.slane %v4588, 4
        %v4592 = vadd.f32 %v4582, %v4590
        %v4593 = vld [vmem:[%s1 + $0x877] sm:$0x1]
        %v4594 = vlaneseq
        %v4595 = vshrl.u32 %v4594, 7
        %v4596 = vsub.s32 0, %v4595
        %v4597 = vrot.slane %v4593, %v4596
        %v4598 = vmul.f32 %v4451, %v4597
        %v4599 = vadd.f32 %v4592, %v4598
        %v4600 = vld [vmem:[%s1 + $0x878] sm:$0x1]
        %v4601 = vlaneseq
        %v4602 = vshrl.u32 %v4601, 7
        %v4603 = vsub.s32 0, %v4602
        %v4604 = vrot.slane %v4600, %v4603
        %v4605 = vmul.f32 %v4451, %v4604
        %v4607 = vrot.slane %v4605, 1
        %v4609 = vadd.f32 %v4599, %v4607
        %v4610 = vld [vmem:[%s1 + $0x879] sm:$0x1]
        %v4611 = vlaneseq
        %v4612 = vshrl.u32 %v4611, 7
        %v4613 = vsub.s32 0, %v4612
        %v4614 = vrot.slane %v4610, %v4613
        %v4615 = vmul.f32 %v4451, %v4614
        %v4617 = vrot.slane %v4615, 2
        %v4619 = vadd.f32 %v4609, %v4617
        %v4620 = vld [vmem:[%s1 + $0x87a] sm:$0x1]
        %v4621 = vlaneseq
        %v4622 = vshrl.u32 %v4621, 7
        %v4623 = vsub.s32 0, %v4622
        %v4624 = vrot.slane %v4620, %v4623
        %v4625 = vmul.f32 %v4451, %v4624
        %v4627 = vrot.slane %v4625, 3
        %v4629 = vadd.f32 %v4619, %v4627
        %v4630 = vld [vmem:[%s1 + $0x87b] sm:$0x1]
        %v4631 = vlaneseq
        %v4632 = vshrl.u32 %v4631, 7
        %v4633 = vsub.s32 0, %v4632
        %v4634 = vrot.slane %v4630, %v4633
        %v4635 = vmul.f32 %v4451, %v4634
        %v4637 = vrot.slane %v4635, 4
        %v4639 = vadd.f32 %v4629, %v4637
        %v4640 = vld [vmem:[%s1 + $0x87c] sm:$0x1]
        %v4641 = vlaneseq
        %v4642 = vshrl.u32 %v4641, 7
        %v4643 = vsub.s32 0, %v4642
        %v4644 = vrot.slane %v4640, %v4643
        %v4645 = vmul.f32 %v4452, %v4644
        %v4646 = vadd.f32 %v4639, %v4645
        %v4647 = vld [vmem:[%s1 + $0x87d] sm:$0x1]
        %v4648 = vlaneseq
        %v4649 = vshrl.u32 %v4648, 7
        %v4650 = vsub.s32 0, %v4649
        %v4651 = vrot.slane %v4647, %v4650
        %v4652 = vmul.f32 %v4452, %v4651
        %v4654 = vrot.slane %v4652, 1
        %v4656 = vadd.f32 %v4646, %v4654
        %v4657 = vld [vmem:[%s1 + $0x87e] sm:$0x1]
        %v4658 = vlaneseq
        %v4659 = vshrl.u32 %v4658, 7
        %v4660 = vsub.s32 0, %v4659
        %v4661 = vrot.slane %v4657, %v4660
        %v4662 = vmul.f32 %v4452, %v4661
        %v4664 = vrot.slane %v4662, 2
        %v4666 = vadd.f32 %v4656, %v4664
        %v4667 = vld [vmem:[%s1 + $0x87f] sm:$0x1]
        %v4668 = vlaneseq
        %v4669 = vshrl.u32 %v4668, 7
        %v4670 = vsub.s32 0, %v4669
        %v4671 = vrot.slane %v4667, %v4670
        %v4672 = vmul.f32 %v4452, %v4671
        %v4674 = vrot.slane %v4672, 3
        %v4676 = vadd.f32 %v4666, %v4674
        %v4677 = vld [vmem:[%s1 + $0x880] sm:$0x1]
        %v4678 = vlaneseq
        %v4679 = vshrl.u32 %v4678, 7
        %v4680 = vsub.s32 0, %v4679
        %v4681 = vrot.slane %v4677, %v4680
        %v4682 = vmul.f32 %v4452, %v4681
        %v4684 = vrot.slane %v4682, 4
        %v4686 = vadd.f32 %v4676, %v4684
        %v4687 = vld [vmem:[%s1 + $0x888] sm:$0x1]
        %v4688 = vlaneseq
        %v4689 = vshrl.u32 %v4688, 7
        %v4690 = vsub.s32 0, %v4689
        %v4691 = vrot.slane %v4687, %v4690
        %v4692 = vadd.f32 %v4686, %v4691
        %v4693 = vld [vmem:[%s2 + $0x128] sm:$0xff]
        %v4694 = vld [vmem:[%s2 + $0x130] sm:$0xff]
        %v4695 = vld [vmem:[%s2 + $0x138] sm:$0xf]
        %v4696 = vld [vmem:[%s1 + $0x890] sm:$0x1]
        %v4697 = vlaneseq
        %v4698 = vshrl.u32 %v4697, 7
        %v4699 = vsub.s32 0, %v4698
        %v4700 = vrot.slane %v4696, %v4699
        %v4702 = vsel %vm3689, %v4692, 0
        %v4705 = vsel %vm2029, %v4695, 0
        %4707 = vmatprep.subr.mxu0 0.0
        %4708 = vmatpush1.msra.mxu0 0.0
        %4709 = vmatprep.subr.mxu0 0.0
        %4710 = vmatpush1.msra.mxu0 0.0
        %4711 = vmatprep.subr.mxu0 0.0
        %4712 = vmatpush1.msra.mxu0 0.0
        %4713 = vmatprep.subr.mxu0 0.0
        %4714 = vmatpush1.msra.mxu0 0.0
        %4715 = vmatprep.subr.mxu0 0.0
        %4716 = vmatpush1.msra.mxu0 0.0
        %4717 = vmatprep.subr.mxu0 0.0
        %4718 = vmatpush1.msra.mxu0 0.0
        %4719 = vmatprep.subr.mxu0 0.0
        %4720 = vmatpush1.msra.mxu0 0.0
        %4721 = vmatprep.subr.mxu0 0.0
        %4722 = vmatpush1.msra.mxu0 0.0
        %4723 = vmatprep.subr.mxu0 0.0
        %4724 = vmatpush1.msra.mxu0 0.0
        %4725 = vmatprep.subr.mxu0 0.0
        %4726 = vmatpush1.msra.mxu0 0.0
        %4727 = vmatprep.subr.mxu0 0.0
        %4728 = vmatpush1.msra.mxu0 0.0
        %4729 = vmatprep.subr.mxu0 0.0
        %4730 = vmatpush1.msra.mxu0 0.0
        %4731 = vmatprep.subr.mxu0 0.0
        %4732 = vmatpush1.msra.mxu0 0.0
        %4733 = vmatprep.subr.mxu0 0.0
        %4734 = vmatpush1.msra.mxu0 %v4705
        %4735 = vmatprep.subr.mxu0 0.0
        %4736 = vmatpush1.msra.mxu0 %v4694
        %4737 = vmatprep.subr.mxu0 0.0
        %4738 = vmatpush1.msra.mxu0 %v4693
        %4739 = vmatprep.subr.mxu0 0.0
        %4740 = vmatpush2.msra.mxu0 0.0
        %4741 = vmatprep.subr.mxu0 0.0
        %4742 = vmatpush2.msra.mxu0 0.0
        %4743 = vmatprep.subr.mxu0 0.0
        %4744 = vmatpush2.msra.mxu0 0.0
        %4745 = vmatprep.subr.mxu0 0.0
        %4746 = vmatpush2.msra.mxu0 0.0
        %4747 = vmatprep.subr.mxu0 0.0
        %4748 = vmatpush2.msra.mxu0 0.0
        %4749 = vmatprep.subr.mxu0 0.0
        %4750 = vmatpush2.msra.mxu0 0.0
        %4751 = vmatprep.subr.mxu0 0.0
        %4752 = vmatpush2.msra.mxu0 0.0
        %4753 = vmatprep.subr.mxu0 0.0
        %4754 = vmatpush2.msra.mxu0 0.0
        %4755 = vmatprep.subr.mxu0 0.0
        %4756 = vmatpush2.msra.mxu0 0.0
        %4757 = vmatprep.subr.mxu0 0.0
        %4758 = vmatpush2.msra.mxu0 0.0
        %4759 = vmatprep.subr.mxu0 0.0
        %4760 = vmatpush2.msra.mxu0 0.0
        %4761 = vmatprep.subr.mxu0 0.0
        %4762 = vmatpush2.msra.mxu0 0.0
        %4763 = vmatprep.subr.mxu0 0.0
        %4764 = vmatpush2.msra.mxu0 0.0
        %4765 = vmatprep.subr.mxu0 0.0
        %4766 = vmatpush2.msra.mxu0 0.0
        %4767 = vmatprep.subr.mxu0 0.0
        %4768 = vmatpush2.msra.mxu0 0.0
        %4769 = vmatprep.subr.mxu0 0.0
        %4770 = vmatpush2.msra.mxu0 0.0
        %4771 = vmatprep.mubr.f32.mxu0 0.0
        %4772 = vmatmul.mubr.f32.gmra.mxu0 %v4702
        %v4773 = vpop.f32.mrf.mxu0
        %v4774 = vadd.f32 %v4700, %v4773
        %v4775 = vpop.f32.mrf.mxu0
        %4776 = vdwg.mxu0
        %vm4777 = vcmask 257024
        %v4778 = vsel %vm4777, %v4774, 0.0
        %v4779 = vrot.slane %v4778, 4
        %v4780 = vadd.f32 %v4778, %v4779
        %v4781 = vrot.slane %v4780, 2
        %v4782 = vadd.f32 %v4780, %v4781
        %v4783 = vrot.slane %v4782, 1
        %v4784 = vadd.f32 %v4782, %v4783
        %v4785 = vrcp.pop 4.0
        %v4786 = vmul.f32 %v4784, %v4785
        %v4787 = vld [vmem:[%s2 + $0x140] sm:$0xff]
        %v4788 = vld [vmem:[%s2 + $0x148] sm:$0xff]
        %v4789 = vld [vmem:[%s2 + $0x150] sm:$0xff]
        %v4790 = vld [vmem:[%s2 + $0x158] sm:$0xff]
        %v4791 = vld [vmem:[%s1 + $0x898] sm:$0x1]
        %vm4792 = vcmask 261120
        %v4794 = vsel %vm4792, %v4786, 0
        %4796 = vmatprep.subr.mxu0 0.0
        %4797 = vmatpush1.msra.mxu0 0.0
        %4798 = vmatprep.subr.mxu0 0.0
        %4799 = vmatpush1.msra.mxu0 0.0
        %4800 = vmatprep.subr.mxu0 0.0
        %4801 = vmatpush1.msra.mxu0 0.0
        %4802 = vmatprep.subr.mxu0 0.0
        %4803 = vmatpush1.msra.mxu0 0.0
        %4804 = vmatprep.subr.mxu0 0.0
        %4805 = vmatpush1.msra.mxu0 0.0
        %4806 = vmatprep.subr.mxu0 0.0
        %4807 = vmatpush1.msra.mxu0 0.0
        %4808 = vmatprep.subr.mxu0 0.0
        %4809 = vmatpush1.msra.mxu0 0.0
        %4810 = vmatprep.subr.mxu0 0.0
        %4811 = vmatpush1.msra.mxu0 0.0
        %4812 = vmatprep.subr.mxu0 0.0
        %4813 = vmatpush1.msra.mxu0 0.0
        %4814 = vmatprep.subr.mxu0 0.0
        %4815 = vmatpush1.msra.mxu0 0.0
        %4816 = vmatprep.subr.mxu0 0.0
        %4817 = vmatpush1.msra.mxu0 0.0
        %4818 = vmatprep.subr.mxu0 0.0
        %4819 = vmatpush1.msra.mxu0 0.0
        %4820 = vmatprep.subr.mxu0 0.0
        %4821 = vmatpush1.msra.mxu0 %v4790
        %4822 = vmatprep.subr.mxu0 0.0
        %4823 = vmatpush1.msra.mxu0 %v4789
        %4824 = vmatprep.subr.mxu0 0.0
        %4825 = vmatpush1.msra.mxu0 %v4788
        %4826 = vmatprep.subr.mxu0 0.0
        %4827 = vmatpush1.msra.mxu0 %v4787
        %4828 = vmatprep.subr.mxu0 0.0
        %4829 = vmatpush2.msra.mxu0 0.0
        %4830 = vmatprep.subr.mxu0 0.0
        %4831 = vmatpush2.msra.mxu0 0.0
        %4832 = vmatprep.subr.mxu0 0.0
        %4833 = vmatpush2.msra.mxu0 0.0
        %4834 = vmatprep.subr.mxu0 0.0
        %4835 = vmatpush2.msra.mxu0 0.0
        %4836 = vmatprep.subr.mxu0 0.0
        %4837 = vmatpush2.msra.mxu0 0.0
        %4838 = vmatprep.subr.mxu0 0.0
        %4839 = vmatpush2.msra.mxu0 0.0
        %4840 = vmatprep.subr.mxu0 0.0
        %4841 = vmatpush2.msra.mxu0 0.0
        %4842 = vmatprep.subr.mxu0 0.0
        %4843 = vmatpush2.msra.mxu0 0.0
        %4844 = vmatprep.subr.mxu0 0.0
        %4845 = vmatpush2.msra.mxu0 0.0
        %4846 = vmatprep.subr.mxu0 0.0
        %4847 = vmatpush2.msra.mxu0 0.0
        %4848 = vmatprep.subr.mxu0 0.0
        %4849 = vmatpush2.msra.mxu0 0.0
        %4850 = vmatprep.subr.mxu0 0.0
        %4851 = vmatpush2.msra.mxu0 0.0
        %4852 = vmatprep.subr.mxu0 0.0
        %4853 = vmatpush2.msra.mxu0 0.0
        %4854 = vmatprep.subr.mxu0 0.0
        %4855 = vmatpush2.msra.mxu0 0.0
        %4856 = vmatprep.subr.mxu0 0.0
        %4857 = vmatpush2.msra.mxu0 0.0
        %4858 = vmatprep.subr.mxu0 0.0
        %4859 = vmatpush2.msra.mxu0 0.0
        %4860 = vmatprep.mubr.f32.mxu0 0.0
        %4861 = vmatmul.mubr.f32.gmra.mxu0 %v4794
        %v4862 = vpop.f32.mrf.mxu0
        %v4863 = vadd.f32 %v4791, %v4862
        %v4864 = vpop.f32.mrf.mxu0
        %4865 = vdwg.mxu0
        %vm4866 = vcmask 278528
        %v4867 = vsel %vm4866, %v4863, -inf
        %4868 = vmax.xlane.f32.xlu0 %v4867
        %v4869 = vpop.xlane.xlu0 %4868
        %v4870 = vsub.f32 %v4863, %v4869
        %v4871 = vmul.f32 %v4870, 1.442695
        %v4872 = vpow.pop %v4871
        %v4873 = vsel %vm4866, %v4872, 0.0
        %4874 = vadd.xlane.f32.xlu0 %v4873
        %v4875 = vpop.xlane.xlu0 %4874
        %v4876 = vlog2.pop %v4875
        %v4877 = vmul.f32 %v4876, 0.6931472
        %v4878 = vsub.f32 %v4870, %v4877
        %4879 = vst.msk [vmem:[%s162] sm:$0x1] %vm4866, %v4878
        %s4880 = sand.u32 %s93, 1
        %s4881 = scalar_lea.sflag [#allocation3], %s4880
        %s4882 = sand.u32 %s93, 1
        %s4883 = scalar_lea.vmem [#allocation2], %s4882
        // Predicated region
        $region33: #{forward.1} parent=31 // pred_check
          %p4884 = pneg %p103
        $region34: #{forward.1} parent=31 // pred_check_branch
          %4886 = sbr.rel (%p4884) target = $region36
        $region35: #{forward.1} parent=31 // pred_region
          %s4888 = ssub.s32 16, 16
          %4889 = vsyncadd %s4881, %s4888
          %s4890 = smul.addr %s17, 16
          %s4891 = scalar_lea.hbm %s3, %s4890
          %s4893 = sshll.u32 %s4883, 4
          %s4894 = int_to_ptr.vmem [resolvable:$true] %s4893
          %4896 = dma.vmem_to_hbm [thread:$0]  %s4894, 16, %s4891, %s4881
        $region36: #{forward.1} parent=31 // pred_fallthru
          _
      $region32: #{forward.1} parent=5 // pred_fallthru
        _
      %p4897 = scmp.le.s32.totalorder 2, %s12
      // Predicated region
      $region37: #{forward.1} parent=5 // pred_check
        %p4898 = pneg %p4897
      $region38: #{forward.1} parent=5 // pred_check_branch
        %4900 = sbr.rel (%p4898) target = $region40
      $region39: #{forward.1} parent=5 // pred_region
        %s4901 = ssub.s32 %s12, 2
        // Predicated region
        $region41: #{forward.1} parent=39 // pred_check
          %p4902 = pneg %p109
        $region42: #{forward.1} parent=39 // pred_check_branch
          %4904 = sbr.rel (%p4902) target = $region44
        $region43: #{forward.1} parent=39 // pred_region
          %s4905 = sand.u32 %s94, 1
          %s4906 = scalar_lea.sflag [#allocation3], %s4905
          %s4907 = sand.u32 %s94, 1
          %s4908 = scalar_lea.vmem [#allocation2], %s4907
          %4909 = dma.done %s4906, 16
        $region44: #{forward.1} parent=39 // pred_fallthru
          _
      $region40: #{forward.1} parent=5 // pred_fallthru
        _
    $region6: #{forward.1} parent=1 // loop_footer
      %s16 = sadd.s32 1, %s12
    $region7: #{forward.1} parent=1 // loop_footer_branch
      %11 = sbr.rel target = $region3
    $region8: #{forward.1} parent=1 // loop_exit
      _
    %4910 = vsyncpa [#allocation3], 1
    %s4911 = scalar_lea.sflag [#allocation3], 1
    %4912 = vsyncpa %s4911, 1

</llo_original>
